<compile_context>
chip_gen: v7x
topology: tpu7x:2x2x1
jax: 0.10.0
libtpu: 0.0.40
codegen_flags: <defaults>
</compile_context>

<pallas_src>
import jax
import jax.numpy as jnp
from jax.experimental import pallas as pl
from jax.experimental.pallas import tpu as pltpu


_NEG_SLOPE = 0.01  # nn.LeakyReLU() default negative_slope


# ---------------------------------------------------------------------------
# fused whole-network kernel
# ---------------------------------------------------------------------------
def resnet_kernel(x_ref, sh_ref, wb1_ref, w9_ref, wb4_ref, wfc128_ref,
                  wb6_ref, wfc256_ref, o_ref, pad_ref, pad2_ref, im_ref):
    N = x_ref.shape[0]

    def leaky(v):
        return jnp.where(v >= 0.0, v, _NEG_SLOPE * v)

    def shift(i, cout):
        return sh_ref[i:i + 1, 0:cout]                      # (1, cout)

    # ---- stride-1 3x3 conv (pad 1), C = 64, one dense-K (576) im2col GEMM --
    def conv_s1(x_val, H, w_val, sft):
        C = 64
        M = N * H * H
        zr = jnp.zeros((N, 1, H + 2, C), jnp.float32)
        zc = jnp.zeros((N, H, 1, C), jnp.float32)
        pad_ref[:, 0:1, 0:H + 2, :] = zr                    # top ring
        pad_ref[:, H + 1:H + 2, 0:H + 2, :] = zr            # bottom ring
        pad_ref[:, 1:H + 1, 0:1, :] = zc                    # left ring
        pad_ref[:, 1:H + 1, H + 1:H + 2, :] = zc            # right ring
        pad_ref[:, 1:H + 1, 1:H + 1, :] = x_val.reshape(N, H, H, C)
        for t in range(9):
            ky, kx = t // 3, t % 3
            patch = pad_ref[:, ky:ky + H, kx:kx + H, :].reshape(M, C)
            im_ref[0:M, t * C:(t + 1) * C] = patch
        acc = jnp.dot(im_ref[0:M, 0:9 * C], w_val,
                      preferred_element_type=jnp.float32)
        return leaky(acc + sft)

    def res_block(x_val, H, w1, sf1, w2, sf2):
        h = conv_s1(x_val, H, w1, sf1)
        return x_val + conv_s1(h, H, w2, sf2)

    # ---- stride-2 3x3 conv (pad 1) from the parity-paired padded buffer ----
    # pad2_ref[n, u, v, q, r*C + c] == conv-padded input at (2u+v-1, 2q+r-1).
    def zero_pad2_ring(Ho, two_c):
        pad2_ref[:, 0:1, :, 0:Ho + 1, 0:two_c] = jnp.zeros(
            (N, 1, 2, Ho + 1, two_c), jnp.float32)
        pad2_ref[:, 0:Ho + 1, :, 0:1, 0:two_c] = jnp.zeros(
            (N, Ho + 1, 2, 1, two_c), jnp.float32)

    def conv_s2_gemm(Ho, Cin, w_val, sft):
        # pad2_ref ring + interior already written for this conv.
        M = N * Ho * Ho
        for t in range(9):
            ky, kx = t // 3, t % 3
            u0, v = (ky + 1) // 2, (ky + 1) % 2
            q0, r = (kx + 1) // 2, (kx + 1) % 2
            patch = pad2_ref[:, u0:u0 + Ho, v:v + 1, q0:q0 + Ho,
                             r * Cin:(r + 1) * Cin].reshape(M, Cin)
            im_ref[0:M, t * Cin:(t + 1) * Cin] = patch
        acc = jnp.dot(im_ref[0:M, 0:9 * Cin], w_val,
                      preferred_element_type=jnp.float32)
        return leaky(acc + sft)

    def conv_s2(x_val, H, w_val, sft):
        # x_val: (N*H*H, 64) activation in (n, y, x) row order.
        C = 64
        Ho = H // 2
        zero_pad2_ring(Ho, 2 * C)
        xq = x_val.reshape(N * Ho, 2, Ho, 2, C)
        for v in range(2):
            for r in range(2):
                quad = xq[:, v:v + 1, :, r:r + 1, :].reshape(N, Ho, 1, Ho, C)
                pad2_ref[:, 1:Ho + 1, v:v + 1, 1:Ho + 1,
                         r * C:(r + 1) * C] = quad
        return conv_s2_gemm(Ho, C, w_val, sft)

    def fc(x_val, w_val, sft):
        # 1x1-spatial conv (centre tap only) == plain matmul.
        return leaky(jnp.dot(x_val, w_val,
                             preferred_element_type=jnp.float32) + sft)

    # ================= block 1 : (N,16,16,3) -> 8x8x64 ======================
    # x_ref arrives host-paired as (N, 8, 2, 8, 2*3): the stride-2 conv's
    # padded interior, stored directly.
    zero_pad2_ring(8, 6)
    pad2_ref[:, 1:9, :, 1:9, 0:6] = x_ref[...]
    x1 = conv_s2_gemm(8, 3, wb1_ref[...], shift(0, 64))
    x1 = res_block(x1, 8, w9_ref[0], shift(1, 64), w9_ref[1], shift(2, 64))

    # ================= block 2 : 8x8x64 -> 4x4x64 ===========================
    x2 = conv_s2(x1, 8, w9_ref[2], shift(3, 64))
    x2 = res_block(x2, 4, w9_ref[3], shift(4, 64), w9_ref[4], shift(5, 64))

    # ================= block 3 : 4x4x64 -> 2x2x64 ===========================
    x3 = conv_s2(x2, 4, w9_ref[5], shift(6, 64))
    x3 = res_block(x3, 2, w9_ref[6], shift(7, 64), w9_ref[7], shift(8, 64))

    # ================= block 4 : 2x2x64 -> 1x1x128 ==========================
    # stride-2 conv on a 2x2 input: only taps (ky,kx) in {1,2}^2 see data ->
    # 4-tap im2col GEMM with K = 256.
    x3q = x3.reshape(N, 4, 64)
    for t in range(4):
        im_ref[0:N, t * 64:(t + 1) * 64] = x3q[:, t:t + 1, :].reshape(N, 64)
    f = leaky(jnp.dot(im_ref[0:N, 0:256], wb4_ref[...],
                      preferred_element_type=jnp.float32) + shift(9, 128))
    f = f + fc(fc(f, wfc128_ref[0], shift(10, 128)),
               wfc128_ref[1], shift(11, 128))

    # ================= block 5 : 1x1x128 -> 1x1x128 =========================
    f = fc(f, wfc128_ref[2], shift(12, 128))
    f = f + fc(fc(f, wfc128_ref[3], shift(13, 128)),
               wfc128_ref[4], shift(14, 128))

    # ================= block 6 : 1x1x128 -> 1x1x256 =========================
    f = fc(f, wb6_ref[...], shift(15, 256))
    f = f + fc(fc(f, wfc256_ref[0], shift(16, 256)),
               wfc256_ref[1], shift(17, 256))

    o_ref[...] = f                                          # lane-dense (N, 256)


# ---------------------------------------------------------------------------
# host wrapper
# ---------------------------------------------------------------------------
def resnet_forward(x_nchw, params):
    shifts, wb1, w9, wb4, wfc128, wb6, wfc256 = params
    x = jnp.transpose(x_nchw, (0, 2, 3, 1)).astype(jnp.float32)   # NCHW->NHWC
    N, H = x.shape[0], x.shape[1]
    cin = x.shape[3]
    # Parity-pair the input for the first stride-2 conv (pure layout plumbing).
    x_paired = x.reshape(N, H // 2, 2, H // 2, 2 * cin)

    vmem = pl.BlockSpec(memory_space=pltpu.MemorySpace.VMEM)
    out = pl.pallas_call(
        resnet_kernel,
        out_shape=jax.ShapeDtypeStruct((N, 256), jnp.float32),
        in_specs=[vmem] * 8,
        out_specs=vmem,
        scratch_shapes=[
            pltpu.VMEM((N, 10, 10, 64), jnp.float32),      # stride-1 padded act
            pltpu.VMEM((N, 9, 2, 9, 128), jnp.float32),    # parity-paired pad
            pltpu.VMEM((N * 64, 9 * 64), jnp.float32),     # dense-K im2col
        ],
        compiler_params=pltpu.CompilerParams(
            vmem_limit_bytes=32 * 1024 * 1024),
    )(x_paired, shifts, wb1, w9, wb4, wfc128, wb6, wfc256)
    # After 6 stride-2 blocks spatial is 1x1, so (N,256) == NCHW (N,256,1,1).
    return out.reshape(N, 256, 1, 1)


# ---------------------------------------------------------------------------
# parameter init (fresh nn.Conv2d + nn.BatchNorm2d in eval mode) + packing
# ---------------------------------------------------------------------------
def _init_conv_folded(key, in_c, out_c):
    """Fold eval-mode BN (+ conv bias) into (weights, per-channel shift)."""
    k_w, k_b = jax.random.split(key)
    fan_in = in_c * 9
    bound = 1.0 / (fan_in ** 0.5)
    w = jax.random.uniform(k_w, (3, 3, in_c, out_c), jnp.float32, -bound, bound)
    b = jax.random.uniform(k_b, (out_c,), jnp.float32, -bound, bound)
    gamma = jnp.ones((out_c,), jnp.float32)
    beta = jnp.zeros((out_c,), jnp.float32)
    running_mean = jnp.zeros((out_c,), jnp.float32)
    running_var = jnp.ones((out_c,), jnp.float32)
    eps = 1e-5
    scale = gamma / jnp.sqrt(running_var + eps)
    w_folded = w * scale                        # BN scale folded into weights
    shift = beta + scale * (b - running_mean)   # conv bias + BN shift folded
    return w_folded, shift


def _pack_dense9(w_f):
    """(3,3,Cin,Cout) -> (9*Cin, Cout): row t*Cin + ci for tap t = ky*3+kx."""
    cin, cout = w_f.shape[2], w_f.shape[3]
    return w_f.reshape(9 * cin, cout)


def _pack_tap4(w_f):
    """Taps (1,1),(1,2),(2,1),(2,2) only (stride-2 conv on a 2x2 input)."""
    cin, cout = w_f.shape[2], w_f.shape[3]
    return w_f[1:3, 1:3].reshape(4 * cin, cout)


def _pack_center(w_f):
    """Centre tap only (1x1 spatial: every other tap reads zero padding)."""
    return w_f[1, 1]


def init_resnet_params(key):
    j = 64
    spec = [(3, j), (j, j), (j, j), (j, 2 * j), (2 * j, 128), (128, 256)]
    shifts = jnp.zeros((18, 256), jnp.float32)
    w9_list, wfc128_list, wfc256_list = [], [], []
    wb1 = wb4 = wb6 = None
    raw = []                                    # unpacked (w, shift) for ref
    for bi, (ci, co) in enumerate(spec):
        key, k0, k1, k2 = jax.random.split(key, 4)
        wc, sc = _init_conv_folded(k0, ci, co)    # stride-2 conv of the block
        w1, s1 = _init_conv_folded(k1, co, co)    # ResBlock conv 1
        w2, s2 = _init_conv_folded(k2, co, co)    # ResBlock conv 2
        raw += [(wc, sc), (w1, s1), (w2, s2)]
        for li, s in enumerate((sc, s1, s2)):
            shifts = shifts.at[3 * bi + li, :co].set(s)
        if bi == 0:
            wb1 = _pack_dense9(wc)                             # (27, 64)
            w9_list += [_pack_dense9(w1), _pack_dense9(w2)]
        elif bi in (1, 2):
            w9_list += [_pack_dense9(wc), _pack_dense9(w1), _pack_dense9(w2)]
        elif bi == 3:
            wb4 = _pack_tap4(wc)                               # (256, 128)
            wfc128_list += [_pack_center(w1), _pack_center(w2)]
        elif bi == 4:
            wfc128_list += [_pack_center(wc), _pack_center(w1),
                            _pack_center(w2)]
        else:
            wb6 = _pack_center(wc)                             # (128, 256)
            wfc256_list += [_pack_center(w1), _pack_center(w2)]
    params = (shifts, wb1, jnp.stack(w9_list), wb4,
              jnp.stack(wfc128_list), wb6, jnp.stack(wfc256_list))
    return params, raw


# ---------------------------------------------------------------------------
# pure-JAX reference (same folded weights) for correctness checking
# ---------------------------------------------------------------------------
def resnet_reference(x_nhwc, raw):
    def conv_bn_act(x, w, s, stride):
        y = jax.lax.conv_general_dilated(
            x, w, window_strides=(stride, stride), padding=((1, 1), (1, 1)),
            dimension_numbers=("NHWC", "HWIO", "NHWC"))
        y = y + s.reshape(1, 1, 1, -1)
        return jnp.where(y >= 0.0, y, _NEG_SLOPE * y)

    h = x_nhwc
    for bi in range(6):
        wc, sc = raw[3 * bi]
        w1, s1 = raw[3 * bi + 1]
        w2, s2 = raw[3 * bi + 2]
        h = conv_bn_act(h, wc, sc, 2)
        h = h + conv_bn_act(conv_bn_act(h, w1, s1, 1), w2, s2, 1)
    return h                                                  # (N, 1, 1, 256)


if __name__ == "__main__":
    key = jax.random.PRNGKey(0)
    k_x, k_p = jax.random.split(key)

    # Small input consistent with the module: batch=2, 3 channels, 16x16.
    x = jax.random.normal(k_x, (2, 3, 16, 16), jnp.float32)
    params, raw = init_resnet_params(k_p)

    out = jax.jit(resnet_forward)(x, params)
    jax.block_until_ready(out)

    # 6 stride-2 blocks: 16 -> 8 -> 4 -> 2 -> 1 -> 1 -> 1; channels 3 -> 256.
    assert out.shape == (2, 256, 1, 1), out.shape
    assert out.dtype == jnp.float32

    ref = jax.jit(resnet_reference)(jnp.transpose(x, (0, 2, 3, 1)), raw)
    diff = float(jnp.max(jnp.abs(out.reshape(2, 256) - ref.reshape(2, 256))))
    assert diff < 1e-3, f"kernel/reference mismatch: max|diff|={diff}"

    print("KERNEL_OK")
</pallas_src>

<mosaic_0001>
module attributes {stable_mosaic.version = 11 : i64} {
  func.func @resnet_kernel(%arg0: memref<2x8x2x8x6xf32, #tpu.memory_space<vmem>>, %arg1: memref<18x256xf32, #tpu.memory_space<vmem>>, %arg2: memref<27x64xf32, #tpu.memory_space<vmem>>, %arg3: memref<8x576x64xf32, #tpu.memory_space<vmem>>, %arg4: memref<256x128xf32, #tpu.memory_space<vmem>>, %arg5: memref<5x128x128xf32, #tpu.memory_space<vmem>>, %arg6: memref<128x256xf32, #tpu.memory_space<vmem>>, %arg7: memref<2x256x256xf32, #tpu.memory_space<vmem>>, %arg8: memref<2x256xf32, #tpu.memory_space<vmem>>, %arg9: memref<2x10x10x64xf32, #tpu.memory_space<vmem>>, %arg10: memref<2x9x2x9x128xf32, #tpu.memory_space<vmem>>, %arg11: memref<128x576xf32, #tpu.memory_space<vmem>>) attributes {dimension_semantics = [], scalar_prefetch = 0 : i64, scratch_operands = 3 : i64, tpu.core_type = #tpu.core_type<tc>} {
    %cst = arith.constant 0.000000e+00 : f32
    %0 = vector.broadcast %cst : f32 to vector<2x1x2x9x6xf32>
    %c0 = arith.constant 0 : index
    %c0_0 = arith.constant 0 : index
    %c0_1 = arith.constant 0 : index
    %c0_2 = arith.constant 0 : index
    %c0_3 = arith.constant 0 : index
    %1 = vector.load %arg10[%c0, %c0_0, %c0_1, %c0_2, %c0_3] : memref<2x9x2x9x128xf32, #tpu.memory_space<vmem>>, vector<2x1x2x9x6xf32>
    tpu.vector_store %arg10[%c0, %c0_0, %c0_1, %c0_2, %c0_3], %0 {strides = array<i32>} : memref<2x9x2x9x128xf32, #tpu.memory_space<vmem>>, vector<2x1x2x9x6xf32>,
    %cst_4 = arith.constant 0.000000e+00 : f32
    %2 = vector.broadcast %cst_4 : f32 to vector<2x9x2x1x6xf32>
    %c0_5 = arith.constant 0 : index
    %c0_6 = arith.constant 0 : index
    %c0_7 = arith.constant 0 : index
    %c0_8 = arith.constant 0 : index
    %c0_9 = arith.constant 0 : index
    %3 = vector.load %arg10[%c0_5, %c0_6, %c0_7, %c0_8, %c0_9] : memref<2x9x2x9x128xf32, #tpu.memory_space<vmem>>, vector<2x9x2x1x6xf32>
    tpu.vector_store %arg10[%c0_5, %c0_6, %c0_7, %c0_8, %c0_9], %2 {strides = array<i32>} : memref<2x9x2x9x128xf32, #tpu.memory_space<vmem>>, vector<2x9x2x1x6xf32>,
    %c0_10 = arith.constant 0 : index
    %c0_11 = arith.constant 0 : index
    %c0_12 = arith.constant 0 : index
    %c0_13 = arith.constant 0 : index
    %c0_14 = arith.constant 0 : index
    %4 = vector.load %arg0[%c0_10, %c0_11, %c0_12, %c0_13, %c0_14] : memref<2x8x2x8x6xf32, #tpu.memory_space<vmem>>, vector<2x8x2x8x6xf32>
    %c0_15 = arith.constant 0 : index
    %c1 = arith.constant 1 : index
    %c0_16 = arith.constant 0 : index
    %c1_17 = arith.constant 1 : index
    %c0_18 = arith.constant 0 : index
    %5 = vector.load %arg10[%c0_15, %c1, %c0_16, %c1_17, %c0_18] : memref<2x9x2x9x128xf32, #tpu.memory_space<vmem>>, vector<2x8x2x8x6xf32>
    tpu.vector_store %arg10[%c0_15, %c1, %c0_16, %c1_17, %c0_18], %4 {strides = array<i32>} : memref<2x9x2x9x128xf32, #tpu.memory_space<vmem>>, vector<2x8x2x8x6xf32>,
    %c0_19 = arith.constant 0 : index
    %c0_20 = arith.constant 0 : index
    %6 = vector.load %arg2[%c0_19, %c0_20] : memref<27x64xf32, #tpu.memory_space<vmem>>, vector<27x64xf32>
    %c0_21 = arith.constant 0 : index
    %c0_22 = arith.constant 0 : index
    %7 = vector.load %arg1[%c0_21, %c0_22] : memref<18x256xf32, #tpu.memory_space<vmem>>, vector<1x64xf32>
    %c0_23 = arith.constant 0 : index
    %c0_24 = arith.constant 0 : index
    %c1_25 = arith.constant 1 : index
    %c0_26 = arith.constant 0 : index
    %c3 = arith.constant 3 : index
    %8 = vector.load %arg10[%c0_23, %c0_24, %c1_25, %c0_26, %c3] : memref<2x9x2x9x128xf32, #tpu.memory_space<vmem>>, vector<2x8x1x8x3xf32>
    %9 = vector.shape_cast %8 : vector<2x8x1x8x3xf32> to vector<128x3xf32>
    %c0_27 = arith.constant 0 : index
    %c0_28 = arith.constant 0 : index
    %10 = vector.load %arg11[%c0_27, %c0_28] : memref<128x576xf32, #tpu.memory_space<vmem>>, vector<128x3xf32>
    tpu.vector_store %arg11[%c0_27, %c0_28], %9 {strides = array<i32>} : memref<128x576xf32, #tpu.memory_space<vmem>>, vector<128x3xf32>,
    %c0_29 = arith.constant 0 : index
    %c0_30 = arith.constant 0 : index
    %c1_31 = arith.constant 1 : index
    %c1_32 = arith.constant 1 : index
    %c0_33 = arith.constant 0 : index
    %11 = vector.load %arg10[%c0_29, %c0_30, %c1_31, %c1_32, %c0_33] : memref<2x9x2x9x128xf32, #tpu.memory_space<vmem>>, vector<2x8x1x8x3xf32>
    %12 = vector.shape_cast %11 : vector<2x8x1x8x3xf32> to vector<128x3xf32>
    %c0_34 = arith.constant 0 : index
    %c3_35 = arith.constant 3 : index
    %13 = vector.load %arg11[%c0_34, %c3_35] : memref<128x576xf32, #tpu.memory_space<vmem>>, vector<128x3xf32>
    tpu.vector_store %arg11[%c0_34, %c3_35], %12 {strides = array<i32>} : memref<128x576xf32, #tpu.memory_space<vmem>>, vector<128x3xf32>,
    %c0_36 = arith.constant 0 : index
    %c0_37 = arith.constant 0 : index
    %c1_38 = arith.constant 1 : index
    %c1_39 = arith.constant 1 : index
    %c3_40 = arith.constant 3 : index
    %14 = vector.load %arg10[%c0_36, %c0_37, %c1_38, %c1_39, %c3_40] : memref<2x9x2x9x128xf32, #tpu.memory_space<vmem>>, vector<2x8x1x8x3xf32>
    %15 = vector.shape_cast %14 : vector<2x8x1x8x3xf32> to vector<128x3xf32>
    %c0_41 = arith.constant 0 : index
    %c6 = arith.constant 6 : index
    %16 = vector.load %arg11[%c0_41, %c6] : memref<128x576xf32, #tpu.memory_space<vmem>>, vector<128x3xf32>
    tpu.vector_store %arg11[%c0_41, %c6], %15 {strides = array<i32>} : memref<128x576xf32, #tpu.memory_space<vmem>>, vector<128x3xf32>,
    %c0_42 = arith.constant 0 : index
    %c1_43 = arith.constant 1 : index
    %c0_44 = arith.constant 0 : index
    %c0_45 = arith.constant 0 : index
    %c3_46 = arith.constant 3 : index
    %17 = vector.load %arg10[%c0_42, %c1_43, %c0_44, %c0_45, %c3_46] : memref<2x9x2x9x128xf32, #tpu.memory_space<vmem>>, vector<2x8x1x8x3xf32>
    %18 = vector.shape_cast %17 : vector<2x8x1x8x3xf32> to vector<128x3xf32>
    %c0_47 = arith.constant 0 : index
    %c9 = arith.constant 9 : index
    %19 = vector.load %arg11[%c0_47, %c9] : memref<128x576xf32, #tpu.memory_space<vmem>>, vector<128x3xf32>
    tpu.vector_store %arg11[%c0_47, %c9], %18 {strides = array<i32>} : memref<128x576xf32, #tpu.memory_space<vmem>>, vector<128x3xf32>,
    %c0_48 = arith.constant 0 : index
    %c1_49 = arith.constant 1 : index
    %c0_50 = arith.constant 0 : index
    %c1_51 = arith.constant 1 : index
    %c0_52 = arith.constant 0 : index
    %20 = vector.load %arg10[%c0_48, %c1_49, %c0_50, %c1_51, %c0_52] : memref<2x9x2x9x128xf32, #tpu.memory_space<vmem>>, vector<2x8x1x8x3xf32>
    %21 = vector.shape_cast %20 : vector<2x8x1x8x3xf32> to vector<128x3xf32>
    %c0_53 = arith.constant 0 : index
    %c12 = arith.constant 12 : index
    %22 = vector.load %arg11[%c0_53, %c12] : memref<128x576xf32, #tpu.memory_space<vmem>>, vector<128x3xf32>
    tpu.vector_store %arg11[%c0_53, %c12], %21 {strides = array<i32>} : memref<128x576xf32, #tpu.memory_space<vmem>>, vector<128x3xf32>,
    %c0_54 = arith.constant 0 : index
    %c1_55 = arith.constant 1 : index
    %c0_56 = arith.constant 0 : index
    %c1_57 = arith.constant 1 : index
    %c3_58 = arith.constant 3 : index
    %23 = vector.load %arg10[%c0_54, %c1_55, %c0_56, %c1_57, %c3_58] : memref<2x9x2x9x128xf32, #tpu.memory_space<vmem>>, vector<2x8x1x8x3xf32>
    %24 = vector.shape_cast %23 : vector<2x8x1x8x3xf32> to vector<128x3xf32>
    %c0_59 = arith.constant 0 : index
    %c15 = arith.constant 15 : index
    %25 = vector.load %arg11[%c0_59, %c15] : memref<128x576xf32, #tpu.memory_space<vmem>>, vector<128x3xf32>
    tpu.vector_store %arg11[%c0_59, %c15], %24 {strides = array<i32>} : memref<128x576xf32, #tpu.memory_space<vmem>>, vector<128x3xf32>,
    %c0_60 = arith.constant 0 : index
    %c1_61 = arith.constant 1 : index
    %c1_62 = arith.constant 1 : index
    %c0_63 = arith.constant 0 : index
    %c3_64 = arith.constant 3 : index
    %26 = vector.load %arg10[%c0_60, %c1_61, %c1_62, %c0_63, %c3_64] : memref<2x9x2x9x128xf32, #tpu.memory_space<vmem>>, vector<2x8x1x8x3xf32>
    %27 = vector.shape_cast %26 : vector<2x8x1x8x3xf32> to vector<128x3xf32>
    %c0_65 = arith.constant 0 : index
    %c18 = arith.constant 18 : index
    %28 = vector.load %arg11[%c0_65, %c18] : memref<128x576xf32, #tpu.memory_space<vmem>>, vector<128x3xf32>
    tpu.vector_store %arg11[%c0_65, %c18], %27 {strides = array<i32>} : memref<128x576xf32, #tpu.memory_space<vmem>>, vector<128x3xf32>,
    %c0_66 = arith.constant 0 : index
    %c1_67 = arith.constant 1 : index
    %c1_68 = arith.constant 1 : index
    %c1_69 = arith.constant 1 : index
    %c0_70 = arith.constant 0 : index
    %29 = vector.load %arg10[%c0_66, %c1_67, %c1_68, %c1_69, %c0_70] : memref<2x9x2x9x128xf32, #tpu.memory_space<vmem>>, vector<2x8x1x8x3xf32>
    %30 = vector.shape_cast %29 : vector<2x8x1x8x3xf32> to vector<128x3xf32>
    %c0_71 = arith.constant 0 : index
    %c21 = arith.constant 21 : index
    %31 = vector.load %arg11[%c0_71, %c21] : memref<128x576xf32, #tpu.memory_space<vmem>>, vector<128x3xf32>
    tpu.vector_store %arg11[%c0_71, %c21], %30 {strides = array<i32>} : memref<128x576xf32, #tpu.memory_space<vmem>>, vector<128x3xf32>,
    %c0_72 = arith.constant 0 : index
    %c1_73 = arith.constant 1 : index
    %c1_74 = arith.constant 1 : index
    %c1_75 = arith.constant 1 : index
    %c3_76 = arith.constant 3 : index
    %32 = vector.load %arg10[%c0_72, %c1_73, %c1_74, %c1_75, %c3_76] : memref<2x9x2x9x128xf32, #tpu.memory_space<vmem>>, vector<2x8x1x8x3xf32>
    %33 = vector.shape_cast %32 : vector<2x8x1x8x3xf32> to vector<128x3xf32>
    %c0_77 = arith.constant 0 : index
    %c24 = arith.constant 24 : index
    %34 = vector.load %arg11[%c0_77, %c24] : memref<128x576xf32, #tpu.memory_space<vmem>>, vector<128x3xf32>
    tpu.vector_store %arg11[%c0_77, %c24], %33 {strides = array<i32>} : memref<128x576xf32, #tpu.memory_space<vmem>>, vector<128x3xf32>,
    %c0_78 = arith.constant 0 : index
    %c0_79 = arith.constant 0 : index
    %35 = vector.load %arg11[%c0_78, %c0_79] : memref<128x576xf32, #tpu.memory_space<vmem>>, vector<128x27xf32>
    %cst_80 = arith.constant dense<0.000000e+00> : vector<128x64xf32>
    %36 = tpu.matmul %35, %6, %cst_80 {dimension_numbers = #tpu.dot_dimension_numbers<[1], [0], [0], [1], [0, 0, 1, 1], [], []>} : vector<128x27xf32>, vector<27x64xf32>, vector<128x64xf32> -> vector<128x64xf32>
    %37 = vector.broadcast %7 : vector<1x64xf32> to vector<128x64xf32>
    %38 = arith.addf %36, %37 : vector<128x64xf32>
    %cst_81 = arith.constant 0.000000e+00 : f32
    %39 = vector.broadcast %cst_81 : f32 to vector<128x64xf32>
    %40 = arith.cmpf oge, %38, %39 : vector<128x64xf32>
    %cst_82 = arith.constant 0.00999999977 : f32
    %41 = vector.broadcast %cst_82 : f32 to vector<128x64xf32>
    %42 = arith.mulf %41, %38 : vector<128x64xf32>
    %43 = arith.select %40, %38, %42 : vector<128x64xi1>, vector<128x64xf32>
    %c0_83 = arith.constant 0 : index
    %c0_84 = arith.constant 0 : index
    %c0_85 = arith.constant 0 : index
    %44 = vector.load %arg3[%c0_83, %c0_84, %c0_85] : memref<8x576x64xf32, #tpu.memory_space<vmem>>, vector<1x576x64xf32>
    %45 = vector.shape_cast %44 : vector<1x576x64xf32> to vector<576x64xf32>
    %c1_86 = arith.constant 1 : index
    %c0_87 = arith.constant 0 : index
    %46 = vector.load %arg1[%c1_86, %c0_87] : memref<18x256xf32, #tpu.memory_space<vmem>>, vector<1x64xf32>
    %c1_88 = arith.constant 1 : index
    %c0_89 = arith.constant 0 : index
    %c0_90 = arith.constant 0 : index
    %47 = vector.load %arg3[%c1_88, %c0_89, %c0_90] : memref<8x576x64xf32, #tpu.memory_space<vmem>>, vector<1x576x64xf32>
    %48 = vector.shape_cast %47 : vector<1x576x64xf32> to vector<576x64xf32>
    %c2 = arith.constant 2 : index
    %c0_91 = arith.constant 0 : index
    %49 = vector.load %arg1[%c2, %c0_91] : memref<18x256xf32, #tpu.memory_space<vmem>>, vector<1x64xf32>
    %cst_92 = arith.constant 0.000000e+00 : f32
    %50 = vector.broadcast %cst_92 : f32 to vector<2x1x10x64xf32>
    %cst_93 = arith.constant 0.000000e+00 : f32
    %51 = vector.broadcast %cst_93 : f32 to vector<2x8x1x64xf32>
    %c0_94 = arith.constant 0 : index
    %c0_95 = arith.constant 0 : index
    %c0_96 = arith.constant 0 : index
    %c0_97 = arith.constant 0 : index
    %52 = vector.load %arg9[%c0_94, %c0_95, %c0_96, %c0_97] : memref<2x10x10x64xf32, #tpu.memory_space<vmem>>, vector<2x1x10x64xf32>
    tpu.vector_store %arg9[%c0_94, %c0_95, %c0_96, %c0_97], %50 {strides = array<i32>} : memref<2x10x10x64xf32, #tpu.memory_space<vmem>>, vector<2x1x10x64xf32>,
    %c0_98 = arith.constant 0 : index
    %c9_99 = arith.constant 9 : index
    %c0_100 = arith.constant 0 : index
    %c0_101 = arith.constant 0 : index
    %53 = vector.load %arg9[%c0_98, %c9_99, %c0_100, %c0_101] : memref<2x10x10x64xf32, #tpu.memory_space<vmem>>, vector<2x1x10x64xf32>
    tpu.vector_store %arg9[%c0_98, %c9_99, %c0_100, %c0_101], %50 {strides = array<i32>} : memref<2x10x10x64xf32, #tpu.memory_space<vmem>>, vector<2x1x10x64xf32>,
    %c0_102 = arith.constant 0 : index
    %c1_103 = arith.constant 1 : index
    %c0_104 = arith.constant 0 : index
    %c0_105 = arith.constant 0 : index
    %54 = vector.load %arg9[%c0_102, %c1_103, %c0_104, %c0_105] : memref<2x10x10x64xf32, #tpu.memory_space<vmem>>, vector<2x8x1x64xf32>
    tpu.vector_store %arg9[%c0_102, %c1_103, %c0_104, %c0_105], %51 {strides = array<i32>} : memref<2x10x10x64xf32, #tpu.memory_space<vmem>>, vector<2x8x1x64xf32>,
    %c0_106 = arith.constant 0 : index
    %c1_107 = arith.constant 1 : index
    %c9_108 = arith.constant 9 : index
    %c0_109 = arith.constant 0 : index
    %55 = vector.load %arg9[%c0_106, %c1_107, %c9_108, %c0_109] : memref<2x10x10x64xf32, #tpu.memory_space<vmem>>, vector<2x8x1x64xf32>
    tpu.vector_store %arg9[%c0_106, %c1_107, %c9_108, %c0_109], %51 {strides = array<i32>} : memref<2x10x10x64xf32, #tpu.memory_space<vmem>>, vector<2x8x1x64xf32>,
    %56 = vector.shape_cast %43 : vector<128x64xf32> to vector<2x8x8x64xf32>
    %c0_110 = arith.constant 0 : index
    %c1_111 = arith.constant 1 : index
    %c1_112 = arith.constant 1 : index
    %c0_113 = arith.constant 0 : index
    %57 = vector.load %arg9[%c0_110, %c1_111, %c1_112, %c0_113] : memref<2x10x10x64xf32, #tpu.memory_space<vmem>>, vector<2x8x8x64xf32>
    tpu.vector_store %arg9[%c0_110, %c1_111, %c1_112, %c0_113], %56 {strides = array<i32>} : memref<2x10x10x64xf32, #tpu.memory_space<vmem>>, vector<2x8x8x64xf32>,
    %c0_114 = arith.constant 0 : index
    %c0_115 = arith.constant 0 : index
    %c0_116 = arith.constant 0 : index
    %c0_117 = arith.constant 0 : index
    %58 = vector.load %arg9[%c0_114, %c0_115, %c0_116, %c0_117] : memref<2x10x10x64xf32, #tpu.memory_space<vmem>>, vector<2x8x8x64xf32>
    %59 = vector.shape_cast %58 : vector<2x8x8x64xf32> to vector<128x64xf32>
    %c0_118 = arith.constant 0 : index
    %c0_119 = arith.constant 0 : index
    %60 = vector.load %arg11[%c0_118, %c0_119] : memref<128x576xf32, #tpu.memory_space<vmem>>, vector<128x64xf32>
    tpu.vector_store %arg11[%c0_118, %c0_119], %59 {strides = array<i32>} : memref<128x576xf32, #tpu.memory_space<vmem>>, vector<128x64xf32>,
    %c0_120 = arith.constant 0 : index
    %c0_121 = arith.constant 0 : index
    %c1_122 = arith.constant 1 : index
    %c0_123 = arith.constant 0 : index
    %61 = vector.load %arg9[%c0_120, %c0_121, %c1_122, %c0_123] : memref<2x10x10x64xf32, #tpu.memory_space<vmem>>, vector<2x8x8x64xf32>
    %62 = vector.shape_cast %61 : vector<2x8x8x64xf32> to vector<128x64xf32>
    %c0_124 = arith.constant 0 : index
    %c64 = arith.constant 64 : index
    %63 = vector.load %arg11[%c0_124, %c64] : memref<128x576xf32, #tpu.memory_space<vmem>>, vector<128x64xf32>
    tpu.vector_store %arg11[%c0_124, %c64], %62 {strides = array<i32>} : memref<128x576xf32, #tpu.memory_space<vmem>>, vector<128x64xf32>,
    %c0_125 = arith.constant 0 : index
    %c0_126 = arith.constant 0 : index
    %c2_127 = arith.constant 2 : index
    %c0_128 = arith.constant 0 : index
    %64 = vector.load %arg9[%c0_125, %c0_126, %c2_127, %c0_128] : memref<2x10x10x64xf32, #tpu.memory_space<vmem>>, vector<2x8x8x64xf32>
    %65 = vector.shape_cast %64 : vector<2x8x8x64xf32> to vector<128x64xf32>
    %c0_129 = arith.constant 0 : index
    %c128 = arith.constant 128 : index
    %66 = vector.load %arg11[%c0_129, %c128] : memref<128x576xf32, #tpu.memory_space<vmem>>, vector<128x64xf32>
    tpu.vector_store %arg11[%c0_129, %c128], %65 {strides = array<i32>} : memref<128x576xf32, #tpu.memory_space<vmem>>, vector<128x64xf32>,
    %c0_130 = arith.constant 0 : index
    %c1_131 = arith.constant 1 : index
    %c0_132 = arith.constant 0 : index
    %c0_133 = arith.constant 0 : index
    %67 = vector.load %arg9[%c0_130, %c1_131, %c0_132, %c0_133] : memref<2x10x10x64xf32, #tpu.memory_space<vmem>>, vector<2x8x8x64xf32>
    %68 = vector.shape_cast %67 : vector<2x8x8x64xf32> to vector<128x64xf32>
    %c0_134 = arith.constant 0 : index
    %c192 = arith.constant 192 : index
    %69 = vector.load %arg11[%c0_134, %c192] : memref<128x576xf32, #tpu.memory_space<vmem>>, vector<128x64xf32>
    tpu.vector_store %arg11[%c0_134, %c192], %68 {strides = array<i32>} : memref<128x576xf32, #tpu.memory_space<vmem>>, vector<128x64xf32>,
    %c0_135 = arith.constant 0 : index
    %c1_136 = arith.constant 1 : index
    %c1_137 = arith.constant 1 : index
    %c0_138 = arith.constant 0 : index
    %70 = vector.load %arg9[%c0_135, %c1_136, %c1_137, %c0_138] : memref<2x10x10x64xf32, #tpu.memory_space<vmem>>, vector<2x8x8x64xf32>
    %71 = vector.shape_cast %70 : vector<2x8x8x64xf32> to vector<128x64xf32>
    %c0_139 = arith.constant 0 : index
    %c256 = arith.constant 256 : index
    %72 = vector.load %arg11[%c0_139, %c256] : memref<128x576xf32, #tpu.memory_space<vmem>>, vector<128x64xf32>
    tpu.vector_store %arg11[%c0_139, %c256], %71 {strides = array<i32>} : memref<128x576xf32, #tpu.memory_space<vmem>>, vector<128x64xf32>,
    %c0_140 = arith.constant 0 : index
    %c1_141 = arith.constant 1 : index
    %c2_142 = arith.constant 2 : index
    %c0_143 = arith.constant 0 : index
    %73 = vector.load %arg9[%c0_140, %c1_141, %c2_142, %c0_143] : memref<2x10x10x64xf32, #tpu.memory_space<vmem>>, vector<2x8x8x64xf32>
    %74 = vector.shape_cast %73 : vector<2x8x8x64xf32> to vector<128x64xf32>
    %c0_144 = arith.constant 0 : index
    %c320 = arith.constant 320 : index
    %75 = vector.load %arg11[%c0_144, %c320] : memref<128x576xf32, #tpu.memory_space<vmem>>, vector<128x64xf32>
    tpu.vector_store %arg11[%c0_144, %c320], %74 {strides = array<i32>} : memref<128x576xf32, #tpu.memory_space<vmem>>, vector<128x64xf32>,
    %c0_145 = arith.constant 0 : index
    %c2_146 = arith.constant 2 : index
    %c0_147 = arith.constant 0 : index
    %c0_148 = arith.constant 0 : index
    %76 = vector.load %arg9[%c0_145, %c2_146, %c0_147, %c0_148] : memref<2x10x10x64xf32, #tpu.memory_space<vmem>>, vector<2x8x8x64xf32>
    %77 = vector.shape_cast %76 : vector<2x8x8x64xf32> to vector<128x64xf32>
    %c0_149 = arith.constant 0 : index
    %c384 = arith.constant 384 : index
    %78 = vector.load %arg11[%c0_149, %c384] : memref<128x576xf32, #tpu.memory_space<vmem>>, vector<128x64xf32>
    tpu.vector_store %arg11[%c0_149, %c384], %77 {strides = array<i32>} : memref<128x576xf32, #tpu.memory_space<vmem>>, vector<128x64xf32>,
    %c0_150 = arith.constant 0 : index
    %c2_151 = arith.constant 2 : index
    %c1_152 = arith.constant 1 : index
    %c0_153 = arith.constant 0 : index
    %79 = vector.load %arg9[%c0_150, %c2_151, %c1_152, %c0_153] : memref<2x10x10x64xf32, #tpu.memory_space<vmem>>, vector<2x8x8x64xf32>
    %80 = vector.shape_cast %79 : vector<2x8x8x64xf32> to vector<128x64xf32>
    %c0_154 = arith.constant 0 : index
    %c448 = arith.constant 448 : index
    %81 = vector.load %arg11[%c0_154, %c448] : memref<128x576xf32, #tpu.memory_space<vmem>>, vector<128x64xf32>
    tpu.vector_store %arg11[%c0_154, %c448], %80 {strides = array<i32>} : memref<128x576xf32, #tpu.memory_space<vmem>>, vector<128x64xf32>,
    %c0_155 = arith.constant 0 : index
    %c2_156 = arith.constant 2 : index
    %c2_157 = arith.constant 2 : index
    %c0_158 = arith.constant 0 : index
    %82 = vector.load %arg9[%c0_155, %c2_156, %c2_157, %c0_158] : memref<2x10x10x64xf32, #tpu.memory_space<vmem>>, vector<2x8x8x64xf32>
    %83 = vector.shape_cast %82 : vector<2x8x8x64xf32> to vector<128x64xf32>
    %c0_159 = arith.constant 0 : index
    %c512 = arith.constant 512 : index
    %84 = vector.load %arg11[%c0_159, %c512] : memref<128x576xf32, #tpu.memory_space<vmem>>, vector<128x64xf32>
    tpu.vector_store %arg11[%c0_159, %c512], %83 {strides = array<i32>} : memref<128x576xf32, #tpu.memory_space<vmem>>, vector<128x64xf32>,
    %c0_160 = arith.constant 0 : index
    %c0_161 = arith.constant 0 : index
    %85 = vector.load %arg11[%c0_160, %c0_161] : memref<128x576xf32, #tpu.memory_space<vmem>>, vector<128x576xf32>
    %cst_162 = arith.constant dense<0.000000e+00> : vector<128x64xf32>
    %86 = tpu.matmul %85, %45, %cst_162 {dimension_numbers = #tpu.dot_dimension_numbers<[1], [0], [0], [1], [0, 0, 1, 1], [], []>} : vector<128x576xf32>, vector<576x64xf32>, vector<128x64xf32> -> vector<128x64xf32>
    %87 = vector.broadcast %46 : vector<1x64xf32> to vector<128x64xf32>
    %88 = arith.addf %86, %87 : vector<128x64xf32>
    %cst_163 = arith.constant 0.000000e+00 : f32
    %89 = vector.broadcast %cst_163 : f32 to vector<128x64xf32>
    %90 = arith.cmpf oge, %88, %89 : vector<128x64xf32>
    %cst_164 = arith.constant 0.00999999977 : f32
    %91 = vector.broadcast %cst_164 : f32 to vector<128x64xf32>
    %92 = arith.mulf %91, %88 : vector<128x64xf32>
    %93 = arith.select %90, %88, %92 : vector<128x64xi1>, vector<128x64xf32>
    %cst_165 = arith.constant 0.000000e+00 : f32
    %94 = vector.broadcast %cst_165 : f32 to vector<2x1x10x64xf32>
    %cst_166 = arith.constant 0.000000e+00 : f32
    %95 = vector.broadcast %cst_166 : f32 to vector<2x8x1x64xf32>
    %c0_167 = arith.constant 0 : index
    %c0_168 = arith.constant 0 : index
    %c0_169 = arith.constant 0 : index
    %c0_170 = arith.constant 0 : index
    %96 = vector.load %arg9[%c0_167, %c0_168, %c0_169, %c0_170] : memref<2x10x10x64xf32, #tpu.memory_space<vmem>>, vector<2x1x10x64xf32>
    tpu.vector_store %arg9[%c0_167, %c0_168, %c0_169, %c0_170], %94 {strides = array<i32>} : memref<2x10x10x64xf32, #tpu.memory_space<vmem>>, vector<2x1x10x64xf32>,
    %c0_171 = arith.constant 0 : index
    %c9_172 = arith.constant 9 : index
    %c0_173 = arith.constant 0 : index
    %c0_174 = arith.constant 0 : index
    %97 = vector.load %arg9[%c0_171, %c9_172, %c0_173, %c0_174] : memref<2x10x10x64xf32, #tpu.memory_space<vmem>>, vector<2x1x10x64xf32>
    tpu.vector_store %arg9[%c0_171, %c9_172, %c0_173, %c0_174], %94 {strides = array<i32>} : memref<2x10x10x64xf32, #tpu.memory_space<vmem>>, vector<2x1x10x64xf32>,
    %c0_175 = arith.constant 0 : index
    %c1_176 = arith.constant 1 : index
    %c0_177 = arith.constant 0 : index
    %c0_178 = arith.constant 0 : index
    %98 = vector.load %arg9[%c0_175, %c1_176, %c0_177, %c0_178] : memref<2x10x10x64xf32, #tpu.memory_space<vmem>>, vector<2x8x1x64xf32>
    tpu.vector_store %arg9[%c0_175, %c1_176, %c0_177, %c0_178], %95 {strides = array<i32>} : memref<2x10x10x64xf32, #tpu.memory_space<vmem>>, vector<2x8x1x64xf32>,
    %c0_179 = arith.constant 0 : index
    %c1_180 = arith.constant 1 : index
    %c9_181 = arith.constant 9 : index
    %c0_182 = arith.constant 0 : index
    %99 = vector.load %arg9[%c0_179, %c1_180, %c9_181, %c0_182] : memref<2x10x10x64xf32, #tpu.memory_space<vmem>>, vector<2x8x1x64xf32>
    tpu.vector_store %arg9[%c0_179, %c1_180, %c9_181, %c0_182], %95 {strides = array<i32>} : memref<2x10x10x64xf32, #tpu.memory_space<vmem>>, vector<2x8x1x64xf32>,
    %100 = vector.shape_cast %93 : vector<128x64xf32> to vector<2x8x8x64xf32>
    %c0_183 = arith.constant 0 : index
    %c1_184 = arith.constant 1 : index
    %c1_185 = arith.constant 1 : index
    %c0_186 = arith.constant 0 : index
    %101 = vector.load %arg9[%c0_183, %c1_184, %c1_185, %c0_186] : memref<2x10x10x64xf32, #tpu.memory_space<vmem>>, vector<2x8x8x64xf32>
    tpu.vector_store %arg9[%c0_183, %c1_184, %c1_185, %c0_186], %100 {strides = array<i32>} : memref<2x10x10x64xf32, #tpu.memory_space<vmem>>, vector<2x8x8x64xf32>,
    %c0_187 = arith.constant 0 : index
    %c0_188 = arith.constant 0 : index
    %c0_189 = arith.constant 0 : index
    %c0_190 = arith.constant 0 : index
    %102 = vector.load %arg9[%c0_187, %c0_188, %c0_189, %c0_190] : memref<2x10x10x64xf32, #tpu.memory_space<vmem>>, vector<2x8x8x64xf32>
    %103 = vector.shape_cast %102 : vector<2x8x8x64xf32> to vector<128x64xf32>
    %c0_191 = arith.constant 0 : index
    %c0_192 = arith.constant 0 : index
    %104 = vector.load %arg11[%c0_191, %c0_192] : memref<128x576xf32, #tpu.memory_space<vmem>>, vector<128x64xf32>
    tpu.vector_store %arg11[%c0_191, %c0_192], %103 {strides = array<i32>} : memref<128x576xf32, #tpu.memory_space<vmem>>, vector<128x64xf32>,
    %c0_193 = arith.constant 0 : index
    %c0_194 = arith.constant 0 : index
    %c1_195 = arith.constant 1 : index
    %c0_196 = arith.constant 0 : index
    %105 = vector.load %arg9[%c0_193, %c0_194, %c1_195, %c0_196] : memref<2x10x10x64xf32, #tpu.memory_space<vmem>>, vector<2x8x8x64xf32>
    %106 = vector.shape_cast %105 : vector<2x8x8x64xf32> to vector<128x64xf32>
    %c0_197 = arith.constant 0 : index
    %c64_198 = arith.constant 64 : index
    %107 = vector.load %arg11[%c0_197, %c64_198] : memref<128x576xf32, #tpu.memory_space<vmem>>, vector<128x64xf32>
    tpu.vector_store %arg11[%c0_197, %c64_198], %106 {strides = array<i32>} : memref<128x576xf32, #tpu.memory_space<vmem>>, vector<128x64xf32>,
    %c0_199 = arith.constant 0 : index
    %c0_200 = arith.constant 0 : index
    %c2_201 = arith.constant 2 : index
    %c0_202 = arith.constant 0 : index
    %108 = vector.load %arg9[%c0_199, %c0_200, %c2_201, %c0_202] : memref<2x10x10x64xf32, #tpu.memory_space<vmem>>, vector<2x8x8x64xf32>
    %109 = vector.shape_cast %108 : vector<2x8x8x64xf32> to vector<128x64xf32>
    %c0_203 = arith.constant 0 : index
    %c128_204 = arith.constant 128 : index
    %110 = vector.load %arg11[%c0_203, %c128_204] : memref<128x576xf32, #tpu.memory_space<vmem>>, vector<128x64xf32>
    tpu.vector_store %arg11[%c0_203, %c128_204], %109 {strides = array<i32>} : memref<128x576xf32, #tpu.memory_space<vmem>>, vector<128x64xf32>,
    %c0_205 = arith.constant 0 : index
    %c1_206 = arith.constant 1 : index
    %c0_207 = arith.constant 0 : index
    %c0_208 = arith.constant 0 : index
    %111 = vector.load %arg9[%c0_205, %c1_206, %c0_207, %c0_208] : memref<2x10x10x64xf32, #tpu.memory_space<vmem>>, vector<2x8x8x64xf32>
    %112 = vector.shape_cast %111 : vector<2x8x8x64xf32> to vector<128x64xf32>
    %c0_209 = arith.constant 0 : index
    %c192_210 = arith.constant 192 : index
    %113 = vector.load %arg11[%c0_209, %c192_210] : memref<128x576xf32, #tpu.memory_space<vmem>>, vector<128x64xf32>
    tpu.vector_store %arg11[%c0_209, %c192_210], %112 {strides = array<i32>} : memref<128x576xf32, #tpu.memory_space<vmem>>, vector<128x64xf32>,
    %c0_211 = arith.constant 0 : index
    %c1_212 = arith.constant 1 : index
    %c1_213 = arith.constant 1 : index
    %c0_214 = arith.constant 0 : index
    %114 = vector.load %arg9[%c0_211, %c1_212, %c1_213, %c0_214] : memref<2x10x10x64xf32, #tpu.memory_space<vmem>>, vector<2x8x8x64xf32>
    %115 = vector.shape_cast %114 : vector<2x8x8x64xf32> to vector<128x64xf32>
    %c0_215 = arith.constant 0 : index
    %c256_216 = arith.constant 256 : index
    %116 = vector.load %arg11[%c0_215, %c256_216] : memref<128x576xf32, #tpu.memory_space<vmem>>, vector<128x64xf32>
    tpu.vector_store %arg11[%c0_215, %c256_216], %115 {strides = array<i32>} : memref<128x576xf32, #tpu.memory_space<vmem>>, vector<128x64xf32>,
    %c0_217 = arith.constant 0 : index
    %c1_218 = arith.constant 1 : index
    %c2_219 = arith.constant 2 : index
    %c0_220 = arith.constant 0 : index
    %117 = vector.load %arg9[%c0_217, %c1_218, %c2_219, %c0_220] : memref<2x10x10x64xf32, #tpu.memory_space<vmem>>, vector<2x8x8x64xf32>
    %118 = vector.shape_cast %117 : vector<2x8x8x64xf32> to vector<128x64xf32>
    %c0_221 = arith.constant 0 : index
    %c320_222 = arith.constant 320 : index
    %119 = vector.load %arg11[%c0_221, %c320_222] : memref<128x576xf32, #tpu.memory_space<vmem>>, vector<128x64xf32>
    tpu.vector_store %arg11[%c0_221, %c320_222], %118 {strides = array<i32>} : memref<128x576xf32, #tpu.memory_space<vmem>>, vector<128x64xf32>,
    %c0_223 = arith.constant 0 : index
    %c2_224 = arith.constant 2 : index
    %c0_225 = arith.constant 0 : index
    %c0_226 = arith.constant 0 : index
    %120 = vector.load %arg9[%c0_223, %c2_224, %c0_225, %c0_226] : memref<2x10x10x64xf32, #tpu.memory_space<vmem>>, vector<2x8x8x64xf32>
    %121 = vector.shape_cast %120 : vector<2x8x8x64xf32> to vector<128x64xf32>
    %c0_227 = arith.constant 0 : index
    %c384_228 = arith.constant 384 : index
    %122 = vector.load %arg11[%c0_227, %c384_228] : memref<128x576xf32, #tpu.memory_space<vmem>>, vector<128x64xf32>
    tpu.vector_store %arg11[%c0_227, %c384_228], %121 {strides = array<i32>} : memref<128x576xf32, #tpu.memory_space<vmem>>, vector<128x64xf32>,
    %c0_229 = arith.constant 0 : index
    %c2_230 = arith.constant 2 : index
    %c1_231 = arith.constant 1 : index
    %c0_232 = arith.constant 0 : index
    %123 = vector.load %arg9[%c0_229, %c2_230, %c1_231, %c0_232] : memref<2x10x10x64xf32, #tpu.memory_space<vmem>>, vector<2x8x8x64xf32>
    %124 = vector.shape_cast %123 : vector<2x8x8x64xf32> to vector<128x64xf32>
    %c0_233 = arith.constant 0 : index
    %c448_234 = arith.constant 448 : index
    %125 = vector.load %arg11[%c0_233, %c448_234] : memref<128x576xf32, #tpu.memory_space<vmem>>, vector<128x64xf32>
    tpu.vector_store %arg11[%c0_233, %c448_234], %124 {strides = array<i32>} : memref<128x576xf32, #tpu.memory_space<vmem>>, vector<128x64xf32>,
    %c0_235 = arith.constant 0 : index
    %c2_236 = arith.constant 2 : index
    %c2_237 = arith.constant 2 : index
    %c0_238 = arith.constant 0 : index
    %126 = vector.load %arg9[%c0_235, %c2_236, %c2_237, %c0_238] : memref<2x10x10x64xf32, #tpu.memory_space<vmem>>, vector<2x8x8x64xf32>
    %127 = vector.shape_cast %126 : vector<2x8x8x64xf32> to vector<128x64xf32>
    %c0_239 = arith.constant 0 : index
    %c512_240 = arith.constant 512 : index
    %128 = vector.load %arg11[%c0_239, %c512_240] : memref<128x576xf32, #tpu.memory_space<vmem>>, vector<128x64xf32>
    tpu.vector_store %arg11[%c0_239, %c512_240], %127 {strides = array<i32>} : memref<128x576xf32, #tpu.memory_space<vmem>>, vector<128x64xf32>,
    %c0_241 = arith.constant 0 : index
    %c0_242 = arith.constant 0 : index
    %129 = vector.load %arg11[%c0_241, %c0_242] : memref<128x576xf32, #tpu.memory_space<vmem>>, vector<128x576xf32>
    %cst_243 = arith.constant dense<0.000000e+00> : vector<128x64xf32>
    %130 = tpu.matmul %129, %48, %cst_243 {dimension_numbers = #tpu.dot_dimension_numbers<[1], [0], [0], [1], [0, 0, 1, 1], [], []>} : vector<128x576xf32>, vector<576x64xf32>, vector<128x64xf32> -> vector<128x64xf32>
    %131 = vector.broadcast %49 : vector<1x64xf32> to vector<128x64xf32>
    %132 = arith.addf %130, %131 : vector<128x64xf32>
    %cst_244 = arith.constant 0.000000e+00 : f32
    %133 = vector.broadcast %cst_244 : f32 to vector<128x64xf32>
    %134 = arith.cmpf oge, %132, %133 : vector<128x64xf32>
    %cst_245 = arith.constant 0.00999999977 : f32
    %135 = vector.broadcast %cst_245 : f32 to vector<128x64xf32>
    %136 = arith.mulf %135, %132 : vector<128x64xf32>
    %137 = arith.select %134, %132, %136 : vector<128x64xi1>, vector<128x64xf32>
    %138 = arith.addf %43, %137 : vector<128x64xf32>
    %c2_246 = arith.constant 2 : index
    %c0_247 = arith.constant 0 : index
    %c0_248 = arith.constant 0 : index
    %139 = vector.load %arg3[%c2_246, %c0_247, %c0_248] : memref<8x576x64xf32, #tpu.memory_space<vmem>>, vector<1x576x64xf32>
    %140 = vector.shape_cast %139 : vector<1x576x64xf32> to vector<576x64xf32>
    %c3_249 = arith.constant 3 : index
    %c0_250 = arith.constant 0 : index
    %141 = vector.load %arg1[%c3_249, %c0_250] : memref<18x256xf32, #tpu.memory_space<vmem>>, vector<1x64xf32>
    %cst_251 = arith.constant 0.000000e+00 : f32
    %142 = vector.broadcast %cst_251 : f32 to vector<2x1x2x5x128xf32>
    %c0_252 = arith.constant 0 : index
    %c0_253 = arith.constant 0 : index
    %c0_254 = arith.constant 0 : index
    %c0_255 = arith.constant 0 : index
    %c0_256 = arith.constant 0 : index
    %143 = vector.load %arg10[%c0_252, %c0_253, %c0_254, %c0_255, %c0_256] : memref<2x9x2x9x128xf32, #tpu.memory_space<vmem>>, vector<2x1x2x5x128xf32>
    tpu.vector_store %arg10[%c0_252, %c0_253, %c0_254, %c0_255, %c0_256], %142 {strides = array<i32>} : memref<2x9x2x9x128xf32, #tpu.memory_space<vmem>>, vector<2x1x2x5x128xf32>,
    %cst_257 = arith.constant 0.000000e+00 : f32
    %144 = vector.broadcast %cst_257 : f32 to vector<2x5x2x1x128xf32>
    %c0_258 = arith.constant 0 : index
    %c0_259 = arith.constant 0 : index
    %c0_260 = arith.constant 0 : index
    %c0_261 = arith.constant 0 : index
    %c0_262 = arith.constant 0 : index
    %145 = vector.load %arg10[%c0_258, %c0_259, %c0_260, %c0_261, %c0_262] : memref<2x9x2x9x128xf32, #tpu.memory_space<vmem>>, vector<2x5x2x1x128xf32>
    tpu.vector_store %arg10[%c0_258, %c0_259, %c0_260, %c0_261, %c0_262], %144 {strides = array<i32>} : memref<2x9x2x9x128xf32, #tpu.memory_space<vmem>>, vector<2x5x2x1x128xf32>,
    %146 = vector.shape_cast %138 : vector<128x64xf32> to vector<8x2x4x2x64xf32>
    %147 = vector.extract_strided_slice %146 {offsets = [0, 0, 0, 0, 0], sizes = [8, 1, 4, 1, 64], strides = [1, 1, 1, 1, 1]} : vector<8x2x4x2x64xf32> to vector<8x1x4x1x64xf32>
    %148 = vector.shape_cast %147 : vector<8x1x4x1x64xf32> to vector<2x4x1x4x64xf32>
    %c0_263 = arith.constant 0 : index
    %c1_264 = arith.constant 1 : index
    %c0_265 = arith.constant 0 : index
    %c1_266 = arith.constant 1 : index
    %c0_267 = arith.constant 0 : index
    %149 = vector.load %arg10[%c0_263, %c1_264, %c0_265, %c1_266, %c0_267] : memref<2x9x2x9x128xf32, #tpu.memory_space<vmem>>, vector<2x4x1x4x64xf32>
    tpu.vector_store %arg10[%c0_263, %c1_264, %c0_265, %c1_266, %c0_267], %148 {strides = array<i32>} : memref<2x9x2x9x128xf32, #tpu.memory_space<vmem>>, vector<2x4x1x4x64xf32>,
    %150 = vector.extract_strided_slice %146 {offsets = [0, 0, 0, 1, 0], sizes = [8, 1, 4, 1, 64], strides = [1, 1, 1, 1, 1]} : vector<8x2x4x2x64xf32> to vector<8x1x4x1x64xf32>
    %151 = vector.shape_cast %150 : vector<8x1x4x1x64xf32> to vector<2x4x1x4x64xf32>
    %c0_268 = arith.constant 0 : index
    %c1_269 = arith.constant 1 : index
    %c0_270 = arith.constant 0 : index
    %c1_271 = arith.constant 1 : index
    %c64_272 = arith.constant 64 : index
    %152 = vector.load %arg10[%c0_268, %c1_269, %c0_270, %c1_271, %c64_272] : memref<2x9x2x9x128xf32, #tpu.memory_space<vmem>>, vector<2x4x1x4x64xf32>
    tpu.vector_store %arg10[%c0_268, %c1_269, %c0_270, %c1_271, %c64_272], %151 {strides = array<i32>} : memref<2x9x2x9x128xf32, #tpu.memory_space<vmem>>, vector<2x4x1x4x64xf32>,
    %153 = vector.extract_strided_slice %146 {offsets = [0, 1, 0, 0, 0], sizes = [8, 1, 4, 1, 64], strides = [1, 1, 1, 1, 1]} : vector<8x2x4x2x64xf32> to vector<8x1x4x1x64xf32>
    %154 = vector.shape_cast %153 : vector<8x1x4x1x64xf32> to vector<2x4x1x4x64xf32>
    %c0_273 = arith.constant 0 : index
    %c1_274 = arith.constant 1 : index
    %c1_275 = arith.constant 1 : index
    %c1_276 = arith.constant 1 : index
    %c0_277 = arith.constant 0 : index
    %155 = vector.load %arg10[%c0_273, %c1_274, %c1_275, %c1_276, %c0_277] : memref<2x9x2x9x128xf32, #tpu.memory_space<vmem>>, vector<2x4x1x4x64xf32>
    tpu.vector_store %arg10[%c0_273, %c1_274, %c1_275, %c1_276, %c0_277], %154 {strides = array<i32>} : memref<2x9x2x9x128xf32, #tpu.memory_space<vmem>>, vector<2x4x1x4x64xf32>,
    %156 = vector.extract_strided_slice %146 {offsets = [0, 1, 0, 1, 0], sizes = [8, 1, 4, 1, 64], strides = [1, 1, 1, 1, 1]} : vector<8x2x4x2x64xf32> to vector<8x1x4x1x64xf32>
    %157 = vector.shape_cast %156 : vector<8x1x4x1x64xf32> to vector<2x4x1x4x64xf32>
    %c0_278 = arith.constant 0 : index
    %c1_279 = arith.constant 1 : index
    %c1_280 = arith.constant 1 : index
    %c1_281 = arith.constant 1 : index
    %c64_282 = arith.constant 64 : index
    %158 = vector.load %arg10[%c0_278, %c1_279, %c1_280, %c1_281, %c64_282] : memref<2x9x2x9x128xf32, #tpu.memory_space<vmem>>, vector<2x4x1x4x64xf32>
    tpu.vector_store %arg10[%c0_278, %c1_279, %c1_280, %c1_281, %c64_282], %157 {strides = array<i32>} : memref<2x9x2x9x128xf32, #tpu.memory_space<vmem>>, vector<2x4x1x4x64xf32>,
    %c0_283 = arith.constant 0 : index
    %c0_284 = arith.constant 0 : index
    %c1_285 = arith.constant 1 : index
    %c0_286 = arith.constant 0 : index
    %c64_287 = arith.constant 64 : index
    %159 = vector.load %arg10[%c0_283, %c0_284, %c1_285, %c0_286, %c64_287] : memref<2x9x2x9x128xf32, #tpu.memory_space<vmem>>, vector<2x4x1x4x64xf32>
    %160 = vector.shape_cast %159 : vector<2x4x1x4x64xf32> to vector<32x64xf32>
    %c0_288 = arith.constant 0 : index
    %c0_289 = arith.constant 0 : index
    %161 = vector.load %arg11[%c0_288, %c0_289] : memref<128x576xf32, #tpu.memory_space<vmem>>, vector<32x64xf32>
    tpu.vector_store %arg11[%c0_288, %c0_289], %160 {strides = array<i32>} : memref<128x576xf32, #tpu.memory_space<vmem>>, vector<32x64xf32>,
    %c0_290 = arith.constant 0 : index
    %c0_291 = arith.constant 0 : index
    %c1_292 = arith.constant 1 : index
    %c1_293 = arith.constant 1 : index
    %c0_294 = arith.constant 0 : index
    %162 = vector.load %arg10[%c0_290, %c0_291, %c1_292, %c1_293, %c0_294] : memref<2x9x2x9x128xf32, #tpu.memory_space<vmem>>, vector<2x4x1x4x64xf32>
    %163 = vector.shape_cast %162 : vector<2x4x1x4x64xf32> to vector<32x64xf32>
    %c0_295 = arith.constant 0 : index
    %c64_296 = arith.constant 64 : index
    %164 = vector.load %arg11[%c0_295, %c64_296] : memref<128x576xf32, #tpu.memory_space<vmem>>, vector<32x64xf32>
    tpu.vector_store %arg11[%c0_295, %c64_296], %163 {strides = array<i32>} : memref<128x576xf32, #tpu.memory_space<vmem>>, vector<32x64xf32>,
    %c0_297 = arith.constant 0 : index
    %c0_298 = arith.constant 0 : index
    %c1_299 = arith.constant 1 : index
    %c1_300 = arith.constant 1 : index
    %c64_301 = arith.constant 64 : index
    %165 = vector.load %arg10[%c0_297, %c0_298, %c1_299, %c1_300, %c64_301] : memref<2x9x2x9x128xf32, #tpu.memory_space<vmem>>, vector<2x4x1x4x64xf32>
    %166 = vector.shape_cast %165 : vector<2x4x1x4x64xf32> to vector<32x64xf32>
    %c0_302 = arith.constant 0 : index
    %c128_303 = arith.constant 128 : index
    %167 = vector.load %arg11[%c0_302, %c128_303] : memref<128x576xf32, #tpu.memory_space<vmem>>, vector<32x64xf32>
    tpu.vector_store %arg11[%c0_302, %c128_303], %166 {strides = array<i32>} : memref<128x576xf32, #tpu.memory_space<vmem>>, vector<32x64xf32>,
    %c0_304 = arith.constant 0 : index
    %c1_305 = arith.constant 1 : index
    %c0_306 = arith.constant 0 : index
    %c0_307 = arith.constant 0 : index
    %c64_308 = arith.constant 64 : index
    %168 = vector.load %arg10[%c0_304, %c1_305, %c0_306, %c0_307, %c64_308] : memref<2x9x2x9x128xf32, #tpu.memory_space<vmem>>, vector<2x4x1x4x64xf32>
    %169 = vector.shape_cast %168 : vector<2x4x1x4x64xf32> to vector<32x64xf32>
    %c0_309 = arith.constant 0 : index
    %c192_310 = arith.constant 192 : index
    %170 = vector.load %arg11[%c0_309, %c192_310] : memref<128x576xf32, #tpu.memory_space<vmem>>, vector<32x64xf32>
    tpu.vector_store %arg11[%c0_309, %c192_310], %169 {strides = array<i32>} : memref<128x576xf32, #tpu.memory_space<vmem>>, vector<32x64xf32>,
    %c0_311 = arith.constant 0 : index
    %c1_312 = arith.constant 1 : index
    %c0_313 = arith.constant 0 : index
    %c1_314 = arith.constant 1 : index
    %c0_315 = arith.constant 0 : index
    %171 = vector.load %arg10[%c0_311, %c1_312, %c0_313, %c1_314, %c0_315] : memref<2x9x2x9x128xf32, #tpu.memory_space<vmem>>, vector<2x4x1x4x64xf32>
    %172 = vector.shape_cast %171 : vector<2x4x1x4x64xf32> to vector<32x64xf32>
    %c0_316 = arith.constant 0 : index
    %c256_317 = arith.constant 256 : index
    %173 = vector.load %arg11[%c0_316, %c256_317] : memref<128x576xf32, #tpu.memory_space<vmem>>, vector<32x64xf32>
    tpu.vector_store %arg11[%c0_316, %c256_317], %172 {strides = array<i32>} : memref<128x576xf32, #tpu.memory_space<vmem>>, vector<32x64xf32>,
    %c0_318 = arith.constant 0 : index
    %c1_319 = arith.constant 1 : index
    %c0_320 = arith.constant 0 : index
    %c1_321 = arith.constant 1 : index
    %c64_322 = arith.constant 64 : index
    %174 = vector.load %arg10[%c0_318, %c1_319, %c0_320, %c1_321, %c64_322] : memref<2x9x2x9x128xf32, #tpu.memory_space<vmem>>, vector<2x4x1x4x64xf32>
    %175 = vector.shape_cast %174 : vector<2x4x1x4x64xf32> to vector<32x64xf32>
    %c0_323 = arith.constant 0 : index
    %c320_324 = arith.constant 320 : index
    %176 = vector.load %arg11[%c0_323, %c320_324] : memref<128x576xf32, #tpu.memory_space<vmem>>, vector<32x64xf32>
    tpu.vector_store %arg11[%c0_323, %c320_324], %175 {strides = array<i32>} : memref<128x576xf32, #tpu.memory_space<vmem>>, vector<32x64xf32>,
    %c0_325 = arith.constant 0 : index
    %c1_326 = arith.constant 1 : index
    %c1_327 = arith.constant 1 : index
    %c0_328 = arith.constant 0 : index
    %c64_329 = arith.constant 64 : index
    %177 = vector.load %arg10[%c0_325, %c1_326, %c1_327, %c0_328, %c64_329] : memref<2x9x2x9x128xf32, #tpu.memory_space<vmem>>, vector<2x4x1x4x64xf32>
    %178 = vector.shape_cast %177 : vector<2x4x1x4x64xf32> to vector<32x64xf32>
    %c0_330 = arith.constant 0 : index
    %c384_331 = arith.constant 384 : index
    %179 = vector.load %arg11[%c0_330, %c384_331] : memref<128x576xf32, #tpu.memory_space<vmem>>, vector<32x64xf32>
    tpu.vector_store %arg11[%c0_330, %c384_331], %178 {strides = array<i32>} : memref<128x576xf32, #tpu.memory_space<vmem>>, vector<32x64xf32>,
    %c0_332 = arith.constant 0 : index
    %c1_333 = arith.constant 1 : index
    %c1_334 = arith.constant 1 : index
    %c1_335 = arith.constant 1 : index
    %c0_336 = arith.constant 0 : index
    %180 = vector.load %arg10[%c0_332, %c1_333, %c1_334, %c1_335, %c0_336] : memref<2x9x2x9x128xf32, #tpu.memory_space<vmem>>, vector<2x4x1x4x64xf32>
    %181 = vector.shape_cast %180 : vector<2x4x1x4x64xf32> to vector<32x64xf32>
    %c0_337 = arith.constant 0 : index
    %c448_338 = arith.constant 448 : index
    %182 = vector.load %arg11[%c0_337, %c448_338] : memref<128x576xf32, #tpu.memory_space<vmem>>, vector<32x64xf32>
    tpu.vector_store %arg11[%c0_337, %c448_338], %181 {strides = array<i32>} : memref<128x576xf32, #tpu.memory_space<vmem>>, vector<32x64xf32>,
    %c0_339 = arith.constant 0 : index
    %c1_340 = arith.constant 1 : index
    %c1_341 = arith.constant 1 : index
    %c1_342 = arith.constant 1 : index
    %c64_343 = arith.constant 64 : index
    %183 = vector.load %arg10[%c0_339, %c1_340, %c1_341, %c1_342, %c64_343] : memref<2x9x2x9x128xf32, #tpu.memory_space<vmem>>, vector<2x4x1x4x64xf32>
    %184 = vector.shape_cast %183 : vector<2x4x1x4x64xf32> to vector<32x64xf32>
    %c0_344 = arith.constant 0 : index
    %c512_345 = arith.constant 512 : index
    %185 = vector.load %arg11[%c0_344, %c512_345] : memref<128x576xf32, #tpu.memory_space<vmem>>, vector<32x64xf32>
    tpu.vector_store %arg11[%c0_344, %c512_345], %184 {strides = array<i32>} : memref<128x576xf32, #tpu.memory_space<vmem>>, vector<32x64xf32>,
    %c0_346 = arith.constant 0 : index
    %c0_347 = arith.constant 0 : index
    %186 = vector.load %arg11[%c0_346, %c0_347] : memref<128x576xf32, #tpu.memory_space<vmem>>, vector<32x576xf32>
    %cst_348 = arith.constant dense<0.000000e+00> : vector<32x64xf32>
    %187 = tpu.matmul %186, %140, %cst_348 {dimension_numbers = #tpu.dot_dimension_numbers<[1], [0], [0], [1], [0, 0, 1, 1], [], []>} : vector<32x576xf32>, vector<576x64xf32>, vector<32x64xf32> -> vector<32x64xf32>
    %188 = vector.broadcast %141 : vector<1x64xf32> to vector<32x64xf32>
    %189 = arith.addf %187, %188 : vector<32x64xf32>
    %cst_349 = arith.constant 0.000000e+00 : f32
    %190 = vector.broadcast %cst_349 : f32 to vector<32x64xf32>
    %191 = arith.cmpf oge, %189, %190 : vector<32x64xf32>
    %cst_350 = arith.constant 0.00999999977 : f32
    %192 = vector.broadcast %cst_350 : f32 to vector<32x64xf32>
    %193 = arith.mulf %192, %189 : vector<32x64xf32>
    %194 = arith.select %191, %189, %193 : vector<32x64xi1>, vector<32x64xf32>
    %c3_351 = arith.constant 3 : index
    %c0_352 = arith.constant 0 : index
    %c0_353 = arith.constant 0 : index
    %195 = vector.load %arg3[%c3_351, %c0_352, %c0_353] : memref<8x576x64xf32, #tpu.memory_space<vmem>>, vector<1x576x64xf32>
    %196 = vector.shape_cast %195 : vector<1x576x64xf32> to vector<576x64xf32>
    %c4 = arith.constant 4 : index
    %c0_354 = arith.constant 0 : index
    %197 = vector.load %arg1[%c4, %c0_354] : memref<18x256xf32, #tpu.memory_space<vmem>>, vector<1x64xf32>
    %c4_355 = arith.constant 4 : index
    %c0_356 = arith.constant 0 : index
    %c0_357 = arith.constant 0 : index
    %198 = vector.load %arg3[%c4_355, %c0_356, %c0_357] : memref<8x576x64xf32, #tpu.memory_space<vmem>>, vector<1x576x64xf32>
    %199 = vector.shape_cast %198 : vector<1x576x64xf32> to vector<576x64xf32>
    %c5 = arith.constant 5 : index
    %c0_358 = arith.constant 0 : index
    %200 = vector.load %arg1[%c5, %c0_358] : memref<18x256xf32, #tpu.memory_space<vmem>>, vector<1x64xf32>
    %cst_359 = arith.constant 0.000000e+00 : f32
    %201 = vector.broadcast %cst_359 : f32 to vector<2x1x6x64xf32>
    %cst_360 = arith.constant 0.000000e+00 : f32
    %202 = vector.broadcast %cst_360 : f32 to vector<2x4x1x64xf32>
    %c0_361 = arith.constant 0 : index
    %c0_362 = arith.constant 0 : index
    %c0_363 = arith.constant 0 : index
    %c0_364 = arith.constant 0 : index
    %203 = vector.load %arg9[%c0_361, %c0_362, %c0_363, %c0_364] : memref<2x10x10x64xf32, #tpu.memory_space<vmem>>, vector<2x1x6x64xf32>
    tpu.vector_store %arg9[%c0_361, %c0_362, %c0_363, %c0_364], %201 {strides = array<i32>} : memref<2x10x10x64xf32, #tpu.memory_space<vmem>>, vector<2x1x6x64xf32>,
    %c0_365 = arith.constant 0 : index
    %c5_366 = arith.constant 5 : index
    %c0_367 = arith.constant 0 : index
    %c0_368 = arith.constant 0 : index
    %204 = vector.load %arg9[%c0_365, %c5_366, %c0_367, %c0_368] : memref<2x10x10x64xf32, #tpu.memory_space<vmem>>, vector<2x1x6x64xf32>
    tpu.vector_store %arg9[%c0_365, %c5_366, %c0_367, %c0_368], %201 {strides = array<i32>} : memref<2x10x10x64xf32, #tpu.memory_space<vmem>>, vector<2x1x6x64xf32>,
    %c0_369 = arith.constant 0 : index
    %c1_370 = arith.constant 1 : index
    %c0_371 = arith.constant 0 : index
    %c0_372 = arith.constant 0 : index
    %205 = vector.load %arg9[%c0_369, %c1_370, %c0_371, %c0_372] : memref<2x10x10x64xf32, #tpu.memory_space<vmem>>, vector<2x4x1x64xf32>
    tpu.vector_store %arg9[%c0_369, %c1_370, %c0_371, %c0_372], %202 {strides = array<i32>} : memref<2x10x10x64xf32, #tpu.memory_space<vmem>>, vector<2x4x1x64xf32>,
    %c0_373 = arith.constant 0 : index
    %c1_374 = arith.constant 1 : index
    %c5_375 = arith.constant 5 : index
    %c0_376 = arith.constant 0 : index
    %206 = vector.load %arg9[%c0_373, %c1_374, %c5_375, %c0_376] : memref<2x10x10x64xf32, #tpu.memory_space<vmem>>, vector<2x4x1x64xf32>
    tpu.vector_store %arg9[%c0_373, %c1_374, %c5_375, %c0_376], %202 {strides = array<i32>} : memref<2x10x10x64xf32, #tpu.memory_space<vmem>>, vector<2x4x1x64xf32>,
    %207 = vector.shape_cast %194 : vector<32x64xf32> to vector<2x4x4x64xf32>
    %c0_377 = arith.constant 0 : index
    %c1_378 = arith.constant 1 : index
    %c1_379 = arith.constant 1 : index
    %c0_380 = arith.constant 0 : index
    %208 = vector.load %arg9[%c0_377, %c1_378, %c1_379, %c0_380] : memref<2x10x10x64xf32, #tpu.memory_space<vmem>>, vector<2x4x4x64xf32>
    tpu.vector_store %arg9[%c0_377, %c1_378, %c1_379, %c0_380], %207 {strides = array<i32>} : memref<2x10x10x64xf32, #tpu.memory_space<vmem>>, vector<2x4x4x64xf32>,
    %c0_381 = arith.constant 0 : index
    %c0_382 = arith.constant 0 : index
    %c0_383 = arith.constant 0 : index
    %c0_384 = arith.constant 0 : index
    %209 = vector.load %arg9[%c0_381, %c0_382, %c0_383, %c0_384] : memref<2x10x10x64xf32, #tpu.memory_space<vmem>>, vector<2x4x4x64xf32>
    %210 = vector.shape_cast %209 : vector<2x4x4x64xf32> to vector<32x64xf32>
    %c0_385 = arith.constant 0 : index
    %c0_386 = arith.constant 0 : index
    %211 = vector.load %arg11[%c0_385, %c0_386] : memref<128x576xf32, #tpu.memory_space<vmem>>, vector<32x64xf32>
    tpu.vector_store %arg11[%c0_385, %c0_386], %210 {strides = array<i32>} : memref<128x576xf32, #tpu.memory_space<vmem>>, vector<32x64xf32>,
    %c0_387 = arith.constant 0 : index
    %c0_388 = arith.constant 0 : index
    %c1_389 = arith.constant 1 : index
    %c0_390 = arith.constant 0 : index
    %212 = vector.load %arg9[%c0_387, %c0_388, %c1_389, %c0_390] : memref<2x10x10x64xf32, #tpu.memory_space<vmem>>, vector<2x4x4x64xf32>
    %213 = vector.shape_cast %212 : vector<2x4x4x64xf32> to vector<32x64xf32>
    %c0_391 = arith.constant 0 : index
    %c64_392 = arith.constant 64 : index
    %214 = vector.load %arg11[%c0_391, %c64_392] : memref<128x576xf32, #tpu.memory_space<vmem>>, vector<32x64xf32>
    tpu.vector_store %arg11[%c0_391, %c64_392], %213 {strides = array<i32>} : memref<128x576xf32, #tpu.memory_space<vmem>>, vector<32x64xf32>,
    %c0_393 = arith.constant 0 : index
    %c0_394 = arith.constant 0 : index
    %c2_395 = arith.constant 2 : index
    %c0_396 = arith.constant 0 : index
    %215 = vector.load %arg9[%c0_393, %c0_394, %c2_395, %c0_396] : memref<2x10x10x64xf32, #tpu.memory_space<vmem>>, vector<2x4x4x64xf32>
    %216 = vector.shape_cast %215 : vector<2x4x4x64xf32> to vector<32x64xf32>
    %c0_397 = arith.constant 0 : index
    %c128_398 = arith.constant 128 : index
    %217 = vector.load %arg11[%c0_397, %c128_398] : memref<128x576xf32, #tpu.memory_space<vmem>>, vector<32x64xf32>
    tpu.vector_store %arg11[%c0_397, %c128_398], %216 {strides = array<i32>} : memref<128x576xf32, #tpu.memory_space<vmem>>, vector<32x64xf32>,
    %c0_399 = arith.constant 0 : index
    %c1_400 = arith.constant 1 : index
    %c0_401 = arith.constant 0 : index
    %c0_402 = arith.constant 0 : index
    %218 = vector.load %arg9[%c0_399, %c1_400, %c0_401, %c0_402] : memref<2x10x10x64xf32, #tpu.memory_space<vmem>>, vector<2x4x4x64xf32>
    %219 = vector.shape_cast %218 : vector<2x4x4x64xf32> to vector<32x64xf32>
    %c0_403 = arith.constant 0 : index
    %c192_404 = arith.constant 192 : index
    %220 = vector.load %arg11[%c0_403, %c192_404] : memref<128x576xf32, #tpu.memory_space<vmem>>, vector<32x64xf32>
    tpu.vector_store %arg11[%c0_403, %c192_404], %219 {strides = array<i32>} : memref<128x576xf32, #tpu.memory_space<vmem>>, vector<32x64xf32>,
    %c0_405 = arith.constant 0 : index
    %c1_406 = arith.constant 1 : index
    %c1_407 = arith.constant 1 : index
    %c0_408 = arith.constant 0 : index
    %221 = vector.load %arg9[%c0_405, %c1_406, %c1_407, %c0_408] : memref<2x10x10x64xf32, #tpu.memory_space<vmem>>, vector<2x4x4x64xf32>
    %222 = vector.shape_cast %221 : vector<2x4x4x64xf32> to vector<32x64xf32>
    %c0_409 = arith.constant 0 : index
    %c256_410 = arith.constant 256 : index
    %223 = vector.load %arg11[%c0_409, %c256_410] : memref<128x576xf32, #tpu.memory_space<vmem>>, vector<32x64xf32>
    tpu.vector_store %arg11[%c0_409, %c256_410], %222 {strides = array<i32>} : memref<128x576xf32, #tpu.memory_space<vmem>>, vector<32x64xf32>,
    %c0_411 = arith.constant 0 : index
    %c1_412 = arith.constant 1 : index
    %c2_413 = arith.constant 2 : index
    %c0_414 = arith.constant 0 : index
    %224 = vector.load %arg9[%c0_411, %c1_412, %c2_413, %c0_414] : memref<2x10x10x64xf32, #tpu.memory_space<vmem>>, vector<2x4x4x64xf32>
    %225 = vector.shape_cast %224 : vector<2x4x4x64xf32> to vector<32x64xf32>
    %c0_415 = arith.constant 0 : index
    %c320_416 = arith.constant 320 : index
    %226 = vector.load %arg11[%c0_415, %c320_416] : memref<128x576xf32, #tpu.memory_space<vmem>>, vector<32x64xf32>
    tpu.vector_store %arg11[%c0_415, %c320_416], %225 {strides = array<i32>} : memref<128x576xf32, #tpu.memory_space<vmem>>, vector<32x64xf32>,
    %c0_417 = arith.constant 0 : index
    %c2_418 = arith.constant 2 : index
    %c0_419 = arith.constant 0 : index
    %c0_420 = arith.constant 0 : index
    %227 = vector.load %arg9[%c0_417, %c2_418, %c0_419, %c0_420] : memref<2x10x10x64xf32, #tpu.memory_space<vmem>>, vector<2x4x4x64xf32>
    %228 = vector.shape_cast %227 : vector<2x4x4x64xf32> to vector<32x64xf32>
    %c0_421 = arith.constant 0 : index
    %c384_422 = arith.constant 384 : index
    %229 = vector.load %arg11[%c0_421, %c384_422] : memref<128x576xf32, #tpu.memory_space<vmem>>, vector<32x64xf32>
    tpu.vector_store %arg11[%c0_421, %c384_422], %228 {strides = array<i32>} : memref<128x576xf32, #tpu.memory_space<vmem>>, vector<32x64xf32>,
    %c0_423 = arith.constant 0 : index
    %c2_424 = arith.constant 2 : index
    %c1_425 = arith.constant 1 : index
    %c0_426 = arith.constant 0 : index
    %230 = vector.load %arg9[%c0_423, %c2_424, %c1_425, %c0_426] : memref<2x10x10x64xf32, #tpu.memory_space<vmem>>, vector<2x4x4x64xf32>
    %231 = vector.shape_cast %230 : vector<2x4x4x64xf32> to vector<32x64xf32>
    %c0_427 = arith.constant 0 : index
    %c448_428 = arith.constant 448 : index
    %232 = vector.load %arg11[%c0_427, %c448_428] : memref<128x576xf32, #tpu.memory_space<vmem>>, vector<32x64xf32>
    tpu.vector_store %arg11[%c0_427, %c448_428], %231 {strides = array<i32>} : memref<128x576xf32, #tpu.memory_space<vmem>>, vector<32x64xf32>,
    %c0_429 = arith.constant 0 : index
    %c2_430 = arith.constant 2 : index
    %c2_431 = arith.constant 2 : index
    %c0_432 = arith.constant 0 : index
    %233 = vector.load %arg9[%c0_429, %c2_430, %c2_431, %c0_432] : memref<2x10x10x64xf32, #tpu.memory_space<vmem>>, vector<2x4x4x64xf32>
    %234 = vector.shape_cast %233 : vector<2x4x4x64xf32> to vector<32x64xf32>
    %c0_433 = arith.constant 0 : index
    %c512_434 = arith.constant 512 : index
    %235 = vector.load %arg11[%c0_433, %c512_434] : memref<128x576xf32, #tpu.memory_space<vmem>>, vector<32x64xf32>
    tpu.vector_store %arg11[%c0_433, %c512_434], %234 {strides = array<i32>} : memref<128x576xf32, #tpu.memory_space<vmem>>, vector<32x64xf32>,
    %c0_435 = arith.constant 0 : index
    %c0_436 = arith.constant 0 : index
    %236 = vector.load %arg11[%c0_435, %c0_436] : memref<128x576xf32, #tpu.memory_space<vmem>>, vector<32x576xf32>
    %cst_437 = arith.constant dense<0.000000e+00> : vector<32x64xf32>
    %237 = tpu.matmul %236, %196, %cst_437 {dimension_numbers = #tpu.dot_dimension_numbers<[1], [0], [0], [1], [0, 0, 1, 1], [], []>} : vector<32x576xf32>, vector<576x64xf32>, vector<32x64xf32> -> vector<32x64xf32>
    %238 = vector.broadcast %197 : vector<1x64xf32> to vector<32x64xf32>
    %239 = arith.addf %237, %238 : vector<32x64xf32>
    %cst_438 = arith.constant 0.000000e+00 : f32
    %240 = vector.broadcast %cst_438 : f32 to vector<32x64xf32>
    %241 = arith.cmpf oge, %239, %240 : vector<32x64xf32>
    %cst_439 = arith.constant 0.00999999977 : f32
    %242 = vector.broadcast %cst_439 : f32 to vector<32x64xf32>
    %243 = arith.mulf %242, %239 : vector<32x64xf32>
    %244 = arith.select %241, %239, %243 : vector<32x64xi1>, vector<32x64xf32>
    %cst_440 = arith.constant 0.000000e+00 : f32
    %245 = vector.broadcast %cst_440 : f32 to vector<2x1x6x64xf32>
    %cst_441 = arith.constant 0.000000e+00 : f32
    %246 = vector.broadcast %cst_441 : f32 to vector<2x4x1x64xf32>
    %c0_442 = arith.constant 0 : index
    %c0_443 = arith.constant 0 : index
    %c0_444 = arith.constant 0 : index
    %c0_445 = arith.constant 0 : index
    %247 = vector.load %arg9[%c0_442, %c0_443, %c0_444, %c0_445] : memref<2x10x10x64xf32, #tpu.memory_space<vmem>>, vector<2x1x6x64xf32>
    tpu.vector_store %arg9[%c0_442, %c0_443, %c0_444, %c0_445], %245 {strides = array<i32>} : memref<2x10x10x64xf32, #tpu.memory_space<vmem>>, vector<2x1x6x64xf32>,
    %c0_446 = arith.constant 0 : index
    %c5_447 = arith.constant 5 : index
    %c0_448 = arith.constant 0 : index
    %c0_449 = arith.constant 0 : index
    %248 = vector.load %arg9[%c0_446, %c5_447, %c0_448, %c0_449] : memref<2x10x10x64xf32, #tpu.memory_space<vmem>>, vector<2x1x6x64xf32>
    tpu.vector_store %arg9[%c0_446, %c5_447, %c0_448, %c0_449], %245 {strides = array<i32>} : memref<2x10x10x64xf32, #tpu.memory_space<vmem>>, vector<2x1x6x64xf32>,
    %c0_450 = arith.constant 0 : index
    %c1_451 = arith.constant 1 : index
    %c0_452 = arith.constant 0 : index
    %c0_453 = arith.constant 0 : index
    %249 = vector.load %arg9[%c0_450, %c1_451, %c0_452, %c0_453] : memref<2x10x10x64xf32, #tpu.memory_space<vmem>>, vector<2x4x1x64xf32>
    tpu.vector_store %arg9[%c0_450, %c1_451, %c0_452, %c0_453], %246 {strides = array<i32>} : memref<2x10x10x64xf32, #tpu.memory_space<vmem>>, vector<2x4x1x64xf32>,
    %c0_454 = arith.constant 0 : index
    %c1_455 = arith.constant 1 : index
    %c5_456 = arith.constant 5 : index
    %c0_457 = arith.constant 0 : index
    %250 = vector.load %arg9[%c0_454, %c1_455, %c5_456, %c0_457] : memref<2x10x10x64xf32, #tpu.memory_space<vmem>>, vector<2x4x1x64xf32>
    tpu.vector_store %arg9[%c0_454, %c1_455, %c5_456, %c0_457], %246 {strides = array<i32>} : memref<2x10x10x64xf32, #tpu.memory_space<vmem>>, vector<2x4x1x64xf32>,
    %251 = vector.shape_cast %244 : vector<32x64xf32> to vector<2x4x4x64xf32>
    %c0_458 = arith.constant 0 : index
    %c1_459 = arith.constant 1 : index
    %c1_460 = arith.constant 1 : index
    %c0_461 = arith.constant 0 : index
    %252 = vector.load %arg9[%c0_458, %c1_459, %c1_460, %c0_461] : memref<2x10x10x64xf32, #tpu.memory_space<vmem>>, vector<2x4x4x64xf32>
    tpu.vector_store %arg9[%c0_458, %c1_459, %c1_460, %c0_461], %251 {strides = array<i32>} : memref<2x10x10x64xf32, #tpu.memory_space<vmem>>, vector<2x4x4x64xf32>,
    %c0_462 = arith.constant 0 : index
    %c0_463 = arith.constant 0 : index
    %c0_464 = arith.constant 0 : index
    %c0_465 = arith.constant 0 : index
    %253 = vector.load %arg9[%c0_462, %c0_463, %c0_464, %c0_465] : memref<2x10x10x64xf32, #tpu.memory_space<vmem>>, vector<2x4x4x64xf32>
    %254 = vector.shape_cast %253 : vector<2x4x4x64xf32> to vector<32x64xf32>
    %c0_466 = arith.constant 0 : index
    %c0_467 = arith.constant 0 : index
    %255 = vector.load %arg11[%c0_466, %c0_467] : memref<128x576xf32, #tpu.memory_space<vmem>>, vector<32x64xf32>
    tpu.vector_store %arg11[%c0_466, %c0_467], %254 {strides = array<i32>} : memref<128x576xf32, #tpu.memory_space<vmem>>, vector<32x64xf32>,
    %c0_468 = arith.constant 0 : index
    %c0_469 = arith.constant 0 : index
    %c1_470 = arith.constant 1 : index
    %c0_471 = arith.constant 0 : index
    %256 = vector.load %arg9[%c0_468, %c0_469, %c1_470, %c0_471] : memref<2x10x10x64xf32, #tpu.memory_space<vmem>>, vector<2x4x4x64xf32>
    %257 = vector.shape_cast %256 : vector<2x4x4x64xf32> to vector<32x64xf32>
    %c0_472 = arith.constant 0 : index
    %c64_473 = arith.constant 64 : index
    %258 = vector.load %arg11[%c0_472, %c64_473] : memref<128x576xf32, #tpu.memory_space<vmem>>, vector<32x64xf32>
    tpu.vector_store %arg11[%c0_472, %c64_473], %257 {strides = array<i32>} : memref<128x576xf32, #tpu.memory_space<vmem>>, vector<32x64xf32>,
    %c0_474 = arith.constant 0 : index
    %c0_475 = arith.constant 0 : index
    %c2_476 = arith.constant 2 : index
    %c0_477 = arith.constant 0 : index
    %259 = vector.load %arg9[%c0_474, %c0_475, %c2_476, %c0_477] : memref<2x10x10x64xf32, #tpu.memory_space<vmem>>, vector<2x4x4x64xf32>
    %260 = vector.shape_cast %259 : vector<2x4x4x64xf32> to vector<32x64xf32>
    %c0_478 = arith.constant 0 : index
    %c128_479 = arith.constant 128 : index
    %261 = vector.load %arg11[%c0_478, %c128_479] : memref<128x576xf32, #tpu.memory_space<vmem>>, vector<32x64xf32>
    tpu.vector_store %arg11[%c0_478, %c128_479], %260 {strides = array<i32>} : memref<128x576xf32, #tpu.memory_space<vmem>>, vector<32x64xf32>,
    %c0_480 = arith.constant 0 : index
    %c1_481 = arith.constant 1 : index
    %c0_482 = arith.constant 0 : index
    %c0_483 = arith.constant 0 : index
    %262 = vector.load %arg9[%c0_480, %c1_481, %c0_482, %c0_483] : memref<2x10x10x64xf32, #tpu.memory_space<vmem>>, vector<2x4x4x64xf32>
    %263 = vector.shape_cast %262 : vector<2x4x4x64xf32> to vector<32x64xf32>
    %c0_484 = arith.constant 0 : index
    %c192_485 = arith.constant 192 : index
    %264 = vector.load %arg11[%c0_484, %c192_485] : memref<128x576xf32, #tpu.memory_space<vmem>>, vector<32x64xf32>
    tpu.vector_store %arg11[%c0_484, %c192_485], %263 {strides = array<i32>} : memref<128x576xf32, #tpu.memory_space<vmem>>, vector<32x64xf32>,
    %c0_486 = arith.constant 0 : index
    %c1_487 = arith.constant 1 : index
    %c1_488 = arith.constant 1 : index
    %c0_489 = arith.constant 0 : index
    %265 = vector.load %arg9[%c0_486, %c1_487, %c1_488, %c0_489] : memref<2x10x10x64xf32, #tpu.memory_space<vmem>>, vector<2x4x4x64xf32>
    %266 = vector.shape_cast %265 : vector<2x4x4x64xf32> to vector<32x64xf32>
    %c0_490 = arith.constant 0 : index
    %c256_491 = arith.constant 256 : index
    %267 = vector.load %arg11[%c0_490, %c256_491] : memref<128x576xf32, #tpu.memory_space<vmem>>, vector<32x64xf32>
    tpu.vector_store %arg11[%c0_490, %c256_491], %266 {strides = array<i32>} : memref<128x576xf32, #tpu.memory_space<vmem>>, vector<32x64xf32>,
    %c0_492 = arith.constant 0 : index
    %c1_493 = arith.constant 1 : index
    %c2_494 = arith.constant 2 : index
    %c0_495 = arith.constant 0 : index
    %268 = vector.load %arg9[%c0_492, %c1_493, %c2_494, %c0_495] : memref<2x10x10x64xf32, #tpu.memory_space<vmem>>, vector<2x4x4x64xf32>
    %269 = vector.shape_cast %268 : vector<2x4x4x64xf32> to vector<32x64xf32>
    %c0_496 = arith.constant 0 : index
    %c320_497 = arith.constant 320 : index
    %270 = vector.load %arg11[%c0_496, %c320_497] : memref<128x576xf32, #tpu.memory_space<vmem>>, vector<32x64xf32>
    tpu.vector_store %arg11[%c0_496, %c320_497], %269 {strides = array<i32>} : memref<128x576xf32, #tpu.memory_space<vmem>>, vector<32x64xf32>,
    %c0_498 = arith.constant 0 : index
    %c2_499 = arith.constant 2 : index
    %c0_500 = arith.constant 0 : index
    %c0_501 = arith.constant 0 : index
    %271 = vector.load %arg9[%c0_498, %c2_499, %c0_500, %c0_501] : memref<2x10x10x64xf32, #tpu.memory_space<vmem>>, vector<2x4x4x64xf32>
    %272 = vector.shape_cast %271 : vector<2x4x4x64xf32> to vector<32x64xf32>
    %c0_502 = arith.constant 0 : index
    %c384_503 = arith.constant 384 : index
    %273 = vector.load %arg11[%c0_502, %c384_503] : memref<128x576xf32, #tpu.memory_space<vmem>>, vector<32x64xf32>
    tpu.vector_store %arg11[%c0_502, %c384_503], %272 {strides = array<i32>} : memref<128x576xf32, #tpu.memory_space<vmem>>, vector<32x64xf32>,
    %c0_504 = arith.constant 0 : index
    %c2_505 = arith.constant 2 : index
    %c1_506 = arith.constant 1 : index
    %c0_507 = arith.constant 0 : index
    %274 = vector.load %arg9[%c0_504, %c2_505, %c1_506, %c0_507] : memref<2x10x10x64xf32, #tpu.memory_space<vmem>>, vector<2x4x4x64xf32>
    %275 = vector.shape_cast %274 : vector<2x4x4x64xf32> to vector<32x64xf32>
    %c0_508 = arith.constant 0 : index
    %c448_509 = arith.constant 448 : index
    %276 = vector.load %arg11[%c0_508, %c448_509] : memref<128x576xf32, #tpu.memory_space<vmem>>, vector<32x64xf32>
    tpu.vector_store %arg11[%c0_508, %c448_509], %275 {strides = array<i32>} : memref<128x576xf32, #tpu.memory_space<vmem>>, vector<32x64xf32>,
    %c0_510 = arith.constant 0 : index
    %c2_511 = arith.constant 2 : index
    %c2_512 = arith.constant 2 : index
    %c0_513 = arith.constant 0 : index
    %277 = vector.load %arg9[%c0_510, %c2_511, %c2_512, %c0_513] : memref<2x10x10x64xf32, #tpu.memory_space<vmem>>, vector<2x4x4x64xf32>
    %278 = vector.shape_cast %277 : vector<2x4x4x64xf32> to vector<32x64xf32>
    %c0_514 = arith.constant 0 : index
    %c512_515 = arith.constant 512 : index
    %279 = vector.load %arg11[%c0_514, %c512_515] : memref<128x576xf32, #tpu.memory_space<vmem>>, vector<32x64xf32>
    tpu.vector_store %arg11[%c0_514, %c512_515], %278 {strides = array<i32>} : memref<128x576xf32, #tpu.memory_space<vmem>>, vector<32x64xf32>,
    %c0_516 = arith.constant 0 : index
    %c0_517 = arith.constant 0 : index
    %280 = vector.load %arg11[%c0_516, %c0_517] : memref<128x576xf32, #tpu.memory_space<vmem>>, vector<32x576xf32>
    %cst_518 = arith.constant dense<0.000000e+00> : vector<32x64xf32>
    %281 = tpu.matmul %280, %199, %cst_518 {dimension_numbers = #tpu.dot_dimension_numbers<[1], [0], [0], [1], [0, 0, 1, 1], [], []>} : vector<32x576xf32>, vector<576x64xf32>, vector<32x64xf32> -> vector<32x64xf32>
    %282 = vector.broadcast %200 : vector<1x64xf32> to vector<32x64xf32>
    %283 = arith.addf %281, %282 : vector<32x64xf32>
    %cst_519 = arith.constant 0.000000e+00 : f32
    %284 = vector.broadcast %cst_519 : f32 to vector<32x64xf32>
    %285 = arith.cmpf oge, %283, %284 : vector<32x64xf32>
    %cst_520 = arith.constant 0.00999999977 : f32
    %286 = vector.broadcast %cst_520 : f32 to vector<32x64xf32>
    %287 = arith.mulf %286, %283 : vector<32x64xf32>
    %288 = arith.select %285, %283, %287 : vector<32x64xi1>, vector<32x64xf32>
    %289 = arith.addf %194, %288 : vector<32x64xf32>
    %c5_521 = arith.constant 5 : index
    %c0_522 = arith.constant 0 : index
    %c0_523 = arith.constant 0 : index
    %290 = vector.load %arg3[%c5_521, %c0_522, %c0_523] : memref<8x576x64xf32, #tpu.memory_space<vmem>>, vector<1x576x64xf32>
    %291 = vector.shape_cast %290 : vector<1x576x64xf32> to vector<576x64xf32>
    %c6_524 = arith.constant 6 : index
    %c0_525 = arith.constant 0 : index
    %292 = vector.load %arg1[%c6_524, %c0_525] : memref<18x256xf32, #tpu.memory_space<vmem>>, vector<1x64xf32>
    %cst_526 = arith.constant 0.000000e+00 : f32
    %293 = vector.broadcast %cst_526 : f32 to vector<2x1x2x3x128xf32>
    %c0_527 = arith.constant 0 : index
    %c0_528 = arith.constant 0 : index
    %c0_529 = arith.constant 0 : index
    %c0_530 = arith.constant 0 : index
    %c0_531 = arith.constant 0 : index
    %294 = vector.load %arg10[%c0_527, %c0_528, %c0_529, %c0_530, %c0_531] : memref<2x9x2x9x128xf32, #tpu.memory_space<vmem>>, vector<2x1x2x3x128xf32>
    tpu.vector_store %arg10[%c0_527, %c0_528, %c0_529, %c0_530, %c0_531], %293 {strides = array<i32>} : memref<2x9x2x9x128xf32, #tpu.memory_space<vmem>>, vector<2x1x2x3x128xf32>,
    %cst_532 = arith.constant 0.000000e+00 : f32
    %295 = vector.broadcast %cst_532 : f32 to vector<2x3x2x1x128xf32>
    %c0_533 = arith.constant 0 : index
    %c0_534 = arith.constant 0 : index
    %c0_535 = arith.constant 0 : index
    %c0_536 = arith.constant 0 : index
    %c0_537 = arith.constant 0 : index
    %296 = vector.load %arg10[%c0_533, %c0_534, %c0_535, %c0_536, %c0_537] : memref<2x9x2x9x128xf32, #tpu.memory_space<vmem>>, vector<2x3x2x1x128xf32>
    tpu.vector_store %arg10[%c0_533, %c0_534, %c0_535, %c0_536, %c0_537], %295 {strides = array<i32>} : memref<2x9x2x9x128xf32, #tpu.memory_space<vmem>>, vector<2x3x2x1x128xf32>,
    %297 = vector.shape_cast %289 : vector<32x64xf32> to vector<4x2x2x2x64xf32>
    %298 = vector.extract_strided_slice %297 {offsets = [0, 0, 0, 0, 0], sizes = [4, 1, 2, 1, 64], strides = [1, 1, 1, 1, 1]} : vector<4x2x2x2x64xf32> to vector<4x1x2x1x64xf32>
    %299 = vector.shape_cast %298 : vector<4x1x2x1x64xf32> to vector<2x2x1x2x64xf32>
    %c0_538 = arith.constant 0 : index
    %c1_539 = arith.constant 1 : index
    %c0_540 = arith.constant 0 : index
    %c1_541 = arith.constant 1 : index
    %c0_542 = arith.constant 0 : index
    %300 = vector.load %arg10[%c0_538, %c1_539, %c0_540, %c1_541, %c0_542] : memref<2x9x2x9x128xf32, #tpu.memory_space<vmem>>, vector<2x2x1x2x64xf32>
    tpu.vector_store %arg10[%c0_538, %c1_539, %c0_540, %c1_541, %c0_542], %299 {strides = array<i32>} : memref<2x9x2x9x128xf32, #tpu.memory_space<vmem>>, vector<2x2x1x2x64xf32>,
    %301 = vector.extract_strided_slice %297 {offsets = [0, 0, 0, 1, 0], sizes = [4, 1, 2, 1, 64], strides = [1, 1, 1, 1, 1]} : vector<4x2x2x2x64xf32> to vector<4x1x2x1x64xf32>
    %302 = vector.shape_cast %301 : vector<4x1x2x1x64xf32> to vector<2x2x1x2x64xf32>
    %c0_543 = arith.constant 0 : index
    %c1_544 = arith.constant 1 : index
    %c0_545 = arith.constant 0 : index
    %c1_546 = arith.constant 1 : index
    %c64_547 = arith.constant 64 : index
    %303 = vector.load %arg10[%c0_543, %c1_544, %c0_545, %c1_546, %c64_547] : memref<2x9x2x9x128xf32, #tpu.memory_space<vmem>>, vector<2x2x1x2x64xf32>
    tpu.vector_store %arg10[%c0_543, %c1_544, %c0_545, %c1_546, %c64_547], %302 {strides = array<i32>} : memref<2x9x2x9x128xf32, #tpu.memory_space<vmem>>, vector<2x2x1x2x64xf32>,
    %304 = vector.extract_strided_slice %297 {offsets = [0, 1, 0, 0, 0], sizes = [4, 1, 2, 1, 64], strides = [1, 1, 1, 1, 1]} : vector<4x2x2x2x64xf32> to vector<4x1x2x1x64xf32>
    %305 = vector.shape_cast %304 : vector<4x1x2x1x64xf32> to vector<2x2x1x2x64xf32>
    %c0_548 = arith.constant 0 : index
    %c1_549 = arith.constant 1 : index
    %c1_550 = arith.constant 1 : index
    %c1_551 = arith.constant 1 : index
    %c0_552 = arith.constant 0 : index
    %306 = vector.load %arg10[%c0_548, %c1_549, %c1_550, %c1_551, %c0_552] : memref<2x9x2x9x128xf32, #tpu.memory_space<vmem>>, vector<2x2x1x2x64xf32>
    tpu.vector_store %arg10[%c0_548, %c1_549, %c1_550, %c1_551, %c0_552], %305 {strides = array<i32>} : memref<2x9x2x9x128xf32, #tpu.memory_space<vmem>>, vector<2x2x1x2x64xf32>,
    %307 = vector.extract_strided_slice %297 {offsets = [0, 1, 0, 1, 0], sizes = [4, 1, 2, 1, 64], strides = [1, 1, 1, 1, 1]} : vector<4x2x2x2x64xf32> to vector<4x1x2x1x64xf32>
    %308 = vector.shape_cast %307 : vector<4x1x2x1x64xf32> to vector<2x2x1x2x64xf32>
    %c0_553 = arith.constant 0 : index
    %c1_554 = arith.constant 1 : index
    %c1_555 = arith.constant 1 : index
    %c1_556 = arith.constant 1 : index
    %c64_557 = arith.constant 64 : index
    %309 = vector.load %arg10[%c0_553, %c1_554, %c1_555, %c1_556, %c64_557] : memref<2x9x2x9x128xf32, #tpu.memory_space<vmem>>, vector<2x2x1x2x64xf32>
    tpu.vector_store %arg10[%c0_553, %c1_554, %c1_555, %c1_556, %c64_557], %308 {strides = array<i32>} : memref<2x9x2x9x128xf32, #tpu.memory_space<vmem>>, vector<2x2x1x2x64xf32>,
    %c0_558 = arith.constant 0 : index
    %c0_559 = arith.constant 0 : index
    %c1_560 = arith.constant 1 : index
    %c0_561 = arith.constant 0 : index
    %c64_562 = arith.constant 64 : index
    %310 = vector.load %arg10[%c0_558, %c0_559, %c1_560, %c0_561, %c64_562] : memref<2x9x2x9x128xf32, #tpu.memory_space<vmem>>, vector<2x2x1x2x64xf32>
    %311 = vector.shape_cast %310 : vector<2x2x1x2x64xf32> to vector<8x64xf32>
    %c0_563 = arith.constant 0 : index
    %c0_564 = arith.constant 0 : index
    %312 = vector.load %arg11[%c0_563, %c0_564] : memref<128x576xf32, #tpu.memory_space<vmem>>, vector<8x64xf32>
    tpu.vector_store %arg11[%c0_563, %c0_564], %311 {strides = array<i32>} : memref<128x576xf32, #tpu.memory_space<vmem>>, vector<8x64xf32>,
    %c0_565 = arith.constant 0 : index
    %c0_566 = arith.constant 0 : index
    %c1_567 = arith.constant 1 : index
    %c1_568 = arith.constant 1 : index
    %c0_569 = arith.constant 0 : index
    %313 = vector.load %arg10[%c0_565, %c0_566, %c1_567, %c1_568, %c0_569] : memref<2x9x2x9x128xf32, #tpu.memory_space<vmem>>, vector<2x2x1x2x64xf32>
    %314 = vector.shape_cast %313 : vector<2x2x1x2x64xf32> to vector<8x64xf32>
    %c0_570 = arith.constant 0 : index
    %c64_571 = arith.constant 64 : index
    %315 = vector.load %arg11[%c0_570, %c64_571] : memref<128x576xf32, #tpu.memory_space<vmem>>, vector<8x64xf32>
    tpu.vector_store %arg11[%c0_570, %c64_571], %314 {strides = array<i32>} : memref<128x576xf32, #tpu.memory_space<vmem>>, vector<8x64xf32>,
    %c0_572 = arith.constant 0 : index
    %c0_573 = arith.constant 0 : index
    %c1_574 = arith.constant 1 : index
    %c1_575 = arith.constant 1 : index
    %c64_576 = arith.constant 64 : index
    %316 = vector.load %arg10[%c0_572, %c0_573, %c1_574, %c1_575, %c64_576] : memref<2x9x2x9x128xf32, #tpu.memory_space<vmem>>, vector<2x2x1x2x64xf32>
    %317 = vector.shape_cast %316 : vector<2x2x1x2x64xf32> to vector<8x64xf32>
    %c0_577 = arith.constant 0 : index
    %c128_578 = arith.constant 128 : index
    %318 = vector.load %arg11[%c0_577, %c128_578] : memref<128x576xf32, #tpu.memory_space<vmem>>, vector<8x64xf32>
    tpu.vector_store %arg11[%c0_577, %c128_578], %317 {strides = array<i32>} : memref<128x576xf32, #tpu.memory_space<vmem>>, vector<8x64xf32>,
    %c0_579 = arith.constant 0 : index
    %c1_580 = arith.constant 1 : index
    %c0_581 = arith.constant 0 : index
    %c0_582 = arith.constant 0 : index
    %c64_583 = arith.constant 64 : index
    %319 = vector.load %arg10[%c0_579, %c1_580, %c0_581, %c0_582, %c64_583] : memref<2x9x2x9x128xf32, #tpu.memory_space<vmem>>, vector<2x2x1x2x64xf32>
    %320 = vector.shape_cast %319 : vector<2x2x1x2x64xf32> to vector<8x64xf32>
    %c0_584 = arith.constant 0 : index
    %c192_585 = arith.constant 192 : index
    %321 = vector.load %arg11[%c0_584, %c192_585] : memref<128x576xf32, #tpu.memory_space<vmem>>, vector<8x64xf32>
    tpu.vector_store %arg11[%c0_584, %c192_585], %320 {strides = array<i32>} : memref<128x576xf32, #tpu.memory_space<vmem>>, vector<8x64xf32>,
    %c0_586 = arith.constant 0 : index
    %c1_587 = arith.constant 1 : index
    %c0_588 = arith.constant 0 : index
    %c1_589 = arith.constant 1 : index
    %c0_590 = arith.constant 0 : index
    %322 = vector.load %arg10[%c0_586, %c1_587, %c0_588, %c1_589, %c0_590] : memref<2x9x2x9x128xf32, #tpu.memory_space<vmem>>, vector<2x2x1x2x64xf32>
    %323 = vector.shape_cast %322 : vector<2x2x1x2x64xf32> to vector<8x64xf32>
    %c0_591 = arith.constant 0 : index
    %c256_592 = arith.constant 256 : index
    %324 = vector.load %arg11[%c0_591, %c256_592] : memref<128x576xf32, #tpu.memory_space<vmem>>, vector<8x64xf32>
    tpu.vector_store %arg11[%c0_591, %c256_592], %323 {strides = array<i32>} : memref<128x576xf32, #tpu.memory_space<vmem>>, vector<8x64xf32>,
    %c0_593 = arith.constant 0 : index
    %c1_594 = arith.constant 1 : index
    %c0_595 = arith.constant 0 : index
    %c1_596 = arith.constant 1 : index
    %c64_597 = arith.constant 64 : index
    %325 = vector.load %arg10[%c0_593, %c1_594, %c0_595, %c1_596, %c64_597] : memref<2x9x2x9x128xf32, #tpu.memory_space<vmem>>, vector<2x2x1x2x64xf32>
    %326 = vector.shape_cast %325 : vector<2x2x1x2x64xf32> to vector<8x64xf32>
    %c0_598 = arith.constant 0 : index
    %c320_599 = arith.constant 320 : index
    %327 = vector.load %arg11[%c0_598, %c320_599] : memref<128x576xf32, #tpu.memory_space<vmem>>, vector<8x64xf32>
    tpu.vector_store %arg11[%c0_598, %c320_599], %326 {strides = array<i32>} : memref<128x576xf32, #tpu.memory_space<vmem>>, vector<8x64xf32>,
    %c0_600 = arith.constant 0 : index
    %c1_601 = arith.constant 1 : index
    %c1_602 = arith.constant 1 : index
    %c0_603 = arith.constant 0 : index
    %c64_604 = arith.constant 64 : index
    %328 = vector.load %arg10[%c0_600, %c1_601, %c1_602, %c0_603, %c64_604] : memref<2x9x2x9x128xf32, #tpu.memory_space<vmem>>, vector<2x2x1x2x64xf32>
    %329 = vector.shape_cast %328 : vector<2x2x1x2x64xf32> to vector<8x64xf32>
    %c0_605 = arith.constant 0 : index
    %c384_606 = arith.constant 384 : index
    %330 = vector.load %arg11[%c0_605, %c384_606] : memref<128x576xf32, #tpu.memory_space<vmem>>, vector<8x64xf32>
    tpu.vector_store %arg11[%c0_605, %c384_606], %329 {strides = array<i32>} : memref<128x576xf32, #tpu.memory_space<vmem>>, vector<8x64xf32>,
    %c0_607 = arith.constant 0 : index
    %c1_608 = arith.constant 1 : index
    %c1_609 = arith.constant 1 : index
    %c1_610 = arith.constant 1 : index
    %c0_611 = arith.constant 0 : index
    %331 = vector.load %arg10[%c0_607, %c1_608, %c1_609, %c1_610, %c0_611] : memref<2x9x2x9x128xf32, #tpu.memory_space<vmem>>, vector<2x2x1x2x64xf32>
    %332 = vector.shape_cast %331 : vector<2x2x1x2x64xf32> to vector<8x64xf32>
    %c0_612 = arith.constant 0 : index
    %c448_613 = arith.constant 448 : index
    %333 = vector.load %arg11[%c0_612, %c448_613] : memref<128x576xf32, #tpu.memory_space<vmem>>, vector<8x64xf32>
    tpu.vector_store %arg11[%c0_612, %c448_613], %332 {strides = array<i32>} : memref<128x576xf32, #tpu.memory_space<vmem>>, vector<8x64xf32>,
    %c0_614 = arith.constant 0 : index
    %c1_615 = arith.constant 1 : index
    %c1_616 = arith.constant 1 : index
    %c1_617 = arith.constant 1 : index
    %c64_618 = arith.constant 64 : index
    %334 = vector.load %arg10[%c0_614, %c1_615, %c1_616, %c1_617, %c64_618] : memref<2x9x2x9x128xf32, #tpu.memory_space<vmem>>, vector<2x2x1x2x64xf32>
    %335 = vector.shape_cast %334 : vector<2x2x1x2x64xf32> to vector<8x64xf32>
    %c0_619 = arith.constant 0 : index
    %c512_620 = arith.constant 512 : index
    %336 = vector.load %arg11[%c0_619, %c512_620] : memref<128x576xf32, #tpu.memory_space<vmem>>, vector<8x64xf32>
    tpu.vector_store %arg11[%c0_619, %c512_620], %335 {strides = array<i32>} : memref<128x576xf32, #tpu.memory_space<vmem>>, vector<8x64xf32>,
    %c0_621 = arith.constant 0 : index
    %c0_622 = arith.constant 0 : index
    %337 = vector.load %arg11[%c0_621, %c0_622] : memref<128x576xf32, #tpu.memory_space<vmem>>, vector<8x576xf32>
    %cst_623 = arith.constant dense<0.000000e+00> : vector<8x64xf32>
    %338 = tpu.matmul %337, %291, %cst_623 {dimension_numbers = #tpu.dot_dimension_numbers<[1], [0], [0], [1], [0, 0, 1, 1], [], []>} : vector<8x576xf32>, vector<576x64xf32>, vector<8x64xf32> -> vector<8x64xf32>
    %339 = vector.broadcast %292 : vector<1x64xf32> to vector<8x64xf32>
    %340 = arith.addf %338, %339 : vector<8x64xf32>
    %cst_624 = arith.constant 0.000000e+00 : f32
    %341 = vector.broadcast %cst_624 : f32 to vector<8x64xf32>
    %342 = arith.cmpf oge, %340, %341 : vector<8x64xf32>
    %cst_625 = arith.constant 0.00999999977 : f32
    %343 = vector.broadcast %cst_625 : f32 to vector<8x64xf32>
    %344 = arith.mulf %343, %340 : vector<8x64xf32>
    %345 = arith.select %342, %340, %344 : vector<8x64xi1>, vector<8x64xf32>
    %c6_626 = arith.constant 6 : index
    %c0_627 = arith.constant 0 : index
    %c0_628 = arith.constant 0 : index
    %346 = vector.load %arg3[%c6_626, %c0_627, %c0_628] : memref<8x576x64xf32, #tpu.memory_space<vmem>>, vector<1x576x64xf32>
    %347 = vector.shape_cast %346 : vector<1x576x64xf32> to vector<576x64xf32>
    %c7 = arith.constant 7 : index
    %c0_629 = arith.constant 0 : index
    %348 = vector.load %arg1[%c7, %c0_629] : memref<18x256xf32, #tpu.memory_space<vmem>>, vector<1x64xf32>
    %c7_630 = arith.constant 7 : index
    %c0_631 = arith.constant 0 : index
    %c0_632 = arith.constant 0 : index
    %349 = vector.load %arg3[%c7_630, %c0_631, %c0_632] : memref<8x576x64xf32, #tpu.memory_space<vmem>>, vector<1x576x64xf32>
    %350 = vector.shape_cast %349 : vector<1x576x64xf32> to vector<576x64xf32>
    %c8 = arith.constant 8 : index
    %c0_633 = arith.constant 0 : index
    %351 = vector.load %arg1[%c8, %c0_633] : memref<18x256xf32, #tpu.memory_space<vmem>>, vector<1x64xf32>
    %cst_634 = arith.constant 0.000000e+00 : f32
    %352 = vector.broadcast %cst_634 : f32 to vector<2x1x4x64xf32>
    %cst_635 = arith.constant 0.000000e+00 : f32
    %353 = vector.broadcast %cst_635 : f32 to vector<2x2x1x64xf32>
    %c0_636 = arith.constant 0 : index
    %c0_637 = arith.constant 0 : index
    %c0_638 = arith.constant 0 : index
    %c0_639 = arith.constant 0 : index
    %354 = vector.load %arg9[%c0_636, %c0_637, %c0_638, %c0_639] : memref<2x10x10x64xf32, #tpu.memory_space<vmem>>, vector<2x1x4x64xf32>
    tpu.vector_store %arg9[%c0_636, %c0_637, %c0_638, %c0_639], %352 {strides = array<i32>} : memref<2x10x10x64xf32, #tpu.memory_space<vmem>>, vector<2x1x4x64xf32>,
    %c0_640 = arith.constant 0 : index
    %c3_641 = arith.constant 3 : index
    %c0_642 = arith.constant 0 : index
    %c0_643 = arith.constant 0 : index
    %355 = vector.load %arg9[%c0_640, %c3_641, %c0_642, %c0_643] : memref<2x10x10x64xf32, #tpu.memory_space<vmem>>, vector<2x1x4x64xf32>
    tpu.vector_store %arg9[%c0_640, %c3_641, %c0_642, %c0_643], %352 {strides = array<i32>} : memref<2x10x10x64xf32, #tpu.memory_space<vmem>>, vector<2x1x4x64xf32>,
    %c0_644 = arith.constant 0 : index
    %c1_645 = arith.constant 1 : index
    %c0_646 = arith.constant 0 : index
    %c0_647 = arith.constant 0 : index
    %356 = vector.load %arg9[%c0_644, %c1_645, %c0_646, %c0_647] : memref<2x10x10x64xf32, #tpu.memory_space<vmem>>, vector<2x2x1x64xf32>
    tpu.vector_store %arg9[%c0_644, %c1_645, %c0_646, %c0_647], %353 {strides = array<i32>} : memref<2x10x10x64xf32, #tpu.memory_space<vmem>>, vector<2x2x1x64xf32>,
    %c0_648 = arith.constant 0 : index
    %c1_649 = arith.constant 1 : index
    %c3_650 = arith.constant 3 : index
    %c0_651 = arith.constant 0 : index
    %357 = vector.load %arg9[%c0_648, %c1_649, %c3_650, %c0_651] : memref<2x10x10x64xf32, #tpu.memory_space<vmem>>, vector<2x2x1x64xf32>
    tpu.vector_store %arg9[%c0_648, %c1_649, %c3_650, %c0_651], %353 {strides = array<i32>} : memref<2x10x10x64xf32, #tpu.memory_space<vmem>>, vector<2x2x1x64xf32>,
    %358 = vector.shape_cast %345 : vector<8x64xf32> to vector<2x2x2x64xf32>
    %c0_652 = arith.constant 0 : index
    %c1_653 = arith.constant 1 : index
    %c1_654 = arith.constant 1 : index
    %c0_655 = arith.constant 0 : index
    %359 = vector.load %arg9[%c0_652, %c1_653, %c1_654, %c0_655] : memref<2x10x10x64xf32, #tpu.memory_space<vmem>>, vector<2x2x2x64xf32>
    tpu.vector_store %arg9[%c0_652, %c1_653, %c1_654, %c0_655], %358 {strides = array<i32>} : memref<2x10x10x64xf32, #tpu.memory_space<vmem>>, vector<2x2x2x64xf32>,
    %c0_656 = arith.constant 0 : index
    %c0_657 = arith.constant 0 : index
    %c0_658 = arith.constant 0 : index
    %c0_659 = arith.constant 0 : index
    %360 = vector.load %arg9[%c0_656, %c0_657, %c0_658, %c0_659] : memref<2x10x10x64xf32, #tpu.memory_space<vmem>>, vector<2x2x2x64xf32>
    %361 = vector.shape_cast %360 : vector<2x2x2x64xf32> to vector<8x64xf32>
    %c0_660 = arith.constant 0 : index
    %c0_661 = arith.constant 0 : index
    %362 = vector.load %arg11[%c0_660, %c0_661] : memref<128x576xf32, #tpu.memory_space<vmem>>, vector<8x64xf32>
    tpu.vector_store %arg11[%c0_660, %c0_661], %361 {strides = array<i32>} : memref<128x576xf32, #tpu.memory_space<vmem>>, vector<8x64xf32>,
    %c0_662 = arith.constant 0 : index
    %c0_663 = arith.constant 0 : index
    %c1_664 = arith.constant 1 : index
    %c0_665 = arith.constant 0 : index
    %363 = vector.load %arg9[%c0_662, %c0_663, %c1_664, %c0_665] : memref<2x10x10x64xf32, #tpu.memory_space<vmem>>, vector<2x2x2x64xf32>
    %364 = vector.shape_cast %363 : vector<2x2x2x64xf32> to vector<8x64xf32>
    %c0_666 = arith.constant 0 : index
    %c64_667 = arith.constant 64 : index
    %365 = vector.load %arg11[%c0_666, %c64_667] : memref<128x576xf32, #tpu.memory_space<vmem>>, vector<8x64xf32>
    tpu.vector_store %arg11[%c0_666, %c64_667], %364 {strides = array<i32>} : memref<128x576xf32, #tpu.memory_space<vmem>>, vector<8x64xf32>,
    %c0_668 = arith.constant 0 : index
    %c0_669 = arith.constant 0 : index
    %c2_670 = arith.constant 2 : index
    %c0_671 = arith.constant 0 : index
    %366 = vector.load %arg9[%c0_668, %c0_669, %c2_670, %c0_671] : memref<2x10x10x64xf32, #tpu.memory_space<vmem>>, vector<2x2x2x64xf32>
    %367 = vector.shape_cast %366 : vector<2x2x2x64xf32> to vector<8x64xf32>
    %c0_672 = arith.constant 0 : index
    %c128_673 = arith.constant 128 : index
    %368 = vector.load %arg11[%c0_672, %c128_673] : memref<128x576xf32, #tpu.memory_space<vmem>>, vector<8x64xf32>
    tpu.vector_store %arg11[%c0_672, %c128_673], %367 {strides = array<i32>} : memref<128x576xf32, #tpu.memory_space<vmem>>, vector<8x64xf32>,
    %c0_674 = arith.constant 0 : index
    %c1_675 = arith.constant 1 : index
    %c0_676 = arith.constant 0 : index
    %c0_677 = arith.constant 0 : index
    %369 = vector.load %arg9[%c0_674, %c1_675, %c0_676, %c0_677] : memref<2x10x10x64xf32, #tpu.memory_space<vmem>>, vector<2x2x2x64xf32>
    %370 = vector.shape_cast %369 : vector<2x2x2x64xf32> to vector<8x64xf32>
    %c0_678 = arith.constant 0 : index
    %c192_679 = arith.constant 192 : index
    %371 = vector.load %arg11[%c0_678, %c192_679] : memref<128x576xf32, #tpu.memory_space<vmem>>, vector<8x64xf32>
    tpu.vector_store %arg11[%c0_678, %c192_679], %370 {strides = array<i32>} : memref<128x576xf32, #tpu.memory_space<vmem>>, vector<8x64xf32>,
    %c0_680 = arith.constant 0 : index
    %c1_681 = arith.constant 1 : index
    %c1_682 = arith.constant 1 : index
    %c0_683 = arith.constant 0 : index
    %372 = vector.load %arg9[%c0_680, %c1_681, %c1_682, %c0_683] : memref<2x10x10x64xf32, #tpu.memory_space<vmem>>, vector<2x2x2x64xf32>
    %373 = vector.shape_cast %372 : vector<2x2x2x64xf32> to vector<8x64xf32>
    %c0_684 = arith.constant 0 : index
    %c256_685 = arith.constant 256 : index
    %374 = vector.load %arg11[%c0_684, %c256_685] : memref<128x576xf32, #tpu.memory_space<vmem>>, vector<8x64xf32>
    tpu.vector_store %arg11[%c0_684, %c256_685], %373 {strides = array<i32>} : memref<128x576xf32, #tpu.memory_space<vmem>>, vector<8x64xf32>,
    %c0_686 = arith.constant 0 : index
    %c1_687 = arith.constant 1 : index
    %c2_688 = arith.constant 2 : index
    %c0_689 = arith.constant 0 : index
    %375 = vector.load %arg9[%c0_686, %c1_687, %c2_688, %c0_689] : memref<2x10x10x64xf32, #tpu.memory_space<vmem>>, vector<2x2x2x64xf32>
    %376 = vector.shape_cast %375 : vector<2x2x2x64xf32> to vector<8x64xf32>
    %c0_690 = arith.constant 0 : index
    %c320_691 = arith.constant 320 : index
    %377 = vector.load %arg11[%c0_690, %c320_691] : memref<128x576xf32, #tpu.memory_space<vmem>>, vector<8x64xf32>
    tpu.vector_store %arg11[%c0_690, %c320_691], %376 {strides = array<i32>} : memref<128x576xf32, #tpu.memory_space<vmem>>, vector<8x64xf32>,
    %c0_692 = arith.constant 0 : index
    %c2_693 = arith.constant 2 : index
    %c0_694 = arith.constant 0 : index
    %c0_695 = arith.constant 0 : index
    %378 = vector.load %arg9[%c0_692, %c2_693, %c0_694, %c0_695] : memref<2x10x10x64xf32, #tpu.memory_space<vmem>>, vector<2x2x2x64xf32>
    %379 = vector.shape_cast %378 : vector<2x2x2x64xf32> to vector<8x64xf32>
    %c0_696 = arith.constant 0 : index
    %c384_697 = arith.constant 384 : index
    %380 = vector.load %arg11[%c0_696, %c384_697] : memref<128x576xf32, #tpu.memory_space<vmem>>, vector<8x64xf32>
    tpu.vector_store %arg11[%c0_696, %c384_697], %379 {strides = array<i32>} : memref<128x576xf32, #tpu.memory_space<vmem>>, vector<8x64xf32>,
    %c0_698 = arith.constant 0 : index
    %c2_699 = arith.constant 2 : index
    %c1_700 = arith.constant 1 : index
    %c0_701 = arith.constant 0 : index
    %381 = vector.load %arg9[%c0_698, %c2_699, %c1_700, %c0_701] : memref<2x10x10x64xf32, #tpu.memory_space<vmem>>, vector<2x2x2x64xf32>
    %382 = vector.shape_cast %381 : vector<2x2x2x64xf32> to vector<8x64xf32>
    %c0_702 = arith.constant 0 : index
    %c448_703 = arith.constant 448 : index
    %383 = vector.load %arg11[%c0_702, %c448_703] : memref<128x576xf32, #tpu.memory_space<vmem>>, vector<8x64xf32>
    tpu.vector_store %arg11[%c0_702, %c448_703], %382 {strides = array<i32>} : memref<128x576xf32, #tpu.memory_space<vmem>>, vector<8x64xf32>,
    %c0_704 = arith.constant 0 : index
    %c2_705 = arith.constant 2 : index
    %c2_706 = arith.constant 2 : index
    %c0_707 = arith.constant 0 : index
    %384 = vector.load %arg9[%c0_704, %c2_705, %c2_706, %c0_707] : memref<2x10x10x64xf32, #tpu.memory_space<vmem>>, vector<2x2x2x64xf32>
    %385 = vector.shape_cast %384 : vector<2x2x2x64xf32> to vector<8x64xf32>
    %c0_708 = arith.constant 0 : index
    %c512_709 = arith.constant 512 : index
    %386 = vector.load %arg11[%c0_708, %c512_709] : memref<128x576xf32, #tpu.memory_space<vmem>>, vector<8x64xf32>
    tpu.vector_store %arg11[%c0_708, %c512_709], %385 {strides = array<i32>} : memref<128x576xf32, #tpu.memory_space<vmem>>, vector<8x64xf32>,
    %c0_710 = arith.constant 0 : index
    %c0_711 = arith.constant 0 : index
    %387 = vector.load %arg11[%c0_710, %c0_711] : memref<128x576xf32, #tpu.memory_space<vmem>>, vector<8x576xf32>
    %cst_712 = arith.constant dense<0.000000e+00> : vector<8x64xf32>
    %388 = tpu.matmul %387, %347, %cst_712 {dimension_numbers = #tpu.dot_dimension_numbers<[1], [0], [0], [1], [0, 0, 1, 1], [], []>} : vector<8x576xf32>, vector<576x64xf32>, vector<8x64xf32> -> vector<8x64xf32>
    %389 = vector.broadcast %348 : vector<1x64xf32> to vector<8x64xf32>
    %390 = arith.addf %388, %389 : vector<8x64xf32>
    %cst_713 = arith.constant 0.000000e+00 : f32
    %391 = vector.broadcast %cst_713 : f32 to vector<8x64xf32>
    %392 = arith.cmpf oge, %390, %391 : vector<8x64xf32>
    %cst_714 = arith.constant 0.00999999977 : f32
    %393 = vector.broadcast %cst_714 : f32 to vector<8x64xf32>
    %394 = arith.mulf %393, %390 : vector<8x64xf32>
    %395 = arith.select %392, %390, %394 : vector<8x64xi1>, vector<8x64xf32>
    %cst_715 = arith.constant 0.000000e+00 : f32
    %396 = vector.broadcast %cst_715 : f32 to vector<2x1x4x64xf32>
    %cst_716 = arith.constant 0.000000e+00 : f32
    %397 = vector.broadcast %cst_716 : f32 to vector<2x2x1x64xf32>
    %c0_717 = arith.constant 0 : index
    %c0_718 = arith.constant 0 : index
    %c0_719 = arith.constant 0 : index
    %c0_720 = arith.constant 0 : index
    %398 = vector.load %arg9[%c0_717, %c0_718, %c0_719, %c0_720] : memref<2x10x10x64xf32, #tpu.memory_space<vmem>>, vector<2x1x4x64xf32>
    tpu.vector_store %arg9[%c0_717, %c0_718, %c0_719, %c0_720], %396 {strides = array<i32>} : memref<2x10x10x64xf32, #tpu.memory_space<vmem>>, vector<2x1x4x64xf32>,
    %c0_721 = arith.constant 0 : index
    %c3_722 = arith.constant 3 : index
    %c0_723 = arith.constant 0 : index
    %c0_724 = arith.constant 0 : index
    %399 = vector.load %arg9[%c0_721, %c3_722, %c0_723, %c0_724] : memref<2x10x10x64xf32, #tpu.memory_space<vmem>>, vector<2x1x4x64xf32>
    tpu.vector_store %arg9[%c0_721, %c3_722, %c0_723, %c0_724], %396 {strides = array<i32>} : memref<2x10x10x64xf32, #tpu.memory_space<vmem>>, vector<2x1x4x64xf32>,
    %c0_725 = arith.constant 0 : index
    %c1_726 = arith.constant 1 : index
    %c0_727 = arith.constant 0 : index
    %c0_728 = arith.constant 0 : index
    %400 = vector.load %arg9[%c0_725, %c1_726, %c0_727, %c0_728] : memref<2x10x10x64xf32, #tpu.memory_space<vmem>>, vector<2x2x1x64xf32>
    tpu.vector_store %arg9[%c0_725, %c1_726, %c0_727, %c0_728], %397 {strides = array<i32>} : memref<2x10x10x64xf32, #tpu.memory_space<vmem>>, vector<2x2x1x64xf32>,
    %c0_729 = arith.constant 0 : index
    %c1_730 = arith.constant 1 : index
    %c3_731 = arith.constant 3 : index
    %c0_732 = arith.constant 0 : index
    %401 = vector.load %arg9[%c0_729, %c1_730, %c3_731, %c0_732] : memref<2x10x10x64xf32, #tpu.memory_space<vmem>>, vector<2x2x1x64xf32>
    tpu.vector_store %arg9[%c0_729, %c1_730, %c3_731, %c0_732], %397 {strides = array<i32>} : memref<2x10x10x64xf32, #tpu.memory_space<vmem>>, vector<2x2x1x64xf32>,
    %402 = vector.shape_cast %395 : vector<8x64xf32> to vector<2x2x2x64xf32>
    %c0_733 = arith.constant 0 : index
    %c1_734 = arith.constant 1 : index
    %c1_735 = arith.constant 1 : index
    %c0_736 = arith.constant 0 : index
    %403 = vector.load %arg9[%c0_733, %c1_734, %c1_735, %c0_736] : memref<2x10x10x64xf32, #tpu.memory_space<vmem>>, vector<2x2x2x64xf32>
    tpu.vector_store %arg9[%c0_733, %c1_734, %c1_735, %c0_736], %402 {strides = array<i32>} : memref<2x10x10x64xf32, #tpu.memory_space<vmem>>, vector<2x2x2x64xf32>,
    %c0_737 = arith.constant 0 : index
    %c0_738 = arith.constant 0 : index
    %c0_739 = arith.constant 0 : index
    %c0_740 = arith.constant 0 : index
    %404 = vector.load %arg9[%c0_737, %c0_738, %c0_739, %c0_740] : memref<2x10x10x64xf32, #tpu.memory_space<vmem>>, vector<2x2x2x64xf32>
    %405 = vector.shape_cast %404 : vector<2x2x2x64xf32> to vector<8x64xf32>
    %c0_741 = arith.constant 0 : index
    %c0_742 = arith.constant 0 : index
    %406 = vector.load %arg11[%c0_741, %c0_742] : memref<128x576xf32, #tpu.memory_space<vmem>>, vector<8x64xf32>
    tpu.vector_store %arg11[%c0_741, %c0_742], %405 {strides = array<i32>} : memref<128x576xf32, #tpu.memory_space<vmem>>, vector<8x64xf32>,
    %c0_743 = arith.constant 0 : index
    %c0_744 = arith.constant 0 : index
    %c1_745 = arith.constant 1 : index
    %c0_746 = arith.constant 0 : index
    %407 = vector.load %arg9[%c0_743, %c0_744, %c1_745, %c0_746] : memref<2x10x10x64xf32, #tpu.memory_space<vmem>>, vector<2x2x2x64xf32>
    %408 = vector.shape_cast %407 : vector<2x2x2x64xf32> to vector<8x64xf32>
    %c0_747 = arith.constant 0 : index
    %c64_748 = arith.constant 64 : index
    %409 = vector.load %arg11[%c0_747, %c64_748] : memref<128x576xf32, #tpu.memory_space<vmem>>, vector<8x64xf32>
    tpu.vector_store %arg11[%c0_747, %c64_748], %408 {strides = array<i32>} : memref<128x576xf32, #tpu.memory_space<vmem>>, vector<8x64xf32>,
    %c0_749 = arith.constant 0 : index
    %c0_750 = arith.constant 0 : index
    %c2_751 = arith.constant 2 : index
    %c0_752 = arith.constant 0 : index
    %410 = vector.load %arg9[%c0_749, %c0_750, %c2_751, %c0_752] : memref<2x10x10x64xf32, #tpu.memory_space<vmem>>, vector<2x2x2x64xf32>
    %411 = vector.shape_cast %410 : vector<2x2x2x64xf32> to vector<8x64xf32>
    %c0_753 = arith.constant 0 : index
    %c128_754 = arith.constant 128 : index
    %412 = vector.load %arg11[%c0_753, %c128_754] : memref<128x576xf32, #tpu.memory_space<vmem>>, vector<8x64xf32>
    tpu.vector_store %arg11[%c0_753, %c128_754], %411 {strides = array<i32>} : memref<128x576xf32, #tpu.memory_space<vmem>>, vector<8x64xf32>,
    %c0_755 = arith.constant 0 : index
    %c1_756 = arith.constant 1 : index
    %c0_757 = arith.constant 0 : index
    %c0_758 = arith.constant 0 : index
    %413 = vector.load %arg9[%c0_755, %c1_756, %c0_757, %c0_758] : memref<2x10x10x64xf32, #tpu.memory_space<vmem>>, vector<2x2x2x64xf32>
    %414 = vector.shape_cast %413 : vector<2x2x2x64xf32> to vector<8x64xf32>
    %c0_759 = arith.constant 0 : index
    %c192_760 = arith.constant 192 : index
    %415 = vector.load %arg11[%c0_759, %c192_760] : memref<128x576xf32, #tpu.memory_space<vmem>>, vector<8x64xf32>
    tpu.vector_store %arg11[%c0_759, %c192_760], %414 {strides = array<i32>} : memref<128x576xf32, #tpu.memory_space<vmem>>, vector<8x64xf32>,
    %c0_761 = arith.constant 0 : index
    %c1_762 = arith.constant 1 : index
    %c1_763 = arith.constant 1 : index
    %c0_764 = arith.constant 0 : index
    %416 = vector.load %arg9[%c0_761, %c1_762, %c1_763, %c0_764] : memref<2x10x10x64xf32, #tpu.memory_space<vmem>>, vector<2x2x2x64xf32>
    %417 = vector.shape_cast %416 : vector<2x2x2x64xf32> to vector<8x64xf32>
    %c0_765 = arith.constant 0 : index
    %c256_766 = arith.constant 256 : index
    %418 = vector.load %arg11[%c0_765, %c256_766] : memref<128x576xf32, #tpu.memory_space<vmem>>, vector<8x64xf32>
    tpu.vector_store %arg11[%c0_765, %c256_766], %417 {strides = array<i32>} : memref<128x576xf32, #tpu.memory_space<vmem>>, vector<8x64xf32>,
    %c0_767 = arith.constant 0 : index
    %c1_768 = arith.constant 1 : index
    %c2_769 = arith.constant 2 : index
    %c0_770 = arith.constant 0 : index
    %419 = vector.load %arg9[%c0_767, %c1_768, %c2_769, %c0_770] : memref<2x10x10x64xf32, #tpu.memory_space<vmem>>, vector<2x2x2x64xf32>
    %420 = vector.shape_cast %419 : vector<2x2x2x64xf32> to vector<8x64xf32>
    %c0_771 = arith.constant 0 : index
    %c320_772 = arith.constant 320 : index
    %421 = vector.load %arg11[%c0_771, %c320_772] : memref<128x576xf32, #tpu.memory_space<vmem>>, vector<8x64xf32>
    tpu.vector_store %arg11[%c0_771, %c320_772], %420 {strides = array<i32>} : memref<128x576xf32, #tpu.memory_space<vmem>>, vector<8x64xf32>,
    %c0_773 = arith.constant 0 : index
    %c2_774 = arith.constant 2 : index
    %c0_775 = arith.constant 0 : index
    %c0_776 = arith.constant 0 : index
    %422 = vector.load %arg9[%c0_773, %c2_774, %c0_775, %c0_776] : memref<2x10x10x64xf32, #tpu.memory_space<vmem>>, vector<2x2x2x64xf32>
    %423 = vector.shape_cast %422 : vector<2x2x2x64xf32> to vector<8x64xf32>
    %c0_777 = arith.constant 0 : index
    %c384_778 = arith.constant 384 : index
    %424 = vector.load %arg11[%c0_777, %c384_778] : memref<128x576xf32, #tpu.memory_space<vmem>>, vector<8x64xf32>
    tpu.vector_store %arg11[%c0_777, %c384_778], %423 {strides = array<i32>} : memref<128x576xf32, #tpu.memory_space<vmem>>, vector<8x64xf32>,
    %c0_779 = arith.constant 0 : index
    %c2_780 = arith.constant 2 : index
    %c1_781 = arith.constant 1 : index
    %c0_782 = arith.constant 0 : index
    %425 = vector.load %arg9[%c0_779, %c2_780, %c1_781, %c0_782] : memref<2x10x10x64xf32, #tpu.memory_space<vmem>>, vector<2x2x2x64xf32>
    %426 = vector.shape_cast %425 : vector<2x2x2x64xf32> to vector<8x64xf32>
    %c0_783 = arith.constant 0 : index
    %c448_784 = arith.constant 448 : index
    %427 = vector.load %arg11[%c0_783, %c448_784] : memref<128x576xf32, #tpu.memory_space<vmem>>, vector<8x64xf32>
    tpu.vector_store %arg11[%c0_783, %c448_784], %426 {strides = array<i32>} : memref<128x576xf32, #tpu.memory_space<vmem>>, vector<8x64xf32>,
    %c0_785 = arith.constant 0 : index
    %c2_786 = arith.constant 2 : index
    %c2_787 = arith.constant 2 : index
    %c0_788 = arith.constant 0 : index
    %428 = vector.load %arg9[%c0_785, %c2_786, %c2_787, %c0_788] : memref<2x10x10x64xf32, #tpu.memory_space<vmem>>, vector<2x2x2x64xf32>
    %429 = vector.shape_cast %428 : vector<2x2x2x64xf32> to vector<8x64xf32>
    %c0_789 = arith.constant 0 : index
    %c512_790 = arith.constant 512 : index
    %430 = vector.load %arg11[%c0_789, %c512_790] : memref<128x576xf32, #tpu.memory_space<vmem>>, vector<8x64xf32>
    tpu.vector_store %arg11[%c0_789, %c512_790], %429 {strides = array<i32>} : memref<128x576xf32, #tpu.memory_space<vmem>>, vector<8x64xf32>,
    %c0_791 = arith.constant 0 : index
    %c0_792 = arith.constant 0 : index
    %431 = vector.load %arg11[%c0_791, %c0_792] : memref<128x576xf32, #tpu.memory_space<vmem>>, vector<8x576xf32>
    %cst_793 = arith.constant dense<0.000000e+00> : vector<8x64xf32>
    %432 = tpu.matmul %431, %350, %cst_793 {dimension_numbers = #tpu.dot_dimension_numbers<[1], [0], [0], [1], [0, 0, 1, 1], [], []>} : vector<8x576xf32>, vector<576x64xf32>, vector<8x64xf32> -> vector<8x64xf32>
    %433 = vector.broadcast %351 : vector<1x64xf32> to vector<8x64xf32>
    %434 = arith.addf %432, %433 : vector<8x64xf32>
    %cst_794 = arith.constant 0.000000e+00 : f32
    %435 = vector.broadcast %cst_794 : f32 to vector<8x64xf32>
    %436 = arith.cmpf oge, %434, %435 : vector<8x64xf32>
    %cst_795 = arith.constant 0.00999999977 : f32
    %437 = vector.broadcast %cst_795 : f32 to vector<8x64xf32>
    %438 = arith.mulf %437, %434 : vector<8x64xf32>
    %439 = arith.select %436, %434, %438 : vector<8x64xi1>, vector<8x64xf32>
    %440 = arith.addf %345, %439 : vector<8x64xf32>
    %441 = vector.shape_cast %440 : vector<8x64xf32> to vector<2x4x64xf32>
    %442 = vector.extract_strided_slice %441 {offsets = [0, 0, 0], sizes = [2, 1, 64], strides = [1, 1, 1]} : vector<2x4x64xf32> to vector<2x1x64xf32>
    %443 = vector.shape_cast %442 : vector<2x1x64xf32> to vector<2x64xf32>
    %c0_796 = arith.constant 0 : index
    %c0_797 = arith.constant 0 : index
    %444 = vector.load %arg11[%c0_796, %c0_797] : memref<128x576xf32, #tpu.memory_space<vmem>>, vector<2x64xf32>
    tpu.vector_store %arg11[%c0_796, %c0_797], %443 {strides = array<i32>} : memref<128x576xf32, #tpu.memory_space<vmem>>, vector<2x64xf32>,
    %445 = vector.extract_strided_slice %441 {offsets = [0, 1, 0], sizes = [2, 1, 64], strides = [1, 1, 1]} : vector<2x4x64xf32> to vector<2x1x64xf32>
    %446 = vector.shape_cast %445 : vector<2x1x64xf32> to vector<2x64xf32>
    %c0_798 = arith.constant 0 : index
    %c64_799 = arith.constant 64 : index
    %447 = vector.load %arg11[%c0_798, %c64_799] : memref<128x576xf32, #tpu.memory_space<vmem>>, vector<2x64xf32>
    tpu.vector_store %arg11[%c0_798, %c64_799], %446 {strides = array<i32>} : memref<128x576xf32, #tpu.memory_space<vmem>>, vector<2x64xf32>,
    %448 = vector.extract_strided_slice %441 {offsets = [0, 2, 0], sizes = [2, 1, 64], strides = [1, 1, 1]} : vector<2x4x64xf32> to vector<2x1x64xf32>
    %449 = vector.shape_cast %448 : vector<2x1x64xf32> to vector<2x64xf32>
    %c0_800 = arith.constant 0 : index
    %c128_801 = arith.constant 128 : index
    %450 = vector.load %arg11[%c0_800, %c128_801] : memref<128x576xf32, #tpu.memory_space<vmem>>, vector<2x64xf32>
    tpu.vector_store %arg11[%c0_800, %c128_801], %449 {strides = array<i32>} : memref<128x576xf32, #tpu.memory_space<vmem>>, vector<2x64xf32>,
    %451 = vector.extract_strided_slice %441 {offsets = [0, 3, 0], sizes = [2, 1, 64], strides = [1, 1, 1]} : vector<2x4x64xf32> to vector<2x1x64xf32>
    %452 = vector.shape_cast %451 : vector<2x1x64xf32> to vector<2x64xf32>
    %c0_802 = arith.constant 0 : index
    %c192_803 = arith.constant 192 : index
    %453 = vector.load %arg11[%c0_802, %c192_803] : memref<128x576xf32, #tpu.memory_space<vmem>>, vector<2x64xf32>
    tpu.vector_store %arg11[%c0_802, %c192_803], %452 {strides = array<i32>} : memref<128x576xf32, #tpu.memory_space<vmem>>, vector<2x64xf32>,
    %c0_804 = arith.constant 0 : index
    %c0_805 = arith.constant 0 : index
    %454 = vector.load %arg11[%c0_804, %c0_805] : memref<128x576xf32, #tpu.memory_space<vmem>>, vector<2x256xf32>
    %c0_806 = arith.constant 0 : index
    %c0_807 = arith.constant 0 : index
    %455 = vector.load %arg4[%c0_806, %c0_807] : memref<256x128xf32, #tpu.memory_space<vmem>>, vector<256x128xf32>
    %cst_808 = arith.constant dense<0.000000e+00> : vector<2x128xf32>
    %456 = tpu.matmul %454, %455, %cst_808 {dimension_numbers = #tpu.dot_dimension_numbers<[1], [0], [0], [1], [0, 0, 1, 1], [], []>} : vector<2x256xf32>, vector<256x128xf32>, vector<2x128xf32> -> vector<2x128xf32>
    %c9_809 = arith.constant 9 : index
    %c0_810 = arith.constant 0 : index
    %457 = vector.load %arg1[%c9_809, %c0_810] : memref<18x256xf32, #tpu.memory_space<vmem>>, vector<1x128xf32>
    %458 = vector.broadcast %457 : vector<1x128xf32> to vector<2x128xf32>
    %459 = arith.addf %456, %458 : vector<2x128xf32>
    %cst_811 = arith.constant 0.000000e+00 : f32
    %460 = vector.broadcast %cst_811 : f32 to vector<2x128xf32>
    %461 = arith.cmpf oge, %459, %460 : vector<2x128xf32>
    %cst_812 = arith.constant 0.00999999977 : f32
    %462 = vector.broadcast %cst_812 : f32 to vector<2x128xf32>
    %463 = arith.mulf %462, %459 : vector<2x128xf32>
    %464 = arith.select %461, %459, %463 : vector<2x128xi1>, vector<2x128xf32>
    %c0_813 = arith.constant 0 : index
    %c0_814 = arith.constant 0 : index
    %c0_815 = arith.constant 0 : index
    %465 = vector.load %arg5[%c0_813, %c0_814, %c0_815] : memref<5x128x128xf32, #tpu.memory_space<vmem>>, vector<1x128x128xf32>
    %466 = vector.shape_cast %465 : vector<1x128x128xf32> to vector<128x128xf32>
    %c10 = arith.constant 10 : index
    %c0_816 = arith.constant 0 : index
    %467 = vector.load %arg1[%c10, %c0_816] : memref<18x256xf32, #tpu.memory_space<vmem>>, vector<1x128xf32>
    %cst_817 = arith.constant dense<0.000000e+00> : vector<2x128xf32>
    %468 = tpu.matmul %464, %466, %cst_817 {dimension_numbers = #tpu.dot_dimension_numbers<[1], [0], [0], [1], [0, 0, 1, 1], [], []>} : vector<2x128xf32>, vector<128x128xf32>, vector<2x128xf32> -> vector<2x128xf32>
    %469 = vector.broadcast %467 : vector<1x128xf32> to vector<2x128xf32>
    %470 = arith.addf %468, %469 : vector<2x128xf32>
    %cst_818 = arith.constant 0.000000e+00 : f32
    %471 = vector.broadcast %cst_818 : f32 to vector<2x128xf32>
    %472 = arith.cmpf oge, %470, %471 : vector<2x128xf32>
    %cst_819 = arith.constant 0.00999999977 : f32
    %473 = vector.broadcast %cst_819 : f32 to vector<2x128xf32>
    %474 = arith.mulf %473, %470 : vector<2x128xf32>
    %475 = arith.select %472, %470, %474 : vector<2x128xi1>, vector<2x128xf32>
    %c1_820 = arith.constant 1 : index
    %c0_821 = arith.constant 0 : index
    %c0_822 = arith.constant 0 : index
    %476 = vector.load %arg5[%c1_820, %c0_821, %c0_822] : memref<5x128x128xf32, #tpu.memory_space<vmem>>, vector<1x128x128xf32>
    %477 = vector.shape_cast %476 : vector<1x128x128xf32> to vector<128x128xf32>
    %c11 = arith.constant 11 : index
    %c0_823 = arith.constant 0 : index
    %478 = vector.load %arg1[%c11, %c0_823] : memref<18x256xf32, #tpu.memory_space<vmem>>, vector<1x128xf32>
    %cst_824 = arith.constant dense<0.000000e+00> : vector<2x128xf32>
    %479 = tpu.matmul %475, %477, %cst_824 {dimension_numbers = #tpu.dot_dimension_numbers<[1], [0], [0], [1], [0, 0, 1, 1], [], []>} : vector<2x128xf32>, vector<128x128xf32>, vector<2x128xf32> -> vector<2x128xf32>
    %480 = vector.broadcast %478 : vector<1x128xf32> to vector<2x128xf32>
    %481 = arith.addf %479, %480 : vector<2x128xf32>
    %cst_825 = arith.constant 0.000000e+00 : f32
    %482 = vector.broadcast %cst_825 : f32 to vector<2x128xf32>
    %483 = arith.cmpf oge, %481, %482 : vector<2x128xf32>
    %cst_826 = arith.constant 0.00999999977 : f32
    %484 = vector.broadcast %cst_826 : f32 to vector<2x128xf32>
    %485 = arith.mulf %484, %481 : vector<2x128xf32>
    %486 = arith.select %483, %481, %485 : vector<2x128xi1>, vector<2x128xf32>
    %487 = arith.addf %464, %486 : vector<2x128xf32>
    %c2_827 = arith.constant 2 : index
    %c0_828 = arith.constant 0 : index
    %c0_829 = arith.constant 0 : index
    %488 = vector.load %arg5[%c2_827, %c0_828, %c0_829] : memref<5x128x128xf32, #tpu.memory_space<vmem>>, vector<1x128x128xf32>
    %489 = vector.shape_cast %488 : vector<1x128x128xf32> to vector<128x128xf32>
    %c12_830 = arith.constant 12 : index
    %c0_831 = arith.constant 0 : index
    %490 = vector.load %arg1[%c12_830, %c0_831] : memref<18x256xf32, #tpu.memory_space<vmem>>, vector<1x128xf32>
    %cst_832 = arith.constant dense<0.000000e+00> : vector<2x128xf32>
    %491 = tpu.matmul %487, %489, %cst_832 {dimension_numbers = #tpu.dot_dimension_numbers<[1], [0], [0], [1], [0, 0, 1, 1], [], []>} : vector<2x128xf32>, vector<128x128xf32>, vector<2x128xf32> -> vector<2x128xf32>
    %492 = vector.broadcast %490 : vector<1x128xf32> to vector<2x128xf32>
    %493 = arith.addf %491, %492 : vector<2x128xf32>
    %cst_833 = arith.constant 0.000000e+00 : f32
    %494 = vector.broadcast %cst_833 : f32 to vector<2x128xf32>
    %495 = arith.cmpf oge, %493, %494 : vector<2x128xf32>
    %cst_834 = arith.constant 0.00999999977 : f32
    %496 = vector.broadcast %cst_834 : f32 to vector<2x128xf32>
    %497 = arith.mulf %496, %493 : vector<2x128xf32>
    %498 = arith.select %495, %493, %497 : vector<2x128xi1>, vector<2x128xf32>
    %c3_835 = arith.constant 3 : index
    %c0_836 = arith.constant 0 : index
    %c0_837 = arith.constant 0 : index
    %499 = vector.load %arg5[%c3_835, %c0_836, %c0_837] : memref<5x128x128xf32, #tpu.memory_space<vmem>>, vector<1x128x128xf32>
    %500 = vector.shape_cast %499 : vector<1x128x128xf32> to vector<128x128xf32>
    %c13 = arith.constant 13 : index
    %c0_838 = arith.constant 0 : index
    %501 = vector.load %arg1[%c13, %c0_838] : memref<18x256xf32, #tpu.memory_space<vmem>>, vector<1x128xf32>
    %cst_839 = arith.constant dense<0.000000e+00> : vector<2x128xf32>
    %502 = tpu.matmul %498, %500, %cst_839 {dimension_numbers = #tpu.dot_dimension_numbers<[1], [0], [0], [1], [0, 0, 1, 1], [], []>} : vector<2x128xf32>, vector<128x128xf32>, vector<2x128xf32> -> vector<2x128xf32>
    %503 = vector.broadcast %501 : vector<1x128xf32> to vector<2x128xf32>
    %504 = arith.addf %502, %503 : vector<2x128xf32>
    %cst_840 = arith.constant 0.000000e+00 : f32
    %505 = vector.broadcast %cst_840 : f32 to vector<2x128xf32>
    %506 = arith.cmpf oge, %504, %505 : vector<2x128xf32>
    %cst_841 = arith.constant 0.00999999977 : f32
    %507 = vector.broadcast %cst_841 : f32 to vector<2x128xf32>
    %508 = arith.mulf %507, %504 : vector<2x128xf32>
    %509 = arith.select %506, %504, %508 : vector<2x128xi1>, vector<2x128xf32>
    %c4_842 = arith.constant 4 : index
    %c0_843 = arith.constant 0 : index
    %c0_844 = arith.constant 0 : index
    %510 = vector.load %arg5[%c4_842, %c0_843, %c0_844] : memref<5x128x128xf32, #tpu.memory_space<vmem>>, vector<1x128x128xf32>
    %511 = vector.shape_cast %510 : vector<1x128x128xf32> to vector<128x128xf32>
    %c14 = arith.constant 14 : index
    %c0_845 = arith.constant 0 : index
    %512 = vector.load %arg1[%c14, %c0_845] : memref<18x256xf32, #tpu.memory_space<vmem>>, vector<1x128xf32>
    %cst_846 = arith.constant dense<0.000000e+00> : vector<2x128xf32>
    %513 = tpu.matmul %509, %511, %cst_846 {dimension_numbers = #tpu.dot_dimension_numbers<[1], [0], [0], [1], [0, 0, 1, 1], [], []>} : vector<2x128xf32>, vector<128x128xf32>, vector<2x128xf32> -> vector<2x128xf32>
    %514 = vector.broadcast %512 : vector<1x128xf32> to vector<2x128xf32>
    %515 = arith.addf %513, %514 : vector<2x128xf32>
    %cst_847 = arith.constant 0.000000e+00 : f32
    %516 = vector.broadcast %cst_847 : f32 to vector<2x128xf32>
    %517 = arith.cmpf oge, %515, %516 : vector<2x128xf32>
    %cst_848 = arith.constant 0.00999999977 : f32
    %518 = vector.broadcast %cst_848 : f32 to vector<2x128xf32>
    %519 = arith.mulf %518, %515 : vector<2x128xf32>
    %520 = arith.select %517, %515, %519 : vector<2x128xi1>, vector<2x128xf32>
    %521 = arith.addf %498, %520 : vector<2x128xf32>
    %c0_849 = arith.constant 0 : index
    %c0_850 = arith.constant 0 : index
    %522 = vector.load %arg6[%c0_849, %c0_850] : memref<128x256xf32, #tpu.memory_space<vmem>>, vector<128x256xf32>
    %c15_851 = arith.constant 15 : index
    %c0_852 = arith.constant 0 : index
    %523 = vector.load %arg1[%c15_851, %c0_852] : memref<18x256xf32, #tpu.memory_space<vmem>>, vector<1x256xf32>
    %cst_853 = arith.constant dense<0.000000e+00> : vector<2x256xf32>
    %524 = tpu.matmul %521, %522, %cst_853 {dimension_numbers = #tpu.dot_dimension_numbers<[1], [0], [0], [1], [0, 0, 1, 1], [], []>} : vector<2x128xf32>, vector<128x256xf32>, vector<2x256xf32> -> vector<2x256xf32>
    %525 = vector.broadcast %523 : vector<1x256xf32> to vector<2x256xf32>
    %526 = arith.addf %524, %525 : vector<2x256xf32>
    %cst_854 = arith.constant 0.000000e+00 : f32
    %527 = vector.broadcast %cst_854 : f32 to vector<2x256xf32>
    %528 = arith.cmpf oge, %526, %527 : vector<2x256xf32>
    %cst_855 = arith.constant 0.00999999977 : f32
    %529 = vector.broadcast %cst_855 : f32 to vector<2x256xf32>
    %530 = arith.mulf %529, %526 : vector<2x256xf32>
    %531 = arith.select %528, %526, %530 : vector<2x256xi1>, vector<2x256xf32>
    %c0_856 = arith.constant 0 : index
    %c0_857 = arith.constant 0 : index
    %c0_858 = arith.constant 0 : index
    %532 = vector.load %arg7[%c0_856, %c0_857, %c0_858] : memref<2x256x256xf32, #tpu.memory_space<vmem>>, vector<1x256x256xf32>
    %533 = vector.shape_cast %532 : vector<1x256x256xf32> to vector<256x256xf32>
    %c16 = arith.constant 16 : index
    %c0_859 = arith.constant 0 : index
    %534 = vector.load %arg1[%c16, %c0_859] : memref<18x256xf32, #tpu.memory_space<vmem>>, vector<1x256xf32>
    %cst_860 = arith.constant dense<0.000000e+00> : vector<2x256xf32>
    %535 = tpu.matmul %531, %533, %cst_860 {dimension_numbers = #tpu.dot_dimension_numbers<[1], [0], [0], [1], [0, 0, 1, 1], [], []>} : vector<2x256xf32>, vector<256x256xf32>, vector<2x256xf32> -> vector<2x256xf32>
    %536 = vector.broadcast %534 : vector<1x256xf32> to vector<2x256xf32>
    %537 = arith.addf %535, %536 : vector<2x256xf32>
    %cst_861 = arith.constant 0.000000e+00 : f32
    %538 = vector.broadcast %cst_861 : f32 to vector<2x256xf32>
    %539 = arith.cmpf oge, %537, %538 : vector<2x256xf32>
    %cst_862 = arith.constant 0.00999999977 : f32
    %540 = vector.broadcast %cst_862 : f32 to vector<2x256xf32>
    %541 = arith.mulf %540, %537 : vector<2x256xf32>
    %542 = arith.select %539, %537, %541 : vector<2x256xi1>, vector<2x256xf32>
    %c1_863 = arith.constant 1 : index
    %c0_864 = arith.constant 0 : index
    %c0_865 = arith.constant 0 : index
    %543 = vector.load %arg7[%c1_863, %c0_864, %c0_865] : memref<2x256x256xf32, #tpu.memory_space<vmem>>, vector<1x256x256xf32>
    %544 = vector.shape_cast %543 : vector<1x256x256xf32> to vector<256x256xf32>
    %c17 = arith.constant 17 : index
    %c0_866 = arith.constant 0 : index
    %545 = vector.load %arg1[%c17, %c0_866] : memref<18x256xf32, #tpu.memory_space<vmem>>, vector<1x256xf32>
    %cst_867 = arith.constant dense<0.000000e+00> : vector<2x256xf32>
    %546 = tpu.matmul %542, %544, %cst_867 {dimension_numbers = #tpu.dot_dimension_numbers<[1], [0], [0], [1], [0, 0, 1, 1], [], []>} : vector<2x256xf32>, vector<256x256xf32>, vector<2x256xf32> -> vector<2x256xf32>
    %547 = vector.broadcast %545 : vector<1x256xf32> to vector<2x256xf32>
    %548 = arith.addf %546, %547 : vector<2x256xf32>
    %cst_868 = arith.constant 0.000000e+00 : f32
    %549 = vector.broadcast %cst_868 : f32 to vector<2x256xf32>
    %550 = arith.cmpf oge, %548, %549 : vector<2x256xf32>
    %cst_869 = arith.constant 0.00999999977 : f32
    %551 = vector.broadcast %cst_869 : f32 to vector<2x256xf32>
    %552 = arith.mulf %551, %548 : vector<2x256xf32>
    %553 = arith.select %550, %548, %552 : vector<2x256xi1>, vector<2x256xf32>
    %554 = arith.addf %531, %553 : vector<2x256xf32>
    %c0_870 = arith.constant 0 : index
    %c0_871 = arith.constant 0 : index
    %555 = vector.load %arg8[%c0_870, %c0_871] : memref<2x256xf32, #tpu.memory_space<vmem>>, vector<2x256xf32>
    tpu.vector_store %arg8[%c0_870, %c0_871], %554 {strides = array<i32>} : memref<2x256xf32, #tpu.memory_space<vmem>>, vector<2x256xf32>,
    return
  }
}

</mosaic_0001>

<llo_original>
// kernel: resnet_forward.1
$region0: #{resnet_forward.1}
  #allocation0 [shape = 'u32[]', space=smem, size = 0x4, offset = 0x4, fixed_abs, tag = 'smem constant byte address 0x4 - core index']
  #allocation1 [shape = 'u32[144,128]{1,0:T(1,128)}', space=vmem, size = 0x12000, scoped, tag = 'internal scratch']
  #allocation2 [shape = 'f32[2,10,10,64]{3,2,1,0:T(8,128)}', space=vmem, size = 0x28000, scoped, tag = 'scratch operand']
  #allocation3 [shape = 'f32[2,9,2,9,128]{4,3,2,1,0:T(8,128)}', space=vmem, size = 0x48000, scoped, tag = 'scratch operand']
  #allocation4 [shape = 'f32[128,576]{1,0:T(8,128)}', space=vmem, size = 0x50000, scoped, tag = 'scratch operand']
  %s0 = inlined_call_operand.vmem [shape: f32[2,8,2,8,6], index: 0, kind: input, shape index: {}]
  %s1 = inlined_call_operand.vmem [shape: f32[18,256], index: 1, kind: input, shape index: {}]
  %s2 = inlined_call_operand.vmem [shape: f32[27,64], index: 2, kind: input, shape index: {}]
  %s3 = inlined_call_operand.vmem [shape: f32[8,576,64], index: 3, kind: input, shape index: {}]
  %s4 = inlined_call_operand.vmem [shape: f32[256,128], index: 4, kind: input, shape index: {}]
  %s5 = inlined_call_operand.vmem [shape: f32[5,128,128], index: 5, kind: input, shape index: {}]
  %s6 = inlined_call_operand.vmem [shape: f32[128,256], index: 6, kind: input, shape index: {}]
  %s7 = inlined_call_operand.vmem [shape: f32[2,256,256], index: 7, kind: input, shape index: {}]
  %s8 = inlined_call_operand.vmem [shape: f32[2,256], index: 8, kind: output, shape index: {}]
  %s9 = sld [smem:[#allocation0]]
  $region42: #{resnet_forward.1} parent=0
    _
  %s11 = ssub.s32 1, %s9
  %s12 = scalar_select 0, %s11, %s9
  // Predicated region
  $region2: #{resnet_forward.1} parent=0 // pred_check
    _
  $region3: #{resnet_forward.1} parent=0 // pred_check_branch
    %14 = sbr.rel (0) target = $region5
  $region4: #{resnet_forward.1} parent=0 // pred_region
    _
  $region5: #{resnet_forward.1} parent=0 // pred_fallthru
    _
  // Predicated region
  $region6: #{resnet_forward.1} parent=0 // pred_check
    _
  $region7: #{resnet_forward.1} parent=0 // pred_check_branch
    %16 = sbr.rel (0) target = $region9
  $region8: #{resnet_forward.1} parent=0 // pred_region
    _
  $region9: #{resnet_forward.1} parent=0 // pred_fallthru
    _
  // Predicated region
  $region10: #{resnet_forward.1} parent=0 // pred_check
    _
  $region11: #{resnet_forward.1} parent=0 // pred_check_branch
    %18 = sbr.rel (0) target = $region13
  $region12: #{resnet_forward.1} parent=0 // pred_region
    _
  $region13: #{resnet_forward.1} parent=0 // pred_fallthru
    _
  // Predicated region
  $region14: #{resnet_forward.1} parent=0 // pred_check
    _
  $region15: #{resnet_forward.1} parent=0 // pred_check_branch
    %20 = sbr.rel (0) target = $region17
  $region16: #{resnet_forward.1} parent=0 // pred_region
    _
  $region17: #{resnet_forward.1} parent=0 // pred_fallthru
    _
  // Predicated region
  $region18: #{resnet_forward.1} parent=0 // pred_check
    _
  $region19: #{resnet_forward.1} parent=0 // pred_check_branch
    %22 = sbr.rel (0) target = $region21
  $region20: #{resnet_forward.1} parent=0 // pred_region
    _
  $region21: #{resnet_forward.1} parent=0 // pred_fallthru
    _
  // Predicated region
  $region22: #{resnet_forward.1} parent=0 // pred_check
    _
  $region23: #{resnet_forward.1} parent=0 // pred_check_branch
    %24 = sbr.rel (0) target = $region25
  $region24: #{resnet_forward.1} parent=0 // pred_region
    _
  $region25: #{resnet_forward.1} parent=0 // pred_fallthru
    _
  // Predicated region
  $region26: #{resnet_forward.1} parent=0 // pred_check
    _
  $region27: #{resnet_forward.1} parent=0 // pred_check_branch
    %26 = sbr.rel (0) target = $region29
  $region28: #{resnet_forward.1} parent=0 // pred_region
    _
  $region29: #{resnet_forward.1} parent=0 // pred_fallthru
    _
  // Predicated region
  $region30: #{resnet_forward.1} parent=0 // pred_check
    _
  $region31: #{resnet_forward.1} parent=0 // pred_check_branch
    %28 = sbr.rel (0) target = $region33
  $region32: #{resnet_forward.1} parent=0 // pred_region
    _
  $region33: #{resnet_forward.1} parent=0 // pred_fallthru
    _
  %vm29 = vcmask 48128
  %30 = vst.msk [vmem:[#allocation3] sm:$0xff] %vm29, 0.0
  %vm31 = vcmask 40960
  %32 = vst.msk [vmem:[#allocation3 + $0x8] sm:$0x1] %vm31, 0.0
  %33 = vst.msk [vmem:[#allocation3 + $0x10] sm:$0xff] %vm29, 0.0
  %34 = vst.msk [vmem:[#allocation3 + $0x18] sm:$0x1] %vm31, 0.0
  %35 = vst.msk [vmem:[#allocation3 + $0x120] sm:$0xff] %vm29, 0.0
  %36 = vst.msk [vmem:[#allocation3 + $0x128] sm:$0x1] %vm31, 0.0
  %37 = vst.msk [vmem:[#allocation3 + $0x130] sm:$0xff] %vm29, 0.0
  %38 = vst.msk [vmem:[#allocation3 + $0x138] sm:$0x1] %vm31, 0.0
  %39 = vst.msk [vmem:[#allocation3] sm:$0x1] %vm31, 0.0
  %40 = vst.msk [vmem:[#allocation3 + $0x10] sm:$0x1] %vm31, 0.0
  %41 = vst.msk [vmem:[#allocation3 + $0x20] sm:$0x1] %vm31, 0.0
  %42 = vst.msk [vmem:[#allocation3 + $0x30] sm:$0x1] %vm31, 0.0
  %43 = vst.msk [vmem:[#allocation3 + $0x40] sm:$0x1] %vm31, 0.0
  %44 = vst.msk [vmem:[#allocation3 + $0x50] sm:$0x1] %vm31, 0.0
  %45 = vst.msk [vmem:[#allocation3 + $0x60] sm:$0x1] %vm31, 0.0
  %46 = vst.msk [vmem:[#allocation3 + $0x70] sm:$0x1] %vm31, 0.0
  %47 = vst.msk [vmem:[#allocation3 + $0x80] sm:$0x1] %vm31, 0.0
  %48 = vst.msk [vmem:[#allocation3 + $0x90] sm:$0x1] %vm31, 0.0
  %49 = vst.msk [vmem:[#allocation3 + $0xa0] sm:$0x1] %vm31, 0.0
  %50 = vst.msk [vmem:[#allocation3 + $0xb0] sm:$0x1] %vm31, 0.0
  %51 = vst.msk [vmem:[#allocation3 + $0xc0] sm:$0x1] %vm31, 0.0
  %52 = vst.msk [vmem:[#allocation3 + $0xd0] sm:$0x1] %vm31, 0.0
  %53 = vst.msk [vmem:[#allocation3 + $0xe0] sm:$0x1] %vm31, 0.0
  %54 = vst.msk [vmem:[#allocation3 + $0xf0] sm:$0x1] %vm31, 0.0
  %55 = vst.msk [vmem:[#allocation3 + $0x100] sm:$0x1] %vm31, 0.0
  %56 = vst.msk [vmem:[#allocation3 + $0x110] sm:$0x1] %vm31, 0.0
  %57 = vst.msk [vmem:[#allocation3 + $0x120] sm:$0x1] %vm31, 0.0
  %58 = vst.msk [vmem:[#allocation3 + $0x130] sm:$0x1] %vm31, 0.0
  %59 = vst.msk [vmem:[#allocation3 + $0x140] sm:$0x1] %vm31, 0.0
  %60 = vst.msk [vmem:[#allocation3 + $0x150] sm:$0x1] %vm31, 0.0
  %61 = vst.msk [vmem:[#allocation3 + $0x160] sm:$0x1] %vm31, 0.0
  %62 = vst.msk [vmem:[#allocation3 + $0x170] sm:$0x1] %vm31, 0.0
  %63 = vst.msk [vmem:[#allocation3 + $0x180] sm:$0x1] %vm31, 0.0
  %64 = vst.msk [vmem:[#allocation3 + $0x190] sm:$0x1] %vm31, 0.0
  %65 = vst.msk [vmem:[#allocation3 + $0x1a0] sm:$0x1] %vm31, 0.0
  %66 = vst.msk [vmem:[#allocation3 + $0x1b0] sm:$0x1] %vm31, 0.0
  %67 = vst.msk [vmem:[#allocation3 + $0x1c0] sm:$0x1] %vm31, 0.0
  %68 = vst.msk [vmem:[#allocation3 + $0x1d0] sm:$0x1] %vm31, 0.0
  %69 = vst.msk [vmem:[#allocation3 + $0x1e0] sm:$0x1] %vm31, 0.0
  %70 = vst.msk [vmem:[#allocation3 + $0x1f0] sm:$0x1] %vm31, 0.0
  %71 = vst.msk [vmem:[#allocation3 + $0x200] sm:$0x1] %vm31, 0.0
  %72 = vst.msk [vmem:[#allocation3 + $0x210] sm:$0x1] %vm31, 0.0
  %73 = vst.msk [vmem:[#allocation3 + $0x220] sm:$0x1] %vm31, 0.0
  %74 = vst.msk [vmem:[#allocation3 + $0x230] sm:$0x1] %vm31, 0.0
  %v75 = vld [vmem:[%s0] sm:$0xff]
  %v76 = vld [vmem:[%s0 + $0x8] sm:$0xff]
  %v77 = vld [vmem:[%s0 + $0x10] sm:$0xff]
  %v78 = vld [vmem:[%s0 + $0x18] sm:$0xff]
  %v79 = vld [vmem:[%s0 + $0x20] sm:$0xff]
  %v80 = vld [vmem:[%s0 + $0x28] sm:$0xff]
  %v81 = vld [vmem:[%s0 + $0x30] sm:$0xff]
  %v82 = vld [vmem:[%s0 + $0x38] sm:$0xff]
  %v83 = vld [vmem:[%s0 + $0x40] sm:$0xff]
  %v84 = vld [vmem:[%s0 + $0x48] sm:$0xff]
  %v85 = vld [vmem:[%s0 + $0x50] sm:$0xff]
  %v86 = vld [vmem:[%s0 + $0x58] sm:$0xff]
  %v87 = vld [vmem:[%s0 + $0x60] sm:$0xff]
  %v88 = vld [vmem:[%s0 + $0x68] sm:$0xff]
  %v89 = vld [vmem:[%s0 + $0x70] sm:$0xff]
  %v90 = vld [vmem:[%s0 + $0x78] sm:$0xff]
  %v91 = vld [vmem:[%s0 + $0x80] sm:$0xff]
  %v92 = vld [vmem:[%s0 + $0x88] sm:$0xff]
  %v93 = vld [vmem:[%s0 + $0x90] sm:$0xff]
  %v94 = vld [vmem:[%s0 + $0x98] sm:$0xff]
  %v95 = vld [vmem:[%s0 + $0xa0] sm:$0xff]
  %v96 = vld [vmem:[%s0 + $0xa8] sm:$0xff]
  %v97 = vld [vmem:[%s0 + $0xb0] sm:$0xff]
  %v98 = vld [vmem:[%s0 + $0xb8] sm:$0xff]
  %v99 = vld [vmem:[%s0 + $0xc0] sm:$0xff]
  %v100 = vld [vmem:[%s0 + $0xc8] sm:$0xff]
  %v101 = vld [vmem:[%s0 + $0xd0] sm:$0xff]
  %v102 = vld [vmem:[%s0 + $0xd8] sm:$0xff]
  %v103 = vld [vmem:[%s0 + $0xe0] sm:$0xff]
  %v104 = vld [vmem:[%s0 + $0xe8] sm:$0xff]
  %v105 = vld [vmem:[%s0 + $0xf0] sm:$0xff]
  %v106 = vld [vmem:[%s0 + $0xf8] sm:$0xff]
  %s107 = scalar_lea.vmem [#allocation3], 32
  %108 = vst.msk [vmem:[%s107 + $0x1] sm:$0xff] %vm29, %v75
  %109 = vst.msk [vmem:[%s107 + $0x11] sm:$0xff] %vm29, %v76
  %110 = vst.msk [vmem:[%s107 + $0x21] sm:$0xff] %vm29, %v77
  %111 = vst.msk [vmem:[%s107 + $0x31] sm:$0xff] %vm29, %v78
  %112 = vst.msk [vmem:[%s107 + $0x41] sm:$0xff] %vm29, %v79
  %113 = vst.msk [vmem:[%s107 + $0x51] sm:$0xff] %vm29, %v80
  %114 = vst.msk [vmem:[%s107 + $0x61] sm:$0xff] %vm29, %v81
  %115 = vst.msk [vmem:[%s107 + $0x71] sm:$0xff] %vm29, %v82
  %116 = vst.msk [vmem:[%s107 + $0x81] sm:$0xff] %vm29, %v83
  %117 = vst.msk [vmem:[%s107 + $0x91] sm:$0xff] %vm29, %v84
  %118 = vst.msk [vmem:[%s107 + $0xa1] sm:$0xff] %vm29, %v85
  %119 = vst.msk [vmem:[%s107 + $0xb1] sm:$0xff] %vm29, %v86
  %120 = vst.msk [vmem:[%s107 + $0xc1] sm:$0xff] %vm29, %v87
  %121 = vst.msk [vmem:[%s107 + $0xd1] sm:$0xff] %vm29, %v88
  %122 = vst.msk [vmem:[%s107 + $0xe1] sm:$0xff] %vm29, %v89
  %123 = vst.msk [vmem:[%s107 + $0xf1] sm:$0xff] %vm29, %v90
  %124 = vst.msk [vmem:[%s107 + $0x121] sm:$0xff] %vm29, %v91
  %125 = vst.msk [vmem:[%s107 + $0x131] sm:$0xff] %vm29, %v92
  %126 = vst.msk [vmem:[%s107 + $0x141] sm:$0xff] %vm29, %v93
  %127 = vst.msk [vmem:[%s107 + $0x151] sm:$0xff] %vm29, %v94
  %128 = vst.msk [vmem:[%s107 + $0x161] sm:$0xff] %vm29, %v95
  %129 = vst.msk [vmem:[%s107 + $0x171] sm:$0xff] %vm29, %v96
  %130 = vst.msk [vmem:[%s107 + $0x181] sm:$0xff] %vm29, %v97
  %131 = vst.msk [vmem:[%s107 + $0x191] sm:$0xff] %vm29, %v98
  %132 = vst.msk [vmem:[%s107 + $0x1a1] sm:$0xff] %vm29, %v99
  %133 = vst.msk [vmem:[%s107 + $0x1b1] sm:$0xff] %vm29, %v100
  %134 = vst.msk [vmem:[%s107 + $0x1c1] sm:$0xff] %vm29, %v101
  %135 = vst.msk [vmem:[%s107 + $0x1d1] sm:$0xff] %vm29, %v102
  %136 = vst.msk [vmem:[%s107 + $0x1e1] sm:$0xff] %vm29, %v103
  %137 = vst.msk [vmem:[%s107 + $0x1f1] sm:$0xff] %vm29, %v104
  %138 = vst.msk [vmem:[%s107 + $0x201] sm:$0xff] %vm29, %v105
  %139 = vst.msk [vmem:[%s107 + $0x211] sm:$0xff] %vm29, %v106
  %v140 = vld [vmem:[%s2] sm:$0xff]
  %v141 = vld [vmem:[%s2 + $0x8] sm:$0xff]
  %v142 = vld [vmem:[%s2 + $0x10] sm:$0xff]
  %v143 = vld [vmem:[%s2 + $0x18] sm:$0x7]
  %v144 = vld [vmem:[%s1] ss:$0 sm:$0xff]
  %s145 = scalar_lea.vmem [#allocation3], 16
  %v146 = vld [vmem:[%s145] sm:$0xff]
  %v147 = vld [vmem:[%s145 + $0x20] sm:$0xff]
  %v148 = vld [vmem:[%s145 + $0x40] sm:$0xff]
  %v149 = vld [vmem:[%s145 + $0x60] sm:$0xff]
  %v150 = vld [vmem:[%s145 + $0x80] sm:$0xff]
  %v151 = vld [vmem:[%s145 + $0xa0] sm:$0xff]
  %v152 = vld [vmem:[%s145 + $0xc0] sm:$0xff]
  %v153 = vld [vmem:[%s145 + $0xe0] sm:$0xff]
  %v154 = vld [vmem:[%s145 + $0x120] sm:$0xff]
  %v155 = vld [vmem:[%s145 + $0x140] sm:$0xff]
  %v156 = vld [vmem:[%s145 + $0x160] sm:$0xff]
  %v157 = vld [vmem:[%s145 + $0x180] sm:$0xff]
  %v158 = vld [vmem:[%s145 + $0x1a0] sm:$0xff]
  %v159 = vld [vmem:[%s145 + $0x1c0] sm:$0xff]
  %v160 = vld [vmem:[%s145 + $0x1e0] sm:$0xff]
  %v161 = vld [vmem:[%s145 + $0x200] sm:$0xff]
  %178 = vrot.lane.b32.xlu0 %v146, 125
  %v179 = vpop.permute.xlu0 %178
  %180 = vrot.lane.b32.xlu0 %v147, 125
  %v181 = vpop.permute.xlu0 %180
  %182 = vrot.lane.b32.xlu0 %v148, 125
  %v183 = vpop.permute.xlu0 %182
  %184 = vrot.lane.b32.xlu0 %v149, 125
  %v185 = vpop.permute.xlu0 %184
  %186 = vrot.lane.b32.xlu0 %v150, 125
  %v187 = vpop.permute.xlu0 %186
  %188 = vrot.lane.b32.xlu0 %v151, 125
  %v189 = vpop.permute.xlu0 %188
  %190 = vrot.lane.b32.xlu0 %v152, 125
  %v191 = vpop.permute.xlu0 %190
  %192 = vrot.lane.b32.xlu0 %v153, 125
  %v193 = vpop.permute.xlu0 %192
  %194 = vrot.lane.b32.xlu0 %v154, 125
  %v195 = vpop.permute.xlu0 %194
  %196 = vrot.lane.b32.xlu0 %v155, 125
  %v197 = vpop.permute.xlu0 %196
  %198 = vrot.lane.b32.xlu0 %v156, 125
  %v199 = vpop.permute.xlu0 %198
  %200 = vrot.lane.b32.xlu0 %v157, 125
  %v201 = vpop.permute.xlu0 %200
  %202 = vrot.lane.b32.xlu0 %v158, 125
  %v203 = vpop.permute.xlu0 %202
  %204 = vrot.lane.b32.xlu0 %v159, 125
  %v205 = vpop.permute.xlu0 %204
  %206 = vrot.lane.b32.xlu0 %v160, 125
  %v207 = vpop.permute.xlu0 %206
  %208 = vrot.lane.b32.xlu0 %v161, 125
  %v209 = vpop.permute.xlu0 %208
  %vm226 = vcmask 23552
  %227 = vst.msk [vmem:[#allocation4] sm:$0xff] %vm226, %v179
  %228 = vst.msk [vmem:[#allocation4 + $0x28] sm:$0xff] %vm226, %v181
  %229 = vst.msk [vmem:[#allocation4 + $0x50] sm:$0xff] %vm226, %v183
  %230 = vst.msk [vmem:[#allocation4 + $0x78] sm:$0xff] %vm226, %v185
  %231 = vst.msk [vmem:[#allocation4 + $0xa0] sm:$0xff] %vm226, %v187
  %232 = vst.msk [vmem:[#allocation4 + $0xc8] sm:$0xff] %vm226, %v189
  %233 = vst.msk [vmem:[#allocation4 + $0xf0] sm:$0xff] %vm226, %v191
  %234 = vst.msk [vmem:[#allocation4 + $0x118] sm:$0xff] %vm226, %v193
  %235 = vst.msk [vmem:[#allocation4 + $0x140] sm:$0xff] %vm226, %v195
  %236 = vst.msk [vmem:[#allocation4 + $0x168] sm:$0xff] %vm226, %v197
  %237 = vst.msk [vmem:[#allocation4 + $0x190] sm:$0xff] %vm226, %v199
  %238 = vst.msk [vmem:[#allocation4 + $0x1b8] sm:$0xff] %vm226, %v201
  %239 = vst.msk [vmem:[#allocation4 + $0x1e0] sm:$0xff] %vm226, %v203
  %240 = vst.msk [vmem:[#allocation4 + $0x208] sm:$0xff] %vm226, %v205
  %241 = vst.msk [vmem:[#allocation4 + $0x230] sm:$0xff] %vm226, %v207
  %242 = vst.msk [vmem:[#allocation4 + $0x258] sm:$0xff] %vm226, %v209
  %v243 = vld [vmem:[%s145 + $0x1] sm:$0xff]
  %v244 = vld [vmem:[%s145 + $0x21] sm:$0xff]
  %v245 = vld [vmem:[%s145 + $0x41] sm:$0xff]
  %v246 = vld [vmem:[%s145 + $0x61] sm:$0xff]
  %v247 = vld [vmem:[%s145 + $0x81] sm:$0xff]
  %v248 = vld [vmem:[%s145 + $0xa1] sm:$0xff]
  %v249 = vld [vmem:[%s145 + $0xc1] sm:$0xff]
  %v250 = vld [vmem:[%s145 + $0xe1] sm:$0xff]
  %v251 = vld [vmem:[%s145 + $0x121] sm:$0xff]
  %v252 = vld [vmem:[%s145 + $0x141] sm:$0xff]
  %v253 = vld [vmem:[%s145 + $0x161] sm:$0xff]
  %v254 = vld [vmem:[%s145 + $0x181] sm:$0xff]
  %v255 = vld [vmem:[%s145 + $0x1a1] sm:$0xff]
  %v256 = vld [vmem:[%s145 + $0x1c1] sm:$0xff]
  %v257 = vld [vmem:[%s145 + $0x1e1] sm:$0xff]
  %v258 = vld [vmem:[%s145 + $0x201] sm:$0xff]
  %275 = vrot.lane.b32.xlu0 %v243, 3
  %v276 = vpop.permute.xlu0 %275
  %277 = vrot.lane.b32.xlu0 %v244, 3
  %v278 = vpop.permute.xlu0 %277
  %279 = vrot.lane.b32.xlu0 %v245, 3
  %v280 = vpop.permute.xlu0 %279
  %281 = vrot.lane.b32.xlu0 %v246, 3
  %v282 = vpop.permute.xlu0 %281
  %283 = vrot.lane.b32.xlu0 %v247, 3
  %v284 = vpop.permute.xlu0 %283
  %285 = vrot.lane.b32.xlu0 %v248, 3
  %v286 = vpop.permute.xlu0 %285
  %287 = vrot.lane.b32.xlu0 %v249, 3
  %v288 = vpop.permute.xlu0 %287
  %289 = vrot.lane.b32.xlu0 %v250, 3
  %v290 = vpop.permute.xlu0 %289
  %291 = vrot.lane.b32.xlu0 %v251, 3
  %v292 = vpop.permute.xlu0 %291
  %293 = vrot.lane.b32.xlu0 %v252, 3
  %v294 = vpop.permute.xlu0 %293
  %295 = vrot.lane.b32.xlu0 %v253, 3
  %v296 = vpop.permute.xlu0 %295
  %297 = vrot.lane.b32.xlu0 %v254, 3
  %v298 = vpop.permute.xlu0 %297
  %299 = vrot.lane.b32.xlu0 %v255, 3
  %v300 = vpop.permute.xlu0 %299
  %301 = vrot.lane.b32.xlu0 %v256, 3
  %v302 = vpop.permute.xlu0 %301
  %303 = vrot.lane.b32.xlu0 %v257, 3
  %v304 = vpop.permute.xlu0 %303
  %305 = vrot.lane.b32.xlu0 %v258, 3
  %v306 = vpop.permute.xlu0 %305
  %vm323 = vcmask 48152
  %324 = vst.msk [vmem:[#allocation4] sm:$0xff] %vm323, %v276
  %325 = vst.msk [vmem:[#allocation4 + $0x28] sm:$0xff] %vm323, %v278
  %326 = vst.msk [vmem:[#allocation4 + $0x50] sm:$0xff] %vm323, %v280
  %327 = vst.msk [vmem:[#allocation4 + $0x78] sm:$0xff] %vm323, %v282
  %328 = vst.msk [vmem:[#allocation4 + $0xa0] sm:$0xff] %vm323, %v284
  %329 = vst.msk [vmem:[#allocation4 + $0xc8] sm:$0xff] %vm323, %v286
  %330 = vst.msk [vmem:[#allocation4 + $0xf0] sm:$0xff] %vm323, %v288
  %331 = vst.msk [vmem:[#allocation4 + $0x118] sm:$0xff] %vm323, %v290
  %332 = vst.msk [vmem:[#allocation4 + $0x140] sm:$0xff] %vm323, %v292
  %333 = vst.msk [vmem:[#allocation4 + $0x168] sm:$0xff] %vm323, %v294
  %334 = vst.msk [vmem:[#allocation4 + $0x190] sm:$0xff] %vm323, %v296
  %335 = vst.msk [vmem:[#allocation4 + $0x1b8] sm:$0xff] %vm323, %v298
  %336 = vst.msk [vmem:[#allocation4 + $0x1e0] sm:$0xff] %vm323, %v300
  %337 = vst.msk [vmem:[#allocation4 + $0x208] sm:$0xff] %vm323, %v302
  %338 = vst.msk [vmem:[#allocation4 + $0x230] sm:$0xff] %vm323, %v304
  %339 = vst.msk [vmem:[#allocation4 + $0x258] sm:$0xff] %vm323, %v306
  %v340 = vld [vmem:[%s145 + $0x1] sm:$0xff]
  %v341 = vld [vmem:[%s145 + $0x21] sm:$0xff]
  %v342 = vld [vmem:[%s145 + $0x41] sm:$0xff]
  %v343 = vld [vmem:[%s145 + $0x61] sm:$0xff]
  %v344 = vld [vmem:[%s145 + $0x81] sm:$0xff]
  %v345 = vld [vmem:[%s145 + $0xa1] sm:$0xff]
  %v346 = vld [vmem:[%s145 + $0xc1] sm:$0xff]
  %v347 = vld [vmem:[%s145 + $0xe1] sm:$0xff]
  %v348 = vld [vmem:[%s145 + $0x121] sm:$0xff]
  %v349 = vld [vmem:[%s145 + $0x141] sm:$0xff]
  %v350 = vld [vmem:[%s145 + $0x161] sm:$0xff]
  %v351 = vld [vmem:[%s145 + $0x181] sm:$0xff]
  %v352 = vld [vmem:[%s145 + $0x1a1] sm:$0xff]
  %v353 = vld [vmem:[%s145 + $0x1c1] sm:$0xff]
  %v354 = vld [vmem:[%s145 + $0x1e1] sm:$0xff]
  %v355 = vld [vmem:[%s145 + $0x201] sm:$0xff]
  %372 = vrot.lane.b32.xlu0 %v340, 3
  %v373 = vpop.permute.xlu0 %372
  %374 = vrot.lane.b32.xlu0 %v341, 3
  %v375 = vpop.permute.xlu0 %374
  %376 = vrot.lane.b32.xlu0 %v342, 3
  %v377 = vpop.permute.xlu0 %376
  %378 = vrot.lane.b32.xlu0 %v343, 3
  %v379 = vpop.permute.xlu0 %378
  %380 = vrot.lane.b32.xlu0 %v344, 3
  %v381 = vpop.permute.xlu0 %380
  %382 = vrot.lane.b32.xlu0 %v345, 3
  %v383 = vpop.permute.xlu0 %382
  %384 = vrot.lane.b32.xlu0 %v346, 3
  %v385 = vpop.permute.xlu0 %384
  %386 = vrot.lane.b32.xlu0 %v347, 3
  %v387 = vpop.permute.xlu0 %386
  %388 = vrot.lane.b32.xlu0 %v348, 3
  %v389 = vpop.permute.xlu0 %388
  %390 = vrot.lane.b32.xlu0 %v349, 3
  %v391 = vpop.permute.xlu0 %390
  %392 = vrot.lane.b32.xlu0 %v350, 3
  %v393 = vpop.permute.xlu0 %392
  %394 = vrot.lane.b32.xlu0 %v351, 3
  %v395 = vpop.permute.xlu0 %394
  %396 = vrot.lane.b32.xlu0 %v352, 3
  %v397 = vpop.permute.xlu0 %396
  %398 = vrot.lane.b32.xlu0 %v353, 3
  %v399 = vpop.permute.xlu0 %398
  %400 = vrot.lane.b32.xlu0 %v354, 3
  %v401 = vpop.permute.xlu0 %400
  %402 = vrot.lane.b32.xlu0 %v355, 3
  %v403 = vpop.permute.xlu0 %402
  %vm420 = vcmask 72752
  %421 = vst.msk [vmem:[#allocation4] sm:$0xff] %vm420, %v373
  %422 = vst.msk [vmem:[#allocation4 + $0x28] sm:$0xff] %vm420, %v375
  %423 = vst.msk [vmem:[#allocation4 + $0x50] sm:$0xff] %vm420, %v377
  %424 = vst.msk [vmem:[#allocation4 + $0x78] sm:$0xff] %vm420, %v379
  %425 = vst.msk [vmem:[#allocation4 + $0xa0] sm:$0xff] %vm420, %v381
  %426 = vst.msk [vmem:[#allocation4 + $0xc8] sm:$0xff] %vm420, %v383
  %427 = vst.msk [vmem:[#allocation4 + $0xf0] sm:$0xff] %vm420, %v385
  %428 = vst.msk [vmem:[#allocation4 + $0x118] sm:$0xff] %vm420, %v387
  %429 = vst.msk [vmem:[#allocation4 + $0x140] sm:$0xff] %vm420, %v389
  %430 = vst.msk [vmem:[#allocation4 + $0x168] sm:$0xff] %vm420, %v391
  %431 = vst.msk [vmem:[#allocation4 + $0x190] sm:$0xff] %vm420, %v393
  %432 = vst.msk [vmem:[#allocation4 + $0x1b8] sm:$0xff] %vm420, %v395
  %433 = vst.msk [vmem:[#allocation4 + $0x1e0] sm:$0xff] %vm420, %v397
  %434 = vst.msk [vmem:[#allocation4 + $0x208] sm:$0xff] %vm420, %v399
  %435 = vst.msk [vmem:[#allocation4 + $0x230] sm:$0xff] %vm420, %v401
  %436 = vst.msk [vmem:[#allocation4 + $0x258] sm:$0xff] %vm420, %v403
  %v437 = vld [vmem:[%s107] sm:$0xff]
  %v438 = vld [vmem:[%s107 + $0x20] sm:$0xff]
  %v439 = vld [vmem:[%s107 + $0x40] sm:$0xff]
  %v440 = vld [vmem:[%s107 + $0x60] sm:$0xff]
  %v441 = vld [vmem:[%s107 + $0x80] sm:$0xff]
  %v442 = vld [vmem:[%s107 + $0xa0] sm:$0xff]
  %v443 = vld [vmem:[%s107 + $0xc0] sm:$0xff]
  %v444 = vld [vmem:[%s107 + $0xe0] sm:$0xff]
  %v445 = vld [vmem:[%s107 + $0x120] sm:$0xff]
  %v446 = vld [vmem:[%s107 + $0x140] sm:$0xff]
  %v447 = vld [vmem:[%s107 + $0x160] sm:$0xff]
  %v448 = vld [vmem:[%s107 + $0x180] sm:$0xff]
  %v449 = vld [vmem:[%s107 + $0x1a0] sm:$0xff]
  %v450 = vld [vmem:[%s107 + $0x1c0] sm:$0xff]
  %v451 = vld [vmem:[%s107 + $0x1e0] sm:$0xff]
  %v452 = vld [vmem:[%s107 + $0x200] sm:$0xff]
  %469 = vrot.lane.b32.xlu0 %v437, 6
  %v470 = vpop.permute.xlu0 %469
  %471 = vrot.lane.b32.xlu0 %v438, 6
  %v472 = vpop.permute.xlu0 %471
  %473 = vrot.lane.b32.xlu0 %v439, 6
  %v474 = vpop.permute.xlu0 %473
  %475 = vrot.lane.b32.xlu0 %v440, 6
  %v476 = vpop.permute.xlu0 %475
  %477 = vrot.lane.b32.xlu0 %v441, 6
  %v478 = vpop.permute.xlu0 %477
  %479 = vrot.lane.b32.xlu0 %v442, 6
  %v480 = vpop.permute.xlu0 %479
  %481 = vrot.lane.b32.xlu0 %v443, 6
  %v482 = vpop.permute.xlu0 %481
  %483 = vrot.lane.b32.xlu0 %v444, 6
  %v484 = vpop.permute.xlu0 %483
  %485 = vrot.lane.b32.xlu0 %v445, 6
  %v486 = vpop.permute.xlu0 %485
  %487 = vrot.lane.b32.xlu0 %v446, 6
  %v488 = vpop.permute.xlu0 %487
  %489 = vrot.lane.b32.xlu0 %v447, 6
  %v490 = vpop.permute.xlu0 %489
  %491 = vrot.lane.b32.xlu0 %v448, 6
  %v492 = vpop.permute.xlu0 %491
  %493 = vrot.lane.b32.xlu0 %v449, 6
  %v494 = vpop.permute.xlu0 %493
  %495 = vrot.lane.b32.xlu0 %v450, 6
  %v496 = vpop.permute.xlu0 %495
  %497 = vrot.lane.b32.xlu0 %v451, 6
  %v498 = vpop.permute.xlu0 %497
  %499 = vrot.lane.b32.xlu0 %v452, 6
  %v500 = vpop.permute.xlu0 %499
  %vm517 = vcmask 97352
  %518 = vst.msk [vmem:[#allocation4] sm:$0xff] %vm517, %v470
  %519 = vst.msk [vmem:[#allocation4 + $0x28] sm:$0xff] %vm517, %v472
  %520 = vst.msk [vmem:[#allocation4 + $0x50] sm:$0xff] %vm517, %v474
  %521 = vst.msk [vmem:[#allocation4 + $0x78] sm:$0xff] %vm517, %v476
  %522 = vst.msk [vmem:[#allocation4 + $0xa0] sm:$0xff] %vm517, %v478
  %523 = vst.msk [vmem:[#allocation4 + $0xc8] sm:$0xff] %vm517, %v480
  %524 = vst.msk [vmem:[#allocation4 + $0xf0] sm:$0xff] %vm517, %v482
  %525 = vst.msk [vmem:[#allocation4 + $0x118] sm:$0xff] %vm517, %v484
  %526 = vst.msk [vmem:[#allocation4 + $0x140] sm:$0xff] %vm517, %v486
  %527 = vst.msk [vmem:[#allocation4 + $0x168] sm:$0xff] %vm517, %v488
  %528 = vst.msk [vmem:[#allocation4 + $0x190] sm:$0xff] %vm517, %v490
  %529 = vst.msk [vmem:[#allocation4 + $0x1b8] sm:$0xff] %vm517, %v492
  %530 = vst.msk [vmem:[#allocation4 + $0x1e0] sm:$0xff] %vm517, %v494
  %531 = vst.msk [vmem:[#allocation4 + $0x208] sm:$0xff] %vm517, %v496
  %532 = vst.msk [vmem:[#allocation4 + $0x230] sm:$0xff] %vm517, %v498
  %533 = vst.msk [vmem:[#allocation4 + $0x258] sm:$0xff] %vm517, %v500
  %v534 = vld [vmem:[%s107 + $0x1] sm:$0xff]
  %v535 = vld [vmem:[%s107 + $0x21] sm:$0xff]
  %v536 = vld [vmem:[%s107 + $0x41] sm:$0xff]
  %v537 = vld [vmem:[%s107 + $0x61] sm:$0xff]
  %v538 = vld [vmem:[%s107 + $0x81] sm:$0xff]
  %v539 = vld [vmem:[%s107 + $0xa1] sm:$0xff]
  %v540 = vld [vmem:[%s107 + $0xc1] sm:$0xff]
  %v541 = vld [vmem:[%s107 + $0xe1] sm:$0xff]
  %v542 = vld [vmem:[%s107 + $0x121] sm:$0xff]
  %v543 = vld [vmem:[%s107 + $0x141] sm:$0xff]
  %v544 = vld [vmem:[%s107 + $0x161] sm:$0xff]
  %v545 = vld [vmem:[%s107 + $0x181] sm:$0xff]
  %v546 = vld [vmem:[%s107 + $0x1a1] sm:$0xff]
  %v547 = vld [vmem:[%s107 + $0x1c1] sm:$0xff]
  %v548 = vld [vmem:[%s107 + $0x1e1] sm:$0xff]
  %v549 = vld [vmem:[%s107 + $0x201] sm:$0xff]
  %566 = vrot.lane.b32.xlu0 %v534, 12
  %v567 = vpop.permute.xlu0 %566
  %568 = vrot.lane.b32.xlu0 %v535, 12
  %v569 = vpop.permute.xlu0 %568
  %570 = vrot.lane.b32.xlu0 %v536, 12
  %v571 = vpop.permute.xlu0 %570
  %572 = vrot.lane.b32.xlu0 %v537, 12
  %v573 = vpop.permute.xlu0 %572
  %574 = vrot.lane.b32.xlu0 %v538, 12
  %v575 = vpop.permute.xlu0 %574
  %576 = vrot.lane.b32.xlu0 %v539, 12
  %v577 = vpop.permute.xlu0 %576
  %578 = vrot.lane.b32.xlu0 %v540, 12
  %v579 = vpop.permute.xlu0 %578
  %580 = vrot.lane.b32.xlu0 %v541, 12
  %v581 = vpop.permute.xlu0 %580
  %582 = vrot.lane.b32.xlu0 %v542, 12
  %v583 = vpop.permute.xlu0 %582
  %584 = vrot.lane.b32.xlu0 %v543, 12
  %v585 = vpop.permute.xlu0 %584
  %586 = vrot.lane.b32.xlu0 %v544, 12
  %v587 = vpop.permute.xlu0 %586
  %588 = vrot.lane.b32.xlu0 %v545, 12
  %v589 = vpop.permute.xlu0 %588
  %590 = vrot.lane.b32.xlu0 %v546, 12
  %v591 = vpop.permute.xlu0 %590
  %592 = vrot.lane.b32.xlu0 %v547, 12
  %v593 = vpop.permute.xlu0 %592
  %594 = vrot.lane.b32.xlu0 %v548, 12
  %v595 = vpop.permute.xlu0 %594
  %596 = vrot.lane.b32.xlu0 %v549, 12
  %v597 = vpop.permute.xlu0 %596
  %vm614 = vcmask 121952
  %615 = vst.msk [vmem:[#allocation4] sm:$0xff] %vm614, %v567
  %616 = vst.msk [vmem:[#allocation4 + $0x28] sm:$0xff] %vm614, %v569
  %617 = vst.msk [vmem:[#allocation4 + $0x50] sm:$0xff] %vm614, %v571
  %618 = vst.msk [vmem:[#allocation4 + $0x78] sm:$0xff] %vm614, %v573
  %619 = vst.msk [vmem:[#allocation4 + $0xa0] sm:$0xff] %vm614, %v575
  %620 = vst.msk [vmem:[#allocation4 + $0xc8] sm:$0xff] %vm614, %v577
  %621 = vst.msk [vmem:[#allocation4 + $0xf0] sm:$0xff] %vm614, %v579
  %622 = vst.msk [vmem:[#allocation4 + $0x118] sm:$0xff] %vm614, %v581
  %623 = vst.msk [vmem:[#allocation4 + $0x140] sm:$0xff] %vm614, %v583
  %624 = vst.msk [vmem:[#allocation4 + $0x168] sm:$0xff] %vm614, %v585
  %625 = vst.msk [vmem:[#allocation4 + $0x190] sm:$0xff] %vm614, %v587
  %626 = vst.msk [vmem:[#allocation4 + $0x1b8] sm:$0xff] %vm614, %v589
  %627 = vst.msk [vmem:[#allocation4 + $0x1e0] sm:$0xff] %vm614, %v591
  %628 = vst.msk [vmem:[#allocation4 + $0x208] sm:$0xff] %vm614, %v593
  %629 = vst.msk [vmem:[#allocation4 + $0x230] sm:$0xff] %vm614, %v595
  %630 = vst.msk [vmem:[#allocation4 + $0x258] sm:$0xff] %vm614, %v597
  %v631 = vld [vmem:[%s107 + $0x1] sm:$0xff]
  %v632 = vld [vmem:[%s107 + $0x21] sm:$0xff]
  %v633 = vld [vmem:[%s107 + $0x41] sm:$0xff]
  %v634 = vld [vmem:[%s107 + $0x61] sm:$0xff]
  %v635 = vld [vmem:[%s107 + $0x81] sm:$0xff]
  %v636 = vld [vmem:[%s107 + $0xa1] sm:$0xff]
  %v637 = vld [vmem:[%s107 + $0xc1] sm:$0xff]
  %v638 = vld [vmem:[%s107 + $0xe1] sm:$0xff]
  %v639 = vld [vmem:[%s107 + $0x121] sm:$0xff]
  %v640 = vld [vmem:[%s107 + $0x141] sm:$0xff]
  %v641 = vld [vmem:[%s107 + $0x161] sm:$0xff]
  %v642 = vld [vmem:[%s107 + $0x181] sm:$0xff]
  %v643 = vld [vmem:[%s107 + $0x1a1] sm:$0xff]
  %v644 = vld [vmem:[%s107 + $0x1c1] sm:$0xff]
  %v645 = vld [vmem:[%s107 + $0x1e1] sm:$0xff]
  %v646 = vld [vmem:[%s107 + $0x201] sm:$0xff]
  %663 = vrot.lane.b32.xlu0 %v631, 12
  %v664 = vpop.permute.xlu0 %663
  %665 = vrot.lane.b32.xlu0 %v632, 12
  %v666 = vpop.permute.xlu0 %665
  %667 = vrot.lane.b32.xlu0 %v633, 12
  %v668 = vpop.permute.xlu0 %667
  %669 = vrot.lane.b32.xlu0 %v634, 12
  %v670 = vpop.permute.xlu0 %669
  %671 = vrot.lane.b32.xlu0 %v635, 12
  %v672 = vpop.permute.xlu0 %671
  %673 = vrot.lane.b32.xlu0 %v636, 12
  %v674 = vpop.permute.xlu0 %673
  %675 = vrot.lane.b32.xlu0 %v637, 12
  %v676 = vpop.permute.xlu0 %675
  %677 = vrot.lane.b32.xlu0 %v638, 12
  %v678 = vpop.permute.xlu0 %677
  %679 = vrot.lane.b32.xlu0 %v639, 12
  %v680 = vpop.permute.xlu0 %679
  %681 = vrot.lane.b32.xlu0 %v640, 12
  %v682 = vpop.permute.xlu0 %681
  %683 = vrot.lane.b32.xlu0 %v641, 12
  %v684 = vpop.permute.xlu0 %683
  %685 = vrot.lane.b32.xlu0 %v642, 12
  %v686 = vpop.permute.xlu0 %685
  %687 = vrot.lane.b32.xlu0 %v643, 12
  %v688 = vpop.permute.xlu0 %687
  %689 = vrot.lane.b32.xlu0 %v644, 12
  %v690 = vpop.permute.xlu0 %689
  %691 = vrot.lane.b32.xlu0 %v645, 12
  %v692 = vpop.permute.xlu0 %691
  %693 = vrot.lane.b32.xlu0 %v646, 12
  %v694 = vpop.permute.xlu0 %693
  %vm711 = vcmask 146552
  %712 = vst.msk [vmem:[#allocation4] sm:$0xff] %vm711, %v664
  %713 = vst.msk [vmem:[#allocation4 + $0x28] sm:$0xff] %vm711, %v666
  %714 = vst.msk [vmem:[#allocation4 + $0x50] sm:$0xff] %vm711, %v668
  %715 = vst.msk [vmem:[#allocation4 + $0x78] sm:$0xff] %vm711, %v670
  %716 = vst.msk [vmem:[#allocation4 + $0xa0] sm:$0xff] %vm711, %v672
  %717 = vst.msk [vmem:[#allocation4 + $0xc8] sm:$0xff] %vm711, %v674
  %718 = vst.msk [vmem:[#allocation4 + $0xf0] sm:$0xff] %vm711, %v676
  %719 = vst.msk [vmem:[#allocation4 + $0x118] sm:$0xff] %vm711, %v678
  %720 = vst.msk [vmem:[#allocation4 + $0x140] sm:$0xff] %vm711, %v680
  %721 = vst.msk [vmem:[#allocation4 + $0x168] sm:$0xff] %vm711, %v682
  %722 = vst.msk [vmem:[#allocation4 + $0x190] sm:$0xff] %vm711, %v684
  %723 = vst.msk [vmem:[#allocation4 + $0x1b8] sm:$0xff] %vm711, %v686
  %724 = vst.msk [vmem:[#allocation4 + $0x1e0] sm:$0xff] %vm711, %v688
  %725 = vst.msk [vmem:[#allocation4 + $0x208] sm:$0xff] %vm711, %v690
  %726 = vst.msk [vmem:[#allocation4 + $0x230] sm:$0xff] %vm711, %v692
  %727 = vst.msk [vmem:[#allocation4 + $0x258] sm:$0xff] %vm711, %v694
  %s728 = scalar_lea.vmem [#allocation3], 48
  %v729 = vld [vmem:[%s728] sm:$0xff]
  %v730 = vld [vmem:[%s728 + $0x20] sm:$0xff]
  %v731 = vld [vmem:[%s728 + $0x40] sm:$0xff]
  %v732 = vld [vmem:[%s728 + $0x60] sm:$0xff]
  %v733 = vld [vmem:[%s728 + $0x80] sm:$0xff]
  %v734 = vld [vmem:[%s728 + $0xa0] sm:$0xff]
  %v735 = vld [vmem:[%s728 + $0xc0] sm:$0xff]
  %v736 = vld [vmem:[%s728 + $0xe0] sm:$0xff]
  %v737 = vld [vmem:[%s728 + $0x120] sm:$0xff]
  %v738 = vld [vmem:[%s728 + $0x140] sm:$0xff]
  %v739 = vld [vmem:[%s728 + $0x160] sm:$0xff]
  %v740 = vld [vmem:[%s728 + $0x180] sm:$0xff]
  %v741 = vld [vmem:[%s728 + $0x1a0] sm:$0xff]
  %v742 = vld [vmem:[%s728 + $0x1c0] sm:$0xff]
  %v743 = vld [vmem:[%s728 + $0x1e0] sm:$0xff]
  %v744 = vld [vmem:[%s728 + $0x200] sm:$0xff]
  %761 = vrot.lane.b32.xlu0 %v729, 15
  %v762 = vpop.permute.xlu0 %761
  %763 = vrot.lane.b32.xlu0 %v730, 15
  %v764 = vpop.permute.xlu0 %763
  %765 = vrot.lane.b32.xlu0 %v731, 15
  %v766 = vpop.permute.xlu0 %765
  %767 = vrot.lane.b32.xlu0 %v732, 15
  %v768 = vpop.permute.xlu0 %767
  %769 = vrot.lane.b32.xlu0 %v733, 15
  %v770 = vpop.permute.xlu0 %769
  %771 = vrot.lane.b32.xlu0 %v734, 15
  %v772 = vpop.permute.xlu0 %771
  %773 = vrot.lane.b32.xlu0 %v735, 15
  %v774 = vpop.permute.xlu0 %773
  %775 = vrot.lane.b32.xlu0 %v736, 15
  %v776 = vpop.permute.xlu0 %775
  %777 = vrot.lane.b32.xlu0 %v737, 15
  %v778 = vpop.permute.xlu0 %777
  %779 = vrot.lane.b32.xlu0 %v738, 15
  %v780 = vpop.permute.xlu0 %779
  %781 = vrot.lane.b32.xlu0 %v739, 15
  %v782 = vpop.permute.xlu0 %781
  %783 = vrot.lane.b32.xlu0 %v740, 15
  %v784 = vpop.permute.xlu0 %783
  %785 = vrot.lane.b32.xlu0 %v741, 15
  %v786 = vpop.permute.xlu0 %785
  %787 = vrot.lane.b32.xlu0 %v742, 15
  %v788 = vpop.permute.xlu0 %787
  %789 = vrot.lane.b32.xlu0 %v743, 15
  %v790 = vpop.permute.xlu0 %789
  %791 = vrot.lane.b32.xlu0 %v744, 15
  %v792 = vpop.permute.xlu0 %791
  %vm809 = vcmask 171152
  %810 = vst.msk [vmem:[#allocation4] sm:$0xff] %vm809, %v762
  %811 = vst.msk [vmem:[#allocation4 + $0x28] sm:$0xff] %vm809, %v764
  %812 = vst.msk [vmem:[#allocation4 + $0x50] sm:$0xff] %vm809, %v766
  %813 = vst.msk [vmem:[#allocation4 + $0x78] sm:$0xff] %vm809, %v768
  %814 = vst.msk [vmem:[#allocation4 + $0xa0] sm:$0xff] %vm809, %v770
  %815 = vst.msk [vmem:[#allocation4 + $0xc8] sm:$0xff] %vm809, %v772
  %816 = vst.msk [vmem:[#allocation4 + $0xf0] sm:$0xff] %vm809, %v774
  %817 = vst.msk [vmem:[#allocation4 + $0x118] sm:$0xff] %vm809, %v776
  %818 = vst.msk [vmem:[#allocation4 + $0x140] sm:$0xff] %vm809, %v778
  %819 = vst.msk [vmem:[#allocation4 + $0x168] sm:$0xff] %vm809, %v780
  %820 = vst.msk [vmem:[#allocation4 + $0x190] sm:$0xff] %vm809, %v782
  %821 = vst.msk [vmem:[#allocation4 + $0x1b8] sm:$0xff] %vm809, %v784
  %822 = vst.msk [vmem:[#allocation4 + $0x1e0] sm:$0xff] %vm809, %v786
  %823 = vst.msk [vmem:[#allocation4 + $0x208] sm:$0xff] %vm809, %v788
  %824 = vst.msk [vmem:[#allocation4 + $0x230] sm:$0xff] %vm809, %v790
  %825 = vst.msk [vmem:[#allocation4 + $0x258] sm:$0xff] %vm809, %v792
  %v826 = vld [vmem:[%s728 + $0x1] sm:$0xff]
  %v827 = vld [vmem:[%s728 + $0x21] sm:$0xff]
  %v828 = vld [vmem:[%s728 + $0x41] sm:$0xff]
  %v829 = vld [vmem:[%s728 + $0x61] sm:$0xff]
  %v830 = vld [vmem:[%s728 + $0x81] sm:$0xff]
  %v831 = vld [vmem:[%s728 + $0xa1] sm:$0xff]
  %v832 = vld [vmem:[%s728 + $0xc1] sm:$0xff]
  %v833 = vld [vmem:[%s728 + $0xe1] sm:$0xff]
  %v834 = vld [vmem:[%s728 + $0x121] sm:$0xff]
  %v835 = vld [vmem:[%s728 + $0x141] sm:$0xff]
  %v836 = vld [vmem:[%s728 + $0x161] sm:$0xff]
  %v837 = vld [vmem:[%s728 + $0x181] sm:$0xff]
  %v838 = vld [vmem:[%s728 + $0x1a1] sm:$0xff]
  %v839 = vld [vmem:[%s728 + $0x1c1] sm:$0xff]
  %v840 = vld [vmem:[%s728 + $0x1e1] sm:$0xff]
  %v841 = vld [vmem:[%s728 + $0x201] sm:$0xff]
  %858 = vrot.lane.b32.xlu0 %v826, 21
  %v859 = vpop.permute.xlu0 %858
  %860 = vrot.lane.b32.xlu0 %v827, 21
  %v861 = vpop.permute.xlu0 %860
  %862 = vrot.lane.b32.xlu0 %v828, 21
  %v863 = vpop.permute.xlu0 %862
  %864 = vrot.lane.b32.xlu0 %v829, 21
  %v865 = vpop.permute.xlu0 %864
  %866 = vrot.lane.b32.xlu0 %v830, 21
  %v867 = vpop.permute.xlu0 %866
  %868 = vrot.lane.b32.xlu0 %v831, 21
  %v869 = vpop.permute.xlu0 %868
  %870 = vrot.lane.b32.xlu0 %v832, 21
  %v871 = vpop.permute.xlu0 %870
  %872 = vrot.lane.b32.xlu0 %v833, 21
  %v873 = vpop.permute.xlu0 %872
  %874 = vrot.lane.b32.xlu0 %v834, 21
  %v875 = vpop.permute.xlu0 %874
  %876 = vrot.lane.b32.xlu0 %v835, 21
  %v877 = vpop.permute.xlu0 %876
  %878 = vrot.lane.b32.xlu0 %v836, 21
  %v879 = vpop.permute.xlu0 %878
  %880 = vrot.lane.b32.xlu0 %v837, 21
  %v881 = vpop.permute.xlu0 %880
  %882 = vrot.lane.b32.xlu0 %v838, 21
  %v883 = vpop.permute.xlu0 %882
  %884 = vrot.lane.b32.xlu0 %v839, 21
  %v885 = vpop.permute.xlu0 %884
  %886 = vrot.lane.b32.xlu0 %v840, 21
  %v887 = vpop.permute.xlu0 %886
  %888 = vrot.lane.b32.xlu0 %v841, 21
  %v889 = vpop.permute.xlu0 %888
  %vm906 = vcmask 195752
  %907 = vst.msk [vmem:[#allocation4] sm:$0xff] %vm906, %v859
  %908 = vst.msk [vmem:[#allocation4 + $0x28] sm:$0xff] %vm906, %v861
  %909 = vst.msk [vmem:[#allocation4 + $0x50] sm:$0xff] %vm906, %v863
  %910 = vst.msk [vmem:[#allocation4 + $0x78] sm:$0xff] %vm906, %v865
  %911 = vst.msk [vmem:[#allocation4 + $0xa0] sm:$0xff] %vm906, %v867
  %912 = vst.msk [vmem:[#allocation4 + $0xc8] sm:$0xff] %vm906, %v869
  %913 = vst.msk [vmem:[#allocation4 + $0xf0] sm:$0xff] %vm906, %v871
  %914 = vst.msk [vmem:[#allocation4 + $0x118] sm:$0xff] %vm906, %v873
  %915 = vst.msk [vmem:[#allocation4 + $0x140] sm:$0xff] %vm906, %v875
  %916 = vst.msk [vmem:[#allocation4 + $0x168] sm:$0xff] %vm906, %v877
  %917 = vst.msk [vmem:[#allocation4 + $0x190] sm:$0xff] %vm906, %v879
  %918 = vst.msk [vmem:[#allocation4 + $0x1b8] sm:$0xff] %vm906, %v881
  %919 = vst.msk [vmem:[#allocation4 + $0x1e0] sm:$0xff] %vm906, %v883
  %920 = vst.msk [vmem:[#allocation4 + $0x208] sm:$0xff] %vm906, %v885
  %921 = vst.msk [vmem:[#allocation4 + $0x230] sm:$0xff] %vm906, %v887
  %922 = vst.msk [vmem:[#allocation4 + $0x258] sm:$0xff] %vm906, %v889
  %v923 = vld [vmem:[%s728 + $0x1] sm:$0xff]
  %v924 = vld [vmem:[%s728 + $0x21] sm:$0xff]
  %v925 = vld [vmem:[%s728 + $0x41] sm:$0xff]
  %v926 = vld [vmem:[%s728 + $0x61] sm:$0xff]
  %v927 = vld [vmem:[%s728 + $0x81] sm:$0xff]
  %v928 = vld [vmem:[%s728 + $0xa1] sm:$0xff]
  %v929 = vld [vmem:[%s728 + $0xc1] sm:$0xff]
  %v930 = vld [vmem:[%s728 + $0xe1] sm:$0xff]
  %v931 = vld [vmem:[%s728 + $0x121] sm:$0xff]
  %v932 = vld [vmem:[%s728 + $0x141] sm:$0xff]
  %v933 = vld [vmem:[%s728 + $0x161] sm:$0xff]
  %v934 = vld [vmem:[%s728 + $0x181] sm:$0xff]
  %v935 = vld [vmem:[%s728 + $0x1a1] sm:$0xff]
  %v936 = vld [vmem:[%s728 + $0x1c1] sm:$0xff]
  %v937 = vld [vmem:[%s728 + $0x1e1] sm:$0xff]
  %v938 = vld [vmem:[%s728 + $0x201] sm:$0xff]
  %955 = vrot.lane.b32.xlu0 %v923, 21
  %v956 = vpop.permute.xlu0 %955
  %957 = vrot.lane.b32.xlu0 %v924, 21
  %v958 = vpop.permute.xlu0 %957
  %959 = vrot.lane.b32.xlu0 %v925, 21
  %v960 = vpop.permute.xlu0 %959
  %961 = vrot.lane.b32.xlu0 %v926, 21
  %v962 = vpop.permute.xlu0 %961
  %963 = vrot.lane.b32.xlu0 %v927, 21
  %v964 = vpop.permute.xlu0 %963
  %965 = vrot.lane.b32.xlu0 %v928, 21
  %v966 = vpop.permute.xlu0 %965
  %967 = vrot.lane.b32.xlu0 %v929, 21
  %v968 = vpop.permute.xlu0 %967
  %969 = vrot.lane.b32.xlu0 %v930, 21
  %v970 = vpop.permute.xlu0 %969
  %971 = vrot.lane.b32.xlu0 %v931, 21
  %v972 = vpop.permute.xlu0 %971
  %973 = vrot.lane.b32.xlu0 %v932, 21
  %v974 = vpop.permute.xlu0 %973
  %975 = vrot.lane.b32.xlu0 %v933, 21
  %v976 = vpop.permute.xlu0 %975
  %977 = vrot.lane.b32.xlu0 %v934, 21
  %v978 = vpop.permute.xlu0 %977
  %979 = vrot.lane.b32.xlu0 %v935, 21
  %v980 = vpop.permute.xlu0 %979
  %981 = vrot.lane.b32.xlu0 %v936, 21
  %v982 = vpop.permute.xlu0 %981
  %983 = vrot.lane.b32.xlu0 %v937, 21
  %v984 = vpop.permute.xlu0 %983
  %985 = vrot.lane.b32.xlu0 %v938, 21
  %v986 = vpop.permute.xlu0 %985
  %vm1003 = vcmask 220352
  %1004 = vst.msk [vmem:[#allocation4] sm:$0xff] %vm1003, %v956
  %1005 = vst.msk [vmem:[#allocation4 + $0x28] sm:$0xff] %vm1003, %v958
  %1006 = vst.msk [vmem:[#allocation4 + $0x50] sm:$0xff] %vm1003, %v960
  %1007 = vst.msk [vmem:[#allocation4 + $0x78] sm:$0xff] %vm1003, %v962
  %1008 = vst.msk [vmem:[#allocation4 + $0xa0] sm:$0xff] %vm1003, %v964
  %1009 = vst.msk [vmem:[#allocation4 + $0xc8] sm:$0xff] %vm1003, %v966
  %1010 = vst.msk [vmem:[#allocation4 + $0xf0] sm:$0xff] %vm1003, %v968
  %1011 = vst.msk [vmem:[#allocation4 + $0x118] sm:$0xff] %vm1003, %v970
  %1012 = vst.msk [vmem:[#allocation4 + $0x140] sm:$0xff] %vm1003, %v972
  %1013 = vst.msk [vmem:[#allocation4 + $0x168] sm:$0xff] %vm1003, %v974
  %1014 = vst.msk [vmem:[#allocation4 + $0x190] sm:$0xff] %vm1003, %v976
  %1015 = vst.msk [vmem:[#allocation4 + $0x1b8] sm:$0xff] %vm1003, %v978
  %1016 = vst.msk [vmem:[#allocation4 + $0x1e0] sm:$0xff] %vm1003, %v980
  %1017 = vst.msk [vmem:[#allocation4 + $0x208] sm:$0xff] %vm1003, %v982
  %1018 = vst.msk [vmem:[#allocation4 + $0x230] sm:$0xff] %vm1003, %v984
  %1019 = vst.msk [vmem:[#allocation4 + $0x258] sm:$0xff] %vm1003, %v986
  %v1020 = vld [vmem:[#allocation4] sm:$0xff]
  %v1021 = vld [vmem:[#allocation4 + $0x28] sm:$0xff]
  %v1022 = vld [vmem:[#allocation4 + $0x50] sm:$0xff]
  %v1023 = vld [vmem:[#allocation4 + $0x78] sm:$0xff]
  %v1024 = vld [vmem:[#allocation4 + $0xa0] sm:$0xff]
  %v1025 = vld [vmem:[#allocation4 + $0xc8] sm:$0xff]
  %v1026 = vld [vmem:[#allocation4 + $0xf0] sm:$0xff]
  %v1027 = vld [vmem:[#allocation4 + $0x118] sm:$0xff]
  %v1028 = vld [vmem:[#allocation4 + $0x140] sm:$0xff]
  %v1029 = vld [vmem:[#allocation4 + $0x168] sm:$0xff]
  %v1030 = vld [vmem:[#allocation4 + $0x190] sm:$0xff]
  %v1031 = vld [vmem:[#allocation4 + $0x1b8] sm:$0xff]
  %v1032 = vld [vmem:[#allocation4 + $0x1e0] sm:$0xff]
  %v1033 = vld [vmem:[#allocation4 + $0x208] sm:$0xff]
  %v1034 = vld [vmem:[#allocation4 + $0x230] sm:$0xff]
  %v1035 = vld [vmem:[#allocation4 + $0x258] sm:$0xff]
  %vm1036 = vcmask 220160
  %v1038 = vsel %vm1036, %v1020, 0
  %v1041 = vsel %vm1036, %v1021, 0
  %v1044 = vsel %vm1036, %v1022, 0
  %v1047 = vsel %vm1036, %v1023, 0
  %v1050 = vsel %vm1036, %v1024, 0
  %v1053 = vsel %vm1036, %v1025, 0
  %v1056 = vsel %vm1036, %v1026, 0
  %v1059 = vsel %vm1036, %v1027, 0
  %v1062 = vsel %vm1036, %v1028, 0
  %v1065 = vsel %vm1036, %v1029, 0
  %v1068 = vsel %vm1036, %v1030, 0
  %v1071 = vsel %vm1036, %v1031, 0
  %v1074 = vsel %vm1036, %v1032, 0
  %v1077 = vsel %vm1036, %v1033, 0
  %v1080 = vsel %vm1036, %v1034, 0
  %v1083 = vsel %vm1036, %v1035, 0
  %vm1085 = vcmask 1042432
  %v1087 = vsel %vm1085, %v143, 0
  %1089 = vmatprep.subr.mxu0 0.0
  %1090 = vmatpush1.msra.mxu0 %v140
  %1091 = vmatprep.subr.mxu0 0.0
  %1092 = vmatpush1.msra.mxu0 %v141
  %1093 = vmatprep.subr.mxu0 0.0
  %1094 = vmatpush1.msra.mxu0 %v142
  %1095 = vmatprep.subr.mxu0 0.0
  %1096 = vmatpush1.msra.mxu0 %v1087
  %1097 = vmatprep.subr.mxu0 0.0
  %1098 = vmatpush1.msra.mxu0 0.0
  %1099 = vmatprep.subr.mxu0 0.0
  %1100 = vmatpush1.msra.mxu0 0.0
  %1101 = vmatprep.subr.mxu0 0.0
  %1102 = vmatpush1.msra.mxu0 0.0
  %1103 = vmatprep.subr.mxu0 0.0
  %1104 = vmatpush1.msra.mxu0 0.0
  %1105 = vmatprep.subr.mxu0 0.0
  %1106 = vmatpush1.msra.mxu0 0.0
  %1107 = vmatprep.subr.mxu0 0.0
  %1108 = vmatpush1.msra.mxu0 0.0
  %1109 = vmatprep.subr.mxu0 0.0
  %1110 = vmatpush1.msra.mxu0 0.0
  %1111 = vmatprep.subr.mxu0 0.0
  %1112 = vmatpush1.msra.mxu0 0.0
  %1113 = vmatprep.subr.mxu0 0.0
  %1114 = vmatpush1.msra.mxu0 0.0
  %1115 = vmatprep.subr.mxu0 0.0
  %1116 = vmatpush1.msra.mxu0 0.0
  %1117 = vmatprep.subr.mxu0 0.0
  %1118 = vmatpush1.msra.mxu0 0.0
  %1119 = vmatprep.subr.mxu0 0.0
  %1120 = vmatpush1.msra.mxu0 0.0
  %1121 = vmatprep.subr.mxu0 0.0
  %1122 = vmatpush1.msra.mxu0 0.0
  %1123 = vmatprep.subr.mxu0 0.0
  %1124 = vmatpush1.msra.mxu0 0.0
  %1125 = vmatprep.subr.mxu0 0.0
  %1126 = vmatpush1.msra.mxu0 0.0
  %1127 = vmatprep.subr.mxu0 0.0
  %1128 = vmatpush1.msra.mxu0 0.0
  %1129 = vmatprep.subr.mxu0 0.0
  %1130 = vmatpush1.msra.mxu0 0.0
  %1131 = vmatprep.subr.mxu0 0.0
  %1132 = vmatpush1.msra.mxu0 0.0
  %1133 = vmatprep.subr.mxu0 0.0
  %1134 = vmatpush1.msra.mxu0 0.0
  %1135 = vmatprep.subr.mxu0 0.0
  %1136 = vmatpush1.msra.mxu0 0.0
  %1137 = vmatprep.subr.mxu0 0.0
  %1138 = vmatpush1.msra.mxu0 0.0
  %1139 = vmatprep.subr.mxu0 0.0
  %1140 = vmatpush1.msra.mxu0 0.0
  %1141 = vmatprep.subr.mxu0 0.0
  %1142 = vmatpush1.msra.mxu0 0.0
  %1143 = vmatprep.subr.mxu0 0.0
  %1144 = vmatpush1.msra.mxu0 0.0
  %1145 = vmatprep.subr.mxu0 0.0
  %1146 = vmatpush1.msra.mxu0 0.0
  %1147 = vmatprep.subr.mxu0 0.0
  %1148 = vmatpush1.msra.mxu0 0.0
  %1149 = vmatprep.subr.mxu0 0.0
  %1150 = vmatpush1.msra.mxu0 0.0
  %1151 = vmatprep.subr.mxu0 0.0
  %1152 = vmatpush1.msra.mxu0 0.0
  %1153 = vmatprep.mubr.f32.mxu0 0.0
  %1154 = vmatmul.mubr.f32.gmra.mrb[0].mxu0 %v1038
  %v1155 = vpop.f32.mrb[0].mxu0
  %v1156 = vadd.f32 %v144, %v1155
  %v1157 = vpop.f32.mrb[0].mxu0
  %1158 = vmatprep.mubr.f32.mxu0 0.0
  %1159 = vmatmul.mubr.f32.gmra.mrb[0].mxu0 %v1041
  %v1160 = vpop.f32.mrb[0].mxu0
  %v1161 = vadd.f32 %v144, %v1160
  %v1162 = vpop.f32.mrb[0].mxu0
  %1163 = vmatprep.mubr.f32.mxu0 0.0
  %1164 = vmatmul.mubr.f32.gmra.mrb[0].mxu0 %v1044
  %v1165 = vpop.f32.mrb[0].mxu0
  %v1166 = vadd.f32 %v144, %v1165
  %v1167 = vpop.f32.mrb[0].mxu0
  %1168 = vmatprep.mubr.f32.mxu0 0.0
  %1169 = vmatmul.mubr.f32.gmra.mrb[0].mxu0 %v1047
  %v1170 = vpop.f32.mrb[0].mxu0
  %v1171 = vadd.f32 %v144, %v1170
  %v1172 = vpop.f32.mrb[0].mxu0
  %1173 = vmatprep.mubr.f32.mxu0 0.0
  %1174 = vmatmul.mubr.f32.gmra.mrb[0].mxu0 %v1050
  %v1175 = vpop.f32.mrb[0].mxu0
  %v1176 = vadd.f32 %v144, %v1175
  %v1177 = vpop.f32.mrb[0].mxu0
  %1178 = vmatprep.mubr.f32.mxu0 0.0
  %1179 = vmatmul.mubr.f32.gmra.mrb[0].mxu0 %v1053
  %v1180 = vpop.f32.mrb[0].mxu0
  %v1181 = vadd.f32 %v144, %v1180
  %v1182 = vpop.f32.mrb[0].mxu0
  %1183 = vmatprep.mubr.f32.mxu0 0.0
  %1184 = vmatmul.mubr.f32.gmra.mrb[0].mxu0 %v1056
  %v1185 = vpop.f32.mrb[0].mxu0
  %v1186 = vadd.f32 %v144, %v1185
  %v1187 = vpop.f32.mrb[0].mxu0
  %1188 = vmatprep.mubr.f32.mxu0 0.0
  %1189 = vmatmul.mubr.f32.gmra.mrb[0].mxu0 %v1059
  %v1190 = vpop.f32.mrb[0].mxu0
  %v1191 = vadd.f32 %v144, %v1190
  %v1192 = vpop.f32.mrb[0].mxu0
  %1193 = vmatprep.mubr.f32.mxu0 0.0
  %1194 = vmatmul.mubr.f32.gmra.mrb[0].mxu0 %v1062
  %v1195 = vpop.f32.mrb[0].mxu0
  %v1196 = vadd.f32 %v144, %v1195
  %v1197 = vpop.f32.mrb[0].mxu0
  %1198 = vmatprep.mubr.f32.mxu0 0.0
  %1199 = vmatmul.mubr.f32.gmra.mrb[0].mxu0 %v1065
  %v1200 = vpop.f32.mrb[0].mxu0
  %v1201 = vadd.f32 %v144, %v1200
  %v1202 = vpop.f32.mrb[0].mxu0
  %1203 = vmatprep.mubr.f32.mxu0 0.0
  %1204 = vmatmul.mubr.f32.gmra.mrb[0].mxu0 %v1068
  %v1205 = vpop.f32.mrb[0].mxu0
  %v1206 = vadd.f32 %v144, %v1205
  %v1207 = vpop.f32.mrb[0].mxu0
  %1208 = vmatprep.mubr.f32.mxu0 0.0
  %1209 = vmatmul.mubr.f32.gmra.mrb[0].mxu0 %v1071
  %v1210 = vpop.f32.mrb[0].mxu0
  %v1211 = vadd.f32 %v144, %v1210
  %v1212 = vpop.f32.mrb[0].mxu0
  %1213 = vmatprep.mubr.f32.mxu0 0.0
  %1214 = vmatmul.mubr.f32.gmra.mrb[0].mxu0 %v1074
  %v1215 = vpop.f32.mrb[0].mxu0
  %v1216 = vadd.f32 %v144, %v1215
  %v1217 = vpop.f32.mrb[0].mxu0
  %1218 = vmatprep.mubr.f32.mxu0 0.0
  %1219 = vmatmul.mubr.f32.gmra.mrb[0].mxu0 %v1077
  %v1220 = vpop.f32.mrb[0].mxu0
  %v1221 = vadd.f32 %v144, %v1220
  %v1222 = vpop.f32.mrb[0].mxu0
  %1223 = vmatprep.mubr.f32.mxu0 0.0
  %1224 = vmatmul.mubr.f32.gmra.mrb[0].mxu0 %v1080
  %v1225 = vpop.f32.mrb[0].mxu0
  %v1226 = vadd.f32 %v144, %v1225
  %v1227 = vpop.f32.mrb[0].mxu0
  %1228 = vmatprep.mubr.f32.mxu0 0.0
  %1229 = vmatmul.mubr.f32.gmra.mrb[0].mxu0 %v1083
  %v1230 = vpop.f32.mrb[0].mxu0
  %v1231 = vadd.f32 %v144, %v1230
  %v1232 = vpop.f32.mrb[0].mxu0
  %1233 = vdwg.mxu0
  %vm1234 = vcmp.ge.f32.partialorder %v1156, 0.0
  %vm1235 = vcmp.ge.f32.partialorder %v1161, 0.0
  %vm1236 = vcmp.ge.f32.partialorder %v1166, 0.0
  %vm1237 = vcmp.ge.f32.partialorder %v1171, 0.0
  %vm1238 = vcmp.ge.f32.partialorder %v1176, 0.0
  %vm1239 = vcmp.ge.f32.partialorder %v1181, 0.0
  %vm1240 = vcmp.ge.f32.partialorder %v1186, 0.0
  %vm1241 = vcmp.ge.f32.partialorder %v1191, 0.0
  %vm1242 = vcmp.ge.f32.partialorder %v1196, 0.0
  %vm1243 = vcmp.ge.f32.partialorder %v1201, 0.0
  %vm1244 = vcmp.ge.f32.partialorder %v1206, 0.0
  %vm1245 = vcmp.ge.f32.partialorder %v1211, 0.0
  %vm1246 = vcmp.ge.f32.partialorder %v1216, 0.0
  %vm1247 = vcmp.ge.f32.partialorder %v1221, 0.0
  %vm1248 = vcmp.ge.f32.partialorder %v1226, 0.0
  %vm1249 = vcmp.ge.f32.partialorder %v1231, 0.0
  %v1250 = vmul.f32 %v1156, 0.01
  %v1251 = vmul.f32 %v1161, 0.01
  %v1252 = vmul.f32 %v1166, 0.01
  %v1253 = vmul.f32 %v1171, 0.01
  %v1254 = vmul.f32 %v1176, 0.01
  %v1255 = vmul.f32 %v1181, 0.01
  %v1256 = vmul.f32 %v1186, 0.01
  %v1257 = vmul.f32 %v1191, 0.01
  %v1258 = vmul.f32 %v1196, 0.01
  %v1259 = vmul.f32 %v1201, 0.01
  %v1260 = vmul.f32 %v1206, 0.01
  %v1261 = vmul.f32 %v1211, 0.01
  %v1262 = vmul.f32 %v1216, 0.01
  %v1263 = vmul.f32 %v1221, 0.01
  %v1264 = vmul.f32 %v1226, 0.01
  %v1265 = vmul.f32 %v1231, 0.01
  %v1266 = vsel %vm1234, %v1156, %v1250
  %v1267 = vsel %vm1235, %v1161, %v1251
  %v1268 = vsel %vm1236, %v1166, %v1252
  %v1269 = vsel %vm1237, %v1171, %v1253
  %v1270 = vsel %vm1238, %v1176, %v1254
  %v1271 = vsel %vm1239, %v1181, %v1255
  %v1272 = vsel %vm1240, %v1186, %v1256
  %v1273 = vsel %vm1241, %v1191, %v1257
  %v1274 = vsel %vm1242, %v1196, %v1258
  %v1275 = vsel %vm1243, %v1201, %v1259
  %v1276 = vsel %vm1244, %v1206, %v1260
  %v1277 = vsel %vm1245, %v1211, %v1261
  %v1278 = vsel %vm1246, %v1216, %v1262
  %v1279 = vsel %vm1247, %v1221, %v1263
  %v1280 = vsel %vm1248, %v1226, %v1264
  %v1281 = vsel %vm1249, %v1231, %v1265
  %v1282 = vld [vmem:[%s3] sm:$0xff]
  %v1283 = vld [vmem:[%s3 + $0x8] sm:$0xff]
  %v1284 = vld [vmem:[%s3 + $0x10] sm:$0xff]
  %v1285 = vld [vmem:[%s3 + $0x18] sm:$0xff]
  %v1286 = vld [vmem:[%s3 + $0x20] sm:$0xff]
  %v1287 = vld [vmem:[%s3 + $0x28] sm:$0xff]
  %v1288 = vld [vmem:[%s3 + $0x30] sm:$0xff]
  %v1289 = vld [vmem:[%s3 + $0x38] sm:$0xff]
  %v1290 = vld [vmem:[%s3 + $0x40] sm:$0xff]
  %v1291 = vld [vmem:[%s3 + $0x48] sm:$0xff]
  %v1292 = vld [vmem:[%s3 + $0x50] sm:$0xff]
  %v1293 = vld [vmem:[%s3 + $0x58] sm:$0xff]
  %v1294 = vld [vmem:[%s3 + $0x60] sm:$0xff]
  %v1295 = vld [vmem:[%s3 + $0x68] sm:$0xff]
  %v1296 = vld [vmem:[%s3 + $0x70] sm:$0xff]
  %v1297 = vld [vmem:[%s3 + $0x78] sm:$0xff]
  %v1298 = vld [vmem:[%s3 + $0x80] sm:$0xff]
  %v1299 = vld [vmem:[%s3 + $0x88] sm:$0xff]
  %v1300 = vld [vmem:[%s3 + $0x90] sm:$0xff]
  %v1301 = vld [vmem:[%s3 + $0x98] sm:$0xff]
  %v1302 = vld [vmem:[%s3 + $0xa0] sm:$0xff]
  %v1303 = vld [vmem:[%s3 + $0xa8] sm:$0xff]
  %v1304 = vld [vmem:[%s3 + $0xb0] sm:$0xff]
  %v1305 = vld [vmem:[%s3 + $0xb8] sm:$0xff]
  %v1306 = vld [vmem:[%s3 + $0xc0] sm:$0xff]
  %v1307 = vld [vmem:[%s3 + $0xc8] sm:$0xff]
  %v1308 = vld [vmem:[%s3 + $0xd0] sm:$0xff]
  %v1309 = vld [vmem:[%s3 + $0xd8] sm:$0xff]
  %v1310 = vld [vmem:[%s3 + $0xe0] sm:$0xff]
  %v1311 = vld [vmem:[%s3 + $0xe8] sm:$0xff]
  %v1312 = vld [vmem:[%s3 + $0xf0] sm:$0xff]
  %v1313 = vld [vmem:[%s3 + $0xf8] sm:$0xff]
  %v1314 = vld [vmem:[%s3 + $0x100] sm:$0xff]
  %v1315 = vld [vmem:[%s3 + $0x108] sm:$0xff]
  %v1316 = vld [vmem:[%s3 + $0x110] sm:$0xff]
  %v1317 = vld [vmem:[%s3 + $0x118] sm:$0xff]
  %v1318 = vld [vmem:[%s3 + $0x120] sm:$0xff]
  %v1319 = vld [vmem:[%s3 + $0x128] sm:$0xff]
  %v1320 = vld [vmem:[%s3 + $0x130] sm:$0xff]
  %v1321 = vld [vmem:[%s3 + $0x138] sm:$0xff]
  %v1322 = vld [vmem:[%s3 + $0x140] sm:$0xff]
  %v1323 = vld [vmem:[%s3 + $0x148] sm:$0xff]
  %v1324 = vld [vmem:[%s3 + $0x150] sm:$0xff]
  %v1325 = vld [vmem:[%s3 + $0x158] sm:$0xff]
  %v1326 = vld [vmem:[%s3 + $0x160] sm:$0xff]
  %v1327 = vld [vmem:[%s3 + $0x168] sm:$0xff]
  %v1328 = vld [vmem:[%s3 + $0x170] sm:$0xff]
  %v1329 = vld [vmem:[%s3 + $0x178] sm:$0xff]
  %v1330 = vld [vmem:[%s3 + $0x180] sm:$0xff]
  %v1331 = vld [vmem:[%s3 + $0x188] sm:$0xff]
  %v1332 = vld [vmem:[%s3 + $0x190] sm:$0xff]
  %v1333 = vld [vmem:[%s3 + $0x198] sm:$0xff]
  %v1334 = vld [vmem:[%s3 + $0x1a0] sm:$0xff]
  %v1335 = vld [vmem:[%s3 + $0x1a8] sm:$0xff]
  %v1336 = vld [vmem:[%s3 + $0x1b0] sm:$0xff]
  %v1337 = vld [vmem:[%s3 + $0x1b8] sm:$0xff]
  %v1338 = vld [vmem:[%s3 + $0x1c0] sm:$0xff]
  %v1339 = vld [vmem:[%s3 + $0x1c8] sm:$0xff]
  %v1340 = vld [vmem:[%s3 + $0x1d0] sm:$0xff]
  %v1341 = vld [vmem:[%s3 + $0x1d8] sm:$0xff]
  %v1342 = vld [vmem:[%s3 + $0x1e0] sm:$0xff]
  %v1343 = vld [vmem:[%s3 + $0x1e8] sm:$0xff]
  %v1344 = vld [vmem:[%s3 + $0x1f0] sm:$0xff]
  %v1345 = vld [vmem:[%s3 + $0x1f8] sm:$0xff]
  %v1346 = vld [vmem:[%s3 + $0x200] sm:$0xff]
  %v1347 = vld [vmem:[%s3 + $0x208] sm:$0xff]
  %v1348 = vld [vmem:[%s3 + $0x210] sm:$0xff]
  %v1349 = vld [vmem:[%s3 + $0x218] sm:$0xff]
  %v1350 = vld [vmem:[%s3 + $0x220] sm:$0xff]
  %v1351 = vld [vmem:[%s3 + $0x228] sm:$0xff]
  %v1352 = vld [vmem:[%s3 + $0x230] sm:$0xff]
  %v1353 = vld [vmem:[%s3 + $0x238] sm:$0xff]
  %v1354 = vld [vmem:[%s1 + $0x1] ss:$0 sm:$0xff]
  %s1355 = scalar_lea.vmem %s3, 576
  %v1356 = vld [vmem:[%s1355] sm:$0xff]
  %v1357 = vld [vmem:[%s1355 + $0x8] sm:$0xff]
  %v1358 = vld [vmem:[%s1355 + $0x10] sm:$0xff]
  %v1359 = vld [vmem:[%s1355 + $0x18] sm:$0xff]
  %v1360 = vld [vmem:[%s1355 + $0x20] sm:$0xff]
  %v1361 = vld [vmem:[%s1355 + $0x28] sm:$0xff]
  %v1362 = vld [vmem:[%s1355 + $0x30] sm:$0xff]
  %v1363 = vld [vmem:[%s1355 + $0x38] sm:$0xff]
  %v1364 = vld [vmem:[%s1355 + $0x40] sm:$0xff]
  %v1365 = vld [vmem:[%s1355 + $0x48] sm:$0xff]
  %v1366 = vld [vmem:[%s1355 + $0x50] sm:$0xff]
  %v1367 = vld [vmem:[%s1355 + $0x58] sm:$0xff]
  %v1368 = vld [vmem:[%s1355 + $0x60] sm:$0xff]
  %v1369 = vld [vmem:[%s1355 + $0x68] sm:$0xff]
  %v1370 = vld [vmem:[%s1355 + $0x70] sm:$0xff]
  %v1371 = vld [vmem:[%s1355 + $0x78] sm:$0xff]
  %v1372 = vld [vmem:[%s1355 + $0x80] sm:$0xff]
  %v1373 = vld [vmem:[%s1355 + $0x88] sm:$0xff]
  %v1374 = vld [vmem:[%s1355 + $0x90] sm:$0xff]
  %v1375 = vld [vmem:[%s1355 + $0x98] sm:$0xff]
  %v1376 = vld [vmem:[%s1355 + $0xa0] sm:$0xff]
  %v1377 = vld [vmem:[%s1355 + $0xa8] sm:$0xff]
  %v1378 = vld [vmem:[%s1355 + $0xb0] sm:$0xff]
  %v1379 = vld [vmem:[%s1355 + $0xb8] sm:$0xff]
  %v1380 = vld [vmem:[%s1355 + $0xc0] sm:$0xff]
  %v1381 = vld [vmem:[%s1355 + $0xc8] sm:$0xff]
  %v1382 = vld [vmem:[%s1355 + $0xd0] sm:$0xff]
  %v1383 = vld [vmem:[%s1355 + $0xd8] sm:$0xff]
  %v1384 = vld [vmem:[%s1355 + $0xe0] sm:$0xff]
  %v1385 = vld [vmem:[%s1355 + $0xe8] sm:$0xff]
  %v1386 = vld [vmem:[%s1355 + $0xf0] sm:$0xff]
  %v1387 = vld [vmem:[%s1355 + $0xf8] sm:$0xff]
  %v1388 = vld [vmem:[%s1355 + $0x100] sm:$0xff]
  %v1389 = vld [vmem:[%s1355 + $0x108] sm:$0xff]
  %v1390 = vld [vmem:[%s1355 + $0x110] sm:$0xff]
  %v1391 = vld [vmem:[%s1355 + $0x118] sm:$0xff]
  %v1392 = vld [vmem:[%s1355 + $0x120] sm:$0xff]
  %v1393 = vld [vmem:[%s1355 + $0x128] sm:$0xff]
  %v1394 = vld [vmem:[%s1355 + $0x130] sm:$0xff]
  %v1395 = vld [vmem:[%s1355 + $0x138] sm:$0xff]
  %v1396 = vld [vmem:[%s1355 + $0x140] sm:$0xff]
  %v1397 = vld [vmem:[%s1355 + $0x148] sm:$0xff]
  %v1398 = vld [vmem:[%s1355 + $0x150] sm:$0xff]
  %v1399 = vld [vmem:[%s1355 + $0x158] sm:$0xff]
  %v1400 = vld [vmem:[%s1355 + $0x160] sm:$0xff]
  %v1401 = vld [vmem:[%s1355 + $0x168] sm:$0xff]
  %v1402 = vld [vmem:[%s1355 + $0x170] sm:$0xff]
  %v1403 = vld [vmem:[%s1355 + $0x178] sm:$0xff]
  %v1404 = vld [vmem:[%s1355 + $0x180] sm:$0xff]
  %v1405 = vld [vmem:[%s1355 + $0x188] sm:$0xff]
  %v1406 = vld [vmem:[%s1355 + $0x190] sm:$0xff]
  %v1407 = vld [vmem:[%s1355 + $0x198] sm:$0xff]
  %v1408 = vld [vmem:[%s1355 + $0x1a0] sm:$0xff]
  %v1409 = vld [vmem:[%s1355 + $0x1a8] sm:$0xff]
  %v1410 = vld [vmem:[%s1355 + $0x1b0] sm:$0xff]
  %v1411 = vld [vmem:[%s1355 + $0x1b8] sm:$0xff]
  %v1412 = vld [vmem:[%s1355 + $0x1c0] sm:$0xff]
  %v1413 = vld [vmem:[%s1355 + $0x1c8] sm:$0xff]
  %v1414 = vld [vmem:[%s1355 + $0x1d0] sm:$0xff]
  %v1415 = vld [vmem:[%s1355 + $0x1d8] sm:$0xff]
  %v1416 = vld [vmem:[%s1355 + $0x1e0] sm:$0xff]
  %v1417 = vld [vmem:[%s1355 + $0x1e8] sm:$0xff]
  %v1418 = vld [vmem:[%s1355 + $0x1f0] sm:$0xff]
  %v1419 = vld [vmem:[%s1355 + $0x1f8] sm:$0xff]
  %v1420 = vld [vmem:[%s1355 + $0x200] sm:$0xff]
  %v1421 = vld [vmem:[%s1355 + $0x208] sm:$0xff]
  %v1422 = vld [vmem:[%s1355 + $0x210] sm:$0xff]
  %v1423 = vld [vmem:[%s1355 + $0x218] sm:$0xff]
  %v1424 = vld [vmem:[%s1355 + $0x220] sm:$0xff]
  %v1425 = vld [vmem:[%s1355 + $0x228] sm:$0xff]
  %v1426 = vld [vmem:[%s1355 + $0x230] sm:$0xff]
  %v1427 = vld [vmem:[%s1355 + $0x238] sm:$0xff]
  %v1428 = vld [vmem:[%s1 + $0x2] ss:$0 sm:$0xff]
  %vm1429 = vcmask 523264
  %1430 = vst.msk [vmem:[#allocation2] sm:$0xff] %vm1429, 0.0
  %vm1431 = vcmask 517120
  %1432 = vst.msk [vmem:[#allocation2 + $0x8] sm:$0x3] %vm1431, 0.0
  %1433 = vst.msk [vmem:[#allocation2 + $0xa0] sm:$0xff] %vm1429, 0.0
  %1434 = vst.msk [vmem:[#allocation2 + $0xa8] sm:$0x3] %vm1431, 0.0
  %s1435 = scalar_lea.vmem [#allocation2], 144
  %1436 = vst.msk [vmem:[%s1435] sm:$0xff] %vm1429, 0.0
  %1437 = vst.msk [vmem:[%s1435 + $0x8] sm:$0x3] %vm1431, 0.0
  %1438 = vst.msk [vmem:[%s1435 + $0xa0] sm:$0xff] %vm1429, 0.0
  %1439 = vst.msk [vmem:[%s1435 + $0xa8] sm:$0x3] %vm1431, 0.0
  %s1440 = scalar_lea.vmem [#allocation2], 16
  %vm1441 = vcmask 516096
  %1442 = vst.msk [vmem:[%s1440] sm:$0x1] %vm1441, 0.0
  %1443 = vst.msk [vmem:[%s1440 + $0x10] sm:$0x1] %vm1441, 0.0
  %1444 = vst.msk [vmem:[%s1440 + $0x20] sm:$0x1] %vm1441, 0.0
  %1445 = vst.msk [vmem:[%s1440 + $0x30] sm:$0x1] %vm1441, 0.0
  %1446 = vst.msk [vmem:[%s1440 + $0x40] sm:$0x1] %vm1441, 0.0
  %1447 = vst.msk [vmem:[%s1440 + $0x50] sm:$0x1] %vm1441, 0.0
  %1448 = vst.msk [vmem:[%s1440 + $0x60] sm:$0x1] %vm1441, 0.0
  %1449 = vst.msk [vmem:[%s1440 + $0x70] sm:$0x1] %vm1441, 0.0
  %1450 = vst.msk [vmem:[%s1440 + $0xa0] sm:$0x1] %vm1441, 0.0
  %1451 = vst.msk [vmem:[%s1440 + $0xb0] sm:$0x1] %vm1441, 0.0
  %1452 = vst.msk [vmem:[%s1440 + $0xc0] sm:$0x1] %vm1441, 0.0
  %1453 = vst.msk [vmem:[%s1440 + $0xd0] sm:$0x1] %vm1441, 0.0
  %1454 = vst.msk [vmem:[%s1440 + $0xe0] sm:$0x1] %vm1441, 0.0
  %1455 = vst.msk [vmem:[%s1440 + $0xf0] sm:$0x1] %vm1441, 0.0
  %1456 = vst.msk [vmem:[%s1440 + $0x100] sm:$0x1] %vm1441, 0.0
  %1457 = vst.msk [vmem:[%s1440 + $0x110] sm:$0x1] %vm1441, 0.0
  %1458 = vst.msk [vmem:[%s1440 + $0x9] sm:$0x1] %vm1441, 0.0
  %1459 = vst.msk [vmem:[%s1440 + $0x19] sm:$0x1] %vm1441, 0.0
  %1460 = vst.msk [vmem:[%s1440 + $0x29] sm:$0x1] %vm1441, 0.0
  %1461 = vst.msk [vmem:[%s1440 + $0x39] sm:$0x1] %vm1441, 0.0
  %1462 = vst.msk [vmem:[%s1440 + $0x49] sm:$0x1] %vm1441, 0.0
  %1463 = vst.msk [vmem:[%s1440 + $0x59] sm:$0x1] %vm1441, 0.0
  %1464 = vst.msk [vmem:[%s1440 + $0x69] sm:$0x1] %vm1441, 0.0
  %1465 = vst.msk [vmem:[%s1440 + $0x79] sm:$0x1] %vm1441, 0.0
  %1466 = vst.msk [vmem:[%s1440 + $0xa9] sm:$0x1] %vm1441, 0.0
  %1467 = vst.msk [vmem:[%s1440 + $0xb9] sm:$0x1] %vm1441, 0.0
  %1468 = vst.msk [vmem:[%s1440 + $0xc9] sm:$0x1] %vm1441, 0.0
  %1469 = vst.msk [vmem:[%s1440 + $0xd9] sm:$0x1] %vm1441, 0.0
  %1470 = vst.msk [vmem:[%s1440 + $0xe9] sm:$0x1] %vm1441, 0.0
  %1471 = vst.msk [vmem:[%s1440 + $0xf9] sm:$0x1] %vm1441, 0.0
  %1472 = vst.msk [vmem:[%s1440 + $0x109] sm:$0x1] %vm1441, 0.0
  %1473 = vst.msk [vmem:[%s1440 + $0x119] sm:$0x1] %vm1441, 0.0
  %1474 = vst.msk [vmem:[%s1440 + $0x1] sm:$0xff] %vm1429, %v1266
  %1475 = vst.msk [vmem:[%s1440 + $0x11] sm:$0xff] %vm1429, %v1267
  %1476 = vst.msk [vmem:[%s1440 + $0x21] sm:$0xff] %vm1429, %v1268
  %1477 = vst.msk [vmem:[%s1440 + $0x31] sm:$0xff] %vm1429, %v1269
  %1478 = vst.msk [vmem:[%s1440 + $0x41] sm:$0xff] %vm1429, %v1270
  %1479 = vst.msk [vmem:[%s1440 + $0x51] sm:$0xff] %vm1429, %v1271
  %1480 = vst.msk [vmem:[%s1440 + $0x61] sm:$0xff] %vm1429, %v1272
  %1481 = vst.msk [vmem:[%s1440 + $0x71] sm:$0xff] %vm1429, %v1273
  %1482 = vst.msk [vmem:[%s1440 + $0xa1] sm:$0xff] %vm1429, %v1274
  %1483 = vst.msk [vmem:[%s1440 + $0xb1] sm:$0xff] %vm1429, %v1275
  %1484 = vst.msk [vmem:[%s1440 + $0xc1] sm:$0xff] %vm1429, %v1276
  %1485 = vst.msk [vmem:[%s1440 + $0xd1] sm:$0xff] %vm1429, %v1277
  %1486 = vst.msk [vmem:[%s1440 + $0xe1] sm:$0xff] %vm1429, %v1278
  %1487 = vst.msk [vmem:[%s1440 + $0xf1] sm:$0xff] %vm1429, %v1279
  %1488 = vst.msk [vmem:[%s1440 + $0x101] sm:$0xff] %vm1429, %v1280
  %1489 = vst.msk [vmem:[%s1440 + $0x111] sm:$0xff] %vm1429, %v1281
  %v1490 = vld [vmem:[#allocation2] sm:$0xff]
  %v1491 = vld [vmem:[#allocation2 + $0x10] sm:$0xff]
  %v1492 = vld [vmem:[#allocation2 + $0x20] sm:$0xff]
  %v1493 = vld [vmem:[#allocation2 + $0x30] sm:$0xff]
  %v1494 = vld [vmem:[#allocation2 + $0x40] sm:$0xff]
  %v1495 = vld [vmem:[#allocation2 + $0x50] sm:$0xff]
  %v1496 = vld [vmem:[#allocation2 + $0x60] sm:$0xff]
  %v1497 = vld [vmem:[#allocation2 + $0x70] sm:$0xff]
  %v1498 = vld [vmem:[#allocation2 + $0xa0] sm:$0xff]
  %v1499 = vld [vmem:[#allocation2 + $0xb0] sm:$0xff]
  %v1500 = vld [vmem:[#allocation2 + $0xc0] sm:$0xff]
  %v1501 = vld [vmem:[#allocation2 + $0xd0] sm:$0xff]
  %v1502 = vld [vmem:[#allocation2 + $0xe0] sm:$0xff]
  %v1503 = vld [vmem:[#allocation2 + $0xf0] sm:$0xff]
  %v1504 = vld [vmem:[#allocation2 + $0x100] sm:$0xff]
  %v1505 = vld [vmem:[#allocation2 + $0x110] sm:$0xff]
  %1506 = vst.msk [vmem:[#allocation4] sm:$0xff] %vm1429, %v1490
  %1507 = vst.msk [vmem:[#allocation4 + $0x28] sm:$0xff] %vm1429, %v1491
  %1508 = vst.msk [vmem:[#allocation4 + $0x50] sm:$0xff] %vm1429, %v1492
  %1509 = vst.msk [vmem:[#allocation4 + $0x78] sm:$0xff] %vm1429, %v1493
  %1510 = vst.msk [vmem:[#allocation4 + $0xa0] sm:$0xff] %vm1429, %v1494
  %1511 = vst.msk [vmem:[#allocation4 + $0xc8] sm:$0xff] %vm1429, %v1495
  %1512 = vst.msk [vmem:[#allocation4 + $0xf0] sm:$0xff] %vm1429, %v1496
  %1513 = vst.msk [vmem:[#allocation4 + $0x118] sm:$0xff] %vm1429, %v1497
  %1514 = vst.msk [vmem:[#allocation4 + $0x140] sm:$0xff] %vm1429, %v1498
  %1515 = vst.msk [vmem:[#allocation4 + $0x168] sm:$0xff] %vm1429, %v1499
  %1516 = vst.msk [vmem:[#allocation4 + $0x190] sm:$0xff] %vm1429, %v1500
  %1517 = vst.msk [vmem:[#allocation4 + $0x1b8] sm:$0xff] %vm1429, %v1501
  %1518 = vst.msk [vmem:[#allocation4 + $0x1e0] sm:$0xff] %vm1429, %v1502
  %1519 = vst.msk [vmem:[#allocation4 + $0x208] sm:$0xff] %vm1429, %v1503
  %1520 = vst.msk [vmem:[#allocation4 + $0x230] sm:$0xff] %vm1429, %v1504
  %1521 = vst.msk [vmem:[#allocation4 + $0x258] sm:$0xff] %vm1429, %v1505
  %v1522 = vld [vmem:[#allocation2 + $0x1] sm:$0xff]
  %v1523 = vld [vmem:[#allocation2 + $0x11] sm:$0xff]
  %v1524 = vld [vmem:[#allocation2 + $0x21] sm:$0xff]
  %v1525 = vld [vmem:[#allocation2 + $0x31] sm:$0xff]
  %v1526 = vld [vmem:[#allocation2 + $0x41] sm:$0xff]
  %v1527 = vld [vmem:[#allocation2 + $0x51] sm:$0xff]
  %v1528 = vld [vmem:[#allocation2 + $0x61] sm:$0xff]
  %v1529 = vld [vmem:[#allocation2 + $0x71] sm:$0xff]
  %v1530 = vld [vmem:[#allocation2 + $0xa1] sm:$0xff]
  %v1531 = vld [vmem:[#allocation2 + $0xb1] sm:$0xff]
  %v1532 = vld [vmem:[#allocation2 + $0xc1] sm:$0xff]
  %v1533 = vld [vmem:[#allocation2 + $0xd1] sm:$0xff]
  %v1534 = vld [vmem:[#allocation2 + $0xe1] sm:$0xff]
  %v1535 = vld [vmem:[#allocation2 + $0xf1] sm:$0xff]
  %v1536 = vld [vmem:[#allocation2 + $0x101] sm:$0xff]
  %v1537 = vld [vmem:[#allocation2 + $0x111] sm:$0xff]
  %1554 = vrot.lane.b32.xlu0 %v1522, 64
  %v1555 = vpop.permute.xlu0 %1554
  %1556 = vrot.lane.b32.xlu0 %v1523, 64
  %v1557 = vpop.permute.xlu0 %1556
  %1558 = vrot.lane.b32.xlu0 %v1524, 64
  %v1559 = vpop.permute.xlu0 %1558
  %1560 = vrot.lane.b32.xlu0 %v1525, 64
  %v1561 = vpop.permute.xlu0 %1560
  %1562 = vrot.lane.b32.xlu0 %v1526, 64
  %v1563 = vpop.permute.xlu0 %1562
  %1564 = vrot.lane.b32.xlu0 %v1527, 64
  %v1565 = vpop.permute.xlu0 %1564
  %1566 = vrot.lane.b32.xlu0 %v1528, 64
  %v1567 = vpop.permute.xlu0 %1566
  %1568 = vrot.lane.b32.xlu0 %v1529, 64
  %v1569 = vpop.permute.xlu0 %1568
  %1570 = vrot.lane.b32.xlu0 %v1530, 64
  %v1571 = vpop.permute.xlu0 %1570
  %1572 = vrot.lane.b32.xlu0 %v1531, 64
  %v1573 = vpop.permute.xlu0 %1572
  %1574 = vrot.lane.b32.xlu0 %v1532, 64
  %v1575 = vpop.permute.xlu0 %1574
  %1576 = vrot.lane.b32.xlu0 %v1533, 64
  %v1577 = vpop.permute.xlu0 %1576
  %1578 = vrot.lane.b32.xlu0 %v1534, 64
  %v1579 = vpop.permute.xlu0 %1578
  %1580 = vrot.lane.b32.xlu0 %v1535, 64
  %v1581 = vpop.permute.xlu0 %1580
  %1582 = vrot.lane.b32.xlu0 %v1536, 64
  %v1583 = vpop.permute.xlu0 %1582
  %1584 = vrot.lane.b32.xlu0 %v1537, 64
  %v1585 = vpop.permute.xlu0 %1584
  %vm1602 = vcmask 1048064
  %1603 = vst.msk [vmem:[#allocation4] sm:$0xff] %vm1602, %v1555
  %1604 = vst.msk [vmem:[#allocation4 + $0x28] sm:$0xff] %vm1602, %v1557
  %1605 = vst.msk [vmem:[#allocation4 + $0x50] sm:$0xff] %vm1602, %v1559
  %1606 = vst.msk [vmem:[#allocation4 + $0x78] sm:$0xff] %vm1602, %v1561
  %1607 = vst.msk [vmem:[#allocation4 + $0xa0] sm:$0xff] %vm1602, %v1563
  %1608 = vst.msk [vmem:[#allocation4 + $0xc8] sm:$0xff] %vm1602, %v1565
  %1609 = vst.msk [vmem:[#allocation4 + $0xf0] sm:$0xff] %vm1602, %v1567
  %1610 = vst.msk [vmem:[#allocation4 + $0x118] sm:$0xff] %vm1602, %v1569
  %1611 = vst.msk [vmem:[#allocation4 + $0x140] sm:$0xff] %vm1602, %v1571
  %1612 = vst.msk [vmem:[#allocation4 + $0x168] sm:$0xff] %vm1602, %v1573
  %1613 = vst.msk [vmem:[#allocation4 + $0x190] sm:$0xff] %vm1602, %v1575
  %1614 = vst.msk [vmem:[#allocation4 + $0x1b8] sm:$0xff] %vm1602, %v1577
  %1615 = vst.msk [vmem:[#allocation4 + $0x1e0] sm:$0xff] %vm1602, %v1579
  %1616 = vst.msk [vmem:[#allocation4 + $0x208] sm:$0xff] %vm1602, %v1581
  %1617 = vst.msk [vmem:[#allocation4 + $0x230] sm:$0xff] %vm1602, %v1583
  %1618 = vst.msk [vmem:[#allocation4 + $0x258] sm:$0xff] %vm1602, %v1585
  %v1619 = vld [vmem:[#allocation2 + $0x2] sm:$0xff]
  %v1620 = vld [vmem:[#allocation2 + $0x12] sm:$0xff]
  %v1621 = vld [vmem:[#allocation2 + $0x22] sm:$0xff]
  %v1622 = vld [vmem:[#allocation2 + $0x32] sm:$0xff]
  %v1623 = vld [vmem:[#allocation2 + $0x42] sm:$0xff]
  %v1624 = vld [vmem:[#allocation2 + $0x52] sm:$0xff]
  %v1625 = vld [vmem:[#allocation2 + $0x62] sm:$0xff]
  %v1626 = vld [vmem:[#allocation2 + $0x72] sm:$0xff]
  %v1627 = vld [vmem:[#allocation2 + $0xa2] sm:$0xff]
  %v1628 = vld [vmem:[#allocation2 + $0xb2] sm:$0xff]
  %v1629 = vld [vmem:[#allocation2 + $0xc2] sm:$0xff]
  %v1630 = vld [vmem:[#allocation2 + $0xd2] sm:$0xff]
  %v1631 = vld [vmem:[#allocation2 + $0xe2] sm:$0xff]
  %v1632 = vld [vmem:[#allocation2 + $0xf2] sm:$0xff]
  %v1633 = vld [vmem:[#allocation2 + $0x102] sm:$0xff]
  %v1634 = vld [vmem:[#allocation2 + $0x112] sm:$0xff]
  %1635 = vst.msk [vmem:[#allocation4 + $0x8] sm:$0xff] %vm1429, %v1619
  %1636 = vst.msk [vmem:[#allocation4 + $0x30] sm:$0xff] %vm1429, %v1620
  %1637 = vst.msk [vmem:[#allocation4 + $0x58] sm:$0xff] %vm1429, %v1621
  %1638 = vst.msk [vmem:[#allocation4 + $0x80] sm:$0xff] %vm1429, %v1622
  %1639 = vst.msk [vmem:[#allocation4 + $0xa8] sm:$0xff] %vm1429, %v1623
  %1640 = vst.msk [vmem:[#allocation4 + $0xd0] sm:$0xff] %vm1429, %v1624
  %1641 = vst.msk [vmem:[#allocation4 + $0xf8] sm:$0xff] %vm1429, %v1625
  %1642 = vst.msk [vmem:[#allocation4 + $0x120] sm:$0xff] %vm1429, %v1626
  %1643 = vst.msk [vmem:[#allocation4 + $0x148] sm:$0xff] %vm1429, %v1627
  %1644 = vst.msk [vmem:[#allocation4 + $0x170] sm:$0xff] %vm1429, %v1628
  %1645 = vst.msk [vmem:[#allocation4 + $0x198] sm:$0xff] %vm1429, %v1629
  %1646 = vst.msk [vmem:[#allocation4 + $0x1c0] sm:$0xff] %vm1429, %v1630
  %1647 = vst.msk [vmem:[#allocation4 + $0x1e8] sm:$0xff] %vm1429, %v1631
  %1648 = vst.msk [vmem:[#allocation4 + $0x210] sm:$0xff] %vm1429, %v1632
  %1649 = vst.msk [vmem:[#allocation4 + $0x238] sm:$0xff] %vm1429, %v1633
  %1650 = vst.msk [vmem:[#allocation4 + $0x260] sm:$0xff] %vm1429, %v1634
  %v1651 = vld [vmem:[%s1440] sm:$0xff]
  %v1652 = vld [vmem:[%s1440 + $0x10] sm:$0xff]
  %v1653 = vld [vmem:[%s1440 + $0x20] sm:$0xff]
  %v1654 = vld [vmem:[%s1440 + $0x30] sm:$0xff]
  %v1655 = vld [vmem:[%s1440 + $0x40] sm:$0xff]
  %v1656 = vld [vmem:[%s1440 + $0x50] sm:$0xff]
  %v1657 = vld [vmem:[%s1440 + $0x60] sm:$0xff]
  %v1658 = vld [vmem:[%s1440 + $0x70] sm:$0xff]
  %v1659 = vld [vmem:[%s1440 + $0xa0] sm:$0xff]
  %v1660 = vld [vmem:[%s1440 + $0xb0] sm:$0xff]
  %v1661 = vld [vmem:[%s1440 + $0xc0] sm:$0xff]
  %v1662 = vld [vmem:[%s1440 + $0xd0] sm:$0xff]
  %v1663 = vld [vmem:[%s1440 + $0xe0] sm:$0xff]
  %v1664 = vld [vmem:[%s1440 + $0xf0] sm:$0xff]
  %v1665 = vld [vmem:[%s1440 + $0x100] sm:$0xff]
  %v1666 = vld [vmem:[%s1440 + $0x110] sm:$0xff]
  %1683 = vrot.lane.b32.xlu0 %v1651, 64
  %v1684 = vpop.permute.xlu0 %1683
  %1685 = vrot.lane.b32.xlu0 %v1652, 64
  %v1686 = vpop.permute.xlu0 %1685
  %1687 = vrot.lane.b32.xlu0 %v1653, 64
  %v1688 = vpop.permute.xlu0 %1687
  %1689 = vrot.lane.b32.xlu0 %v1654, 64
  %v1690 = vpop.permute.xlu0 %1689
  %1691 = vrot.lane.b32.xlu0 %v1655, 64
  %v1692 = vpop.permute.xlu0 %1691
  %1693 = vrot.lane.b32.xlu0 %v1656, 64
  %v1694 = vpop.permute.xlu0 %1693
  %1695 = vrot.lane.b32.xlu0 %v1657, 64
  %v1696 = vpop.permute.xlu0 %1695
  %1697 = vrot.lane.b32.xlu0 %v1658, 64
  %v1698 = vpop.permute.xlu0 %1697
  %1699 = vrot.lane.b32.xlu0 %v1659, 64
  %v1700 = vpop.permute.xlu0 %1699
  %1701 = vrot.lane.b32.xlu0 %v1660, 64
  %v1702 = vpop.permute.xlu0 %1701
  %1703 = vrot.lane.b32.xlu0 %v1661, 64
  %v1704 = vpop.permute.xlu0 %1703
  %1705 = vrot.lane.b32.xlu0 %v1662, 64
  %v1706 = vpop.permute.xlu0 %1705
  %1707 = vrot.lane.b32.xlu0 %v1663, 64
  %v1708 = vpop.permute.xlu0 %1707
  %1709 = vrot.lane.b32.xlu0 %v1664, 64
  %v1710 = vpop.permute.xlu0 %1709
  %1711 = vrot.lane.b32.xlu0 %v1665, 64
  %v1712 = vpop.permute.xlu0 %1711
  %1713 = vrot.lane.b32.xlu0 %v1666, 64
  %v1714 = vpop.permute.xlu0 %1713
  %1731 = vst.msk [vmem:[#allocation4 + $0x8] sm:$0xff] %vm1602, %v1684
  %1732 = vst.msk [vmem:[#allocation4 + $0x30] sm:$0xff] %vm1602, %v1686
  %1733 = vst.msk [vmem:[#allocation4 + $0x58] sm:$0xff] %vm1602, %v1688
  %1734 = vst.msk [vmem:[#allocation4 + $0x80] sm:$0xff] %vm1602, %v1690
  %1735 = vst.msk [vmem:[#allocation4 + $0xa8] sm:$0xff] %vm1602, %v1692
  %1736 = vst.msk [vmem:[#allocation4 + $0xd0] sm:$0xff] %vm1602, %v1694
  %1737 = vst.msk [vmem:[#allocation4 + $0xf8] sm:$0xff] %vm1602, %v1696
  %1738 = vst.msk [vmem:[#allocation4 + $0x120] sm:$0xff] %vm1602, %v1698
  %1739 = vst.msk [vmem:[#allocation4 + $0x148] sm:$0xff] %vm1602, %v1700
  %1740 = vst.msk [vmem:[#allocation4 + $0x170] sm:$0xff] %vm1602, %v1702
  %1741 = vst.msk [vmem:[#allocation4 + $0x198] sm:$0xff] %vm1602, %v1704
  %1742 = vst.msk [vmem:[#allocation4 + $0x1c0] sm:$0xff] %vm1602, %v1706
  %1743 = vst.msk [vmem:[#allocation4 + $0x1e8] sm:$0xff] %vm1602, %v1708
  %1744 = vst.msk [vmem:[#allocation4 + $0x210] sm:$0xff] %vm1602, %v1710
  %1745 = vst.msk [vmem:[#allocation4 + $0x238] sm:$0xff] %vm1602, %v1712
  %1746 = vst.msk [vmem:[#allocation4 + $0x260] sm:$0xff] %vm1602, %v1714
  %v1747 = vld [vmem:[%s1440 + $0x1] sm:$0xff]
  %v1748 = vld [vmem:[%s1440 + $0x11] sm:$0xff]
  %v1749 = vld [vmem:[%s1440 + $0x21] sm:$0xff]
  %v1750 = vld [vmem:[%s1440 + $0x31] sm:$0xff]
  %v1751 = vld [vmem:[%s1440 + $0x41] sm:$0xff]
  %v1752 = vld [vmem:[%s1440 + $0x51] sm:$0xff]
  %v1753 = vld [vmem:[%s1440 + $0x61] sm:$0xff]
  %v1754 = vld [vmem:[%s1440 + $0x71] sm:$0xff]
  %v1755 = vld [vmem:[%s1440 + $0xa1] sm:$0xff]
  %v1756 = vld [vmem:[%s1440 + $0xb1] sm:$0xff]
  %v1757 = vld [vmem:[%s1440 + $0xc1] sm:$0xff]
  %v1758 = vld [vmem:[%s1440 + $0xd1] sm:$0xff]
  %v1759 = vld [vmem:[%s1440 + $0xe1] sm:$0xff]
  %v1760 = vld [vmem:[%s1440 + $0xf1] sm:$0xff]
  %v1761 = vld [vmem:[%s1440 + $0x101] sm:$0xff]
  %v1762 = vld [vmem:[%s1440 + $0x111] sm:$0xff]
  %1763 = vst.msk [vmem:[#allocation4 + $0x10] sm:$0xff] %vm1429, %v1747
  %1764 = vst.msk [vmem:[#allocation4 + $0x38] sm:$0xff] %vm1429, %v1748
  %1765 = vst.msk [vmem:[#allocation4 + $0x60] sm:$0xff] %vm1429, %v1749
  %1766 = vst.msk [vmem:[#allocation4 + $0x88] sm:$0xff] %vm1429, %v1750
  %1767 = vst.msk [vmem:[#allocation4 + $0xb0] sm:$0xff] %vm1429, %v1751
  %1768 = vst.msk [vmem:[#allocation4 + $0xd8] sm:$0xff] %vm1429, %v1752
  %1769 = vst.msk [vmem:[#allocation4 + $0x100] sm:$0xff] %vm1429, %v1753
  %1770 = vst.msk [vmem:[#allocation4 + $0x128] sm:$0xff] %vm1429, %v1754
  %1771 = vst.msk [vmem:[#allocation4 + $0x150] sm:$0xff] %vm1429, %v1755
  %1772 = vst.msk [vmem:[#allocation4 + $0x178] sm:$0xff] %vm1429, %v1756
  %1773 = vst.msk [vmem:[#allocation4 + $0x1a0] sm:$0xff] %vm1429, %v1757
  %1774 = vst.msk [vmem:[#allocation4 + $0x1c8] sm:$0xff] %vm1429, %v1758
  %1775 = vst.msk [vmem:[#allocation4 + $0x1f0] sm:$0xff] %vm1429, %v1759
  %1776 = vst.msk [vmem:[#allocation4 + $0x218] sm:$0xff] %vm1429, %v1760
  %1777 = vst.msk [vmem:[#allocation4 + $0x240] sm:$0xff] %vm1429, %v1761
  %1778 = vst.msk [vmem:[#allocation4 + $0x268] sm:$0xff] %vm1429, %v1762
  %v1779 = vld [vmem:[%s1440 + $0x2] sm:$0xff]
  %v1780 = vld [vmem:[%s1440 + $0x12] sm:$0xff]
  %v1781 = vld [vmem:[%s1440 + $0x22] sm:$0xff]
  %v1782 = vld [vmem:[%s1440 + $0x32] sm:$0xff]
  %v1783 = vld [vmem:[%s1440 + $0x42] sm:$0xff]
  %v1784 = vld [vmem:[%s1440 + $0x52] sm:$0xff]
  %v1785 = vld [vmem:[%s1440 + $0x62] sm:$0xff]
  %v1786 = vld [vmem:[%s1440 + $0x72] sm:$0xff]
  %v1787 = vld [vmem:[%s1440 + $0xa2] sm:$0xff]
  %v1788 = vld [vmem:[%s1440 + $0xb2] sm:$0xff]
  %v1789 = vld [vmem:[%s1440 + $0xc2] sm:$0xff]
  %v1790 = vld [vmem:[%s1440 + $0xd2] sm:$0xff]
  %v1791 = vld [vmem:[%s1440 + $0xe2] sm:$0xff]
  %v1792 = vld [vmem:[%s1440 + $0xf2] sm:$0xff]
  %v1793 = vld [vmem:[%s1440 + $0x102] sm:$0xff]
  %v1794 = vld [vmem:[%s1440 + $0x112] sm:$0xff]
  %1811 = vrot.lane.b32.xlu0 %v1779, 64
  %v1812 = vpop.permute.xlu0 %1811
  %1813 = vrot.lane.b32.xlu0 %v1780, 64
  %v1814 = vpop.permute.xlu0 %1813
  %1815 = vrot.lane.b32.xlu0 %v1781, 64
  %v1816 = vpop.permute.xlu0 %1815
  %1817 = vrot.lane.b32.xlu0 %v1782, 64
  %v1818 = vpop.permute.xlu0 %1817
  %1819 = vrot.lane.b32.xlu0 %v1783, 64
  %v1820 = vpop.permute.xlu0 %1819
  %1821 = vrot.lane.b32.xlu0 %v1784, 64
  %v1822 = vpop.permute.xlu0 %1821
  %1823 = vrot.lane.b32.xlu0 %v1785, 64
  %v1824 = vpop.permute.xlu0 %1823
  %1825 = vrot.lane.b32.xlu0 %v1786, 64
  %v1826 = vpop.permute.xlu0 %1825
  %1827 = vrot.lane.b32.xlu0 %v1787, 64
  %v1828 = vpop.permute.xlu0 %1827
  %1829 = vrot.lane.b32.xlu0 %v1788, 64
  %v1830 = vpop.permute.xlu0 %1829
  %1831 = vrot.lane.b32.xlu0 %v1789, 64
  %v1832 = vpop.permute.xlu0 %1831
  %1833 = vrot.lane.b32.xlu0 %v1790, 64
  %v1834 = vpop.permute.xlu0 %1833
  %1835 = vrot.lane.b32.xlu0 %v1791, 64
  %v1836 = vpop.permute.xlu0 %1835
  %1837 = vrot.lane.b32.xlu0 %v1792, 64
  %v1838 = vpop.permute.xlu0 %1837
  %1839 = vrot.lane.b32.xlu0 %v1793, 64
  %v1840 = vpop.permute.xlu0 %1839
  %1841 = vrot.lane.b32.xlu0 %v1794, 64
  %v1842 = vpop.permute.xlu0 %1841
  %1859 = vst.msk [vmem:[#allocation4 + $0x10] sm:$0xff] %vm1602, %v1812
  %1860 = vst.msk [vmem:[#allocation4 + $0x38] sm:$0xff] %vm1602, %v1814
  %1861 = vst.msk [vmem:[#allocation4 + $0x60] sm:$0xff] %vm1602, %v1816
  %1862 = vst.msk [vmem:[#allocation4 + $0x88] sm:$0xff] %vm1602, %v1818
  %1863 = vst.msk [vmem:[#allocation4 + $0xb0] sm:$0xff] %vm1602, %v1820
  %1864 = vst.msk [vmem:[#allocation4 + $0xd8] sm:$0xff] %vm1602, %v1822
  %1865 = vst.msk [vmem:[#allocation4 + $0x100] sm:$0xff] %vm1602, %v1824
  %1866 = vst.msk [vmem:[#allocation4 + $0x128] sm:$0xff] %vm1602, %v1826
  %1867 = vst.msk [vmem:[#allocation4 + $0x150] sm:$0xff] %vm1602, %v1828
  %1868 = vst.msk [vmem:[#allocation4 + $0x178] sm:$0xff] %vm1602, %v1830
  %1869 = vst.msk [vmem:[#allocation4 + $0x1a0] sm:$0xff] %vm1602, %v1832
  %1870 = vst.msk [vmem:[#allocation4 + $0x1c8] sm:$0xff] %vm1602, %v1834
  %1871 = vst.msk [vmem:[#allocation4 + $0x1f0] sm:$0xff] %vm1602, %v1836
  %1872 = vst.msk [vmem:[#allocation4 + $0x218] sm:$0xff] %vm1602, %v1838
  %1873 = vst.msk [vmem:[#allocation4 + $0x240] sm:$0xff] %vm1602, %v1840
  %1874 = vst.msk [vmem:[#allocation4 + $0x268] sm:$0xff] %vm1602, %v1842
  %s1875 = scalar_lea.vmem [#allocation2], 32
  %v1876 = vld [vmem:[%s1875] sm:$0xff]
  %v1877 = vld [vmem:[%s1875 + $0x10] sm:$0xff]
  %v1878 = vld [vmem:[%s1875 + $0x20] sm:$0xff]
  %v1879 = vld [vmem:[%s1875 + $0x30] sm:$0xff]
  %v1880 = vld [vmem:[%s1875 + $0x40] sm:$0xff]
  %v1881 = vld [vmem:[%s1875 + $0x50] sm:$0xff]
  %v1882 = vld [vmem:[%s1875 + $0x60] sm:$0xff]
  %v1883 = vld [vmem:[%s1875 + $0x70] sm:$0xff]
  %v1884 = vld [vmem:[%s1875 + $0xa0] sm:$0xff]
  %v1885 = vld [vmem:[%s1875 + $0xb0] sm:$0xff]
  %v1886 = vld [vmem:[%s1875 + $0xc0] sm:$0xff]
  %v1887 = vld [vmem:[%s1875 + $0xd0] sm:$0xff]
  %v1888 = vld [vmem:[%s1875 + $0xe0] sm:$0xff]
  %v1889 = vld [vmem:[%s1875 + $0xf0] sm:$0xff]
  %v1890 = vld [vmem:[%s1875 + $0x100] sm:$0xff]
  %v1891 = vld [vmem:[%s1875 + $0x110] sm:$0xff]
  %1892 = vst.msk [vmem:[#allocation4 + $0x18] sm:$0xff] %vm1429, %v1876
  %1893 = vst.msk [vmem:[#allocation4 + $0x40] sm:$0xff] %vm1429, %v1877
  %1894 = vst.msk [vmem:[#allocation4 + $0x68] sm:$0xff] %vm1429, %v1878
  %1895 = vst.msk [vmem:[#allocation4 + $0x90] sm:$0xff] %vm1429, %v1879
  %1896 = vst.msk [vmem:[#allocation4 + $0xb8] sm:$0xff] %vm1429, %v1880
  %1897 = vst.msk [vmem:[#allocation4 + $0xe0] sm:$0xff] %vm1429, %v1881
  %1898 = vst.msk [vmem:[#allocation4 + $0x108] sm:$0xff] %vm1429, %v1882
  %1899 = vst.msk [vmem:[#allocation4 + $0x130] sm:$0xff] %vm1429, %v1883
  %1900 = vst.msk [vmem:[#allocation4 + $0x158] sm:$0xff] %vm1429, %v1884
  %1901 = vst.msk [vmem:[#allocation4 + $0x180] sm:$0xff] %vm1429, %v1885
  %1902 = vst.msk [vmem:[#allocation4 + $0x1a8] sm:$0xff] %vm1429, %v1886
  %1903 = vst.msk [vmem:[#allocation4 + $0x1d0] sm:$0xff] %vm1429, %v1887
  %1904 = vst.msk [vmem:[#allocation4 + $0x1f8] sm:$0xff] %vm1429, %v1888
  %1905 = vst.msk [vmem:[#allocation4 + $0x220] sm:$0xff] %vm1429, %v1889
  %1906 = vst.msk [vmem:[#allocation4 + $0x248] sm:$0xff] %vm1429, %v1890
  %1907 = vst.msk [vmem:[#allocation4 + $0x270] sm:$0xff] %vm1429, %v1891
  %v1908 = vld [vmem:[%s1875 + $0x1] sm:$0xff]
  %v1909 = vld [vmem:[%s1875 + $0x11] sm:$0xff]
  %v1910 = vld [vmem:[%s1875 + $0x21] sm:$0xff]
  %v1911 = vld [vmem:[%s1875 + $0x31] sm:$0xff]
  %v1912 = vld [vmem:[%s1875 + $0x41] sm:$0xff]
  %v1913 = vld [vmem:[%s1875 + $0x51] sm:$0xff]
  %v1914 = vld [vmem:[%s1875 + $0x61] sm:$0xff]
  %v1915 = vld [vmem:[%s1875 + $0x71] sm:$0xff]
  %v1916 = vld [vmem:[%s1875 + $0xa1] sm:$0xff]
  %v1917 = vld [vmem:[%s1875 + $0xb1] sm:$0xff]
  %v1918 = vld [vmem:[%s1875 + $0xc1] sm:$0xff]
  %v1919 = vld [vmem:[%s1875 + $0xd1] sm:$0xff]
  %v1920 = vld [vmem:[%s1875 + $0xe1] sm:$0xff]
  %v1921 = vld [vmem:[%s1875 + $0xf1] sm:$0xff]
  %v1922 = vld [vmem:[%s1875 + $0x101] sm:$0xff]
  %v1923 = vld [vmem:[%s1875 + $0x111] sm:$0xff]
  %1940 = vrot.lane.b32.xlu0 %v1908, 64
  %v1941 = vpop.permute.xlu0 %1940
  %1942 = vrot.lane.b32.xlu0 %v1909, 64
  %v1943 = vpop.permute.xlu0 %1942
  %1944 = vrot.lane.b32.xlu0 %v1910, 64
  %v1945 = vpop.permute.xlu0 %1944
  %1946 = vrot.lane.b32.xlu0 %v1911, 64
  %v1947 = vpop.permute.xlu0 %1946
  %1948 = vrot.lane.b32.xlu0 %v1912, 64
  %v1949 = vpop.permute.xlu0 %1948
  %1950 = vrot.lane.b32.xlu0 %v1913, 64
  %v1951 = vpop.permute.xlu0 %1950
  %1952 = vrot.lane.b32.xlu0 %v1914, 64
  %v1953 = vpop.permute.xlu0 %1952
  %1954 = vrot.lane.b32.xlu0 %v1915, 64
  %v1955 = vpop.permute.xlu0 %1954
  %1956 = vrot.lane.b32.xlu0 %v1916, 64
  %v1957 = vpop.permute.xlu0 %1956
  %1958 = vrot.lane.b32.xlu0 %v1917, 64
  %v1959 = vpop.permute.xlu0 %1958
  %1960 = vrot.lane.b32.xlu0 %v1918, 64
  %v1961 = vpop.permute.xlu0 %1960
  %1962 = vrot.lane.b32.xlu0 %v1919, 64
  %v1963 = vpop.permute.xlu0 %1962
  %1964 = vrot.lane.b32.xlu0 %v1920, 64
  %v1965 = vpop.permute.xlu0 %1964
  %1966 = vrot.lane.b32.xlu0 %v1921, 64
  %v1967 = vpop.permute.xlu0 %1966
  %1968 = vrot.lane.b32.xlu0 %v1922, 64
  %v1969 = vpop.permute.xlu0 %1968
  %1970 = vrot.lane.b32.xlu0 %v1923, 64
  %v1971 = vpop.permute.xlu0 %1970
  %1988 = vst.msk [vmem:[#allocation4 + $0x18] sm:$0xff] %vm1602, %v1941
  %1989 = vst.msk [vmem:[#allocation4 + $0x40] sm:$0xff] %vm1602, %v1943
  %1990 = vst.msk [vmem:[#allocation4 + $0x68] sm:$0xff] %vm1602, %v1945
  %1991 = vst.msk [vmem:[#allocation4 + $0x90] sm:$0xff] %vm1602, %v1947
  %1992 = vst.msk [vmem:[#allocation4 + $0xb8] sm:$0xff] %vm1602, %v1949
  %1993 = vst.msk [vmem:[#allocation4 + $0xe0] sm:$0xff] %vm1602, %v1951
  %1994 = vst.msk [vmem:[#allocation4 + $0x108] sm:$0xff] %vm1602, %v1953
  %1995 = vst.msk [vmem:[#allocation4 + $0x130] sm:$0xff] %vm1602, %v1955
  %1996 = vst.msk [vmem:[#allocation4 + $0x158] sm:$0xff] %vm1602, %v1957
  %1997 = vst.msk [vmem:[#allocation4 + $0x180] sm:$0xff] %vm1602, %v1959
  %1998 = vst.msk [vmem:[#allocation4 + $0x1a8] sm:$0xff] %vm1602, %v1961
  %1999 = vst.msk [vmem:[#allocation4 + $0x1d0] sm:$0xff] %vm1602, %v1963
  %2000 = vst.msk [vmem:[#allocation4 + $0x1f8] sm:$0xff] %vm1602, %v1965
  %2001 = vst.msk [vmem:[#allocation4 + $0x220] sm:$0xff] %vm1602, %v1967
  %2002 = vst.msk [vmem:[#allocation4 + $0x248] sm:$0xff] %vm1602, %v1969
  %2003 = vst.msk [vmem:[#allocation4 + $0x270] sm:$0xff] %vm1602, %v1971
  %v2004 = vld [vmem:[%s1875 + $0x2] sm:$0xff]
  %v2005 = vld [vmem:[%s1875 + $0x12] sm:$0xff]
  %v2006 = vld [vmem:[%s1875 + $0x22] sm:$0xff]
  %v2007 = vld [vmem:[%s1875 + $0x32] sm:$0xff]
  %v2008 = vld [vmem:[%s1875 + $0x42] sm:$0xff]
  %v2009 = vld [vmem:[%s1875 + $0x52] sm:$0xff]
  %v2010 = vld [vmem:[%s1875 + $0x62] sm:$0xff]
  %v2011 = vld [vmem:[%s1875 + $0x72] sm:$0xff]
  %v2012 = vld [vmem:[%s1875 + $0xa2] sm:$0xff]
  %v2013 = vld [vmem:[%s1875 + $0xb2] sm:$0xff]
  %v2014 = vld [vmem:[%s1875 + $0xc2] sm:$0xff]
  %v2015 = vld [vmem:[%s1875 + $0xd2] sm:$0xff]
  %v2016 = vld [vmem:[%s1875 + $0xe2] sm:$0xff]
  %v2017 = vld [vmem:[%s1875 + $0xf2] sm:$0xff]
  %v2018 = vld [vmem:[%s1875 + $0x102] sm:$0xff]
  %v2019 = vld [vmem:[%s1875 + $0x112] sm:$0xff]
  %2020 = vst.msk [vmem:[#allocation4 + $0x20] sm:$0xff] %vm1429, %v2004
  %2021 = vst.msk [vmem:[#allocation4 + $0x48] sm:$0xff] %vm1429, %v2005
  %2022 = vst.msk [vmem:[#allocation4 + $0x70] sm:$0xff] %vm1429, %v2006
  %2023 = vst.msk [vmem:[#allocation4 + $0x98] sm:$0xff] %vm1429, %v2007
  %2024 = vst.msk [vmem:[#allocation4 + $0xc0] sm:$0xff] %vm1429, %v2008
  %2025 = vst.msk [vmem:[#allocation4 + $0xe8] sm:$0xff] %vm1429, %v2009
  %2026 = vst.msk [vmem:[#allocation4 + $0x110] sm:$0xff] %vm1429, %v2010
  %2027 = vst.msk [vmem:[#allocation4 + $0x138] sm:$0xff] %vm1429, %v2011
  %2028 = vst.msk [vmem:[#allocation4 + $0x160] sm:$0xff] %vm1429, %v2012
  %2029 = vst.msk [vmem:[#allocation4 + $0x188] sm:$0xff] %vm1429, %v2013
  %2030 = vst.msk [vmem:[#allocation4 + $0x1b0] sm:$0xff] %vm1429, %v2014
  %2031 = vst.msk [vmem:[#allocation4 + $0x1d8] sm:$0xff] %vm1429, %v2015
  %2032 = vst.msk [vmem:[#allocation4 + $0x200] sm:$0xff] %vm1429, %v2016
  %2033 = vst.msk [vmem:[#allocation4 + $0x228] sm:$0xff] %vm1429, %v2017
  %2034 = vst.msk [vmem:[#allocation4 + $0x250] sm:$0xff] %vm1429, %v2018
  %2035 = vst.msk [vmem:[#allocation4 + $0x278] sm:$0xff] %vm1429, %v2019
  %v2036 = vld [vmem:[#allocation4] sm:$0xff]
  %v2037 = vld [vmem:[#allocation4 + $0x8] sm:$0xff]
  %v2038 = vld [vmem:[#allocation4 + $0x10] sm:$0xff]
  %v2039 = vld [vmem:[#allocation4 + $0x18] sm:$0xff]
  %v2040 = vld [vmem:[#allocation4 + $0x20] sm:$0xff]
  %v2041 = vld [vmem:[#allocation4 + $0x28] sm:$0xff]
  %v2042 = vld [vmem:[#allocation4 + $0x30] sm:$0xff]
  %v2043 = vld [vmem:[#allocation4 + $0x38] sm:$0xff]
  %v2044 = vld [vmem:[#allocation4 + $0x40] sm:$0xff]
  %v2045 = vld [vmem:[#allocation4 + $0x48] sm:$0xff]
  %v2046 = vld [vmem:[#allocation4 + $0x50] sm:$0xff]
  %v2047 = vld [vmem:[#allocation4 + $0x58] sm:$0xff]
  %v2048 = vld [vmem:[#allocation4 + $0x60] sm:$0xff]
  %v2049 = vld [vmem:[#allocation4 + $0x68] sm:$0xff]
  %v2050 = vld [vmem:[#allocation4 + $0x70] sm:$0xff]
  %v2051 = vld [vmem:[#allocation4 + $0x78] sm:$0xff]
  %v2052 = vld [vmem:[#allocation4 + $0x80] sm:$0xff]
  %v2053 = vld [vmem:[#allocation4 + $0x88] sm:$0xff]
  %v2054 = vld [vmem:[#allocation4 + $0x90] sm:$0xff]
  %v2055 = vld [vmem:[#allocation4 + $0x98] sm:$0xff]
  %v2056 = vld [vmem:[#allocation4 + $0xa0] sm:$0xff]
  %v2057 = vld [vmem:[#allocation4 + $0xa8] sm:$0xff]
  %v2058 = vld [vmem:[#allocation4 + $0xb0] sm:$0xff]
  %v2059 = vld [vmem:[#allocation4 + $0xb8] sm:$0xff]
  %v2060 = vld [vmem:[#allocation4 + $0xc0] sm:$0xff]
  %v2061 = vld [vmem:[#allocation4 + $0xc8] sm:$0xff]
  %v2062 = vld [vmem:[#allocation4 + $0xd0] sm:$0xff]
  %v2063 = vld [vmem:[#allocation4 + $0xd8] sm:$0xff]
  %v2064 = vld [vmem:[#allocation4 + $0xe0] sm:$0xff]
  %v2065 = vld [vmem:[#allocation4 + $0xe8] sm:$0xff]
  %v2066 = vld [vmem:[#allocation4 + $0xf0] sm:$0xff]
  %v2067 = vld [vmem:[#allocation4 + $0xf8] sm:$0xff]
  %v2068 = vld [vmem:[#allocation4 + $0x100] sm:$0xff]
  %v2069 = vld [vmem:[#allocation4 + $0x108] sm:$0xff]
  %v2070 = vld [vmem:[#allocation4 + $0x110] sm:$0xff]
  %v2071 = vld [vmem:[#allocation4 + $0x118] sm:$0xff]
  %v2072 = vld [vmem:[#allocation4 + $0x120] sm:$0xff]
  %v2073 = vld [vmem:[#allocation4 + $0x128] sm:$0xff]
  %v2074 = vld [vmem:[#allocation4 + $0x130] sm:$0xff]
  %v2075 = vld [vmem:[#allocation4 + $0x138] sm:$0xff]
  %v2076 = vld [vmem:[#allocation4 + $0x140] sm:$0xff]
  %v2077 = vld [vmem:[#allocation4 + $0x148] sm:$0xff]
  %v2078 = vld [vmem:[#allocation4 + $0x150] sm:$0xff]
  %v2079 = vld [vmem:[#allocation4 + $0x158] sm:$0xff]
  %v2080 = vld [vmem:[#allocation4 + $0x160] sm:$0xff]
  %v2081 = vld [vmem:[#allocation4 + $0x168] sm:$0xff]
  %v2082 = vld [vmem:[#allocation4 + $0x170] sm:$0xff]
  %v2083 = vld [vmem:[#allocation4 + $0x178] sm:$0xff]
  %v2084 = vld [vmem:[#allocation4 + $0x180] sm:$0xff]
  %v2085 = vld [vmem:[#allocation4 + $0x188] sm:$0xff]
  %v2086 = vld [vmem:[#allocation4 + $0x190] sm:$0xff]
  %v2087 = vld [vmem:[#allocation4 + $0x198] sm:$0xff]
  %v2088 = vld [vmem:[#allocation4 + $0x1a0] sm:$0xff]
  %v2089 = vld [vmem:[#allocation4 + $0x1a8] sm:$0xff]
  %v2090 = vld [vmem:[#allocation4 + $0x1b0] sm:$0xff]
  %v2091 = vld [vmem:[#allocation4 + $0x1b8] sm:$0xff]
  %v2092 = vld [vmem:[#allocation4 + $0x1c0] sm:$0xff]
  %v2093 = vld [vmem:[#allocation4 + $0x1c8] sm:$0xff]
  %v2094 = vld [vmem:[#allocation4 + $0x1d0] sm:$0xff]
  %v2095 = vld [vmem:[#allocation4 + $0x1d8] sm:$0xff]
  %v2096 = vld [vmem:[#allocation4 + $0x1e0] sm:$0xff]
  %v2097 = vld [vmem:[#allocation4 + $0x1e8] sm:$0xff]
  %v2098 = vld [vmem:[#allocation4 + $0x1f0] sm:$0xff]
  %v2099 = vld [vmem:[#allocation4 + $0x1f8] sm:$0xff]
  %v2100 = vld [vmem:[#allocation4 + $0x200] sm:$0xff]
  %v2101 = vld [vmem:[#allocation4 + $0x208] sm:$0xff]
  %v2102 = vld [vmem:[#allocation4 + $0x210] sm:$0xff]
  %v2103 = vld [vmem:[#allocation4 + $0x218] sm:$0xff]
  %v2104 = vld [vmem:[#allocation4 + $0x220] sm:$0xff]
  %v2105 = vld [vmem:[#allocation4 + $0x228] sm:$0xff]
  %v2106 = vld [vmem:[#allocation4 + $0x230] sm:$0xff]
  %v2107 = vld [vmem:[#allocation4 + $0x238] sm:$0xff]
  %v2108 = vld [vmem:[#allocation4 + $0x240] sm:$0xff]
  %v2109 = vld [vmem:[#allocation4 + $0x248] sm:$0xff]
  %v2110 = vld [vmem:[#allocation4 + $0x250] sm:$0xff]
  %v2111 = vld [vmem:[#allocation4 + $0x258] sm:$0xff]
  %v2112 = vld [vmem:[#allocation4 + $0x260] sm:$0xff]
  %v2113 = vld [vmem:[#allocation4 + $0x268] sm:$0xff]
  %v2114 = vld [vmem:[#allocation4 + $0x270] sm:$0xff]
  %v2115 = vld [vmem:[#allocation4 + $0x278] sm:$0xff]
  %v2117 = vsel %vm1429, %v2040, 0
  %v2120 = vsel %vm1429, %v2045, 0
  %v2123 = vsel %vm1429, %v2050, 0
  %v2126 = vsel %vm1429, %v2055, 0
  %v2129 = vsel %vm1429, %v2060, 0
  %v2132 = vsel %vm1429, %v2065, 0
  %v2135 = vsel %vm1429, %v2070, 0
  %v2138 = vsel %vm1429, %v2075, 0
  %v2141 = vsel %vm1429, %v2080, 0
  %v2144 = vsel %vm1429, %v2085, 0
  %v2147 = vsel %vm1429, %v2090, 0
  %v2150 = vsel %vm1429, %v2095, 0
  %v2153 = vsel %vm1429, %v2100, 0
  %v2156 = vsel %vm1429, %v2105, 0
  %v2159 = vsel %vm1429, %v2110, 0
  %v2162 = vsel %vm1429, %v2115, 0
  %2164 = vmatprep.subr.mxu0 0.0
  %2165 = vmatpush1.msra.mxu0 %v1282
  %2166 = vmatprep.subr.mxu0 0.0
  %2167 = vmatpush1.msra.mxu0 %v1283
  %2168 = vmatprep.subr.mxu0 0.0
  %2169 = vmatpush1.msra.mxu0 %v1284
  %2170 = vmatprep.subr.mxu0 0.0
  %2171 = vmatpush1.msra.mxu0 %v1285
  %2172 = vmatprep.subr.mxu0 0.0
  %2173 = vmatpush1.msra.mxu0 %v1286
  %2174 = vmatprep.subr.mxu0 0.0
  %2175 = vmatpush1.msra.mxu0 %v1287
  %2176 = vmatprep.subr.mxu0 0.0
  %2177 = vmatpush1.msra.mxu0 %v1288
  %2178 = vmatprep.subr.mxu0 0.0
  %2179 = vmatpush1.msra.mxu0 %v1289
  %2180 = vmatprep.subr.mxu0 0.0
  %2181 = vmatpush1.msra.mxu0 %v1290
  %2182 = vmatprep.subr.mxu0 0.0
  %2183 = vmatpush1.msra.mxu0 %v1291
  %2184 = vmatprep.subr.mxu0 0.0
  %2185 = vmatpush1.msra.mxu0 %v1292
  %2186 = vmatprep.subr.mxu0 0.0
  %2187 = vmatpush1.msra.mxu0 %v1293
  %2188 = vmatprep.subr.mxu0 0.0
  %2189 = vmatpush1.msra.mxu0 %v1294
  %2190 = vmatprep.subr.mxu0 0.0
  %2191 = vmatpush1.msra.mxu0 %v1295
  %2192 = vmatprep.subr.mxu0 0.0
  %2193 = vmatpush1.msra.mxu0 %v1296
  %2194 = vmatprep.subr.mxu0 0.0
  %2195 = vmatpush1.msra.mxu0 %v1297
  %2196 = vmatprep.subr.mxu0 0.0
  %2197 = vmatpush1.msra.mxu0 %v1298
  %2198 = vmatprep.subr.mxu0 0.0
  %2199 = vmatpush1.msra.mxu0 %v1299
  %2200 = vmatprep.subr.mxu0 0.0
  %2201 = vmatpush1.msra.mxu0 %v1300
  %2202 = vmatprep.subr.mxu0 0.0
  %2203 = vmatpush1.msra.mxu0 %v1301
  %2204 = vmatprep.subr.mxu0 0.0
  %2205 = vmatpush1.msra.mxu0 %v1302
  %2206 = vmatprep.subr.mxu0 0.0
  %2207 = vmatpush1.msra.mxu0 %v1303
  %2208 = vmatprep.subr.mxu0 0.0
  %2209 = vmatpush1.msra.mxu0 %v1304
  %2210 = vmatprep.subr.mxu0 0.0
  %2211 = vmatpush1.msra.mxu0 %v1305
  %2212 = vmatprep.subr.mxu0 0.0
  %2213 = vmatpush1.msra.mxu0 %v1306
  %2214 = vmatprep.subr.mxu0 0.0
  %2215 = vmatpush1.msra.mxu0 %v1307
  %2216 = vmatprep.subr.mxu0 0.0
  %2217 = vmatpush1.msra.mxu0 %v1308
  %2218 = vmatprep.subr.mxu0 0.0
  %2219 = vmatpush1.msra.mxu0 %v1309
  %2220 = vmatprep.subr.mxu0 0.0
  %2221 = vmatpush1.msra.mxu0 %v1310
  %2222 = vmatprep.subr.mxu0 0.0
  %2223 = vmatpush1.msra.mxu0 %v1311
  %2224 = vmatprep.subr.mxu0 0.0
  %2225 = vmatpush1.msra.mxu0 %v1312
  %2226 = vmatprep.subr.mxu0 0.0
  %2227 = vmatpush1.msra.mxu0 %v1313
  %2228 = vmatprep.mubr.f32.mxu0 %v2037
  %2229 = vmatmul.mubr.f32.gmra.mrb[0].mxu0 %v2036
  %v2230 = vpop.f32.mrb[0].mxu0
  %v2231 = vadd.f32 %v1354, %v2230
  %v2232 = vpop.f32.mrb[0].mxu0
  %2233 = vmatprep.mubr.f32.mxu0 %v2042
  %2234 = vmatmul.mubr.f32.gmra.mrb[0].mxu0 %v2041
  %v2235 = vpop.f32.mrb[0].mxu0
  %v2236 = vadd.f32 %v1354, %v2235
  %v2237 = vpop.f32.mrb[0].mxu0
  %2238 = vmatprep.mubr.f32.mxu0 %v2047
  %2239 = vmatmul.mubr.f32.gmra.mrb[0].mxu0 %v2046
  %v2240 = vpop.f32.mrb[0].mxu0
  %v2241 = vadd.f32 %v1354, %v2240
  %v2242 = vpop.f32.mrb[0].mxu0
  %2243 = vmatprep.mubr.f32.mxu0 %v2052
  %2244 = vmatmul.mubr.f32.gmra.mrb[0].mxu0 %v2051
  %v2245 = vpop.f32.mrb[0].mxu0
  %v2246 = vadd.f32 %v1354, %v2245
  %v2247 = vpop.f32.mrb[0].mxu0
  %2248 = vmatprep.mubr.f32.mxu0 %v2057
  %2249 = vmatmul.mubr.f32.gmra.mrb[0].mxu0 %v2056
  %v2250 = vpop.f32.mrb[0].mxu0
  %v2251 = vadd.f32 %v1354, %v2250
  %v2252 = vpop.f32.mrb[0].mxu0
  %2253 = vmatprep.mubr.f32.mxu0 %v2062
  %2254 = vmatmul.mubr.f32.gmra.mrb[0].mxu0 %v2061
  %v2255 = vpop.f32.mrb[0].mxu0
  %v2256 = vadd.f32 %v1354, %v2255
  %v2257 = vpop.f32.mrb[0].mxu0
  %2258 = vmatprep.mubr.f32.mxu0 %v2067
  %2259 = vmatmul.mubr.f32.gmra.mrb[0].mxu0 %v2066
  %v2260 = vpop.f32.mrb[0].mxu0
  %v2261 = vadd.f32 %v1354, %v2260
  %v2262 = vpop.f32.mrb[0].mxu0
  %2263 = vmatprep.mubr.f32.mxu0 %v2072
  %2264 = vmatmul.mubr.f32.gmra.mrb[0].mxu0 %v2071
  %v2265 = vpop.f32.mrb[0].mxu0
  %v2266 = vadd.f32 %v1354, %v2265
  %v2267 = vpop.f32.mrb[0].mxu0
  %2268 = vmatprep.mubr.f32.mxu0 %v2077
  %2269 = vmatmul.mubr.f32.gmra.mrb[0].mxu0 %v2076
  %v2270 = vpop.f32.mrb[0].mxu0
  %v2271 = vadd.f32 %v1354, %v2270
  %v2272 = vpop.f32.mrb[0].mxu0
  %2273 = vmatprep.mubr.f32.mxu0 %v2082
  %2274 = vmatmul.mubr.f32.gmra.mrb[0].mxu0 %v2081
  %v2275 = vpop.f32.mrb[0].mxu0
  %v2276 = vadd.f32 %v1354, %v2275
  %v2277 = vpop.f32.mrb[0].mxu0
  %2278 = vmatprep.mubr.f32.mxu0 %v2087
  %2279 = vmatmul.mubr.f32.gmra.mrb[0].mxu0 %v2086
  %v2280 = vpop.f32.mrb[0].mxu0
  %v2281 = vadd.f32 %v1354, %v2280
  %v2282 = vpop.f32.mrb[0].mxu0
  %2283 = vmatprep.mubr.f32.mxu0 %v2092
  %2284 = vmatmul.mubr.f32.gmra.mrb[0].mxu0 %v2091
  %v2285 = vpop.f32.mrb[0].mxu0
  %v2286 = vadd.f32 %v1354, %v2285
  %v2287 = vpop.f32.mrb[0].mxu0
  %2288 = vmatprep.mubr.f32.mxu0 %v2097
  %2289 = vmatmul.mubr.f32.gmra.mrb[0].mxu0 %v2096
  %v2290 = vpop.f32.mrb[0].mxu0
  %v2291 = vadd.f32 %v1354, %v2290
  %v2292 = vpop.f32.mrb[0].mxu0
  %2293 = vmatprep.mubr.f32.mxu0 %v2102
  %2294 = vmatmul.mubr.f32.gmra.mrb[0].mxu0 %v2101
  %v2295 = vpop.f32.mrb[0].mxu0
  %v2296 = vadd.f32 %v1354, %v2295
  %v2297 = vpop.f32.mrb[0].mxu0
  %2298 = vmatprep.mubr.f32.mxu0 %v2107
  %2299 = vmatmul.mubr.f32.gmra.mrb[0].mxu0 %v2106
  %v2300 = vpop.f32.mrb[0].mxu0
  %v2301 = vadd.f32 %v1354, %v2300
  %v2302 = vpop.f32.mrb[0].mxu0
  %2303 = vmatprep.mubr.f32.mxu0 %v2112
  %2304 = vmatmul.mubr.f32.gmra.mrb[0].mxu0 %v2111
  %v2305 = vpop.f32.mrb[0].mxu0
  %v2306 = vadd.f32 %v1354, %v2305
  %v2307 = vpop.f32.mrb[0].mxu0
  %2308 = vdwg.mxu0
  %2309 = vmatprep.subr.mxu0 0.0
  %2310 = vmatpush1.msra.mxu0 %v1314
  %2311 = vmatprep.subr.mxu0 0.0
  %2312 = vmatpush1.msra.mxu0 %v1315
  %2313 = vmatprep.subr.mxu0 0.0
  %2314 = vmatpush1.msra.mxu0 %v1316
  %2315 = vmatprep.subr.mxu0 0.0
  %2316 = vmatpush1.msra.mxu0 %v1317
  %2317 = vmatprep.subr.mxu0 0.0
  %2318 = vmatpush1.msra.mxu0 %v1318
  %2319 = vmatprep.subr.mxu0 0.0
  %2320 = vmatpush1.msra.mxu0 %v1319
  %2321 = vmatprep.subr.mxu0 0.0
  %2322 = vmatpush1.msra.mxu0 %v1320
  %2323 = vmatprep.subr.mxu0 0.0
  %2324 = vmatpush1.msra.mxu0 %v1321
  %2325 = vmatprep.subr.mxu0 0.0
  %2326 = vmatpush1.msra.mxu0 %v1322
  %2327 = vmatprep.subr.mxu0 0.0
  %2328 = vmatpush1.msra.mxu0 %v1323
  %2329 = vmatprep.subr.mxu0 0.0
  %2330 = vmatpush1.msra.mxu0 %v1324
  %2331 = vmatprep.subr.mxu0 0.0
  %2332 = vmatpush1.msra.mxu0 %v1325
  %2333 = vmatprep.subr.mxu0 0.0
  %2334 = vmatpush1.msra.mxu0 %v1326
  %2335 = vmatprep.subr.mxu0 0.0
  %2336 = vmatpush1.msra.mxu0 %v1327
  %2337 = vmatprep.subr.mxu0 0.0
  %2338 = vmatpush1.msra.mxu0 %v1328
  %2339 = vmatprep.subr.mxu0 0.0
  %2340 = vmatpush1.msra.mxu0 %v1329
  %2341 = vmatprep.subr.mxu0 0.0
  %2342 = vmatpush1.msra.mxu0 %v1330
  %2343 = vmatprep.subr.mxu0 0.0
  %2344 = vmatpush1.msra.mxu0 %v1331
  %2345 = vmatprep.subr.mxu0 0.0
  %2346 = vmatpush1.msra.mxu0 %v1332
  %2347 = vmatprep.subr.mxu0 0.0
  %2348 = vmatpush1.msra.mxu0 %v1333
  %2349 = vmatprep.subr.mxu0 0.0
  %2350 = vmatpush1.msra.mxu0 %v1334
  %2351 = vmatprep.subr.mxu0 0.0
  %2352 = vmatpush1.msra.mxu0 %v1335
  %2353 = vmatprep.subr.mxu0 0.0
  %2354 = vmatpush1.msra.mxu0 %v1336
  %2355 = vmatprep.subr.mxu0 0.0
  %2356 = vmatpush1.msra.mxu0 %v1337
  %2357 = vmatprep.subr.mxu0 0.0
  %2358 = vmatpush1.msra.mxu0 %v1338
  %2359 = vmatprep.subr.mxu0 0.0
  %2360 = vmatpush1.msra.mxu0 %v1339
  %2361 = vmatprep.subr.mxu0 0.0
  %2362 = vmatpush1.msra.mxu0 %v1340
  %2363 = vmatprep.subr.mxu0 0.0
  %2364 = vmatpush1.msra.mxu0 %v1341
  %2365 = vmatprep.subr.mxu0 0.0
  %2366 = vmatpush1.msra.mxu0 %v1342
  %2367 = vmatprep.subr.mxu0 0.0
  %2368 = vmatpush1.msra.mxu0 %v1343
  %2369 = vmatprep.subr.mxu0 0.0
  %2370 = vmatpush1.msra.mxu0 %v1344
  %2371 = vmatprep.subr.mxu0 0.0
  %2372 = vmatpush1.msra.mxu0 %v1345
  %2373 = vmatprep.mubr.f32.mxu0 %v2039
  %2374 = vmatmul.mubr.f32.gmra.mrb[0].mxu0 %v2038
  %v2375 = vpop.f32.mrb[0].mxu0
  %v2376 = vadd.f32 %v2231, %v2375
  %v2377 = vpop.f32.mrb[0].mxu0
  %2378 = vmatprep.mubr.f32.mxu0 %v2044
  %2379 = vmatmul.mubr.f32.gmra.mrb[0].mxu0 %v2043
  %v2380 = vpop.f32.mrb[0].mxu0
  %v2381 = vadd.f32 %v2236, %v2380
  %v2382 = vpop.f32.mrb[0].mxu0
  %2383 = vmatprep.mubr.f32.mxu0 %v2049
  %2384 = vmatmul.mubr.f32.gmra.mrb[0].mxu0 %v2048
  %v2385 = vpop.f32.mrb[0].mxu0
  %v2386 = vadd.f32 %v2241, %v2385
  %v2387 = vpop.f32.mrb[0].mxu0
  %2388 = vmatprep.mubr.f32.mxu0 %v2054
  %2389 = vmatmul.mubr.f32.gmra.mrb[0].mxu0 %v2053
  %v2390 = vpop.f32.mrb[0].mxu0
  %v2391 = vadd.f32 %v2246, %v2390
  %v2392 = vpop.f32.mrb[0].mxu0
  %2393 = vmatprep.mubr.f32.mxu0 %v2059
  %2394 = vmatmul.mubr.f32.gmra.mrb[0].mxu0 %v2058
  %v2395 = vpop.f32.mrb[0].mxu0
  %v2396 = vadd.f32 %v2251, %v2395
  %v2397 = vpop.f32.mrb[0].mxu0
  %2398 = vmatprep.mubr.f32.mxu0 %v2064
  %2399 = vmatmul.mubr.f32.gmra.mrb[0].mxu0 %v2063
  %v2400 = vpop.f32.mrb[0].mxu0
  %v2401 = vadd.f32 %v2256, %v2400
  %v2402 = vpop.f32.mrb[0].mxu0
  %2403 = vmatprep.mubr.f32.mxu0 %v2069
  %2404 = vmatmul.mubr.f32.gmra.mrb[0].mxu0 %v2068
  %v2405 = vpop.f32.mrb[0].mxu0
  %v2406 = vadd.f32 %v2261, %v2405
  %v2407 = vpop.f32.mrb[0].mxu0
  %2408 = vmatprep.mubr.f32.mxu0 %v2074
  %2409 = vmatmul.mubr.f32.gmra.mrb[0].mxu0 %v2073
  %v2410 = vpop.f32.mrb[0].mxu0
  %v2411 = vadd.f32 %v2266, %v2410
  %v2412 = vpop.f32.mrb[0].mxu0
  %2413 = vmatprep.mubr.f32.mxu0 %v2079
  %2414 = vmatmul.mubr.f32.gmra.mrb[0].mxu0 %v2078
  %v2415 = vpop.f32.mrb[0].mxu0
  %v2416 = vadd.f32 %v2271, %v2415
  %v2417 = vpop.f32.mrb[0].mxu0
  %2418 = vmatprep.mubr.f32.mxu0 %v2084
  %2419 = vmatmul.mubr.f32.gmra.mrb[0].mxu0 %v2083
  %v2420 = vpop.f32.mrb[0].mxu0
  %v2421 = vadd.f32 %v2276, %v2420
  %v2422 = vpop.f32.mrb[0].mxu0
  %2423 = vmatprep.mubr.f32.mxu0 %v2089
  %2424 = vmatmul.mubr.f32.gmra.mrb[0].mxu0 %v2088
  %v2425 = vpop.f32.mrb[0].mxu0
  %v2426 = vadd.f32 %v2281, %v2425
  %v2427 = vpop.f32.mrb[0].mxu0
  %2428 = vmatprep.mubr.f32.mxu0 %v2094
  %2429 = vmatmul.mubr.f32.gmra.mrb[0].mxu0 %v2093
  %v2430 = vpop.f32.mrb[0].mxu0
  %v2431 = vadd.f32 %v2286, %v2430
  %v2432 = vpop.f32.mrb[0].mxu0
  %2433 = vmatprep.mubr.f32.mxu0 %v2099
  %2434 = vmatmul.mubr.f32.gmra.mrb[0].mxu0 %v2098
  %v2435 = vpop.f32.mrb[0].mxu0
  %v2436 = vadd.f32 %v2291, %v2435
  %v2437 = vpop.f32.mrb[0].mxu0
  %2438 = vmatprep.mubr.f32.mxu0 %v2104
  %2439 = vmatmul.mubr.f32.gmra.mrb[0].mxu0 %v2103
  %v2440 = vpop.f32.mrb[0].mxu0
  %v2441 = vadd.f32 %v2296, %v2440
  %v2442 = vpop.f32.mrb[0].mxu0
  %2443 = vmatprep.mubr.f32.mxu0 %v2109
  %2444 = vmatmul.mubr.f32.gmra.mrb[0].mxu0 %v2108
  %v2445 = vpop.f32.mrb[0].mxu0
  %v2446 = vadd.f32 %v2301, %v2445
  %v2447 = vpop.f32.mrb[0].mxu0
  %2448 = vmatprep.mubr.f32.mxu0 %v2114
  %2449 = vmatmul.mubr.f32.gmra.mrb[0].mxu0 %v2113
  %v2450 = vpop.f32.mrb[0].mxu0
  %v2451 = vadd.f32 %v2306, %v2450
  %v2452 = vpop.f32.mrb[0].mxu0
  %2453 = vdwg.mxu0
  %2454 = vmatprep.subr.mxu0 0.0
  %2455 = vmatpush1.msra.mxu0 %v1346
  %2456 = vmatprep.subr.mxu0 0.0
  %2457 = vmatpush1.msra.mxu0 %v1347
  %2458 = vmatprep.subr.mxu0 0.0
  %2459 = vmatpush1.msra.mxu0 %v1348
  %2460 = vmatprep.subr.mxu0 0.0
  %2461 = vmatpush1.msra.mxu0 %v1349
  %2462 = vmatprep.subr.mxu0 0.0
  %2463 = vmatpush1.msra.mxu0 %v1350
  %2464 = vmatprep.subr.mxu0 0.0
  %2465 = vmatpush1.msra.mxu0 %v1351
  %2466 = vmatprep.subr.mxu0 0.0
  %2467 = vmatpush1.msra.mxu0 %v1352
  %2468 = vmatprep.subr.mxu0 0.0
  %2469 = vmatpush1.msra.mxu0 %v1353
  %2470 = vmatprep.subr.mxu0 0.0
  %2471 = vmatpush1.msra.mxu0 0.0
  %2472 = vmatprep.subr.mxu0 0.0
  %2473 = vmatpush1.msra.mxu0 0.0
  %2474 = vmatprep.subr.mxu0 0.0
  %2475 = vmatpush1.msra.mxu0 0.0
  %2476 = vmatprep.subr.mxu0 0.0
  %2477 = vmatpush1.msra.mxu0 0.0
  %2478 = vmatprep.subr.mxu0 0.0
  %2479 = vmatpush1.msra.mxu0 0.0
  %2480 = vmatprep.subr.mxu0 0.0
  %2481 = vmatpush1.msra.mxu0 0.0
  %2482 = vmatprep.subr.mxu0 0.0
  %2483 = vmatpush1.msra.mxu0 0.0
  %2484 = vmatprep.subr.mxu0 0.0
  %2485 = vmatpush1.msra.mxu0 0.0
  %2486 = vmatprep.subr.mxu0 0.0
  %2487 = vmatpush1.msra.mxu0 0.0
  %2488 = vmatprep.subr.mxu0 0.0
  %2489 = vmatpush1.msra.mxu0 0.0
  %2490 = vmatprep.subr.mxu0 0.0
  %2491 = vmatpush1.msra.mxu0 0.0
  %2492 = vmatprep.subr.mxu0 0.0
  %2493 = vmatpush1.msra.mxu0 0.0
  %2494 = vmatprep.subr.mxu0 0.0
  %2495 = vmatpush1.msra.mxu0 0.0
  %2496 = vmatprep.subr.mxu0 0.0
  %2497 = vmatpush1.msra.mxu0 0.0
  %2498 = vmatprep.subr.mxu0 0.0
  %2499 = vmatpush1.msra.mxu0 0.0
  %2500 = vmatprep.subr.mxu0 0.0
  %2501 = vmatpush1.msra.mxu0 0.0
  %2502 = vmatprep.subr.mxu0 0.0
  %2503 = vmatpush1.msra.mxu0 0.0
  %2504 = vmatprep.subr.mxu0 0.0
  %2505 = vmatpush1.msra.mxu0 0.0
  %2506 = vmatprep.subr.mxu0 0.0
  %2507 = vmatpush1.msra.mxu0 0.0
  %2508 = vmatprep.subr.mxu0 0.0
  %2509 = vmatpush1.msra.mxu0 0.0
  %2510 = vmatprep.subr.mxu0 0.0
  %2511 = vmatpush1.msra.mxu0 0.0
  %2512 = vmatprep.subr.mxu0 0.0
  %2513 = vmatpush1.msra.mxu0 0.0
  %2514 = vmatprep.subr.mxu0 0.0
  %2515 = vmatpush1.msra.mxu0 0.0
  %2516 = vmatprep.subr.mxu0 0.0
  %2517 = vmatpush1.msra.mxu0 0.0
  %2518 = vmatprep.mubr.f32.mxu0 0.0
  %2519 = vmatmul.mubr.f32.gmra.mrb[0].mxu0 %v2117
  %v2520 = vpop.f32.mrb[0].mxu0
  %v2521 = vadd.f32 %v2376, %v2520
  %v2522 = vpop.f32.mrb[0].mxu0
  %2523 = vmatprep.mubr.f32.mxu0 0.0
  %2524 = vmatmul.mubr.f32.gmra.mrb[0].mxu0 %v2120
  %v2525 = vpop.f32.mrb[0].mxu0
  %v2526 = vadd.f32 %v2381, %v2525
  %v2527 = vpop.f32.mrb[0].mxu0
  %2528 = vmatprep.mubr.f32.mxu0 0.0
  %2529 = vmatmul.mubr.f32.gmra.mrb[0].mxu0 %v2123
  %v2530 = vpop.f32.mrb[0].mxu0
  %v2531 = vadd.f32 %v2386, %v2530
  %v2532 = vpop.f32.mrb[0].mxu0
  %2533 = vmatprep.mubr.f32.mxu0 0.0
  %2534 = vmatmul.mubr.f32.gmra.mrb[0].mxu0 %v2126
  %v2535 = vpop.f32.mrb[0].mxu0
  %v2536 = vadd.f32 %v2391, %v2535
  %v2537 = vpop.f32.mrb[0].mxu0
  %2538 = vmatprep.mubr.f32.mxu0 0.0
  %2539 = vmatmul.mubr.f32.gmra.mrb[0].mxu0 %v2129
  %v2540 = vpop.f32.mrb[0].mxu0
  %v2541 = vadd.f32 %v2396, %v2540
  %v2542 = vpop.f32.mrb[0].mxu0
  %2543 = vmatprep.mubr.f32.mxu0 0.0
  %2544 = vmatmul.mubr.f32.gmra.mrb[0].mxu0 %v2132
  %v2545 = vpop.f32.mrb[0].mxu0
  %v2546 = vadd.f32 %v2401, %v2545
  %v2547 = vpop.f32.mrb[0].mxu0
  %2548 = vmatprep.mubr.f32.mxu0 0.0
  %2549 = vmatmul.mubr.f32.gmra.mrb[0].mxu0 %v2135
  %v2550 = vpop.f32.mrb[0].mxu0
  %v2551 = vadd.f32 %v2406, %v2550
  %v2552 = vpop.f32.mrb[0].mxu0
  %2553 = vmatprep.mubr.f32.mxu0 0.0
  %2554 = vmatmul.mubr.f32.gmra.mrb[0].mxu0 %v2138
  %v2555 = vpop.f32.mrb[0].mxu0
  %v2556 = vadd.f32 %v2411, %v2555
  %v2557 = vpop.f32.mrb[0].mxu0
  %2558 = vmatprep.mubr.f32.mxu0 0.0
  %2559 = vmatmul.mubr.f32.gmra.mrb[0].mxu0 %v2141
  %v2560 = vpop.f32.mrb[0].mxu0
  %v2561 = vadd.f32 %v2416, %v2560
  %v2562 = vpop.f32.mrb[0].mxu0
  %2563 = vmatprep.mubr.f32.mxu0 0.0
  %2564 = vmatmul.mubr.f32.gmra.mrb[0].mxu0 %v2144
  %v2565 = vpop.f32.mrb[0].mxu0
  %v2566 = vadd.f32 %v2421, %v2565
  %v2567 = vpop.f32.mrb[0].mxu0
  %2568 = vmatprep.mubr.f32.mxu0 0.0
  %2569 = vmatmul.mubr.f32.gmra.mrb[0].mxu0 %v2147
  %v2570 = vpop.f32.mrb[0].mxu0
  %v2571 = vadd.f32 %v2426, %v2570
  %v2572 = vpop.f32.mrb[0].mxu0
  %2573 = vmatprep.mubr.f32.mxu0 0.0
  %2574 = vmatmul.mubr.f32.gmra.mrb[0].mxu0 %v2150
  %v2575 = vpop.f32.mrb[0].mxu0
  %v2576 = vadd.f32 %v2431, %v2575
  %v2577 = vpop.f32.mrb[0].mxu0
  %2578 = vmatprep.mubr.f32.mxu0 0.0
  %2579 = vmatmul.mubr.f32.gmra.mrb[0].mxu0 %v2153
  %v2580 = vpop.f32.mrb[0].mxu0
  %v2581 = vadd.f32 %v2436, %v2580
  %v2582 = vpop.f32.mrb[0].mxu0
  %2583 = vmatprep.mubr.f32.mxu0 0.0
  %2584 = vmatmul.mubr.f32.gmra.mrb[0].mxu0 %v2156
  %v2585 = vpop.f32.mrb[0].mxu0
  %v2586 = vadd.f32 %v2441, %v2585
  %v2587 = vpop.f32.mrb[0].mxu0
  %2588 = vmatprep.mubr.f32.mxu0 0.0
  %2589 = vmatmul.mubr.f32.gmra.mrb[0].mxu0 %v2159
  %v2590 = vpop.f32.mrb[0].mxu0
  %v2591 = vadd.f32 %v2446, %v2590
  %v2592 = vpop.f32.mrb[0].mxu0
  %2593 = vmatprep.mubr.f32.mxu0 0.0
  %2594 = vmatmul.mubr.f32.gmra.mrb[0].mxu0 %v2162
  %v2595 = vpop.f32.mrb[0].mxu0
  %v2596 = vadd.f32 %v2451, %v2595
  %v2597 = vpop.f32.mrb[0].mxu0
  %2598 = vdwg.mxu0
  %vm2599 = vcmp.ge.f32.partialorder %v2521, 0.0
  %vm2600 = vcmp.ge.f32.partialorder %v2526, 0.0
  %vm2601 = vcmp.ge.f32.partialorder %v2531, 0.0
  %vm2602 = vcmp.ge.f32.partialorder %v2536, 0.0
  %vm2603 = vcmp.ge.f32.partialorder %v2541, 0.0
  %vm2604 = vcmp.ge.f32.partialorder %v2546, 0.0
  %vm2605 = vcmp.ge.f32.partialorder %v2551, 0.0
  %vm2606 = vcmp.ge.f32.partialorder %v2556, 0.0
  %vm2607 = vcmp.ge.f32.partialorder %v2561, 0.0
  %vm2608 = vcmp.ge.f32.partialorder %v2566, 0.0
  %vm2609 = vcmp.ge.f32.partialorder %v2571, 0.0
  %vm2610 = vcmp.ge.f32.partialorder %v2576, 0.0
  %vm2611 = vcmp.ge.f32.partialorder %v2581, 0.0
  %vm2612 = vcmp.ge.f32.partialorder %v2586, 0.0
  %vm2613 = vcmp.ge.f32.partialorder %v2591, 0.0
  %vm2614 = vcmp.ge.f32.partialorder %v2596, 0.0
  %v2615 = vmul.f32 %v2521, 0.01
  %v2616 = vmul.f32 %v2526, 0.01
  %v2617 = vmul.f32 %v2531, 0.01
  %v2618 = vmul.f32 %v2536, 0.01
  %v2619 = vmul.f32 %v2541, 0.01
  %v2620 = vmul.f32 %v2546, 0.01
  %v2621 = vmul.f32 %v2551, 0.01
  %v2622 = vmul.f32 %v2556, 0.01
  %v2623 = vmul.f32 %v2561, 0.01
  %v2624 = vmul.f32 %v2566, 0.01
  %v2625 = vmul.f32 %v2571, 0.01
  %v2626 = vmul.f32 %v2576, 0.01
  %v2627 = vmul.f32 %v2581, 0.01
  %v2628 = vmul.f32 %v2586, 0.01
  %v2629 = vmul.f32 %v2591, 0.01
  %v2630 = vmul.f32 %v2596, 0.01
  %v2631 = vsel %vm2599, %v2521, %v2615
  %v2632 = vsel %vm2600, %v2526, %v2616
  %v2633 = vsel %vm2601, %v2531, %v2617
  %v2634 = vsel %vm2602, %v2536, %v2618
  %v2635 = vsel %vm2603, %v2541, %v2619
  %v2636 = vsel %vm2604, %v2546, %v2620
  %v2637 = vsel %vm2605, %v2551, %v2621
  %v2638 = vsel %vm2606, %v2556, %v2622
  %v2639 = vsel %vm2607, %v2561, %v2623
  %v2640 = vsel %vm2608, %v2566, %v2624
  %v2641 = vsel %vm2609, %v2571, %v2625
  %v2642 = vsel %vm2610, %v2576, %v2626
  %v2643 = vsel %vm2611, %v2581, %v2627
  %v2644 = vsel %vm2612, %v2586, %v2628
  %v2645 = vsel %vm2613, %v2591, %v2629
  %v2646 = vsel %vm2614, %v2596, %v2630
  %2647 = vst.msk [vmem:[#allocation2] sm:$0xff] %vm1429, 0.0
  %2648 = vst.msk [vmem:[#allocation2 + $0x8] sm:$0x3] %vm1431, 0.0
  %2649 = vst.msk [vmem:[#allocation2 + $0xa0] sm:$0xff] %vm1429, 0.0
  %2650 = vst.msk [vmem:[#allocation2 + $0xa8] sm:$0x3] %vm1431, 0.0
  %2651 = vst.msk [vmem:[%s1435] sm:$0xff] %vm1429, 0.0
  %2652 = vst.msk [vmem:[%s1435 + $0x8] sm:$0x3] %vm1431, 0.0
  %2653 = vst.msk [vmem:[%s1435 + $0xa0] sm:$0xff] %vm1429, 0.0
  %2654 = vst.msk [vmem:[%s1435 + $0xa8] sm:$0x3] %vm1431, 0.0
  %2655 = vst.msk [vmem:[%s1440] sm:$0x1] %vm1441, 0.0
  %2656 = vst.msk [vmem:[%s1440 + $0x10] sm:$0x1] %vm1441, 0.0
  %2657 = vst.msk [vmem:[%s1440 + $0x20] sm:$0x1] %vm1441, 0.0
  %2658 = vst.msk [vmem:[%s1440 + $0x30] sm:$0x1] %vm1441, 0.0
  %2659 = vst.msk [vmem:[%s1440 + $0x40] sm:$0x1] %vm1441, 0.0
  %2660 = vst.msk [vmem:[%s1440 + $0x50] sm:$0x1] %vm1441, 0.0
  %2661 = vst.msk [vmem:[%s1440 + $0x60] sm:$0x1] %vm1441, 0.0
  %2662 = vst.msk [vmem:[%s1440 + $0x70] sm:$0x1] %vm1441, 0.0
  %2663 = vst.msk [vmem:[%s1440 + $0xa0] sm:$0x1] %vm1441, 0.0
  %2664 = vst.msk [vmem:[%s1440 + $0xb0] sm:$0x1] %vm1441, 0.0
  %2665 = vst.msk [vmem:[%s1440 + $0xc0] sm:$0x1] %vm1441, 0.0
  %2666 = vst.msk [vmem:[%s1440 + $0xd0] sm:$0x1] %vm1441, 0.0
  %2667 = vst.msk [vmem:[%s1440 + $0xe0] sm:$0x1] %vm1441, 0.0
  %2668 = vst.msk [vmem:[%s1440 + $0xf0] sm:$0x1] %vm1441, 0.0
  %2669 = vst.msk [vmem:[%s1440 + $0x100] sm:$0x1] %vm1441, 0.0
  %2670 = vst.msk [vmem:[%s1440 + $0x110] sm:$0x1] %vm1441, 0.0
  %2671 = vst.msk [vmem:[%s1440 + $0x9] sm:$0x1] %vm1441, 0.0
  %2672 = vst.msk [vmem:[%s1440 + $0x19] sm:$0x1] %vm1441, 0.0
  %2673 = vst.msk [vmem:[%s1440 + $0x29] sm:$0x1] %vm1441, 0.0
  %2674 = vst.msk [vmem:[%s1440 + $0x39] sm:$0x1] %vm1441, 0.0
  %2675 = vst.msk [vmem:[%s1440 + $0x49] sm:$0x1] %vm1441, 0.0
  %2676 = vst.msk [vmem:[%s1440 + $0x59] sm:$0x1] %vm1441, 0.0
  %2677 = vst.msk [vmem:[%s1440 + $0x69] sm:$0x1] %vm1441, 0.0
  %2678 = vst.msk [vmem:[%s1440 + $0x79] sm:$0x1] %vm1441, 0.0
  %2679 = vst.msk [vmem:[%s1440 + $0xa9] sm:$0x1] %vm1441, 0.0
  %2680 = vst.msk [vmem:[%s1440 + $0xb9] sm:$0x1] %vm1441, 0.0
  %2681 = vst.msk [vmem:[%s1440 + $0xc9] sm:$0x1] %vm1441, 0.0
  %2682 = vst.msk [vmem:[%s1440 + $0xd9] sm:$0x1] %vm1441, 0.0
  %2683 = vst.msk [vmem:[%s1440 + $0xe9] sm:$0x1] %vm1441, 0.0
  %2684 = vst.msk [vmem:[%s1440 + $0xf9] sm:$0x1] %vm1441, 0.0
  %2685 = vst.msk [vmem:[%s1440 + $0x109] sm:$0x1] %vm1441, 0.0
  %2686 = vst.msk [vmem:[%s1440 + $0x119] sm:$0x1] %vm1441, 0.0
  %2687 = vst.msk [vmem:[%s1440 + $0x1] sm:$0xff] %vm1429, %v2631
  %2688 = vst.msk [vmem:[%s1440 + $0x11] sm:$0xff] %vm1429, %v2632
  %2689 = vst.msk [vmem:[%s1440 + $0x21] sm:$0xff] %vm1429, %v2633
  %2690 = vst.msk [vmem:[%s1440 + $0x31] sm:$0xff] %vm1429, %v2634
  %2691 = vst.msk [vmem:[%s1440 + $0x41] sm:$0xff] %vm1429, %v2635
  %2692 = vst.msk [vmem:[%s1440 + $0x51] sm:$0xff] %vm1429, %v2636
  %2693 = vst.msk [vmem:[%s1440 + $0x61] sm:$0xff] %vm1429, %v2637
  %2694 = vst.msk [vmem:[%s1440 + $0x71] sm:$0xff] %vm1429, %v2638
  %2695 = vst.msk [vmem:[%s1440 + $0xa1] sm:$0xff] %vm1429, %v2639
  %2696 = vst.msk [vmem:[%s1440 + $0xb1] sm:$0xff] %vm1429, %v2640
  %2697 = vst.msk [vmem:[%s1440 + $0xc1] sm:$0xff] %vm1429, %v2641
  %2698 = vst.msk [vmem:[%s1440 + $0xd1] sm:$0xff] %vm1429, %v2642
  %2699 = vst.msk [vmem:[%s1440 + $0xe1] sm:$0xff] %vm1429, %v2643
  %2700 = vst.msk [vmem:[%s1440 + $0xf1] sm:$0xff] %vm1429, %v2644
  %2701 = vst.msk [vmem:[%s1440 + $0x101] sm:$0xff] %vm1429, %v2645
  %2702 = vst.msk [vmem:[%s1440 + $0x111] sm:$0xff] %vm1429, %v2646
  %v2703 = vld [vmem:[#allocation2] sm:$0xff]
  %v2704 = vld [vmem:[#allocation2 + $0x10] sm:$0xff]
  %v2705 = vld [vmem:[#allocation2 + $0x20] sm:$0xff]
  %v2706 = vld [vmem:[#allocation2 + $0x30] sm:$0xff]
  %v2707 = vld [vmem:[#allocation2 + $0x40] sm:$0xff]
  %v2708 = vld [vmem:[#allocation2 + $0x50] sm:$0xff]
  %v2709 = vld [vmem:[#allocation2 + $0x60] sm:$0xff]
  %v2710 = vld [vmem:[#allocation2 + $0x70] sm:$0xff]
  %v2711 = vld [vmem:[#allocation2 + $0xa0] sm:$0xff]
  %v2712 = vld [vmem:[#allocation2 + $0xb0] sm:$0xff]
  %v2713 = vld [vmem:[#allocation2 + $0xc0] sm:$0xff]
  %v2714 = vld [vmem:[#allocation2 + $0xd0] sm:$0xff]
  %v2715 = vld [vmem:[#allocation2 + $0xe0] sm:$0xff]
  %v2716 = vld [vmem:[#allocation2 + $0xf0] sm:$0xff]
  %v2717 = vld [vmem:[#allocation2 + $0x100] sm:$0xff]
  %v2718 = vld [vmem:[#allocation2 + $0x110] sm:$0xff]
  %2719 = vst.msk [vmem:[#allocation4] sm:$0xff] %vm1429, %v2703
  %2720 = vst.msk [vmem:[#allocation4 + $0x28] sm:$0xff] %vm1429, %v2704
  %2721 = vst.msk [vmem:[#allocation4 + $0x50] sm:$0xff] %vm1429, %v2705
  %2722 = vst.msk [vmem:[#allocation4 + $0x78] sm:$0xff] %vm1429, %v2706
  %2723 = vst.msk [vmem:[#allocation4 + $0xa0] sm:$0xff] %vm1429, %v2707
  %2724 = vst.msk [vmem:[#allocation4 + $0xc8] sm:$0xff] %vm1429, %v2708
  %2725 = vst.msk [vmem:[#allocation4 + $0xf0] sm:$0xff] %vm1429, %v2709
  %2726 = vst.msk [vmem:[#allocation4 + $0x118] sm:$0xff] %vm1429, %v2710
  %2727 = vst.msk [vmem:[#allocation4 + $0x140] sm:$0xff] %vm1429, %v2711
  %2728 = vst.msk [vmem:[#allocation4 + $0x168] sm:$0xff] %vm1429, %v2712
  %2729 = vst.msk [vmem:[#allocation4 + $0x190] sm:$0xff] %vm1429, %v2713
  %2730 = vst.msk [vmem:[#allocation4 + $0x1b8] sm:$0xff] %vm1429, %v2714
  %2731 = vst.msk [vmem:[#allocation4 + $0x1e0] sm:$0xff] %vm1429, %v2715
  %2732 = vst.msk [vmem:[#allocation4 + $0x208] sm:$0xff] %vm1429, %v2716
  %2733 = vst.msk [vmem:[#allocation4 + $0x230] sm:$0xff] %vm1429, %v2717
  %2734 = vst.msk [vmem:[#allocation4 + $0x258] sm:$0xff] %vm1429, %v2718
  %v2735 = vld [vmem:[#allocation2 + $0x1] sm:$0xff]
  %v2736 = vld [vmem:[#allocation2 + $0x11] sm:$0xff]
  %v2737 = vld [vmem:[#allocation2 + $0x21] sm:$0xff]
  %v2738 = vld [vmem:[#allocation2 + $0x31] sm:$0xff]
  %v2739 = vld [vmem:[#allocation2 + $0x41] sm:$0xff]
  %v2740 = vld [vmem:[#allocation2 + $0x51] sm:$0xff]
  %v2741 = vld [vmem:[#allocation2 + $0x61] sm:$0xff]
  %v2742 = vld [vmem:[#allocation2 + $0x71] sm:$0xff]
  %v2743 = vld [vmem:[#allocation2 + $0xa1] sm:$0xff]
  %v2744 = vld [vmem:[#allocation2 + $0xb1] sm:$0xff]
  %v2745 = vld [vmem:[#allocation2 + $0xc1] sm:$0xff]
  %v2746 = vld [vmem:[#allocation2 + $0xd1] sm:$0xff]
  %v2747 = vld [vmem:[#allocation2 + $0xe1] sm:$0xff]
  %v2748 = vld [vmem:[#allocation2 + $0xf1] sm:$0xff]
  %v2749 = vld [vmem:[#allocation2 + $0x101] sm:$0xff]
  %v2750 = vld [vmem:[#allocation2 + $0x111] sm:$0xff]
  %2767 = vrot.lane.b32.xlu0 %v2735, 64
  %v2768 = vpop.permute.xlu0 %2767
  %2769 = vrot.lane.b32.xlu0 %v2736, 64
  %v2770 = vpop.permute.xlu0 %2769
  %2771 = vrot.lane.b32.xlu0 %v2737, 64
  %v2772 = vpop.permute.xlu0 %2771
  %2773 = vrot.lane.b32.xlu0 %v2738, 64
  %v2774 = vpop.permute.xlu0 %2773
  %2775 = vrot.lane.b32.xlu0 %v2739, 64
  %v2776 = vpop.permute.xlu0 %2775
  %2777 = vrot.lane.b32.xlu0 %v2740, 64
  %v2778 = vpop.permute.xlu0 %2777
  %2779 = vrot.lane.b32.xlu0 %v2741, 64
  %v2780 = vpop.permute.xlu0 %2779
  %2781 = vrot.lane.b32.xlu0 %v2742, 64
  %v2782 = vpop.permute.xlu0 %2781
  %2783 = vrot.lane.b32.xlu0 %v2743, 64
  %v2784 = vpop.permute.xlu0 %2783
  %2785 = vrot.lane.b32.xlu0 %v2744, 64
  %v2786 = vpop.permute.xlu0 %2785
  %2787 = vrot.lane.b32.xlu0 %v2745, 64
  %v2788 = vpop.permute.xlu0 %2787
  %2789 = vrot.lane.b32.xlu0 %v2746, 64
  %v2790 = vpop.permute.xlu0 %2789
  %2791 = vrot.lane.b32.xlu0 %v2747, 64
  %v2792 = vpop.permute.xlu0 %2791
  %2793 = vrot.lane.b32.xlu0 %v2748, 64
  %v2794 = vpop.permute.xlu0 %2793
  %2795 = vrot.lane.b32.xlu0 %v2749, 64
  %v2796 = vpop.permute.xlu0 %2795
  %2797 = vrot.lane.b32.xlu0 %v2750, 64
  %v2798 = vpop.permute.xlu0 %2797
  %2815 = vst.msk [vmem:[#allocation4] sm:$0xff] %vm1602, %v2768
  %2816 = vst.msk [vmem:[#allocation4 + $0x28] sm:$0xff] %vm1602, %v2770
  %2817 = vst.msk [vmem:[#allocation4 + $0x50] sm:$0xff] %vm1602, %v2772
  %2818 = vst.msk [vmem:[#allocation4 + $0x78] sm:$0xff] %vm1602, %v2774
  %2819 = vst.msk [vmem:[#allocation4 + $0xa0] sm:$0xff] %vm1602, %v2776
  %2820 = vst.msk [vmem:[#allocation4 + $0xc8] sm:$0xff] %vm1602, %v2778
  %2821 = vst.msk [vmem:[#allocation4 + $0xf0] sm:$0xff] %vm1602, %v2780
  %2822 = vst.msk [vmem:[#allocation4 + $0x118] sm:$0xff] %vm1602, %v2782
  %2823 = vst.msk [vmem:[#allocation4 + $0x140] sm:$0xff] %vm1602, %v2784
  %2824 = vst.msk [vmem:[#allocation4 + $0x168] sm:$0xff] %vm1602, %v2786
  %2825 = vst.msk [vmem:[#allocation4 + $0x190] sm:$0xff] %vm1602, %v2788
  %2826 = vst.msk [vmem:[#allocation4 + $0x1b8] sm:$0xff] %vm1602, %v2790
  %2827 = vst.msk [vmem:[#allocation4 + $0x1e0] sm:$0xff] %vm1602, %v2792
  %2828 = vst.msk [vmem:[#allocation4 + $0x208] sm:$0xff] %vm1602, %v2794
  %2829 = vst.msk [vmem:[#allocation4 + $0x230] sm:$0xff] %vm1602, %v2796
  %2830 = vst.msk [vmem:[#allocation4 + $0x258] sm:$0xff] %vm1602, %v2798
  %v2831 = vld [vmem:[#allocation2 + $0x2] sm:$0xff]
  %v2832 = vld [vmem:[#allocation2 + $0x12] sm:$0xff]
  %v2833 = vld [vmem:[#allocation2 + $0x22] sm:$0xff]
  %v2834 = vld [vmem:[#allocation2 + $0x32] sm:$0xff]
  %v2835 = vld [vmem:[#allocation2 + $0x42] sm:$0xff]
  %v2836 = vld [vmem:[#allocation2 + $0x52] sm:$0xff]
  %v2837 = vld [vmem:[#allocation2 + $0x62] sm:$0xff]
  %v2838 = vld [vmem:[#allocation2 + $0x72] sm:$0xff]
  %v2839 = vld [vmem:[#allocation2 + $0xa2] sm:$0xff]
  %v2840 = vld [vmem:[#allocation2 + $0xb2] sm:$0xff]
  %v2841 = vld [vmem:[#allocation2 + $0xc2] sm:$0xff]
  %v2842 = vld [vmem:[#allocation2 + $0xd2] sm:$0xff]
  %v2843 = vld [vmem:[#allocation2 + $0xe2] sm:$0xff]
  %v2844 = vld [vmem:[#allocation2 + $0xf2] sm:$0xff]
  %v2845 = vld [vmem:[#allocation2 + $0x102] sm:$0xff]
  %v2846 = vld [vmem:[#allocation2 + $0x112] sm:$0xff]
  %2847 = vst.msk [vmem:[#allocation4 + $0x8] sm:$0xff] %vm1429, %v2831
  %2848 = vst.msk [vmem:[#allocation4 + $0x30] sm:$0xff] %vm1429, %v2832
  %2849 = vst.msk [vmem:[#allocation4 + $0x58] sm:$0xff] %vm1429, %v2833
  %2850 = vst.msk [vmem:[#allocation4 + $0x80] sm:$0xff] %vm1429, %v2834
  %2851 = vst.msk [vmem:[#allocation4 + $0xa8] sm:$0xff] %vm1429, %v2835
  %2852 = vst.msk [vmem:[#allocation4 + $0xd0] sm:$0xff] %vm1429, %v2836
  %2853 = vst.msk [vmem:[#allocation4 + $0xf8] sm:$0xff] %vm1429, %v2837
  %2854 = vst.msk [vmem:[#allocation4 + $0x120] sm:$0xff] %vm1429, %v2838
  %2855 = vst.msk [vmem:[#allocation4 + $0x148] sm:$0xff] %vm1429, %v2839
  %2856 = vst.msk [vmem:[#allocation4 + $0x170] sm:$0xff] %vm1429, %v2840
  %2857 = vst.msk [vmem:[#allocation4 + $0x198] sm:$0xff] %vm1429, %v2841
  %2858 = vst.msk [vmem:[#allocation4 + $0x1c0] sm:$0xff] %vm1429, %v2842
  %2859 = vst.msk [vmem:[#allocation4 + $0x1e8] sm:$0xff] %vm1429, %v2843
  %2860 = vst.msk [vmem:[#allocation4 + $0x210] sm:$0xff] %vm1429, %v2844
  %2861 = vst.msk [vmem:[#allocation4 + $0x238] sm:$0xff] %vm1429, %v2845
  %2862 = vst.msk [vmem:[#allocation4 + $0x260] sm:$0xff] %vm1429, %v2846
  %v2863 = vld [vmem:[%s1440] sm:$0xff]
  %v2864 = vld [vmem:[%s1440 + $0x10] sm:$0xff]
  %v2865 = vld [vmem:[%s1440 + $0x20] sm:$0xff]
  %v2866 = vld [vmem:[%s1440 + $0x30] sm:$0xff]
  %v2867 = vld [vmem:[%s1440 + $0x40] sm:$0xff]
  %v2868 = vld [vmem:[%s1440 + $0x50] sm:$0xff]
  %v2869 = vld [vmem:[%s1440 + $0x60] sm:$0xff]
  %v2870 = vld [vmem:[%s1440 + $0x70] sm:$0xff]
  %v2871 = vld [vmem:[%s1440 + $0xa0] sm:$0xff]
  %v2872 = vld [vmem:[%s1440 + $0xb0] sm:$0xff]
  %v2873 = vld [vmem:[%s1440 + $0xc0] sm:$0xff]
  %v2874 = vld [vmem:[%s1440 + $0xd0] sm:$0xff]
  %v2875 = vld [vmem:[%s1440 + $0xe0] sm:$0xff]
  %v2876 = vld [vmem:[%s1440 + $0xf0] sm:$0xff]
  %v2877 = vld [vmem:[%s1440 + $0x100] sm:$0xff]
  %v2878 = vld [vmem:[%s1440 + $0x110] sm:$0xff]
  %2895 = vrot.lane.b32.xlu0 %v2863, 64
  %v2896 = vpop.permute.xlu0 %2895
  %2897 = vrot.lane.b32.xlu0 %v2864, 64
  %v2898 = vpop.permute.xlu0 %2897
  %2899 = vrot.lane.b32.xlu0 %v2865, 64
  %v2900 = vpop.permute.xlu0 %2899
  %2901 = vrot.lane.b32.xlu0 %v2866, 64
  %v2902 = vpop.permute.xlu0 %2901
  %2903 = vrot.lane.b32.xlu0 %v2867, 64
  %v2904 = vpop.permute.xlu0 %2903
  %2905 = vrot.lane.b32.xlu0 %v2868, 64
  %v2906 = vpop.permute.xlu0 %2905
  %2907 = vrot.lane.b32.xlu0 %v2869, 64
  %v2908 = vpop.permute.xlu0 %2907
  %2909 = vrot.lane.b32.xlu0 %v2870, 64
  %v2910 = vpop.permute.xlu0 %2909
  %2911 = vrot.lane.b32.xlu0 %v2871, 64
  %v2912 = vpop.permute.xlu0 %2911
  %2913 = vrot.lane.b32.xlu0 %v2872, 64
  %v2914 = vpop.permute.xlu0 %2913
  %2915 = vrot.lane.b32.xlu0 %v2873, 64
  %v2916 = vpop.permute.xlu0 %2915
  %2917 = vrot.lane.b32.xlu0 %v2874, 64
  %v2918 = vpop.permute.xlu0 %2917
  %2919 = vrot.lane.b32.xlu0 %v2875, 64
  %v2920 = vpop.permute.xlu0 %2919
  %2921 = vrot.lane.b32.xlu0 %v2876, 64
  %v2922 = vpop.permute.xlu0 %2921
  %2923 = vrot.lane.b32.xlu0 %v2877, 64
  %v2924 = vpop.permute.xlu0 %2923
  %2925 = vrot.lane.b32.xlu0 %v2878, 64
  %v2926 = vpop.permute.xlu0 %2925
  %2943 = vst.msk [vmem:[#allocation4 + $0x8] sm:$0xff] %vm1602, %v2896
  %2944 = vst.msk [vmem:[#allocation4 + $0x30] sm:$0xff] %vm1602, %v2898
  %2945 = vst.msk [vmem:[#allocation4 + $0x58] sm:$0xff] %vm1602, %v2900
  %2946 = vst.msk [vmem:[#allocation4 + $0x80] sm:$0xff] %vm1602, %v2902
  %2947 = vst.msk [vmem:[#allocation4 + $0xa8] sm:$0xff] %vm1602, %v2904
  %2948 = vst.msk [vmem:[#allocation4 + $0xd0] sm:$0xff] %vm1602, %v2906
  %2949 = vst.msk [vmem:[#allocation4 + $0xf8] sm:$0xff] %vm1602, %v2908
  %2950 = vst.msk [vmem:[#allocation4 + $0x120] sm:$0xff] %vm1602, %v2910
  %2951 = vst.msk [vmem:[#allocation4 + $0x148] sm:$0xff] %vm1602, %v2912
  %2952 = vst.msk [vmem:[#allocation4 + $0x170] sm:$0xff] %vm1602, %v2914
  %2953 = vst.msk [vmem:[#allocation4 + $0x198] sm:$0xff] %vm1602, %v2916
  %2954 = vst.msk [vmem:[#allocation4 + $0x1c0] sm:$0xff] %vm1602, %v2918
  %2955 = vst.msk [vmem:[#allocation4 + $0x1e8] sm:$0xff] %vm1602, %v2920
  %2956 = vst.msk [vmem:[#allocation4 + $0x210] sm:$0xff] %vm1602, %v2922
  %2957 = vst.msk [vmem:[#allocation4 + $0x238] sm:$0xff] %vm1602, %v2924
  %2958 = vst.msk [vmem:[#allocation4 + $0x260] sm:$0xff] %vm1602, %v2926
  %v2959 = vld [vmem:[%s1440 + $0x1] sm:$0xff]
  %v2960 = vld [vmem:[%s1440 + $0x11] sm:$0xff]
  %v2961 = vld [vmem:[%s1440 + $0x21] sm:$0xff]
  %v2962 = vld [vmem:[%s1440 + $0x31] sm:$0xff]
  %v2963 = vld [vmem:[%s1440 + $0x41] sm:$0xff]
  %v2964 = vld [vmem:[%s1440 + $0x51] sm:$0xff]
  %v2965 = vld [vmem:[%s1440 + $0x61] sm:$0xff]
  %v2966 = vld [vmem:[%s1440 + $0x71] sm:$0xff]
  %v2967 = vld [vmem:[%s1440 + $0xa1] sm:$0xff]
  %v2968 = vld [vmem:[%s1440 + $0xb1] sm:$0xff]
  %v2969 = vld [vmem:[%s1440 + $0xc1] sm:$0xff]
  %v2970 = vld [vmem:[%s1440 + $0xd1] sm:$0xff]
  %v2971 = vld [vmem:[%s1440 + $0xe1] sm:$0xff]
  %v2972 = vld [vmem:[%s1440 + $0xf1] sm:$0xff]
  %v2973 = vld [vmem:[%s1440 + $0x101] sm:$0xff]
  %v2974 = vld [vmem:[%s1440 + $0x111] sm:$0xff]
  %2975 = vst.msk [vmem:[#allocation4 + $0x10] sm:$0xff] %vm1429, %v2959
  %2976 = vst.msk [vmem:[#allocation4 + $0x38] sm:$0xff] %vm1429, %v2960
  %2977 = vst.msk [vmem:[#allocation4 + $0x60] sm:$0xff] %vm1429, %v2961
  %2978 = vst.msk [vmem:[#allocation4 + $0x88] sm:$0xff] %vm1429, %v2962
  %2979 = vst.msk [vmem:[#allocation4 + $0xb0] sm:$0xff] %vm1429, %v2963
  %2980 = vst.msk [vmem:[#allocation4 + $0xd8] sm:$0xff] %vm1429, %v2964
  %2981 = vst.msk [vmem:[#allocation4 + $0x100] sm:$0xff] %vm1429, %v2965
  %2982 = vst.msk [vmem:[#allocation4 + $0x128] sm:$0xff] %vm1429, %v2966
  %2983 = vst.msk [vmem:[#allocation4 + $0x150] sm:$0xff] %vm1429, %v2967
  %2984 = vst.msk [vmem:[#allocation4 + $0x178] sm:$0xff] %vm1429, %v2968
  %2985 = vst.msk [vmem:[#allocation4 + $0x1a0] sm:$0xff] %vm1429, %v2969
  %2986 = vst.msk [vmem:[#allocation4 + $0x1c8] sm:$0xff] %vm1429, %v2970
  %2987 = vst.msk [vmem:[#allocation4 + $0x1f0] sm:$0xff] %vm1429, %v2971
  %2988 = vst.msk [vmem:[#allocation4 + $0x218] sm:$0xff] %vm1429, %v2972
  %2989 = vst.msk [vmem:[#allocation4 + $0x240] sm:$0xff] %vm1429, %v2973
  %2990 = vst.msk [vmem:[#allocation4 + $0x268] sm:$0xff] %vm1429, %v2974
  %v2991 = vld [vmem:[%s1440 + $0x2] sm:$0xff]
  %v2992 = vld [vmem:[%s1440 + $0x12] sm:$0xff]
  %v2993 = vld [vmem:[%s1440 + $0x22] sm:$0xff]
  %v2994 = vld [vmem:[%s1440 + $0x32] sm:$0xff]
  %v2995 = vld [vmem:[%s1440 + $0x42] sm:$0xff]
  %v2996 = vld [vmem:[%s1440 + $0x52] sm:$0xff]
  %v2997 = vld [vmem:[%s1440 + $0x62] sm:$0xff]
  %v2998 = vld [vmem:[%s1440 + $0x72] sm:$0xff]
  %v2999 = vld [vmem:[%s1440 + $0xa2] sm:$0xff]
  %v3000 = vld [vmem:[%s1440 + $0xb2] sm:$0xff]
  %v3001 = vld [vmem:[%s1440 + $0xc2] sm:$0xff]
  %v3002 = vld [vmem:[%s1440 + $0xd2] sm:$0xff]
  %v3003 = vld [vmem:[%s1440 + $0xe2] sm:$0xff]
  %v3004 = vld [vmem:[%s1440 + $0xf2] sm:$0xff]
  %v3005 = vld [vmem:[%s1440 + $0x102] sm:$0xff]
  %v3006 = vld [vmem:[%s1440 + $0x112] sm:$0xff]
  %3023 = vrot.lane.b32.xlu0 %v2991, 64
  %v3024 = vpop.permute.xlu0 %3023
  %3025 = vrot.lane.b32.xlu0 %v2992, 64
  %v3026 = vpop.permute.xlu0 %3025
  %3027 = vrot.lane.b32.xlu0 %v2993, 64
  %v3028 = vpop.permute.xlu0 %3027
  %3029 = vrot.lane.b32.xlu0 %v2994, 64
  %v3030 = vpop.permute.xlu0 %3029
  %3031 = vrot.lane.b32.xlu0 %v2995, 64
  %v3032 = vpop.permute.xlu0 %3031
  %3033 = vrot.lane.b32.xlu0 %v2996, 64
  %v3034 = vpop.permute.xlu0 %3033
  %3035 = vrot.lane.b32.xlu0 %v2997, 64
  %v3036 = vpop.permute.xlu0 %3035
  %3037 = vrot.lane.b32.xlu0 %v2998, 64
  %v3038 = vpop.permute.xlu0 %3037
  %3039 = vrot.lane.b32.xlu0 %v2999, 64
  %v3040 = vpop.permute.xlu0 %3039
  %3041 = vrot.lane.b32.xlu0 %v3000, 64
  %v3042 = vpop.permute.xlu0 %3041
  %3043 = vrot.lane.b32.xlu0 %v3001, 64
  %v3044 = vpop.permute.xlu0 %3043
  %3045 = vrot.lane.b32.xlu0 %v3002, 64
  %v3046 = vpop.permute.xlu0 %3045
  %3047 = vrot.lane.b32.xlu0 %v3003, 64
  %v3048 = vpop.permute.xlu0 %3047
  %3049 = vrot.lane.b32.xlu0 %v3004, 64
  %v3050 = vpop.permute.xlu0 %3049
  %3051 = vrot.lane.b32.xlu0 %v3005, 64
  %v3052 = vpop.permute.xlu0 %3051
  %3053 = vrot.lane.b32.xlu0 %v3006, 64
  %v3054 = vpop.permute.xlu0 %3053
  %3071 = vst.msk [vmem:[#allocation4 + $0x10] sm:$0xff] %vm1602, %v3024
  %3072 = vst.msk [vmem:[#allocation4 + $0x38] sm:$0xff] %vm1602, %v3026
  %3073 = vst.msk [vmem:[#allocation4 + $0x60] sm:$0xff] %vm1602, %v3028
  %3074 = vst.msk [vmem:[#allocation4 + $0x88] sm:$0xff] %vm1602, %v3030
  %3075 = vst.msk [vmem:[#allocation4 + $0xb0] sm:$0xff] %vm1602, %v3032
  %3076 = vst.msk [vmem:[#allocation4 + $0xd8] sm:$0xff] %vm1602, %v3034
  %3077 = vst.msk [vmem:[#allocation4 + $0x100] sm:$0xff] %vm1602, %v3036
  %3078 = vst.msk [vmem:[#allocation4 + $0x128] sm:$0xff] %vm1602, %v3038
  %3079 = vst.msk [vmem:[#allocation4 + $0x150] sm:$0xff] %vm1602, %v3040
  %3080 = vst.msk [vmem:[#allocation4 + $0x178] sm:$0xff] %vm1602, %v3042
  %3081 = vst.msk [vmem:[#allocation4 + $0x1a0] sm:$0xff] %vm1602, %v3044
  %3082 = vst.msk [vmem:[#allocation4 + $0x1c8] sm:$0xff] %vm1602, %v3046
  %3083 = vst.msk [vmem:[#allocation4 + $0x1f0] sm:$0xff] %vm1602, %v3048
  %3084 = vst.msk [vmem:[#allocation4 + $0x218] sm:$0xff] %vm1602, %v3050
  %3085 = vst.msk [vmem:[#allocation4 + $0x240] sm:$0xff] %vm1602, %v3052
  %3086 = vst.msk [vmem:[#allocation4 + $0x268] sm:$0xff] %vm1602, %v3054
  %v3087 = vld [vmem:[%s1875] sm:$0xff]
  %v3088 = vld [vmem:[%s1875 + $0x10] sm:$0xff]
  %v3089 = vld [vmem:[%s1875 + $0x20] sm:$0xff]
  %v3090 = vld [vmem:[%s1875 + $0x30] sm:$0xff]
  %v3091 = vld [vmem:[%s1875 + $0x40] sm:$0xff]
  %v3092 = vld [vmem:[%s1875 + $0x50] sm:$0xff]
  %v3093 = vld [vmem:[%s1875 + $0x60] sm:$0xff]
  %v3094 = vld [vmem:[%s1875 + $0x70] sm:$0xff]
  %v3095 = vld [vmem:[%s1875 + $0xa0] sm:$0xff]
  %v3096 = vld [vmem:[%s1875 + $0xb0] sm:$0xff]
  %v3097 = vld [vmem:[%s1875 + $0xc0] sm:$0xff]
  %v3098 = vld [vmem:[%s1875 + $0xd0] sm:$0xff]
  %v3099 = vld [vmem:[%s1875 + $0xe0] sm:$0xff]
  %v3100 = vld [vmem:[%s1875 + $0xf0] sm:$0xff]
  %v3101 = vld [vmem:[%s1875 + $0x100] sm:$0xff]
  %v3102 = vld [vmem:[%s1875 + $0x110] sm:$0xff]
  %3103 = vst.msk [vmem:[#allocation4 + $0x18] sm:$0xff] %vm1429, %v3087
  %3104 = vst.msk [vmem:[#allocation4 + $0x40] sm:$0xff] %vm1429, %v3088
  %3105 = vst.msk [vmem:[#allocation4 + $0x68] sm:$0xff] %vm1429, %v3089
  %3106 = vst.msk [vmem:[#allocation4 + $0x90] sm:$0xff] %vm1429, %v3090
  %3107 = vst.msk [vmem:[#allocation4 + $0xb8] sm:$0xff] %vm1429, %v3091
  %3108 = vst.msk [vmem:[#allocation4 + $0xe0] sm:$0xff] %vm1429, %v3092
  %3109 = vst.msk [vmem:[#allocation4 + $0x108] sm:$0xff] %vm1429, %v3093
  %3110 = vst.msk [vmem:[#allocation4 + $0x130] sm:$0xff] %vm1429, %v3094
  %3111 = vst.msk [vmem:[#allocation4 + $0x158] sm:$0xff] %vm1429, %v3095
  %3112 = vst.msk [vmem:[#allocation4 + $0x180] sm:$0xff] %vm1429, %v3096
  %3113 = vst.msk [vmem:[#allocation4 + $0x1a8] sm:$0xff] %vm1429, %v3097
  %3114 = vst.msk [vmem:[#allocation4 + $0x1d0] sm:$0xff] %vm1429, %v3098
  %3115 = vst.msk [vmem:[#allocation4 + $0x1f8] sm:$0xff] %vm1429, %v3099
  %3116 = vst.msk [vmem:[#allocation4 + $0x220] sm:$0xff] %vm1429, %v3100
  %3117 = vst.msk [vmem:[#allocation4 + $0x248] sm:$0xff] %vm1429, %v3101
  %3118 = vst.msk [vmem:[#allocation4 + $0x270] sm:$0xff] %vm1429, %v3102
  %v3119 = vld [vmem:[%s1875 + $0x1] sm:$0xff]
  %v3120 = vld [vmem:[%s1875 + $0x11] sm:$0xff]
  %v3121 = vld [vmem:[%s1875 + $0x21] sm:$0xff]
  %v3122 = vld [vmem:[%s1875 + $0x31] sm:$0xff]
  %v3123 = vld [vmem:[%s1875 + $0x41] sm:$0xff]
  %v3124 = vld [vmem:[%s1875 + $0x51] sm:$0xff]
  %v3125 = vld [vmem:[%s1875 + $0x61] sm:$0xff]
  %v3126 = vld [vmem:[%s1875 + $0x71] sm:$0xff]
  %v3127 = vld [vmem:[%s1875 + $0xa1] sm:$0xff]
  %v3128 = vld [vmem:[%s1875 + $0xb1] sm:$0xff]
  %v3129 = vld [vmem:[%s1875 + $0xc1] sm:$0xff]
  %v3130 = vld [vmem:[%s1875 + $0xd1] sm:$0xff]
  %v3131 = vld [vmem:[%s1875 + $0xe1] sm:$0xff]
  %v3132 = vld [vmem:[%s1875 + $0xf1] sm:$0xff]
  %v3133 = vld [vmem:[%s1875 + $0x101] sm:$0xff]
  %v3134 = vld [vmem:[%s1875 + $0x111] sm:$0xff]
  %3151 = vrot.lane.b32.xlu0 %v3119, 64
  %v3152 = vpop.permute.xlu0 %3151
  %3153 = vrot.lane.b32.xlu0 %v3120, 64
  %v3154 = vpop.permute.xlu0 %3153
  %3155 = vrot.lane.b32.xlu0 %v3121, 64
  %v3156 = vpop.permute.xlu0 %3155
  %3157 = vrot.lane.b32.xlu0 %v3122, 64
  %v3158 = vpop.permute.xlu0 %3157
  %3159 = vrot.lane.b32.xlu0 %v3123, 64
  %v3160 = vpop.permute.xlu0 %3159
  %3161 = vrot.lane.b32.xlu0 %v3124, 64
  %v3162 = vpop.permute.xlu0 %3161
  %3163 = vrot.lane.b32.xlu0 %v3125, 64
  %v3164 = vpop.permute.xlu0 %3163
  %3165 = vrot.lane.b32.xlu0 %v3126, 64
  %v3166 = vpop.permute.xlu0 %3165
  %3167 = vrot.lane.b32.xlu0 %v3127, 64
  %v3168 = vpop.permute.xlu0 %3167
  %3169 = vrot.lane.b32.xlu0 %v3128, 64
  %v3170 = vpop.permute.xlu0 %3169
  %3171 = vrot.lane.b32.xlu0 %v3129, 64
  %v3172 = vpop.permute.xlu0 %3171
  %3173 = vrot.lane.b32.xlu0 %v3130, 64
  %v3174 = vpop.permute.xlu0 %3173
  %3175 = vrot.lane.b32.xlu0 %v3131, 64
  %v3176 = vpop.permute.xlu0 %3175
  %3177 = vrot.lane.b32.xlu0 %v3132, 64
  %v3178 = vpop.permute.xlu0 %3177
  %3179 = vrot.lane.b32.xlu0 %v3133, 64
  %v3180 = vpop.permute.xlu0 %3179
  %3181 = vrot.lane.b32.xlu0 %v3134, 64
  %v3182 = vpop.permute.xlu0 %3181
  %3199 = vst.msk [vmem:[#allocation4 + $0x18] sm:$0xff] %vm1602, %v3152
  %3200 = vst.msk [vmem:[#allocation4 + $0x40] sm:$0xff] %vm1602, %v3154
  %3201 = vst.msk [vmem:[#allocation4 + $0x68] sm:$0xff] %vm1602, %v3156
  %3202 = vst.msk [vmem:[#allocation4 + $0x90] sm:$0xff] %vm1602, %v3158
  %3203 = vst.msk [vmem:[#allocation4 + $0xb8] sm:$0xff] %vm1602, %v3160
  %3204 = vst.msk [vmem:[#allocation4 + $0xe0] sm:$0xff] %vm1602, %v3162
  %3205 = vst.msk [vmem:[#allocation4 + $0x108] sm:$0xff] %vm1602, %v3164
  %3206 = vst.msk [vmem:[#allocation4 + $0x130] sm:$0xff] %vm1602, %v3166
  %3207 = vst.msk [vmem:[#allocation4 + $0x158] sm:$0xff] %vm1602, %v3168
  %3208 = vst.msk [vmem:[#allocation4 + $0x180] sm:$0xff] %vm1602, %v3170
  %3209 = vst.msk [vmem:[#allocation4 + $0x1a8] sm:$0xff] %vm1602, %v3172
  %3210 = vst.msk [vmem:[#allocation4 + $0x1d0] sm:$0xff] %vm1602, %v3174
  %3211 = vst.msk [vmem:[#allocation4 + $0x1f8] sm:$0xff] %vm1602, %v3176
  %3212 = vst.msk [vmem:[#allocation4 + $0x220] sm:$0xff] %vm1602, %v3178
  %3213 = vst.msk [vmem:[#allocation4 + $0x248] sm:$0xff] %vm1602, %v3180
  %3214 = vst.msk [vmem:[#allocation4 + $0x270] sm:$0xff] %vm1602, %v3182
  %v3215 = vld [vmem:[%s1875 + $0x2] sm:$0xff]
  %v3216 = vld [vmem:[%s1875 + $0x12] sm:$0xff]
  %v3217 = vld [vmem:[%s1875 + $0x22] sm:$0xff]
  %v3218 = vld [vmem:[%s1875 + $0x32] sm:$0xff]
  %v3219 = vld [vmem:[%s1875 + $0x42] sm:$0xff]
  %v3220 = vld [vmem:[%s1875 + $0x52] sm:$0xff]
  %v3221 = vld [vmem:[%s1875 + $0x62] sm:$0xff]
  %v3222 = vld [vmem:[%s1875 + $0x72] sm:$0xff]
  %v3223 = vld [vmem:[%s1875 + $0xa2] sm:$0xff]
  %v3224 = vld [vmem:[%s1875 + $0xb2] sm:$0xff]
  %v3225 = vld [vmem:[%s1875 + $0xc2] sm:$0xff]
  %v3226 = vld [vmem:[%s1875 + $0xd2] sm:$0xff]
  %v3227 = vld [vmem:[%s1875 + $0xe2] sm:$0xff]
  %v3228 = vld [vmem:[%s1875 + $0xf2] sm:$0xff]
  %v3229 = vld [vmem:[%s1875 + $0x102] sm:$0xff]
  %v3230 = vld [vmem:[%s1875 + $0x112] sm:$0xff]
  %3231 = vst.msk [vmem:[#allocation4 + $0x20] sm:$0xff] %vm1429, %v3215
  %3232 = vst.msk [vmem:[#allocation4 + $0x48] sm:$0xff] %vm1429, %v3216
  %3233 = vst.msk [vmem:[#allocation4 + $0x70] sm:$0xff] %vm1429, %v3217
  %3234 = vst.msk [vmem:[#allocation4 + $0x98] sm:$0xff] %vm1429, %v3218
  %3235 = vst.msk [vmem:[#allocation4 + $0xc0] sm:$0xff] %vm1429, %v3219
  %3236 = vst.msk [vmem:[#allocation4 + $0xe8] sm:$0xff] %vm1429, %v3220
  %3237 = vst.msk [vmem:[#allocation4 + $0x110] sm:$0xff] %vm1429, %v3221
  %3238 = vst.msk [vmem:[#allocation4 + $0x138] sm:$0xff] %vm1429, %v3222
  %3239 = vst.msk [vmem:[#allocation4 + $0x160] sm:$0xff] %vm1429, %v3223
  %3240 = vst.msk [vmem:[#allocation4 + $0x188] sm:$0xff] %vm1429, %v3224
  %3241 = vst.msk [vmem:[#allocation4 + $0x1b0] sm:$0xff] %vm1429, %v3225
  %3242 = vst.msk [vmem:[#allocation4 + $0x1d8] sm:$0xff] %vm1429, %v3226
  %3243 = vst.msk [vmem:[#allocation4 + $0x200] sm:$0xff] %vm1429, %v3227
  %3244 = vst.msk [vmem:[#allocation4 + $0x228] sm:$0xff] %vm1429, %v3228
  %3245 = vst.msk [vmem:[#allocation4 + $0x250] sm:$0xff] %vm1429, %v3229
  %3246 = vst.msk [vmem:[#allocation4 + $0x278] sm:$0xff] %vm1429, %v3230
  %v3247 = vld [vmem:[#allocation4] sm:$0xff]
  %v3248 = vld [vmem:[#allocation4 + $0x8] sm:$0xff]
  %v3249 = vld [vmem:[#allocation4 + $0x10] sm:$0xff]
  %v3250 = vld [vmem:[#allocation4 + $0x18] sm:$0xff]
  %v3251 = vld [vmem:[#allocation4 + $0x20] sm:$0xff]
  %v3252 = vld [vmem:[#allocation4 + $0x28] sm:$0xff]
  %v3253 = vld [vmem:[#allocation4 + $0x30] sm:$0xff]
  %v3254 = vld [vmem:[#allocation4 + $0x38] sm:$0xff]
  %v3255 = vld [vmem:[#allocation4 + $0x40] sm:$0xff]
  %v3256 = vld [vmem:[#allocation4 + $0x48] sm:$0xff]
  %v3257 = vld [vmem:[#allocation4 + $0x50] sm:$0xff]
  %v3258 = vld [vmem:[#allocation4 + $0x58] sm:$0xff]
  %v3259 = vld [vmem:[#allocation4 + $0x60] sm:$0xff]
  %v3260 = vld [vmem:[#allocation4 + $0x68] sm:$0xff]
  %v3261 = vld [vmem:[#allocation4 + $0x70] sm:$0xff]
  %v3262 = vld [vmem:[#allocation4 + $0x78] sm:$0xff]
  %v3263 = vld [vmem:[#allocation4 + $0x80] sm:$0xff]
  %v3264 = vld [vmem:[#allocation4 + $0x88] sm:$0xff]
  %v3265 = vld [vmem:[#allocation4 + $0x90] sm:$0xff]
  %v3266 = vld [vmem:[#allocation4 + $0x98] sm:$0xff]
  %v3267 = vld [vmem:[#allocation4 + $0xa0] sm:$0xff]
  %v3268 = vld [vmem:[#allocation4 + $0xa8] sm:$0xff]
  %v3269 = vld [vmem:[#allocation4 + $0xb0] sm:$0xff]
  %v3270 = vld [vmem:[#allocation4 + $0xb8] sm:$0xff]
  %v3271 = vld [vmem:[#allocation4 + $0xc0] sm:$0xff]
  %v3272 = vld [vmem:[#allocation4 + $0xc8] sm:$0xff]
  %v3273 = vld [vmem:[#allocation4 + $0xd0] sm:$0xff]
  %v3274 = vld [vmem:[#allocation4 + $0xd8] sm:$0xff]
  %v3275 = vld [vmem:[#allocation4 + $0xe0] sm:$0xff]
  %v3276 = vld [vmem:[#allocation4 + $0xe8] sm:$0xff]
  %v3277 = vld [vmem:[#allocation4 + $0xf0] sm:$0xff]
  %v3278 = vld [vmem:[#allocation4 + $0xf8] sm:$0xff]
  %v3279 = vld [vmem:[#allocation4 + $0x100] sm:$0xff]
  %v3280 = vld [vmem:[#allocation4 + $0x108] sm:$0xff]
  %v3281 = vld [vmem:[#allocation4 + $0x110] sm:$0xff]
  %v3282 = vld [vmem:[#allocation4 + $0x118] sm:$0xff]
  %v3283 = vld [vmem:[#allocation4 + $0x120] sm:$0xff]
  %v3284 = vld [vmem:[#allocation4 + $0x128] sm:$0xff]
  %v3285 = vld [vmem:[#allocation4 + $0x130] sm:$0xff]
  %v3286 = vld [vmem:[#allocation4 + $0x138] sm:$0xff]
  %v3287 = vld [vmem:[#allocation4 + $0x140] sm:$0xff]
  %v3288 = vld [vmem:[#allocation4 + $0x148] sm:$0xff]
  %v3289 = vld [vmem:[#allocation4 + $0x150] sm:$0xff]
  %v3290 = vld [vmem:[#allocation4 + $0x158] sm:$0xff]
  %v3291 = vld [vmem:[#allocation4 + $0x160] sm:$0xff]
  %v3292 = vld [vmem:[#allocation4 + $0x168] sm:$0xff]
  %v3293 = vld [vmem:[#allocation4 + $0x170] sm:$0xff]
  %v3294 = vld [vmem:[#allocation4 + $0x178] sm:$0xff]
  %v3295 = vld [vmem:[#allocation4 + $0x180] sm:$0xff]
  %v3296 = vld [vmem:[#allocation4 + $0x188] sm:$0xff]
  %v3297 = vld [vmem:[#allocation4 + $0x190] sm:$0xff]
  %v3298 = vld [vmem:[#allocation4 + $0x198] sm:$0xff]
  %v3299 = vld [vmem:[#allocation4 + $0x1a0] sm:$0xff]
  %v3300 = vld [vmem:[#allocation4 + $0x1a8] sm:$0xff]
  %v3301 = vld [vmem:[#allocation4 + $0x1b0] sm:$0xff]
  %v3302 = vld [vmem:[#allocation4 + $0x1b8] sm:$0xff]
  %v3303 = vld [vmem:[#allocation4 + $0x1c0] sm:$0xff]
  %v3304 = vld [vmem:[#allocation4 + $0x1c8] sm:$0xff]
  %v3305 = vld [vmem:[#allocation4 + $0x1d0] sm:$0xff]
  %v3306 = vld [vmem:[#allocation4 + $0x1d8] sm:$0xff]
  %v3307 = vld [vmem:[#allocation4 + $0x1e0] sm:$0xff]
  %v3308 = vld [vmem:[#allocation4 + $0x1e8] sm:$0xff]
  %v3309 = vld [vmem:[#allocation4 + $0x1f0] sm:$0xff]
  %v3310 = vld [vmem:[#allocation4 + $0x1f8] sm:$0xff]
  %v3311 = vld [vmem:[#allocation4 + $0x200] sm:$0xff]
  %v3312 = vld [vmem:[#allocation4 + $0x208] sm:$0xff]
  %v3313 = vld [vmem:[#allocation4 + $0x210] sm:$0xff]
  %v3314 = vld [vmem:[#allocation4 + $0x218] sm:$0xff]
  %v3315 = vld [vmem:[#allocation4 + $0x220] sm:$0xff]
  %v3316 = vld [vmem:[#allocation4 + $0x228] sm:$0xff]
  %v3317 = vld [vmem:[#allocation4 + $0x230] sm:$0xff]
  %v3318 = vld [vmem:[#allocation4 + $0x238] sm:$0xff]
  %v3319 = vld [vmem:[#allocation4 + $0x240] sm:$0xff]
  %v3320 = vld [vmem:[#allocation4 + $0x248] sm:$0xff]
  %v3321 = vld [vmem:[#allocation4 + $0x250] sm:$0xff]
  %v3322 = vld [vmem:[#allocation4 + $0x258] sm:$0xff]
  %v3323 = vld [vmem:[#allocation4 + $0x260] sm:$0xff]
  %v3324 = vld [vmem:[#allocation4 + $0x268] sm:$0xff]
  %v3325 = vld [vmem:[#allocation4 + $0x270] sm:$0xff]
  %v3326 = vld [vmem:[#allocation4 + $0x278] sm:$0xff]
  %v3328 = vsel %vm1429, %v3251, 0
  %v3331 = vsel %vm1429, %v3256, 0
  %v3334 = vsel %vm1429, %v3261, 0
  %v3337 = vsel %vm1429, %v3266, 0
  %v3340 = vsel %vm1429, %v3271, 0
  %v3343 = vsel %vm1429, %v3276, 0
  %v3346 = vsel %vm1429, %v3281, 0
  %v3349 = vsel %vm1429, %v3286, 0
  %v3352 = vsel %vm1429, %v3291, 0
  %v3355 = vsel %vm1429, %v3296, 0
  %v3358 = vsel %vm1429, %v3301, 0
  %v3361 = vsel %vm1429, %v3306, 0
  %v3364 = vsel %vm1429, %v3311, 0
  %v3367 = vsel %vm1429, %v3316, 0
  %v3370 = vsel %vm1429, %v3321, 0
  %v3373 = vsel %vm1429, %v3326, 0
  %3375 = vmatprep.subr.mxu0 0.0
  %3376 = vmatpush1.msra.mxu0 %v1356
  %3377 = vmatprep.subr.mxu0 0.0
  %3378 = vmatpush1.msra.mxu0 %v1357
  %3379 = vmatprep.subr.mxu0 0.0
  %3380 = vmatpush1.msra.mxu0 %v1358
  %3381 = vmatprep.subr.mxu0 0.0
  %3382 = vmatpush1.msra.mxu0 %v1359
  %3383 = vmatprep.subr.mxu0 0.0
  %3384 = vmatpush1.msra.mxu0 %v1360
  %3385 = vmatprep.subr.mxu0 0.0
  %3386 = vmatpush1.msra.mxu0 %v1361
  %3387 = vmatprep.subr.mxu0 0.0
  %3388 = vmatpush1.msra.mxu0 %v1362
  %3389 = vmatprep.subr.mxu0 0.0
  %3390 = vmatpush1.msra.mxu0 %v1363
  %3391 = vmatprep.subr.mxu0 0.0
  %3392 = vmatpush1.msra.mxu0 %v1364
  %3393 = vmatprep.subr.mxu0 0.0
  %3394 = vmatpush1.msra.mxu0 %v1365
  %3395 = vmatprep.subr.mxu0 0.0
  %3396 = vmatpush1.msra.mxu0 %v1366
  %3397 = vmatprep.subr.mxu0 0.0
  %3398 = vmatpush1.msra.mxu0 %v1367
  %3399 = vmatprep.subr.mxu0 0.0
  %3400 = vmatpush1.msra.mxu0 %v1368
  %3401 = vmatprep.subr.mxu0 0.0
  %3402 = vmatpush1.msra.mxu0 %v1369
  %3403 = vmatprep.subr.mxu0 0.0
  %3404 = vmatpush1.msra.mxu0 %v1370
  %3405 = vmatprep.subr.mxu0 0.0
  %3406 = vmatpush1.msra.mxu0 %v1371
  %3407 = vmatprep.subr.mxu0 0.0
  %3408 = vmatpush1.msra.mxu0 %v1372
  %3409 = vmatprep.subr.mxu0 0.0
  %3410 = vmatpush1.msra.mxu0 %v1373
  %3411 = vmatprep.subr.mxu0 0.0
  %3412 = vmatpush1.msra.mxu0 %v1374
  %3413 = vmatprep.subr.mxu0 0.0
  %3414 = vmatpush1.msra.mxu0 %v1375
  %3415 = vmatprep.subr.mxu0 0.0
  %3416 = vmatpush1.msra.mxu0 %v1376
  %3417 = vmatprep.subr.mxu0 0.0
  %3418 = vmatpush1.msra.mxu0 %v1377
  %3419 = vmatprep.subr.mxu0 0.0
  %3420 = vmatpush1.msra.mxu0 %v1378
  %3421 = vmatprep.subr.mxu0 0.0
  %3422 = vmatpush1.msra.mxu0 %v1379
  %3423 = vmatprep.subr.mxu0 0.0
  %3424 = vmatpush1.msra.mxu0 %v1380
  %3425 = vmatprep.subr.mxu0 0.0
  %3426 = vmatpush1.msra.mxu0 %v1381
  %3427 = vmatprep.subr.mxu0 0.0
  %3428 = vmatpush1.msra.mxu0 %v1382
  %3429 = vmatprep.subr.mxu0 0.0
  %3430 = vmatpush1.msra.mxu0 %v1383
  %3431 = vmatprep.subr.mxu0 0.0
  %3432 = vmatpush1.msra.mxu0 %v1384
  %3433 = vmatprep.subr.mxu0 0.0
  %3434 = vmatpush1.msra.mxu0 %v1385
  %3435 = vmatprep.subr.mxu0 0.0
  %3436 = vmatpush1.msra.mxu0 %v1386
  %3437 = vmatprep.subr.mxu0 0.0
  %3438 = vmatpush1.msra.mxu0 %v1387
  %3439 = vmatprep.mubr.f32.mxu0 %v3248
  %3440 = vmatmul.mubr.f32.gmra.mrb[0].mxu0 %v3247
  %v3441 = vpop.f32.mrb[0].mxu0
  %v3442 = vadd.f32 %v1428, %v3441
  %v3443 = vpop.f32.mrb[0].mxu0
  %3444 = vmatprep.mubr.f32.mxu0 %v3253
  %3445 = vmatmul.mubr.f32.gmra.mrb[0].mxu0 %v3252
  %v3446 = vpop.f32.mrb[0].mxu0
  %v3447 = vadd.f32 %v1428, %v3446
  %v3448 = vpop.f32.mrb[0].mxu0
  %3449 = vmatprep.mubr.f32.mxu0 %v3258
  %3450 = vmatmul.mubr.f32.gmra.mrb[0].mxu0 %v3257
  %v3451 = vpop.f32.mrb[0].mxu0
  %v3452 = vadd.f32 %v1428, %v3451
  %v3453 = vpop.f32.mrb[0].mxu0
  %3454 = vmatprep.mubr.f32.mxu0 %v3263
  %3455 = vmatmul.mubr.f32.gmra.mrb[0].mxu0 %v3262
  %v3456 = vpop.f32.mrb[0].mxu0
  %v3457 = vadd.f32 %v1428, %v3456
  %v3458 = vpop.f32.mrb[0].mxu0
  %3459 = vmatprep.mubr.f32.mxu0 %v3268
  %3460 = vmatmul.mubr.f32.gmra.mrb[0].mxu0 %v3267
  %v3461 = vpop.f32.mrb[0].mxu0
  %v3462 = vadd.f32 %v1428, %v3461
  %v3463 = vpop.f32.mrb[0].mxu0
  %3464 = vmatprep.mubr.f32.mxu0 %v3273
  %3465 = vmatmul.mubr.f32.gmra.mrb[0].mxu0 %v3272
  %v3466 = vpop.f32.mrb[0].mxu0
  %v3467 = vadd.f32 %v1428, %v3466
  %v3468 = vpop.f32.mrb[0].mxu0
  %3469 = vmatprep.mubr.f32.mxu0 %v3278
  %3470 = vmatmul.mubr.f32.gmra.mrb[0].mxu0 %v3277
  %v3471 = vpop.f32.mrb[0].mxu0
  %v3472 = vadd.f32 %v1428, %v3471
  %v3473 = vpop.f32.mrb[0].mxu0
  %3474 = vmatprep.mubr.f32.mxu0 %v3283
  %3475 = vmatmul.mubr.f32.gmra.mrb[0].mxu0 %v3282
  %v3476 = vpop.f32.mrb[0].mxu0
  %v3477 = vadd.f32 %v1428, %v3476
  %v3478 = vpop.f32.mrb[0].mxu0
  %3479 = vmatprep.mubr.f32.mxu0 %v3288
  %3480 = vmatmul.mubr.f32.gmra.mrb[0].mxu0 %v3287
  %v3481 = vpop.f32.mrb[0].mxu0
  %v3482 = vadd.f32 %v1428, %v3481
  %v3483 = vpop.f32.mrb[0].mxu0
  %3484 = vmatprep.mubr.f32.mxu0 %v3293
  %3485 = vmatmul.mubr.f32.gmra.mrb[0].mxu0 %v3292
  %v3486 = vpop.f32.mrb[0].mxu0
  %v3487 = vadd.f32 %v1428, %v3486
  %v3488 = vpop.f32.mrb[0].mxu0
  %3489 = vmatprep.mubr.f32.mxu0 %v3298
  %3490 = vmatmul.mubr.f32.gmra.mrb[0].mxu0 %v3297
  %v3491 = vpop.f32.mrb[0].mxu0
  %v3492 = vadd.f32 %v1428, %v3491
  %v3493 = vpop.f32.mrb[0].mxu0
  %3494 = vmatprep.mubr.f32.mxu0 %v3303
  %3495 = vmatmul.mubr.f32.gmra.mrb[0].mxu0 %v3302
  %v3496 = vpop.f32.mrb[0].mxu0
  %v3497 = vadd.f32 %v1428, %v3496
  %v3498 = vpop.f32.mrb[0].mxu0
  %3499 = vmatprep.mubr.f32.mxu0 %v3308
  %3500 = vmatmul.mubr.f32.gmra.mrb[0].mxu0 %v3307
  %v3501 = vpop.f32.mrb[0].mxu0
  %v3502 = vadd.f32 %v1428, %v3501
  %v3503 = vpop.f32.mrb[0].mxu0
  %3504 = vmatprep.mubr.f32.mxu0 %v3313
  %3505 = vmatmul.mubr.f32.gmra.mrb[0].mxu0 %v3312
  %v3506 = vpop.f32.mrb[0].mxu0
  %v3507 = vadd.f32 %v1428, %v3506
  %v3508 = vpop.f32.mrb[0].mxu0
  %3509 = vmatprep.mubr.f32.mxu0 %v3318
  %3510 = vmatmul.mubr.f32.gmra.mrb[0].mxu0 %v3317
  %v3511 = vpop.f32.mrb[0].mxu0
  %v3512 = vadd.f32 %v1428, %v3511
  %v3513 = vpop.f32.mrb[0].mxu0
  %3514 = vmatprep.mubr.f32.mxu0 %v3323
  %3515 = vmatmul.mubr.f32.gmra.mrb[0].mxu0 %v3322
  %v3516 = vpop.f32.mrb[0].mxu0
  %v3517 = vadd.f32 %v1428, %v3516
  %v3518 = vpop.f32.mrb[0].mxu0
  %3519 = vdwg.mxu0
  %3520 = vmatprep.subr.mxu0 0.0
  %3521 = vmatpush1.msra.mxu0 %v1388
  %3522 = vmatprep.subr.mxu0 0.0
  %3523 = vmatpush1.msra.mxu0 %v1389
  %3524 = vmatprep.subr.mxu0 0.0
  %3525 = vmatpush1.msra.mxu0 %v1390
  %3526 = vmatprep.subr.mxu0 0.0
  %3527 = vmatpush1.msra.mxu0 %v1391
  %3528 = vmatprep.subr.mxu0 0.0
  %3529 = vmatpush1.msra.mxu0 %v1392
  %3530 = vmatprep.subr.mxu0 0.0
  %3531 = vmatpush1.msra.mxu0 %v1393
  %3532 = vmatprep.subr.mxu0 0.0
  %3533 = vmatpush1.msra.mxu0 %v1394
  %3534 = vmatprep.subr.mxu0 0.0
  %3535 = vmatpush1.msra.mxu0 %v1395
  %3536 = vmatprep.subr.mxu0 0.0
  %3537 = vmatpush1.msra.mxu0 %v1396
  %3538 = vmatprep.subr.mxu0 0.0
  %3539 = vmatpush1.msra.mxu0 %v1397
  %3540 = vmatprep.subr.mxu0 0.0
  %3541 = vmatpush1.msra.mxu0 %v1398
  %3542 = vmatprep.subr.mxu0 0.0
  %3543 = vmatpush1.msra.mxu0 %v1399
  %3544 = vmatprep.subr.mxu0 0.0
  %3545 = vmatpush1.msra.mxu0 %v1400
  %3546 = vmatprep.subr.mxu0 0.0
  %3547 = vmatpush1.msra.mxu0 %v1401
  %3548 = vmatprep.subr.mxu0 0.0
  %3549 = vmatpush1.msra.mxu0 %v1402
  %3550 = vmatprep.subr.mxu0 0.0
  %3551 = vmatpush1.msra.mxu0 %v1403
  %3552 = vmatprep.subr.mxu0 0.0
  %3553 = vmatpush1.msra.mxu0 %v1404
  %3554 = vmatprep.subr.mxu0 0.0
  %3555 = vmatpush1.msra.mxu0 %v1405
  %3556 = vmatprep.subr.mxu0 0.0
  %3557 = vmatpush1.msra.mxu0 %v1406
  %3558 = vmatprep.subr.mxu0 0.0
  %3559 = vmatpush1.msra.mxu0 %v1407
  %3560 = vmatprep.subr.mxu0 0.0
  %3561 = vmatpush1.msra.mxu0 %v1408
  %3562 = vmatprep.subr.mxu0 0.0
  %3563 = vmatpush1.msra.mxu0 %v1409
  %3564 = vmatprep.subr.mxu0 0.0
  %3565 = vmatpush1.msra.mxu0 %v1410
  %3566 = vmatprep.subr.mxu0 0.0
  %3567 = vmatpush1.msra.mxu0 %v1411
  %3568 = vmatprep.subr.mxu0 0.0
  %3569 = vmatpush1.msra.mxu0 %v1412
  %3570 = vmatprep.subr.mxu0 0.0
  %3571 = vmatpush1.msra.mxu0 %v1413
  %3572 = vmatprep.subr.mxu0 0.0
  %3573 = vmatpush1.msra.mxu0 %v1414
  %3574 = vmatprep.subr.mxu0 0.0
  %3575 = vmatpush1.msra.mxu0 %v1415
  %3576 = vmatprep.subr.mxu0 0.0
  %3577 = vmatpush1.msra.mxu0 %v1416
  %3578 = vmatprep.subr.mxu0 0.0
  %3579 = vmatpush1.msra.mxu0 %v1417
  %3580 = vmatprep.subr.mxu0 0.0
  %3581 = vmatpush1.msra.mxu0 %v1418
  %3582 = vmatprep.subr.mxu0 0.0
  %3583 = vmatpush1.msra.mxu0 %v1419
  %3584 = vmatprep.mubr.f32.mxu0 %v3250
  %3585 = vmatmul.mubr.f32.gmra.mrb[0].mxu0 %v3249
  %v3586 = vpop.f32.mrb[0].mxu0
  %v3587 = vadd.f32 %v3442, %v3586
  %v3588 = vpop.f32.mrb[0].mxu0
  %3589 = vmatprep.mubr.f32.mxu0 %v3255
  %3590 = vmatmul.mubr.f32.gmra.mrb[0].mxu0 %v3254
  %v3591 = vpop.f32.mrb[0].mxu0
  %v3592 = vadd.f32 %v3447, %v3591
  %v3593 = vpop.f32.mrb[0].mxu0
  %3594 = vmatprep.mubr.f32.mxu0 %v3260
  %3595 = vmatmul.mubr.f32.gmra.mrb[0].mxu0 %v3259
  %v3596 = vpop.f32.mrb[0].mxu0
  %v3597 = vadd.f32 %v3452, %v3596
  %v3598 = vpop.f32.mrb[0].mxu0
  %3599 = vmatprep.mubr.f32.mxu0 %v3265
  %3600 = vmatmul.mubr.f32.gmra.mrb[0].mxu0 %v3264
  %v3601 = vpop.f32.mrb[0].mxu0
  %v3602 = vadd.f32 %v3457, %v3601
  %v3603 = vpop.f32.mrb[0].mxu0
  %3604 = vmatprep.mubr.f32.mxu0 %v3270
  %3605 = vmatmul.mubr.f32.gmra.mrb[0].mxu0 %v3269
  %v3606 = vpop.f32.mrb[0].mxu0
  %v3607 = vadd.f32 %v3462, %v3606
  %v3608 = vpop.f32.mrb[0].mxu0
  %3609 = vmatprep.mubr.f32.mxu0 %v3275
  %3610 = vmatmul.mubr.f32.gmra.mrb[0].mxu0 %v3274
  %v3611 = vpop.f32.mrb[0].mxu0
  %v3612 = vadd.f32 %v3467, %v3611
  %v3613 = vpop.f32.mrb[0].mxu0
  %3614 = vmatprep.mubr.f32.mxu0 %v3280
  %3615 = vmatmul.mubr.f32.gmra.mrb[0].mxu0 %v3279
  %v3616 = vpop.f32.mrb[0].mxu0
  %v3617 = vadd.f32 %v3472, %v3616
  %v3618 = vpop.f32.mrb[0].mxu0
  %3619 = vmatprep.mubr.f32.mxu0 %v3285
  %3620 = vmatmul.mubr.f32.gmra.mrb[0].mxu0 %v3284
  %v3621 = vpop.f32.mrb[0].mxu0
  %v3622 = vadd.f32 %v3477, %v3621
  %v3623 = vpop.f32.mrb[0].mxu0
  %3624 = vmatprep.mubr.f32.mxu0 %v3290
  %3625 = vmatmul.mubr.f32.gmra.mrb[0].mxu0 %v3289
  %v3626 = vpop.f32.mrb[0].mxu0
  %v3627 = vadd.f32 %v3482, %v3626
  %v3628 = vpop.f32.mrb[0].mxu0
  %3629 = vmatprep.mubr.f32.mxu0 %v3295
  %3630 = vmatmul.mubr.f32.gmra.mrb[0].mxu0 %v3294
  %v3631 = vpop.f32.mrb[0].mxu0
  %v3632 = vadd.f32 %v3487, %v3631
  %v3633 = vpop.f32.mrb[0].mxu0
  %3634 = vmatprep.mubr.f32.mxu0 %v3300
  %3635 = vmatmul.mubr.f32.gmra.mrb[0].mxu0 %v3299
  %v3636 = vpop.f32.mrb[0].mxu0
  %v3637 = vadd.f32 %v3492, %v3636
  %v3638 = vpop.f32.mrb[0].mxu0
  %3639 = vmatprep.mubr.f32.mxu0 %v3305
  %3640 = vmatmul.mubr.f32.gmra.mrb[0].mxu0 %v3304
  %v3641 = vpop.f32.mrb[0].mxu0
  %v3642 = vadd.f32 %v3497, %v3641
  %v3643 = vpop.f32.mrb[0].mxu0
  %3644 = vmatprep.mubr.f32.mxu0 %v3310
  %3645 = vmatmul.mubr.f32.gmra.mrb[0].mxu0 %v3309
  %v3646 = vpop.f32.mrb[0].mxu0
  %v3647 = vadd.f32 %v3502, %v3646
  %v3648 = vpop.f32.mrb[0].mxu0
  %3649 = vmatprep.mubr.f32.mxu0 %v3315
  %3650 = vmatmul.mubr.f32.gmra.mrb[0].mxu0 %v3314
  %v3651 = vpop.f32.mrb[0].mxu0
  %v3652 = vadd.f32 %v3507, %v3651
  %v3653 = vpop.f32.mrb[0].mxu0
  %3654 = vmatprep.mubr.f32.mxu0 %v3320
  %3655 = vmatmul.mubr.f32.gmra.mrb[0].mxu0 %v3319
  %v3656 = vpop.f32.mrb[0].mxu0
  %v3657 = vadd.f32 %v3512, %v3656
  %v3658 = vpop.f32.mrb[0].mxu0
  %3659 = vmatprep.mubr.f32.mxu0 %v3325
  %3660 = vmatmul.mubr.f32.gmra.mrb[0].mxu0 %v3324
  %v3661 = vpop.f32.mrb[0].mxu0
  %v3662 = vadd.f32 %v3517, %v3661
  %v3663 = vpop.f32.mrb[0].mxu0
  %3664 = vdwg.mxu0
  %3665 = vmatprep.subr.mxu0 0.0
  %3666 = vmatpush1.msra.mxu0 %v1420
  %3667 = vmatprep.subr.mxu0 0.0
  %3668 = vmatpush1.msra.mxu0 %v1421
  %3669 = vmatprep.subr.mxu0 0.0
  %3670 = vmatpush1.msra.mxu0 %v1422
  %3671 = vmatprep.subr.mxu0 0.0
  %3672 = vmatpush1.msra.mxu0 %v1423
  %3673 = vmatprep.subr.mxu0 0.0
  %3674 = vmatpush1.msra.mxu0 %v1424
  %3675 = vmatprep.subr.mxu0 0.0
  %3676 = vmatpush1.msra.mxu0 %v1425
  %3677 = vmatprep.subr.mxu0 0.0
  %3678 = vmatpush1.msra.mxu0 %v1426
  %3679 = vmatprep.subr.mxu0 0.0
  %3680 = vmatpush1.msra.mxu0 %v1427
  %3681 = vmatprep.subr.mxu0 0.0
  %3682 = vmatpush1.msra.mxu0 0.0
  %3683 = vmatprep.subr.mxu0 0.0
  %3684 = vmatpush1.msra.mxu0 0.0
  %3685 = vmatprep.subr.mxu0 0.0
  %3686 = vmatpush1.msra.mxu0 0.0
  %3687 = vmatprep.subr.mxu0 0.0
  %3688 = vmatpush1.msra.mxu0 0.0
  %3689 = vmatprep.subr.mxu0 0.0
  %3690 = vmatpush1.msra.mxu0 0.0
  %3691 = vmatprep.subr.mxu0 0.0
  %3692 = vmatpush1.msra.mxu0 0.0
  %3693 = vmatprep.subr.mxu0 0.0
  %3694 = vmatpush1.msra.mxu0 0.0
  %3695 = vmatprep.subr.mxu0 0.0
  %3696 = vmatpush1.msra.mxu0 0.0
  %3697 = vmatprep.subr.mxu0 0.0
  %3698 = vmatpush1.msra.mxu0 0.0
  %3699 = vmatprep.subr.mxu0 0.0
  %3700 = vmatpush1.msra.mxu0 0.0
  %3701 = vmatprep.subr.mxu0 0.0
  %3702 = vmatpush1.msra.mxu0 0.0
  %3703 = vmatprep.subr.mxu0 0.0
  %3704 = vmatpush1.msra.mxu0 0.0
  %3705 = vmatprep.subr.mxu0 0.0
  %3706 = vmatpush1.msra.mxu0 0.0
  %3707 = vmatprep.subr.mxu0 0.0
  %3708 = vmatpush1.msra.mxu0 0.0
  %3709 = vmatprep.subr.mxu0 0.0
  %3710 = vmatpush1.msra.mxu0 0.0
  %3711 = vmatprep.subr.mxu0 0.0
  %3712 = vmatpush1.msra.mxu0 0.0
  %3713 = vmatprep.subr.mxu0 0.0
  %3714 = vmatpush1.msra.mxu0 0.0
  %3715 = vmatprep.subr.mxu0 0.0
  %3716 = vmatpush1.msra.mxu0 0.0
  %3717 = vmatprep.subr.mxu0 0.0
  %3718 = vmatpush1.msra.mxu0 0.0
  %3719 = vmatprep.subr.mxu0 0.0
  %3720 = vmatpush1.msra.mxu0 0.0
  %3721 = vmatprep.subr.mxu0 0.0
  %3722 = vmatpush1.msra.mxu0 0.0
  %3723 = vmatprep.subr.mxu0 0.0
  %3724 = vmatpush1.msra.mxu0 0.0
  %3725 = vmatprep.subr.mxu0 0.0
  %3726 = vmatpush1.msra.mxu0 0.0
  %3727 = vmatprep.subr.mxu0 0.0
  %3728 = vmatpush1.msra.mxu0 0.0
  %3729 = vmatprep.mubr.f32.mxu0 0.0
  %3730 = vmatmul.mubr.f32.gmra.mrb[0].mxu0 %v3328
  %v3731 = vpop.f32.mrb[0].mxu0
  %v3732 = vadd.f32 %v3587, %v3731
  %v3733 = vpop.f32.mrb[0].mxu0
  %3734 = vmatprep.mubr.f32.mxu0 0.0
  %3735 = vmatmul.mubr.f32.gmra.mrb[0].mxu0 %v3331
  %v3736 = vpop.f32.mrb[0].mxu0
  %v3737 = vadd.f32 %v3592, %v3736
  %v3738 = vpop.f32.mrb[0].mxu0
  %3739 = vmatprep.mubr.f32.mxu0 0.0
  %3740 = vmatmul.mubr.f32.gmra.mrb[0].mxu0 %v3334
  %v3741 = vpop.f32.mrb[0].mxu0
  %v3742 = vadd.f32 %v3597, %v3741
  %v3743 = vpop.f32.mrb[0].mxu0
  %3744 = vmatprep.mubr.f32.mxu0 0.0
  %3745 = vmatmul.mubr.f32.gmra.mrb[0].mxu0 %v3337
  %v3746 = vpop.f32.mrb[0].mxu0
  %v3747 = vadd.f32 %v3602, %v3746
  %v3748 = vpop.f32.mrb[0].mxu0
  %3749 = vmatprep.mubr.f32.mxu0 0.0
  %3750 = vmatmul.mubr.f32.gmra.mrb[0].mxu0 %v3340
  %v3751 = vpop.f32.mrb[0].mxu0
  %v3752 = vadd.f32 %v3607, %v3751
  %v3753 = vpop.f32.mrb[0].mxu0
  %3754 = vmatprep.mubr.f32.mxu0 0.0
  %3755 = vmatmul.mubr.f32.gmra.mrb[0].mxu0 %v3343
  %v3756 = vpop.f32.mrb[0].mxu0
  %v3757 = vadd.f32 %v3612, %v3756
  %v3758 = vpop.f32.mrb[0].mxu0
  %3759 = vmatprep.mubr.f32.mxu0 0.0
  %3760 = vmatmul.mubr.f32.gmra.mrb[0].mxu0 %v3346
  %v3761 = vpop.f32.mrb[0].mxu0
  %v3762 = vadd.f32 %v3617, %v3761
  %v3763 = vpop.f32.mrb[0].mxu0
  %3764 = vmatprep.mubr.f32.mxu0 0.0
  %3765 = vmatmul.mubr.f32.gmra.mrb[0].mxu0 %v3349
  %v3766 = vpop.f32.mrb[0].mxu0
  %v3767 = vadd.f32 %v3622, %v3766
  %v3768 = vpop.f32.mrb[0].mxu0
  %3769 = vmatprep.mubr.f32.mxu0 0.0
  %3770 = vmatmul.mubr.f32.gmra.mrb[0].mxu0 %v3352
  %v3771 = vpop.f32.mrb[0].mxu0
  %v3772 = vadd.f32 %v3627, %v3771
  %v3773 = vpop.f32.mrb[0].mxu0
  %3774 = vmatprep.mubr.f32.mxu0 0.0
  %3775 = vmatmul.mubr.f32.gmra.mrb[0].mxu0 %v3355
  %v3776 = vpop.f32.mrb[0].mxu0
  %v3777 = vadd.f32 %v3632, %v3776
  %v3778 = vpop.f32.mrb[0].mxu0
  %3779 = vmatprep.mubr.f32.mxu0 0.0
  %3780 = vmatmul.mubr.f32.gmra.mrb[0].mxu0 %v3358
  %v3781 = vpop.f32.mrb[0].mxu0
  %v3782 = vadd.f32 %v3637, %v3781
  %v3783 = vpop.f32.mrb[0].mxu0
  %3784 = vmatprep.mubr.f32.mxu0 0.0
  %3785 = vmatmul.mubr.f32.gmra.mrb[0].mxu0 %v3361
  %v3786 = vpop.f32.mrb[0].mxu0
  %v3787 = vadd.f32 %v3642, %v3786
  %v3788 = vpop.f32.mrb[0].mxu0
  %3789 = vmatprep.mubr.f32.mxu0 0.0
  %3790 = vmatmul.mubr.f32.gmra.mrb[0].mxu0 %v3364
  %v3791 = vpop.f32.mrb[0].mxu0
  %v3792 = vadd.f32 %v3647, %v3791
  %v3793 = vpop.f32.mrb[0].mxu0
  %3794 = vmatprep.mubr.f32.mxu0 0.0
  %3795 = vmatmul.mubr.f32.gmra.mrb[0].mxu0 %v3367
  %v3796 = vpop.f32.mrb[0].mxu0
  %v3797 = vadd.f32 %v3652, %v3796
  %v3798 = vpop.f32.mrb[0].mxu0
  %3799 = vmatprep.mubr.f32.mxu0 0.0
  %3800 = vmatmul.mubr.f32.gmra.mrb[0].mxu0 %v3370
  %v3801 = vpop.f32.mrb[0].mxu0
  %v3802 = vadd.f32 %v3657, %v3801
  %v3803 = vpop.f32.mrb[0].mxu0
  %3804 = vmatprep.mubr.f32.mxu0 0.0
  %3805 = vmatmul.mubr.f32.gmra.mrb[0].mxu0 %v3373
  %v3806 = vpop.f32.mrb[0].mxu0
  %v3807 = vadd.f32 %v3662, %v3806
  %v3808 = vpop.f32.mrb[0].mxu0
  %3809 = vdwg.mxu0
  %vm3810 = vcmp.ge.f32.partialorder %v3732, 0.0
  %vm3811 = vcmp.ge.f32.partialorder %v3737, 0.0
  %vm3812 = vcmp.ge.f32.partialorder %v3742, 0.0
  %vm3813 = vcmp.ge.f32.partialorder %v3747, 0.0
  %vm3814 = vcmp.ge.f32.partialorder %v3752, 0.0
  %vm3815 = vcmp.ge.f32.partialorder %v3757, 0.0
  %vm3816 = vcmp.ge.f32.partialorder %v3762, 0.0
  %vm3817 = vcmp.ge.f32.partialorder %v3767, 0.0
  %vm3818 = vcmp.ge.f32.partialorder %v3772, 0.0
  %vm3819 = vcmp.ge.f32.partialorder %v3777, 0.0
  %vm3820 = vcmp.ge.f32.partialorder %v3782, 0.0
  %vm3821 = vcmp.ge.f32.partialorder %v3787, 0.0
  %vm3822 = vcmp.ge.f32.partialorder %v3792, 0.0
  %vm3823 = vcmp.ge.f32.partialorder %v3797, 0.0
  %vm3824 = vcmp.ge.f32.partialorder %v3802, 0.0
  %vm3825 = vcmp.ge.f32.partialorder %v3807, 0.0
  %v3826 = vmul.f32 %v3732, 0.01
  %v3827 = vmul.f32 %v3737, 0.01
  %v3828 = vmul.f32 %v3742, 0.01
  %v3829 = vmul.f32 %v3747, 0.01
  %v3830 = vmul.f32 %v3752, 0.01
  %v3831 = vmul.f32 %v3757, 0.01
  %v3832 = vmul.f32 %v3762, 0.01
  %v3833 = vmul.f32 %v3767, 0.01
  %v3834 = vmul.f32 %v3772, 0.01
  %v3835 = vmul.f32 %v3777, 0.01
  %v3836 = vmul.f32 %v3782, 0.01
  %v3837 = vmul.f32 %v3787, 0.01
  %v3838 = vmul.f32 %v3792, 0.01
  %v3839 = vmul.f32 %v3797, 0.01
  %v3840 = vmul.f32 %v3802, 0.01
  %v3841 = vmul.f32 %v3807, 0.01
  %v3842 = vsel %vm3810, %v3732, %v3826
  %v3843 = vsel %vm3811, %v3737, %v3827
  %v3844 = vsel %vm3812, %v3742, %v3828
  %v3845 = vsel %vm3813, %v3747, %v3829
  %v3846 = vsel %vm3814, %v3752, %v3830
  %v3847 = vsel %vm3815, %v3757, %v3831
  %v3848 = vsel %vm3816, %v3762, %v3832
  %v3849 = vsel %vm3817, %v3767, %v3833
  %v3850 = vsel %vm3818, %v3772, %v3834
  %v3851 = vsel %vm3819, %v3777, %v3835
  %v3852 = vsel %vm3820, %v3782, %v3836
  %v3853 = vsel %vm3821, %v3787, %v3837
  %v3854 = vsel %vm3822, %v3792, %v3838
  %v3855 = vsel %vm3823, %v3797, %v3839
  %v3856 = vsel %vm3824, %v3802, %v3840
  %v3857 = vsel %vm3825, %v3807, %v3841
  %v3858 = vadd.f32 %v1266, %v3842
  %v3859 = vadd.f32 %v1267, %v3843
  %v3860 = vadd.f32 %v1268, %v3844
  %v3861 = vadd.f32 %v1269, %v3845
  %v3862 = vadd.f32 %v1270, %v3846
  %v3863 = vadd.f32 %v1271, %v3847
  %v3864 = vadd.f32 %v1272, %v3848
  %v3865 = vadd.f32 %v1273, %v3849
  %v3866 = vadd.f32 %v1274, %v3850
  %v3867 = vadd.f32 %v1275, %v3851
  %v3868 = vadd.f32 %v1276, %v3852
  %v3869 = vadd.f32 %v1277, %v3853
  %v3870 = vadd.f32 %v1278, %v3854
  %v3871 = vadd.f32 %v1279, %v3855
  %v3872 = vadd.f32 %v1280, %v3856
  %v3873 = vadd.f32 %v1281, %v3857
  %s3874 = scalar_lea.vmem %s3, 1152
  %v3875 = vld [vmem:[%s3874] sm:$0xff]
  %v3876 = vld [vmem:[%s3874 + $0x8] sm:$0xff]
  %v3877 = vld [vmem:[%s3874 + $0x10] sm:$0xff]
  %v3878 = vld [vmem:[%s3874 + $0x18] sm:$0xff]
  %v3879 = vld [vmem:[%s3874 + $0x20] sm:$0xff]
  %v3880 = vld [vmem:[%s3874 + $0x28] sm:$0xff]
  %v3881 = vld [vmem:[%s3874 + $0x30] sm:$0xff]
  %v3882 = vld [vmem:[%s3874 + $0x38] sm:$0xff]
  %v3883 = vld [vmem:[%s3874 + $0x40] sm:$0xff]
  %v3884 = vld [vmem:[%s3874 + $0x48] sm:$0xff]
  %v3885 = vld [vmem:[%s3874 + $0x50] sm:$0xff]
  %v3886 = vld [vmem:[%s3874 + $0x58] sm:$0xff]
  %v3887 = vld [vmem:[%s3874 + $0x60] sm:$0xff]
  %v3888 = vld [vmem:[%s3874 + $0x68] sm:$0xff]
  %v3889 = vld [vmem:[%s3874 + $0x70] sm:$0xff]
  %v3890 = vld [vmem:[%s3874 + $0x78] sm:$0xff]
  %v3891 = vld [vmem:[%s3874 + $0x80] sm:$0xff]
  %v3892 = vld [vmem:[%s3874 + $0x88] sm:$0xff]
  %v3893 = vld [vmem:[%s3874 + $0x90] sm:$0xff]
  %v3894 = vld [vmem:[%s3874 + $0x98] sm:$0xff]
  %v3895 = vld [vmem:[%s3874 + $0xa0] sm:$0xff]
  %v3896 = vld [vmem:[%s3874 + $0xa8] sm:$0xff]
  %v3897 = vld [vmem:[%s3874 + $0xb0] sm:$0xff]
  %v3898 = vld [vmem:[%s3874 + $0xb8] sm:$0xff]
  %v3899 = vld [vmem:[%s3874 + $0xc0] sm:$0xff]
  %v3900 = vld [vmem:[%s3874 + $0xc8] sm:$0xff]
  %v3901 = vld [vmem:[%s3874 + $0xd0] sm:$0xff]
  %v3902 = vld [vmem:[%s3874 + $0xd8] sm:$0xff]
  %v3903 = vld [vmem:[%s3874 + $0xe0] sm:$0xff]
  %v3904 = vld [vmem:[%s3874 + $0xe8] sm:$0xff]
  %v3905 = vld [vmem:[%s3874 + $0xf0] sm:$0xff]
  %v3906 = vld [vmem:[%s3874 + $0xf8] sm:$0xff]
  %v3907 = vld [vmem:[%s3874 + $0x100] sm:$0xff]
  %v3908 = vld [vmem:[%s3874 + $0x108] sm:$0xff]
  %v3909 = vld [vmem:[%s3874 + $0x110] sm:$0xff]
  %v3910 = vld [vmem:[%s3874 + $0x118] sm:$0xff]
  %v3911 = vld [vmem:[%s3874 + $0x120] sm:$0xff]
  %v3912 = vld [vmem:[%s3874 + $0x128] sm:$0xff]
  %v3913 = vld [vmem:[%s3874 + $0x130] sm:$0xff]
  %v3914 = vld [vmem:[%s3874 + $0x138] sm:$0xff]
  %v3915 = vld [vmem:[%s3874 + $0x140] sm:$0xff]
  %v3916 = vld [vmem:[%s3874 + $0x148] sm:$0xff]
  %v3917 = vld [vmem:[%s3874 + $0x150] sm:$0xff]
  %v3918 = vld [vmem:[%s3874 + $0x158] sm:$0xff]
  %v3919 = vld [vmem:[%s3874 + $0x160] sm:$0xff]
  %v3920 = vld [vmem:[%s3874 + $0x168] sm:$0xff]
  %v3921 = vld [vmem:[%s3874 + $0x170] sm:$0xff]
  %v3922 = vld [vmem:[%s3874 + $0x178] sm:$0xff]
  %v3923 = vld [vmem:[%s3874 + $0x180] sm:$0xff]
  %v3924 = vld [vmem:[%s3874 + $0x188] sm:$0xff]
  %v3925 = vld [vmem:[%s3874 + $0x190] sm:$0xff]
  %v3926 = vld [vmem:[%s3874 + $0x198] sm:$0xff]
  %v3927 = vld [vmem:[%s3874 + $0x1a0] sm:$0xff]
  %v3928 = vld [vmem:[%s3874 + $0x1a8] sm:$0xff]
  %v3929 = vld [vmem:[%s3874 + $0x1b0] sm:$0xff]
  %v3930 = vld [vmem:[%s3874 + $0x1b8] sm:$0xff]
  %v3931 = vld [vmem:[%s3874 + $0x1c0] sm:$0xff]
  %v3932 = vld [vmem:[%s3874 + $0x1c8] sm:$0xff]
  %v3933 = vld [vmem:[%s3874 + $0x1d0] sm:$0xff]
  %v3934 = vld [vmem:[%s3874 + $0x1d8] sm:$0xff]
  %v3935 = vld [vmem:[%s3874 + $0x1e0] sm:$0xff]
  %v3936 = vld [vmem:[%s3874 + $0x1e8] sm:$0xff]
  %v3937 = vld [vmem:[%s3874 + $0x1f0] sm:$0xff]
  %v3938 = vld [vmem:[%s3874 + $0x1f8] sm:$0xff]
  %v3939 = vld [vmem:[%s3874 + $0x200] sm:$0xff]
  %v3940 = vld [vmem:[%s3874 + $0x208] sm:$0xff]
  %v3941 = vld [vmem:[%s3874 + $0x210] sm:$0xff]
  %v3942 = vld [vmem:[%s3874 + $0x218] sm:$0xff]
  %v3943 = vld [vmem:[%s3874 + $0x220] sm:$0xff]
  %v3944 = vld [vmem:[%s3874 + $0x228] sm:$0xff]
  %v3945 = vld [vmem:[%s3874 + $0x230] sm:$0xff]
  %v3946 = vld [vmem:[%s3874 + $0x238] sm:$0xff]
  %v3947 = vld [vmem:[%s1 + $0x3] ss:$0 sm:$0xff]
  %3948 = vst [vmem:[#allocation3] sm:$0x1f] 0.0
  %3949 = vst [vmem:[#allocation3 + $0x10] sm:$0x1f] 0.0
  %3950 = vst [vmem:[#allocation3 + $0x120] sm:$0x1f] 0.0
  %3951 = vst [vmem:[#allocation3 + $0x130] sm:$0x1f] 0.0
  %3952 = vst [vmem:[#allocation3] sm:$0x1] 0.0
  %3953 = vst [vmem:[#allocation3 + $0x10] sm:$0x1] 0.0
  %3954 = vst [vmem:[#allocation3 + $0x20] sm:$0x1] 0.0
  %3955 = vst [vmem:[#allocation3 + $0x30] sm:$0x1] 0.0
  %3956 = vst [vmem:[#allocation3 + $0x40] sm:$0x1] 0.0
  %3957 = vst [vmem:[#allocation3 + $0x50] sm:$0x1] 0.0
  %3958 = vst [vmem:[#allocation3 + $0x60] sm:$0x1] 0.0
  %3959 = vst [vmem:[#allocation3 + $0x70] sm:$0x1] 0.0
  %3960 = vst [vmem:[#allocation3 + $0x80] sm:$0x1] 0.0
  %3961 = vst [vmem:[#allocation3 + $0x90] sm:$0x1] 0.0
  %3962 = vst [vmem:[#allocation3 + $0x120] sm:$0x1] 0.0
  %3963 = vst [vmem:[#allocation3 + $0x130] sm:$0x1] 0.0
  %3964 = vst [vmem:[#allocation3 + $0x140] sm:$0x1] 0.0
  %3965 = vst [vmem:[#allocation3 + $0x150] sm:$0x1] 0.0
  %3966 = vst [vmem:[#allocation3 + $0x160] sm:$0x1] 0.0
  %3967 = vst [vmem:[#allocation3 + $0x170] sm:$0x1] 0.0
  %3968 = vst [vmem:[#allocation3 + $0x180] sm:$0x1] 0.0
  %3969 = vst [vmem:[#allocation3 + $0x190] sm:$0x1] 0.0
  %3970 = vst [vmem:[#allocation3 + $0x1a0] sm:$0x1] 0.0
  %3971 = vst [vmem:[#allocation3 + $0x1b0] sm:$0x1] 0.0
  %v3988 = vcombine.high %v3858, %v3858
  %v3990 = vunpack.c.l.s4 1983009808
  %v3991 = vunpack.c.0.s8 %v3990
  %v3992 = vlaneseq
  %v3993 = vshrl.u32 %v3992, 7
  %v3994 = vsub.s32 %v3991, %v3993
  %v3995 = vrot.slane %v3858, %v3994
  %v3997 = vunpack.c.l.s4 1983009808
  %v3998 = vunpack.c.0.s8 %v3997
  %v3999 = vlaneseq
  %v4000 = vshrl.u32 %v3999, 7
  %v4001 = vsub.s32 %v3998, %v4000
  %v4002 = vrot.slane %v3988, %v4001
  %v4003 = vcombine.high %v3995, %v3995
  %v4004 = vcombine.high %v4002, %v4002
  %v4005 = vcombine.high %v3859, %v3859
  %v4007 = vunpack.c.l.s4 1983009808
  %v4008 = vunpack.c.0.s8 %v4007
  %v4009 = vlaneseq
  %v4010 = vshrl.u32 %v4009, 7
  %v4011 = vsub.s32 %v4008, %v4010
  %v4012 = vrot.slane %v3859, %v4011
  %v4014 = vunpack.c.l.s4 1983009808
  %v4015 = vunpack.c.0.s8 %v4014
  %v4016 = vlaneseq
  %v4017 = vshrl.u32 %v4016, 7
  %v4018 = vsub.s32 %v4015, %v4017
  %v4019 = vrot.slane %v4005, %v4018
  %v4020 = vcombine.high %v4012, %v4012
  %v4021 = vcombine.high %v4019, %v4019
  %v4022 = vcombine.high %v3860, %v3860
  %v4024 = vunpack.c.l.s4 1983009808
  %v4025 = vunpack.c.0.s8 %v4024
  %v4026 = vlaneseq
  %v4027 = vshrl.u32 %v4026, 7
  %v4028 = vsub.s32 %v4025, %v4027
  %v4029 = vrot.slane %v3860, %v4028
  %v4031 = vunpack.c.l.s4 1983009808
  %v4032 = vunpack.c.0.s8 %v4031
  %v4033 = vlaneseq
  %v4034 = vshrl.u32 %v4033, 7
  %v4035 = vsub.s32 %v4032, %v4034
  %v4036 = vrot.slane %v4022, %v4035
  %v4037 = vcombine.high %v4029, %v4029
  %v4038 = vcombine.high %v4036, %v4036
  %v4039 = vcombine.high %v3861, %v3861
  %v4041 = vunpack.c.l.s4 1983009808
  %v4042 = vunpack.c.0.s8 %v4041
  %v4043 = vlaneseq
  %v4044 = vshrl.u32 %v4043, 7
  %v4045 = vsub.s32 %v4042, %v4044
  %v4046 = vrot.slane %v3861, %v4045
  %v4048 = vunpack.c.l.s4 1983009808
  %v4049 = vunpack.c.0.s8 %v4048
  %v4050 = vlaneseq
  %v4051 = vshrl.u32 %v4050, 7
  %v4052 = vsub.s32 %v4049, %v4051
  %v4053 = vrot.slane %v4039, %v4052
  %v4054 = vcombine.high %v4046, %v4046
  %v4055 = vcombine.high %v4053, %v4053
  %v4056 = vcombine.high %v3862, %v3862
  %v4058 = vunpack.c.l.s4 1983009808
  %v4059 = vunpack.c.0.s8 %v4058
  %v4060 = vlaneseq
  %v4061 = vshrl.u32 %v4060, 7
  %v4062 = vsub.s32 %v4059, %v4061
  %v4063 = vrot.slane %v3862, %v4062
  %v4065 = vunpack.c.l.s4 1983009808
  %v4066 = vunpack.c.0.s8 %v4065
  %v4067 = vlaneseq
  %v4068 = vshrl.u32 %v4067, 7
  %v4069 = vsub.s32 %v4066, %v4068
  %v4070 = vrot.slane %v4056, %v4069
  %v4071 = vcombine.high %v4063, %v4063
  %v4072 = vcombine.high %v4070, %v4070
  %v4073 = vcombine.high %v3863, %v3863
  %v4075 = vunpack.c.l.s4 1983009808
  %v4076 = vunpack.c.0.s8 %v4075
  %v4077 = vlaneseq
  %v4078 = vshrl.u32 %v4077, 7
  %v4079 = vsub.s32 %v4076, %v4078
  %v4080 = vrot.slane %v3863, %v4079
  %v4082 = vunpack.c.l.s4 1983009808
  %v4083 = vunpack.c.0.s8 %v4082
  %v4084 = vlaneseq
  %v4085 = vshrl.u32 %v4084, 7
  %v4086 = vsub.s32 %v4083, %v4085
  %v4087 = vrot.slane %v4073, %v4086
  %v4088 = vcombine.high %v4080, %v4080
  %v4089 = vcombine.high %v4087, %v4087
  %v4090 = vcombine.high %v3864, %v3864
  %v4092 = vunpack.c.l.s4 1983009808
  %v4093 = vunpack.c.0.s8 %v4092
  %v4094 = vlaneseq
  %v4095 = vshrl.u32 %v4094, 7
  %v4096 = vsub.s32 %v4093, %v4095
  %v4097 = vrot.slane %v3864, %v4096
  %v4099 = vunpack.c.l.s4 1983009808
  %v4100 = vunpack.c.0.s8 %v4099
  %v4101 = vlaneseq
  %v4102 = vshrl.u32 %v4101, 7
  %v4103 = vsub.s32 %v4100, %v4102
  %v4104 = vrot.slane %v4090, %v4103
  %v4105 = vcombine.high %v4097, %v4097
  %v4106 = vcombine.high %v4104, %v4104
  %v4107 = vcombine.high %v3865, %v3865
  %v4109 = vunpack.c.l.s4 1983009808
  %v4110 = vunpack.c.0.s8 %v4109
  %v4111 = vlaneseq
  %v4112 = vshrl.u32 %v4111, 7
  %v4113 = vsub.s32 %v4110, %v4112
  %v4114 = vrot.slane %v3865, %v4113
  %v4116 = vunpack.c.l.s4 1983009808
  %v4117 = vunpack.c.0.s8 %v4116
  %v4118 = vlaneseq
  %v4119 = vshrl.u32 %v4118, 7
  %v4120 = vsub.s32 %v4117, %v4119
  %v4121 = vrot.slane %v4107, %v4120
  %v4122 = vcombine.high %v4114, %v4114
  %v4123 = vcombine.high %v4121, %v4121
  %v4124 = vcombine.high %v3866, %v3866
  %v4126 = vunpack.c.l.s4 1983009808
  %v4127 = vunpack.c.0.s8 %v4126
  %v4128 = vlaneseq
  %v4129 = vshrl.u32 %v4128, 7
  %v4130 = vsub.s32 %v4127, %v4129
  %v4131 = vrot.slane %v3866, %v4130
  %v4133 = vunpack.c.l.s4 1983009808
  %v4134 = vunpack.c.0.s8 %v4133
  %v4135 = vlaneseq
  %v4136 = vshrl.u32 %v4135, 7
  %v4137 = vsub.s32 %v4134, %v4136
  %v4138 = vrot.slane %v4124, %v4137
  %v4139 = vcombine.high %v4131, %v4131
  %v4140 = vcombine.high %v4138, %v4138
  %v4141 = vcombine.high %v3867, %v3867
  %v4143 = vunpack.c.l.s4 1983009808
  %v4144 = vunpack.c.0.s8 %v4143
  %v4145 = vlaneseq
  %v4146 = vshrl.u32 %v4145, 7
  %v4147 = vsub.s32 %v4144, %v4146
  %v4148 = vrot.slane %v3867, %v4147
  %v4150 = vunpack.c.l.s4 1983009808
  %v4151 = vunpack.c.0.s8 %v4150
  %v4152 = vlaneseq
  %v4153 = vshrl.u32 %v4152, 7
  %v4154 = vsub.s32 %v4151, %v4153
  %v4155 = vrot.slane %v4141, %v4154
  %v4156 = vcombine.high %v4148, %v4148
  %v4157 = vcombine.high %v4155, %v4155
  %v4158 = vcombine.high %v3868, %v3868
  %v4160 = vunpack.c.l.s4 1983009808
  %v4161 = vunpack.c.0.s8 %v4160
  %v4162 = vlaneseq
  %v4163 = vshrl.u32 %v4162, 7
  %v4164 = vsub.s32 %v4161, %v4163
  %v4165 = vrot.slane %v3868, %v4164
  %v4167 = vunpack.c.l.s4 1983009808
  %v4168 = vunpack.c.0.s8 %v4167
  %v4169 = vlaneseq
  %v4170 = vshrl.u32 %v4169, 7
  %v4171 = vsub.s32 %v4168, %v4170
  %v4172 = vrot.slane %v4158, %v4171
  %v4173 = vcombine.high %v4165, %v4165
  %v4174 = vcombine.high %v4172, %v4172
  %v4175 = vcombine.high %v3869, %v3869
  %v4177 = vunpack.c.l.s4 1983009808
  %v4178 = vunpack.c.0.s8 %v4177
  %v4179 = vlaneseq
  %v4180 = vshrl.u32 %v4179, 7
  %v4181 = vsub.s32 %v4178, %v4180
  %v4182 = vrot.slane %v3869, %v4181
  %v4184 = vunpack.c.l.s4 1983009808
  %v4185 = vunpack.c.0.s8 %v4184
  %v4186 = vlaneseq
  %v4187 = vshrl.u32 %v4186, 7
  %v4188 = vsub.s32 %v4185, %v4187
  %v4189 = vrot.slane %v4175, %v4188
  %v4190 = vcombine.high %v4182, %v4182
  %v4191 = vcombine.high %v4189, %v4189
  %v4192 = vcombine.high %v3870, %v3870
  %v4194 = vunpack.c.l.s4 1983009808
  %v4195 = vunpack.c.0.s8 %v4194
  %v4196 = vlaneseq
  %v4197 = vshrl.u32 %v4196, 7
  %v4198 = vsub.s32 %v4195, %v4197
  %v4199 = vrot.slane %v3870, %v4198
  %v4201 = vunpack.c.l.s4 1983009808
  %v4202 = vunpack.c.0.s8 %v4201
  %v4203 = vlaneseq
  %v4204 = vshrl.u32 %v4203, 7
  %v4205 = vsub.s32 %v4202, %v4204
  %v4206 = vrot.slane %v4192, %v4205
  %v4207 = vcombine.high %v4199, %v4199
  %v4208 = vcombine.high %v4206, %v4206
  %v4209 = vcombine.high %v3871, %v3871
  %v4211 = vunpack.c.l.s4 1983009808
  %v4212 = vunpack.c.0.s8 %v4211
  %v4213 = vlaneseq
  %v4214 = vshrl.u32 %v4213, 7
  %v4215 = vsub.s32 %v4212, %v4214
  %v4216 = vrot.slane %v3871, %v4215
  %v4218 = vunpack.c.l.s4 1983009808
  %v4219 = vunpack.c.0.s8 %v4218
  %v4220 = vlaneseq
  %v4221 = vshrl.u32 %v4220, 7
  %v4222 = vsub.s32 %v4219, %v4221
  %v4223 = vrot.slane %v4209, %v4222
  %v4224 = vcombine.high %v4216, %v4216
  %v4225 = vcombine.high %v4223, %v4223
  %v4226 = vcombine.high %v3872, %v3872
  %v4228 = vunpack.c.l.s4 1983009808
  %v4229 = vunpack.c.0.s8 %v4228
  %v4230 = vlaneseq
  %v4231 = vshrl.u32 %v4230, 7
  %v4232 = vsub.s32 %v4229, %v4231
  %v4233 = vrot.slane %v3872, %v4232
  %v4235 = vunpack.c.l.s4 1983009808
  %v4236 = vunpack.c.0.s8 %v4235
  %v4237 = vlaneseq
  %v4238 = vshrl.u32 %v4237, 7
  %v4239 = vsub.s32 %v4236, %v4238
  %v4240 = vrot.slane %v4226, %v4239
  %v4241 = vcombine.high %v4233, %v4233
  %v4242 = vcombine.high %v4240, %v4240
  %v4243 = vcombine.high %v3873, %v3873
  %v4245 = vunpack.c.l.s4 1983009808
  %v4246 = vunpack.c.0.s8 %v4245
  %v4247 = vlaneseq
  %v4248 = vshrl.u32 %v4247, 7
  %v4249 = vsub.s32 %v4246, %v4248
  %v4250 = vrot.slane %v3873, %v4249
  %v4252 = vunpack.c.l.s4 1983009808
  %v4253 = vunpack.c.0.s8 %v4252
  %v4254 = vlaneseq
  %v4255 = vshrl.u32 %v4254, 7
  %v4256 = vsub.s32 %v4253, %v4255
  %v4257 = vrot.slane %v4243, %v4256
  %v4258 = vcombine.high %v4250, %v4250
  %v4259 = vcombine.high %v4257, %v4257
  %v4260 = vlaneseq
  %v4261 = vshrl.u32 %v4260, 7
  %v4262 = vsub.s32 0, %v4261
  %v4263 = vrot.slane %v3995, %v4262
  %v4264 = vlaneseq
  %v4265 = vshrl.u32 %v4264, 7
  %v4266 = vsub.s32 0, %v4265
  %v4267 = vrot.slane %v4003, %v4266
  %v4268 = vlaneseq
  %v4269 = vshrl.u32 %v4268, 7
  %v4270 = vsub.s32 0, %v4269
  %v4271 = vrot.slane %v4002, %v4270
  %v4272 = vlaneseq
  %v4273 = vshrl.u32 %v4272, 7
  %v4274 = vsub.s32 0, %v4273
  %v4275 = vrot.slane %v4004, %v4274
  %v4276 = vlaneseq
  %v4277 = vshrl.u32 %v4276, 7
  %v4278 = vsub.s32 0, %v4277
  %v4279 = vrot.slane %v4029, %v4278
  %v4280 = vlaneseq
  %v4281 = vshrl.u32 %v4280, 7
  %v4282 = vsub.s32 0, %v4281
  %v4283 = vrot.slane %v4037, %v4282
  %v4284 = vlaneseq
  %v4285 = vshrl.u32 %v4284, 7
  %v4286 = vsub.s32 0, %v4285
  %v4287 = vrot.slane %v4036, %v4286
  %v4288 = vlaneseq
  %v4289 = vshrl.u32 %v4288, 7
  %v4290 = vsub.s32 0, %v4289
  %v4291 = vrot.slane %v4038, %v4290
  %v4292 = vlaneseq
  %v4293 = vshrl.u32 %v4292, 7
  %v4294 = vsub.s32 0, %v4293
  %v4295 = vrot.slane %v4063, %v4294
  %v4296 = vlaneseq
  %v4297 = vshrl.u32 %v4296, 7
  %v4298 = vsub.s32 0, %v4297
  %v4299 = vrot.slane %v4071, %v4298
  %v4300 = vlaneseq
  %v4301 = vshrl.u32 %v4300, 7
  %v4302 = vsub.s32 0, %v4301
  %v4303 = vrot.slane %v4070, %v4302
  %v4304 = vlaneseq
  %v4305 = vshrl.u32 %v4304, 7
  %v4306 = vsub.s32 0, %v4305
  %v4307 = vrot.slane %v4072, %v4306
  %v4308 = vlaneseq
  %v4309 = vshrl.u32 %v4308, 7
  %v4310 = vsub.s32 0, %v4309
  %v4311 = vrot.slane %v4097, %v4310
  %v4312 = vlaneseq
  %v4313 = vshrl.u32 %v4312, 7
  %v4314 = vsub.s32 0, %v4313
  %v4315 = vrot.slane %v4105, %v4314
  %v4316 = vlaneseq
  %v4317 = vshrl.u32 %v4316, 7
  %v4318 = vsub.s32 0, %v4317
  %v4319 = vrot.slane %v4104, %v4318
  %v4320 = vlaneseq
  %v4321 = vshrl.u32 %v4320, 7
  %v4322 = vsub.s32 0, %v4321
  %v4323 = vrot.slane %v4106, %v4322
  %v4324 = vlaneseq
  %v4325 = vshrl.u32 %v4324, 7
  %v4326 = vsub.s32 0, %v4325
  %v4327 = vrot.slane %v4131, %v4326
  %v4328 = vlaneseq
  %v4329 = vshrl.u32 %v4328, 7
  %v4330 = vsub.s32 0, %v4329
  %v4331 = vrot.slane %v4139, %v4330
  %v4332 = vlaneseq
  %v4333 = vshrl.u32 %v4332, 7
  %v4334 = vsub.s32 0, %v4333
  %v4335 = vrot.slane %v4138, %v4334
  %v4336 = vlaneseq
  %v4337 = vshrl.u32 %v4336, 7
  %v4338 = vsub.s32 0, %v4337
  %v4339 = vrot.slane %v4140, %v4338
  %v4340 = vlaneseq
  %v4341 = vshrl.u32 %v4340, 7
  %v4342 = vsub.s32 0, %v4341
  %v4343 = vrot.slane %v4165, %v4342
  %v4344 = vlaneseq
  %v4345 = vshrl.u32 %v4344, 7
  %v4346 = vsub.s32 0, %v4345
  %v4347 = vrot.slane %v4173, %v4346
  %v4348 = vlaneseq
  %v4349 = vshrl.u32 %v4348, 7
  %v4350 = vsub.s32 0, %v4349
  %v4351 = vrot.slane %v4172, %v4350
  %v4352 = vlaneseq
  %v4353 = vshrl.u32 %v4352, 7
  %v4354 = vsub.s32 0, %v4353
  %v4355 = vrot.slane %v4174, %v4354
  %v4356 = vlaneseq
  %v4357 = vshrl.u32 %v4356, 7
  %v4358 = vsub.s32 0, %v4357
  %v4359 = vrot.slane %v4199, %v4358
  %v4360 = vlaneseq
  %v4361 = vshrl.u32 %v4360, 7
  %v4362 = vsub.s32 0, %v4361
  %v4363 = vrot.slane %v4207, %v4362
  %v4364 = vlaneseq
  %v4365 = vshrl.u32 %v4364, 7
  %v4366 = vsub.s32 0, %v4365
  %v4367 = vrot.slane %v4206, %v4366
  %v4368 = vlaneseq
  %v4369 = vshrl.u32 %v4368, 7
  %v4370 = vsub.s32 0, %v4369
  %v4371 = vrot.slane %v4208, %v4370
  %v4372 = vlaneseq
  %v4373 = vshrl.u32 %v4372, 7
  %v4374 = vsub.s32 0, %v4373
  %v4375 = vrot.slane %v4233, %v4374
  %v4376 = vlaneseq
  %v4377 = vshrl.u32 %v4376, 7
  %v4378 = vsub.s32 0, %v4377
  %v4379 = vrot.slane %v4241, %v4378
  %v4380 = vlaneseq
  %v4381 = vshrl.u32 %v4380, 7
  %v4382 = vsub.s32 0, %v4381
  %v4383 = vrot.slane %v4240, %v4382
  %v4384 = vlaneseq
  %v4385 = vshrl.u32 %v4384, 7
  %v4386 = vsub.s32 0, %v4385
  %v4387 = vrot.slane %v4242, %v4386
  %vm4388 = vcmask 1041409
  %v4389 = vsel %vm4388, %v4267, %v4263
  %vm4390 = vcmask 1042434
  %v4391 = vsel %vm4390, %v4271, %v4389
  %vm4392 = vcmask 1043459
  %v4393 = vsel %vm4392, %v4275, %v4391
  %v4394 = vsel %vm4388, %v4283, %v4279
  %v4395 = vsel %vm4390, %v4287, %v4394
  %v4396 = vsel %vm4392, %v4291, %v4395
  %v4397 = vsel %vm4388, %v4299, %v4295
  %v4398 = vsel %vm4390, %v4303, %v4397
  %v4399 = vsel %vm4392, %v4307, %v4398
  %v4400 = vsel %vm4388, %v4315, %v4311
  %v4401 = vsel %vm4390, %v4319, %v4400
  %v4402 = vsel %vm4392, %v4323, %v4401
  %v4403 = vsel %vm4388, %v4331, %v4327
  %v4404 = vsel %vm4390, %v4335, %v4403
  %v4405 = vsel %vm4392, %v4339, %v4404
  %v4406 = vsel %vm4388, %v4347, %v4343
  %v4407 = vsel %vm4390, %v4351, %v4406
  %v4408 = vsel %vm4392, %v4355, %v4407
  %v4409 = vsel %vm4388, %v4363, %v4359
  %v4410 = vsel %vm4390, %v4367, %v4409
  %v4411 = vsel %vm4392, %v4371, %v4410
  %v4412 = vsel %vm4388, %v4379, %v4375
  %v4413 = vsel %vm4390, %v4383, %v4412
  %v4414 = vsel %vm4392, %v4387, %v4413
  %vm4423 = vcmask 519168
  %4424 = vst.msk [vmem:[%s107 + $0x1] sm:$0xf] %vm4423, %v4393
  %4425 = vst.msk [vmem:[%s107 + $0x21] sm:$0xf] %vm4423, %v4396
  %4426 = vst.msk [vmem:[%s107 + $0x41] sm:$0xf] %vm4423, %v4399
  %4427 = vst.msk [vmem:[%s107 + $0x61] sm:$0xf] %vm4423, %v4402
  %4428 = vst.msk [vmem:[%s107 + $0x121] sm:$0xf] %vm4423, %v4405
  %4429 = vst.msk [vmem:[%s107 + $0x141] sm:$0xf] %vm4423, %v4408
  %4430 = vst.msk [vmem:[%s107 + $0x161] sm:$0xf] %vm4423, %v4411
  %4431 = vst.msk [vmem:[%s107 + $0x181] sm:$0xf] %vm4423, %v4414
  %v4432 = vlaneseq
  %v4433 = vshrl.u32 %v4432, 7
  %v4434 = vsub.s32 1, %v4433
  %v4435 = vrot.slane %v3995, %v4434
  %v4436 = vlaneseq
  %v4437 = vshrl.u32 %v4436, 7
  %v4438 = vsub.s32 1, %v4437
  %v4439 = vrot.slane %v4003, %v4438
  %v4440 = vlaneseq
  %v4441 = vshrl.u32 %v4440, 7
  %v4442 = vsub.s32 1, %v4441
  %v4443 = vrot.slane %v4002, %v4442
  %v4444 = vlaneseq
  %v4445 = vshrl.u32 %v4444, 7
  %v4446 = vsub.s32 1, %v4445
  %v4447 = vrot.slane %v4004, %v4446
  %v4448 = vlaneseq
  %v4449 = vshrl.u32 %v4448, 7
  %v4450 = vsub.s32 1, %v4449
  %v4451 = vrot.slane %v4029, %v4450
  %v4452 = vlaneseq
  %v4453 = vshrl.u32 %v4452, 7
  %v4454 = vsub.s32 1, %v4453
  %v4455 = vrot.slane %v4037, %v4454
  %v4456 = vlaneseq
  %v4457 = vshrl.u32 %v4456, 7
  %v4458 = vsub.s32 1, %v4457
  %v4459 = vrot.slane %v4036, %v4458
  %v4460 = vlaneseq
  %v4461 = vshrl.u32 %v4460, 7
  %v4462 = vsub.s32 1, %v4461
  %v4463 = vrot.slane %v4038, %v4462
  %v4464 = vlaneseq
  %v4465 = vshrl.u32 %v4464, 7
  %v4466 = vsub.s32 1, %v4465
  %v4467 = vrot.slane %v4063, %v4466
  %v4468 = vlaneseq
  %v4469 = vshrl.u32 %v4468, 7
  %v4470 = vsub.s32 1, %v4469
  %v4471 = vrot.slane %v4071, %v4470
  %v4472 = vlaneseq
  %v4473 = vshrl.u32 %v4472, 7
  %v4474 = vsub.s32 1, %v4473
  %v4475 = vrot.slane %v4070, %v4474
  %v4476 = vlaneseq
  %v4477 = vshrl.u32 %v4476, 7
  %v4478 = vsub.s32 1, %v4477
  %v4479 = vrot.slane %v4072, %v4478
  %v4480 = vlaneseq
  %v4481 = vshrl.u32 %v4480, 7
  %v4482 = vsub.s32 1, %v4481
  %v4483 = vrot.slane %v4097, %v4482
  %v4484 = vlaneseq
  %v4485 = vshrl.u32 %v4484, 7
  %v4486 = vsub.s32 1, %v4485
  %v4487 = vrot.slane %v4105, %v4486
  %v4488 = vlaneseq
  %v4489 = vshrl.u32 %v4488, 7
  %v4490 = vsub.s32 1, %v4489
  %v4491 = vrot.slane %v4104, %v4490
  %v4492 = vlaneseq
  %v4493 = vshrl.u32 %v4492, 7
  %v4494 = vsub.s32 1, %v4493
  %v4495 = vrot.slane %v4106, %v4494
  %v4496 = vlaneseq
  %v4497 = vshrl.u32 %v4496, 7
  %v4498 = vsub.s32 1, %v4497
  %v4499 = vrot.slane %v4131, %v4498
  %v4500 = vlaneseq
  %v4501 = vshrl.u32 %v4500, 7
  %v4502 = vsub.s32 1, %v4501
  %v4503 = vrot.slane %v4139, %v4502
  %v4504 = vlaneseq
  %v4505 = vshrl.u32 %v4504, 7
  %v4506 = vsub.s32 1, %v4505
  %v4507 = vrot.slane %v4138, %v4506
  %v4508 = vlaneseq
  %v4509 = vshrl.u32 %v4508, 7
  %v4510 = vsub.s32 1, %v4509
  %v4511 = vrot.slane %v4140, %v4510
  %v4512 = vlaneseq
  %v4513 = vshrl.u32 %v4512, 7
  %v4514 = vsub.s32 1, %v4513
  %v4515 = vrot.slane %v4165, %v4514
  %v4516 = vlaneseq
  %v4517 = vshrl.u32 %v4516, 7
  %v4518 = vsub.s32 1, %v4517
  %v4519 = vrot.slane %v4173, %v4518
  %v4520 = vlaneseq
  %v4521 = vshrl.u32 %v4520, 7
  %v4522 = vsub.s32 1, %v4521
  %v4523 = vrot.slane %v4172, %v4522
  %v4524 = vlaneseq
  %v4525 = vshrl.u32 %v4524, 7
  %v4526 = vsub.s32 1, %v4525
  %v4527 = vrot.slane %v4174, %v4526
  %v4528 = vlaneseq
  %v4529 = vshrl.u32 %v4528, 7
  %v4530 = vsub.s32 1, %v4529
  %v4531 = vrot.slane %v4199, %v4530
  %v4532 = vlaneseq
  %v4533 = vshrl.u32 %v4532, 7
  %v4534 = vsub.s32 1, %v4533
  %v4535 = vrot.slane %v4207, %v4534
  %v4536 = vlaneseq
  %v4537 = vshrl.u32 %v4536, 7
  %v4538 = vsub.s32 1, %v4537
  %v4539 = vrot.slane %v4206, %v4538
  %v4540 = vlaneseq
  %v4541 = vshrl.u32 %v4540, 7
  %v4542 = vsub.s32 1, %v4541
  %v4543 = vrot.slane %v4208, %v4542
  %v4544 = vlaneseq
  %v4545 = vshrl.u32 %v4544, 7
  %v4546 = vsub.s32 1, %v4545
  %v4547 = vrot.slane %v4233, %v4546
  %v4548 = vlaneseq
  %v4549 = vshrl.u32 %v4548, 7
  %v4550 = vsub.s32 1, %v4549
  %v4551 = vrot.slane %v4241, %v4550
  %v4552 = vlaneseq
  %v4553 = vshrl.u32 %v4552, 7
  %v4554 = vsub.s32 1, %v4553
  %v4555 = vrot.slane %v4240, %v4554
  %v4556 = vlaneseq
  %v4557 = vshrl.u32 %v4556, 7
  %v4558 = vsub.s32 1, %v4557
  %v4559 = vrot.slane %v4242, %v4558
  %v4560 = vsel %vm4390, %v4439, %v4435
  %v4561 = vsel %vm4392, %v4443, %v4560
  %vm4562 = vcmask 1044484
  %v4563 = vsel %vm4562, %v4447, %v4561
  %v4564 = vsel %vm4390, %v4455, %v4451
  %v4565 = vsel %vm4392, %v4459, %v4564
  %v4566 = vsel %vm4562, %v4463, %v4565
  %v4567 = vsel %vm4390, %v4471, %v4467
  %v4568 = vsel %vm4392, %v4475, %v4567
  %v4569 = vsel %vm4562, %v4479, %v4568
  %v4570 = vsel %vm4390, %v4487, %v4483
  %v4571 = vsel %vm4392, %v4491, %v4570
  %v4572 = vsel %vm4562, %v4495, %v4571
  %v4573 = vsel %vm4390, %v4503, %v4499
  %v4574 = vsel %vm4392, %v4507, %v4573
  %v4575 = vsel %vm4562, %v4511, %v4574
  %v4576 = vsel %vm4390, %v4519, %v4515
  %v4577 = vsel %vm4392, %v4523, %v4576
  %v4578 = vsel %vm4562, %v4527, %v4577
  %v4579 = vsel %vm4390, %v4535, %v4531
  %v4580 = vsel %vm4392, %v4539, %v4579
  %v4581 = vsel %vm4562, %v4543, %v4580
  %v4582 = vsel %vm4390, %v4551, %v4547
  %v4583 = vsel %vm4392, %v4555, %v4582
  %v4584 = vsel %vm4562, %v4559, %v4583
  %4585 = vrot.lane.b32.xlu0 %v4563, 64
  %v4586 = vpop.permute.xlu0 %4585
  %4587 = vrot.lane.b32.xlu0 %v4566, 64
  %v4588 = vpop.permute.xlu0 %4587
  %4589 = vrot.lane.b32.xlu0 %v4569, 64
  %v4590 = vpop.permute.xlu0 %4589
  %4591 = vrot.lane.b32.xlu0 %v4572, 64
  %v4592 = vpop.permute.xlu0 %4591
  %4593 = vrot.lane.b32.xlu0 %v4575, 64
  %v4594 = vpop.permute.xlu0 %4593
  %4595 = vrot.lane.b32.xlu0 %v4578, 64
  %v4596 = vpop.permute.xlu0 %4595
  %4597 = vrot.lane.b32.xlu0 %v4581, 64
  %v4598 = vpop.permute.xlu0 %4597
  %4599 = vrot.lane.b32.xlu0 %v4584, 64
  %v4600 = vpop.permute.xlu0 %4599
  %vm4609 = vcmask 1044993
  %4610 = vst.msk [vmem:[%s107] sm:$0x1e] %vm4609, %v4586
  %4611 = vst.msk [vmem:[%s107 + $0x20] sm:$0x1e] %vm4609, %v4588
  %4612 = vst.msk [vmem:[%s107 + $0x40] sm:$0x1e] %vm4609, %v4590
  %4613 = vst.msk [vmem:[%s107 + $0x60] sm:$0x1e] %vm4609, %v4592
  %4614 = vst.msk [vmem:[%s107 + $0x120] sm:$0x1e] %vm4609, %v4594
  %4615 = vst.msk [vmem:[%s107 + $0x140] sm:$0x1e] %vm4609, %v4596
  %4616 = vst.msk [vmem:[%s107 + $0x160] sm:$0x1e] %vm4609, %v4598
  %4617 = vst.msk [vmem:[%s107 + $0x180] sm:$0x1e] %vm4609, %v4600
  %v4618 = vlaneseq
  %v4619 = vshrl.u32 %v4618, 7
  %v4620 = vsub.s32 0, %v4619
  %v4621 = vrot.slane %v4012, %v4620
  %v4622 = vlaneseq
  %v4623 = vshrl.u32 %v4622, 7
  %v4624 = vsub.s32 0, %v4623
  %v4625 = vrot.slane %v4020, %v4624
  %v4626 = vlaneseq
  %v4627 = vshrl.u32 %v4626, 7
  %v4628 = vsub.s32 0, %v4627
  %v4629 = vrot.slane %v4019, %v4628
  %v4630 = vlaneseq
  %v4631 = vshrl.u32 %v4630, 7
  %v4632 = vsub.s32 0, %v4631
  %v4633 = vrot.slane %v4021, %v4632
  %v4634 = vlaneseq
  %v4635 = vshrl.u32 %v4634, 7
  %v4636 = vsub.s32 0, %v4635
  %v4637 = vrot.slane %v4046, %v4636
  %v4638 = vlaneseq
  %v4639 = vshrl.u32 %v4638, 7
  %v4640 = vsub.s32 0, %v4639
  %v4641 = vrot.slane %v4054, %v4640
  %v4642 = vlaneseq
  %v4643 = vshrl.u32 %v4642, 7
  %v4644 = vsub.s32 0, %v4643
  %v4645 = vrot.slane %v4053, %v4644
  %v4646 = vlaneseq
  %v4647 = vshrl.u32 %v4646, 7
  %v4648 = vsub.s32 0, %v4647
  %v4649 = vrot.slane %v4055, %v4648
  %v4650 = vlaneseq
  %v4651 = vshrl.u32 %v4650, 7
  %v4652 = vsub.s32 0, %v4651
  %v4653 = vrot.slane %v4080, %v4652
  %v4654 = vlaneseq
  %v4655 = vshrl.u32 %v4654, 7
  %v4656 = vsub.s32 0, %v4655
  %v4657 = vrot.slane %v4088, %v4656
  %v4658 = vlaneseq
  %v4659 = vshrl.u32 %v4658, 7
  %v4660 = vsub.s32 0, %v4659
  %v4661 = vrot.slane %v4087, %v4660
  %v4662 = vlaneseq
  %v4663 = vshrl.u32 %v4662, 7
  %v4664 = vsub.s32 0, %v4663
  %v4665 = vrot.slane %v4089, %v4664
  %v4666 = vlaneseq
  %v4667 = vshrl.u32 %v4666, 7
  %v4668 = vsub.s32 0, %v4667
  %v4669 = vrot.slane %v4114, %v4668
  %v4670 = vlaneseq
  %v4671 = vshrl.u32 %v4670, 7
  %v4672 = vsub.s32 0, %v4671
  %v4673 = vrot.slane %v4122, %v4672
  %v4674 = vlaneseq
  %v4675 = vshrl.u32 %v4674, 7
  %v4676 = vsub.s32 0, %v4675
  %v4677 = vrot.slane %v4121, %v4676
  %v4678 = vlaneseq
  %v4679 = vshrl.u32 %v4678, 7
  %v4680 = vsub.s32 0, %v4679
  %v4681 = vrot.slane %v4123, %v4680
  %v4682 = vlaneseq
  %v4683 = vshrl.u32 %v4682, 7
  %v4684 = vsub.s32 0, %v4683
  %v4685 = vrot.slane %v4148, %v4684
  %v4686 = vlaneseq
  %v4687 = vshrl.u32 %v4686, 7
  %v4688 = vsub.s32 0, %v4687
  %v4689 = vrot.slane %v4156, %v4688
  %v4690 = vlaneseq
  %v4691 = vshrl.u32 %v4690, 7
  %v4692 = vsub.s32 0, %v4691
  %v4693 = vrot.slane %v4155, %v4692
  %v4694 = vlaneseq
  %v4695 = vshrl.u32 %v4694, 7
  %v4696 = vsub.s32 0, %v4695
  %v4697 = vrot.slane %v4157, %v4696
  %v4698 = vlaneseq
  %v4699 = vshrl.u32 %v4698, 7
  %v4700 = vsub.s32 0, %v4699
  %v4701 = vrot.slane %v4182, %v4700
  %v4702 = vlaneseq
  %v4703 = vshrl.u32 %v4702, 7
  %v4704 = vsub.s32 0, %v4703
  %v4705 = vrot.slane %v4190, %v4704
  %v4706 = vlaneseq
  %v4707 = vshrl.u32 %v4706, 7
  %v4708 = vsub.s32 0, %v4707
  %v4709 = vrot.slane %v4189, %v4708
  %v4710 = vlaneseq
  %v4711 = vshrl.u32 %v4710, 7
  %v4712 = vsub.s32 0, %v4711
  %v4713 = vrot.slane %v4191, %v4712
  %v4714 = vlaneseq
  %v4715 = vshrl.u32 %v4714, 7
  %v4716 = vsub.s32 0, %v4715
  %v4717 = vrot.slane %v4216, %v4716
  %v4718 = vlaneseq
  %v4719 = vshrl.u32 %v4718, 7
  %v4720 = vsub.s32 0, %v4719
  %v4721 = vrot.slane %v4224, %v4720
  %v4722 = vlaneseq
  %v4723 = vshrl.u32 %v4722, 7
  %v4724 = vsub.s32 0, %v4723
  %v4725 = vrot.slane %v4223, %v4724
  %v4726 = vlaneseq
  %v4727 = vshrl.u32 %v4726, 7
  %v4728 = vsub.s32 0, %v4727
  %v4729 = vrot.slane %v4225, %v4728
  %v4730 = vlaneseq
  %v4731 = vshrl.u32 %v4730, 7
  %v4732 = vsub.s32 0, %v4731
  %v4733 = vrot.slane %v4250, %v4732
  %v4734 = vlaneseq
  %v4735 = vshrl.u32 %v4734, 7
  %v4736 = vsub.s32 0, %v4735
  %v4737 = vrot.slane %v4258, %v4736
  %v4738 = vlaneseq
  %v4739 = vshrl.u32 %v4738, 7
  %v4740 = vsub.s32 0, %v4739
  %v4741 = vrot.slane %v4257, %v4740
  %v4742 = vlaneseq
  %v4743 = vshrl.u32 %v4742, 7
  %v4744 = vsub.s32 0, %v4743
  %v4745 = vrot.slane %v4259, %v4744
  %v4746 = vsel %vm4388, %v4625, %v4621
  %v4747 = vsel %vm4390, %v4629, %v4746
  %v4748 = vsel %vm4392, %v4633, %v4747
  %v4749 = vsel %vm4388, %v4641, %v4637
  %v4750 = vsel %vm4390, %v4645, %v4749
  %v4751 = vsel %vm4392, %v4649, %v4750
  %v4752 = vsel %vm4388, %v4657, %v4653
  %v4753 = vsel %vm4390, %v4661, %v4752
  %v4754 = vsel %vm4392, %v4665, %v4753
  %v4755 = vsel %vm4388, %v4673, %v4669
  %v4756 = vsel %vm4390, %v4677, %v4755
  %v4757 = vsel %vm4392, %v4681, %v4756
  %v4758 = vsel %vm4388, %v4689, %v4685
  %v4759 = vsel %vm4390, %v4693, %v4758
  %v4760 = vsel %vm4392, %v4697, %v4759
  %v4761 = vsel %vm4388, %v4705, %v4701
  %v4762 = vsel %vm4390, %v4709, %v4761
  %v4763 = vsel %vm4392, %v4713, %v4762
  %v4764 = vsel %vm4388, %v4721, %v4717
  %v4765 = vsel %vm4390, %v4725, %v4764
  %v4766 = vsel %vm4392, %v4729, %v4765
  %v4767 = vsel %vm4388, %v4737, %v4733
  %v4768 = vsel %vm4390, %v4741, %v4767
  %v4769 = vsel %vm4392, %v4745, %v4768
  %4778 = vst.msk [vmem:[%s728 + $0x1] sm:$0xf] %vm4423, %v4748
  %4779 = vst.msk [vmem:[%s728 + $0x21] sm:$0xf] %vm4423, %v4751
  %4780 = vst.msk [vmem:[%s728 + $0x41] sm:$0xf] %vm4423, %v4754
  %4781 = vst.msk [vmem:[%s728 + $0x61] sm:$0xf] %vm4423, %v4757
  %4782 = vst.msk [vmem:[%s728 + $0x121] sm:$0xf] %vm4423, %v4760
  %4783 = vst.msk [vmem:[%s728 + $0x141] sm:$0xf] %vm4423, %v4763
  %4784 = vst.msk [vmem:[%s728 + $0x161] sm:$0xf] %vm4423, %v4766
  %4785 = vst.msk [vmem:[%s728 + $0x181] sm:$0xf] %vm4423, %v4769
  %v4786 = vlaneseq
  %v4787 = vshrl.u32 %v4786, 7
  %v4788 = vsub.s32 1, %v4787
  %v4789 = vrot.slane %v4012, %v4788
  %v4790 = vlaneseq
  %v4791 = vshrl.u32 %v4790, 7
  %v4792 = vsub.s32 1, %v4791
  %v4793 = vrot.slane %v4020, %v4792
  %v4794 = vlaneseq
  %v4795 = vshrl.u32 %v4794, 7
  %v4796 = vsub.s32 1, %v4795
  %v4797 = vrot.slane %v4019, %v4796
  %v4798 = vlaneseq
  %v4799 = vshrl.u32 %v4798, 7
  %v4800 = vsub.s32 1, %v4799
  %v4801 = vrot.slane %v4021, %v4800
  %v4802 = vlaneseq
  %v4803 = vshrl.u32 %v4802, 7
  %v4804 = vsub.s32 1, %v4803
  %v4805 = vrot.slane %v4046, %v4804
  %v4806 = vlaneseq
  %v4807 = vshrl.u32 %v4806, 7
  %v4808 = vsub.s32 1, %v4807
  %v4809 = vrot.slane %v4054, %v4808
  %v4810 = vlaneseq
  %v4811 = vshrl.u32 %v4810, 7
  %v4812 = vsub.s32 1, %v4811
  %v4813 = vrot.slane %v4053, %v4812
  %v4814 = vlaneseq
  %v4815 = vshrl.u32 %v4814, 7
  %v4816 = vsub.s32 1, %v4815
  %v4817 = vrot.slane %v4055, %v4816
  %v4818 = vlaneseq
  %v4819 = vshrl.u32 %v4818, 7
  %v4820 = vsub.s32 1, %v4819
  %v4821 = vrot.slane %v4080, %v4820
  %v4822 = vlaneseq
  %v4823 = vshrl.u32 %v4822, 7
  %v4824 = vsub.s32 1, %v4823
  %v4825 = vrot.slane %v4088, %v4824
  %v4826 = vlaneseq
  %v4827 = vshrl.u32 %v4826, 7
  %v4828 = vsub.s32 1, %v4827
  %v4829 = vrot.slane %v4087, %v4828
  %v4830 = vlaneseq
  %v4831 = vshrl.u32 %v4830, 7
  %v4832 = vsub.s32 1, %v4831
  %v4833 = vrot.slane %v4089, %v4832
  %v4834 = vlaneseq
  %v4835 = vshrl.u32 %v4834, 7
  %v4836 = vsub.s32 1, %v4835
  %v4837 = vrot.slane %v4114, %v4836
  %v4838 = vlaneseq
  %v4839 = vshrl.u32 %v4838, 7
  %v4840 = vsub.s32 1, %v4839
  %v4841 = vrot.slane %v4122, %v4840
  %v4842 = vlaneseq
  %v4843 = vshrl.u32 %v4842, 7
  %v4844 = vsub.s32 1, %v4843
  %v4845 = vrot.slane %v4121, %v4844
  %v4846 = vlaneseq
  %v4847 = vshrl.u32 %v4846, 7
  %v4848 = vsub.s32 1, %v4847
  %v4849 = vrot.slane %v4123, %v4848
  %v4850 = vlaneseq
  %v4851 = vshrl.u32 %v4850, 7
  %v4852 = vsub.s32 1, %v4851
  %v4853 = vrot.slane %v4148, %v4852
  %v4854 = vlaneseq
  %v4855 = vshrl.u32 %v4854, 7
  %v4856 = vsub.s32 1, %v4855
  %v4857 = vrot.slane %v4156, %v4856
  %v4858 = vlaneseq
  %v4859 = vshrl.u32 %v4858, 7
  %v4860 = vsub.s32 1, %v4859
  %v4861 = vrot.slane %v4155, %v4860
  %v4862 = vlaneseq
  %v4863 = vshrl.u32 %v4862, 7
  %v4864 = vsub.s32 1, %v4863
  %v4865 = vrot.slane %v4157, %v4864
  %v4866 = vlaneseq
  %v4867 = vshrl.u32 %v4866, 7
  %v4868 = vsub.s32 1, %v4867
  %v4869 = vrot.slane %v4182, %v4868
  %v4870 = vlaneseq
  %v4871 = vshrl.u32 %v4870, 7
  %v4872 = vsub.s32 1, %v4871
  %v4873 = vrot.slane %v4190, %v4872
  %v4874 = vlaneseq
  %v4875 = vshrl.u32 %v4874, 7
  %v4876 = vsub.s32 1, %v4875
  %v4877 = vrot.slane %v4189, %v4876
  %v4878 = vlaneseq
  %v4879 = vshrl.u32 %v4878, 7
  %v4880 = vsub.s32 1, %v4879
  %v4881 = vrot.slane %v4191, %v4880
  %v4882 = vlaneseq
  %v4883 = vshrl.u32 %v4882, 7
  %v4884 = vsub.s32 1, %v4883
  %v4885 = vrot.slane %v4216, %v4884
  %v4886 = vlaneseq
  %v4887 = vshrl.u32 %v4886, 7
  %v4888 = vsub.s32 1, %v4887
  %v4889 = vrot.slane %v4224, %v4888
  %v4890 = vlaneseq
  %v4891 = vshrl.u32 %v4890, 7
  %v4892 = vsub.s32 1, %v4891
  %v4893 = vrot.slane %v4223, %v4892
  %v4894 = vlaneseq
  %v4895 = vshrl.u32 %v4894, 7
  %v4896 = vsub.s32 1, %v4895
  %v4897 = vrot.slane %v4225, %v4896
  %v4898 = vlaneseq
  %v4899 = vshrl.u32 %v4898, 7
  %v4900 = vsub.s32 1, %v4899
  %v4901 = vrot.slane %v4250, %v4900
  %v4902 = vlaneseq
  %v4903 = vshrl.u32 %v4902, 7
  %v4904 = vsub.s32 1, %v4903
  %v4905 = vrot.slane %v4258, %v4904
  %v4906 = vlaneseq
  %v4907 = vshrl.u32 %v4906, 7
  %v4908 = vsub.s32 1, %v4907
  %v4909 = vrot.slane %v4257, %v4908
  %v4910 = vlaneseq
  %v4911 = vshrl.u32 %v4910, 7
  %v4912 = vsub.s32 1, %v4911
  %v4913 = vrot.slane %v4259, %v4912
  %v4914 = vsel %vm4390, %v4793, %v4789
  %v4915 = vsel %vm4392, %v4797, %v4914
  %v4916 = vsel %vm4562, %v4801, %v4915
  %v4917 = vsel %vm4390, %v4809, %v4805
  %v4918 = vsel %vm4392, %v4813, %v4917
  %v4919 = vsel %vm4562, %v4817, %v4918
  %v4920 = vsel %vm4390, %v4825, %v4821
  %v4921 = vsel %vm4392, %v4829, %v4920
  %v4922 = vsel %vm4562, %v4833, %v4921
  %v4923 = vsel %vm4390, %v4841, %v4837
  %v4924 = vsel %vm4392, %v4845, %v4923
  %v4925 = vsel %vm4562, %v4849, %v4924
  %v4926 = vsel %vm4390, %v4857, %v4853
  %v4927 = vsel %vm4392, %v4861, %v4926
  %v4928 = vsel %vm4562, %v4865, %v4927
  %v4929 = vsel %vm4390, %v4873, %v4869
  %v4930 = vsel %vm4392, %v4877, %v4929
  %v4931 = vsel %vm4562, %v4881, %v4930
  %v4932 = vsel %vm4390, %v4889, %v4885
  %v4933 = vsel %vm4392, %v4893, %v4932
  %v4934 = vsel %vm4562, %v4897, %v4933
  %v4935 = vsel %vm4390, %v4905, %v4901
  %v4936 = vsel %vm4392, %v4909, %v4935
  %v4937 = vsel %vm4562, %v4913, %v4936
  %4938 = vrot.lane.b32.xlu0 %v4916, 64
  %v4939 = vpop.permute.xlu0 %4938
  %4940 = vrot.lane.b32.xlu0 %v4919, 64
  %v4941 = vpop.permute.xlu0 %4940
  %4942 = vrot.lane.b32.xlu0 %v4922, 64
  %v4943 = vpop.permute.xlu0 %4942
  %4944 = vrot.lane.b32.xlu0 %v4925, 64
  %v4945 = vpop.permute.xlu0 %4944
  %4946 = vrot.lane.b32.xlu0 %v4928, 64
  %v4947 = vpop.permute.xlu0 %4946
  %4948 = vrot.lane.b32.xlu0 %v4931, 64
  %v4949 = vpop.permute.xlu0 %4948
  %4950 = vrot.lane.b32.xlu0 %v4934, 64
  %v4951 = vpop.permute.xlu0 %4950
  %4952 = vrot.lane.b32.xlu0 %v4937, 64
  %v4953 = vpop.permute.xlu0 %4952
  %4962 = vst.msk [vmem:[%s728] sm:$0x1e] %vm4609, %v4939
  %4963 = vst.msk [vmem:[%s728 + $0x20] sm:$0x1e] %vm4609, %v4941
  %4964 = vst.msk [vmem:[%s728 + $0x40] sm:$0x1e] %vm4609, %v4943
  %4965 = vst.msk [vmem:[%s728 + $0x60] sm:$0x1e] %vm4609, %v4945
  %4966 = vst.msk [vmem:[%s728 + $0x120] sm:$0x1e] %vm4609, %v4947
  %4967 = vst.msk [vmem:[%s728 + $0x140] sm:$0x1e] %vm4609, %v4949
  %4968 = vst.msk [vmem:[%s728 + $0x160] sm:$0x1e] %vm4609, %v4951
  %4969 = vst.msk [vmem:[%s728 + $0x180] sm:$0x1e] %vm4609, %v4953
  %v4970 = vld [vmem:[%s145] sm:$0xf]
  %v4971 = vld [vmem:[%s145 + $0x20] sm:$0xf]
  %v4972 = vld [vmem:[%s145 + $0x40] sm:$0xf]
  %v4973 = vld [vmem:[%s145 + $0x60] sm:$0xf]
  %v4974 = vld [vmem:[%s145 + $0x120] sm:$0xf]
  %v4975 = vld [vmem:[%s145 + $0x140] sm:$0xf]
  %v4976 = vld [vmem:[%s145 + $0x160] sm:$0xf]
  %v4977 = vld [vmem:[%s145 + $0x180] sm:$0xf]
  %v4986 = vcombine.low %v4970, %v4971
  %v4987 = vcombine.low %v4972, %v4973
  %v4988 = vcombine.low %v4974, %v4975
  %v4989 = vcombine.low %v4976, %v4977
  %4990 = vrot.lane.b32.xlu0 %v4986, 64
  %v4991 = vpop.permute.xlu0 %4990
  %4992 = vrot.lane.b32.xlu0 %v4987, 64
  %v4993 = vpop.permute.xlu0 %4992
  %4994 = vrot.lane.b32.xlu0 %v4988, 64
  %v4995 = vpop.permute.xlu0 %4994
  %4996 = vrot.lane.b32.xlu0 %v4989, 64
  %v4997 = vpop.permute.xlu0 %4996
  %5002 = vst.msk [vmem:[#allocation4] sm:$0xff] %vm1429, %v4991
  %5003 = vst.msk [vmem:[#allocation4 + $0x28] sm:$0xff] %vm1429, %v4993
  %5004 = vst.msk [vmem:[#allocation4 + $0x50] sm:$0xff] %vm1429, %v4995
  %5005 = vst.msk [vmem:[#allocation4 + $0x78] sm:$0xff] %vm1429, %v4997
  %v5006 = vld [vmem:[%s145 + $0x1] sm:$0xf]
  %v5007 = vld [vmem:[%s145 + $0x21] sm:$0xf]
  %v5008 = vld [vmem:[%s145 + $0x41] sm:$0xf]
  %v5009 = vld [vmem:[%s145 + $0x61] sm:$0xf]
  %v5010 = vld [vmem:[%s145 + $0x121] sm:$0xf]
  %v5011 = vld [vmem:[%s145 + $0x141] sm:$0xf]
  %v5012 = vld [vmem:[%s145 + $0x161] sm:$0xf]
  %v5013 = vld [vmem:[%s145 + $0x181] sm:$0xf]
  %v5022 = vcombine.low %v5006, %v5007
  %v5023 = vcombine.low %v5008, %v5009
  %v5024 = vcombine.low %v5010, %v5011
  %v5025 = vcombine.low %v5012, %v5013
  %5026 = vrot.lane.b32.xlu0 %v5022, 64
  %v5027 = vpop.permute.xlu0 %5026
  %5028 = vrot.lane.b32.xlu0 %v5023, 64
  %v5029 = vpop.permute.xlu0 %5028
  %5030 = vrot.lane.b32.xlu0 %v5024, 64
  %v5031 = vpop.permute.xlu0 %5030
  %5032 = vrot.lane.b32.xlu0 %v5025, 64
  %v5033 = vpop.permute.xlu0 %5032
  %5038 = vst.msk [vmem:[#allocation4] sm:$0xff] %vm1602, %v5027
  %5039 = vst.msk [vmem:[#allocation4 + $0x28] sm:$0xff] %vm1602, %v5029
  %5040 = vst.msk [vmem:[#allocation4 + $0x50] sm:$0xff] %vm1602, %v5031
  %5041 = vst.msk [vmem:[#allocation4 + $0x78] sm:$0xff] %vm1602, %v5033
  %v5042 = vld [vmem:[%s145 + $0x1] sm:$0xf]
  %v5043 = vld [vmem:[%s145 + $0x21] sm:$0xf]
  %v5044 = vld [vmem:[%s145 + $0x41] sm:$0xf]
  %v5045 = vld [vmem:[%s145 + $0x61] sm:$0xf]
  %v5046 = vld [vmem:[%s145 + $0x121] sm:$0xf]
  %v5047 = vld [vmem:[%s145 + $0x141] sm:$0xf]
  %v5048 = vld [vmem:[%s145 + $0x161] sm:$0xf]
  %v5049 = vld [vmem:[%s145 + $0x181] sm:$0xf]
  %v5058 = vcombine.low %v5042, %v5043
  %v5059 = vcombine.low %v5044, %v5045
  %v5060 = vcombine.low %v5046, %v5047
  %v5061 = vcombine.low %v5048, %v5049
  %5062 = vrot.lane.b32.xlu0 %v5058, 64
  %v5063 = vpop.permute.xlu0 %5062
  %5064 = vrot.lane.b32.xlu0 %v5059, 64
  %v5065 = vpop.permute.xlu0 %5064
  %5066 = vrot.lane.b32.xlu0 %v5060, 64
  %v5067 = vpop.permute.xlu0 %5066
  %5068 = vrot.lane.b32.xlu0 %v5061, 64
  %v5069 = vpop.permute.xlu0 %5068
  %5074 = vst.msk [vmem:[#allocation4 + $0x8] sm:$0xff] %vm1429, %v5063
  %5075 = vst.msk [vmem:[#allocation4 + $0x30] sm:$0xff] %vm1429, %v5065
  %5076 = vst.msk [vmem:[#allocation4 + $0x58] sm:$0xff] %vm1429, %v5067
  %5077 = vst.msk [vmem:[#allocation4 + $0x80] sm:$0xff] %vm1429, %v5069
  %v5078 = vld [vmem:[%s107] sm:$0xf]
  %v5079 = vld [vmem:[%s107 + $0x20] sm:$0xf]
  %v5080 = vld [vmem:[%s107 + $0x40] sm:$0xf]
  %v5081 = vld [vmem:[%s107 + $0x60] sm:$0xf]
  %v5082 = vld [vmem:[%s107 + $0x120] sm:$0xf]
  %v5083 = vld [vmem:[%s107 + $0x140] sm:$0xf]
  %v5084 = vld [vmem:[%s107 + $0x160] sm:$0xf]
  %v5085 = vld [vmem:[%s107 + $0x180] sm:$0xf]
  %v5094 = vcombine.low %v5078, %v5079
  %v5095 = vcombine.low %v5080, %v5081
  %v5096 = vcombine.low %v5082, %v5083
  %v5097 = vcombine.low %v5084, %v5085
  %5102 = vst.msk [vmem:[#allocation4 + $0x8] sm:$0xff] %vm1602, %v5094
  %5103 = vst.msk [vmem:[#allocation4 + $0x30] sm:$0xff] %vm1602, %v5095
  %5104 = vst.msk [vmem:[#allocation4 + $0x58] sm:$0xff] %vm1602, %v5096
  %5105 = vst.msk [vmem:[#allocation4 + $0x80] sm:$0xff] %vm1602, %v5097
  %v5106 = vld [vmem:[%s107 + $0x1] sm:$0xf]
  %v5107 = vld [vmem:[%s107 + $0x21] sm:$0xf]
  %v5108 = vld [vmem:[%s107 + $0x41] sm:$0xf]
  %v5109 = vld [vmem:[%s107 + $0x61] sm:$0xf]
  %v5110 = vld [vmem:[%s107 + $0x121] sm:$0xf]
  %v5111 = vld [vmem:[%s107 + $0x141] sm:$0xf]
  %v5112 = vld [vmem:[%s107 + $0x161] sm:$0xf]
  %v5113 = vld [vmem:[%s107 + $0x181] sm:$0xf]
  %v5122 = vcombine.low %v5106, %v5107
  %v5123 = vcombine.low %v5108, %v5109
  %v5124 = vcombine.low %v5110, %v5111
  %v5125 = vcombine.low %v5112, %v5113
  %5130 = vst.msk [vmem:[#allocation4 + $0x10] sm:$0xff] %vm1429, %v5122
  %5131 = vst.msk [vmem:[#allocation4 + $0x38] sm:$0xff] %vm1429, %v5123
  %5132 = vst.msk [vmem:[#allocation4 + $0x60] sm:$0xff] %vm1429, %v5124
  %5133 = vst.msk [vmem:[#allocation4 + $0x88] sm:$0xff] %vm1429, %v5125
  %v5134 = vld [vmem:[%s107 + $0x1] sm:$0xf]
  %v5135 = vld [vmem:[%s107 + $0x21] sm:$0xf]
  %v5136 = vld [vmem:[%s107 + $0x41] sm:$0xf]
  %v5137 = vld [vmem:[%s107 + $0x61] sm:$0xf]
  %v5138 = vld [vmem:[%s107 + $0x121] sm:$0xf]
  %v5139 = vld [vmem:[%s107 + $0x141] sm:$0xf]
  %v5140 = vld [vmem:[%s107 + $0x161] sm:$0xf]
  %v5141 = vld [vmem:[%s107 + $0x181] sm:$0xf]
  %v5150 = vcombine.low %v5134, %v5135
  %v5151 = vcombine.low %v5136, %v5137
  %v5152 = vcombine.low %v5138, %v5139
  %v5153 = vcombine.low %v5140, %v5141
  %5158 = vst.msk [vmem:[#allocation4 + $0x10] sm:$0xff] %vm1602, %v5150
  %5159 = vst.msk [vmem:[#allocation4 + $0x38] sm:$0xff] %vm1602, %v5151
  %5160 = vst.msk [vmem:[#allocation4 + $0x60] sm:$0xff] %vm1602, %v5152
  %5161 = vst.msk [vmem:[#allocation4 + $0x88] sm:$0xff] %vm1602, %v5153
  %v5162 = vld [vmem:[%s728] sm:$0xf]
  %v5163 = vld [vmem:[%s728 + $0x20] sm:$0xf]
  %v5164 = vld [vmem:[%s728 + $0x40] sm:$0xf]
  %v5165 = vld [vmem:[%s728 + $0x60] sm:$0xf]
  %v5166 = vld [vmem:[%s728 + $0x120] sm:$0xf]
  %v5167 = vld [vmem:[%s728 + $0x140] sm:$0xf]
  %v5168 = vld [vmem:[%s728 + $0x160] sm:$0xf]
  %v5169 = vld [vmem:[%s728 + $0x180] sm:$0xf]
  %v5178 = vcombine.low %v5162, %v5163
  %v5179 = vcombine.low %v5164, %v5165
  %v5180 = vcombine.low %v5166, %v5167
  %v5181 = vcombine.low %v5168, %v5169
  %5182 = vrot.lane.b32.xlu0 %v5178, 64
  %v5183 = vpop.permute.xlu0 %5182
  %5184 = vrot.lane.b32.xlu0 %v5179, 64
  %v5185 = vpop.permute.xlu0 %5184
  %5186 = vrot.lane.b32.xlu0 %v5180, 64
  %v5187 = vpop.permute.xlu0 %5186
  %5188 = vrot.lane.b32.xlu0 %v5181, 64
  %v5189 = vpop.permute.xlu0 %5188
  %5194 = vst.msk [vmem:[#allocation4 + $0x18] sm:$0xff] %vm1429, %v5183
  %5195 = vst.msk [vmem:[#allocation4 + $0x40] sm:$0xff] %vm1429, %v5185
  %5196 = vst.msk [vmem:[#allocation4 + $0x68] sm:$0xff] %vm1429, %v5187
  %5197 = vst.msk [vmem:[#allocation4 + $0x90] sm:$0xff] %vm1429, %v5189
  %v5198 = vld [vmem:[%s728 + $0x1] sm:$0xf]
  %v5199 = vld [vmem:[%s728 + $0x21] sm:$0xf]
  %v5200 = vld [vmem:[%s728 + $0x41] sm:$0xf]
  %v5201 = vld [vmem:[%s728 + $0x61] sm:$0xf]
  %v5202 = vld [vmem:[%s728 + $0x121] sm:$0xf]
  %v5203 = vld [vmem:[%s728 + $0x141] sm:$0xf]
  %v5204 = vld [vmem:[%s728 + $0x161] sm:$0xf]
  %v5205 = vld [vmem:[%s728 + $0x181] sm:$0xf]
  %v5214 = vcombine.low %v5198, %v5199
  %v5215 = vcombine.low %v5200, %v5201
  %v5216 = vcombine.low %v5202, %v5203
  %v5217 = vcombine.low %v5204, %v5205
  %5218 = vrot.lane.b32.xlu0 %v5214, 64
  %v5219 = vpop.permute.xlu0 %5218
  %5220 = vrot.lane.b32.xlu0 %v5215, 64
  %v5221 = vpop.permute.xlu0 %5220
  %5222 = vrot.lane.b32.xlu0 %v5216, 64
  %v5223 = vpop.permute.xlu0 %5222
  %5224 = vrot.lane.b32.xlu0 %v5217, 64
  %v5225 = vpop.permute.xlu0 %5224
  %5230 = vst.msk [vmem:[#allocation4 + $0x18] sm:$0xff] %vm1602, %v5219
  %5231 = vst.msk [vmem:[#allocation4 + $0x40] sm:$0xff] %vm1602, %v5221
  %5232 = vst.msk [vmem:[#allocation4 + $0x68] sm:$0xff] %vm1602, %v5223
  %5233 = vst.msk [vmem:[#allocation4 + $0x90] sm:$0xff] %vm1602, %v5225
  %v5234 = vld [vmem:[%s728 + $0x1] sm:$0xf]
  %v5235 = vld [vmem:[%s728 + $0x21] sm:$0xf]
  %v5236 = vld [vmem:[%s728 + $0x41] sm:$0xf]
  %v5237 = vld [vmem:[%s728 + $0x61] sm:$0xf]
  %v5238 = vld [vmem:[%s728 + $0x121] sm:$0xf]
  %v5239 = vld [vmem:[%s728 + $0x141] sm:$0xf]
  %v5240 = vld [vmem:[%s728 + $0x161] sm:$0xf]
  %v5241 = vld [vmem:[%s728 + $0x181] sm:$0xf]
  %v5250 = vcombine.low %v5234, %v5235
  %v5251 = vcombine.low %v5236, %v5237
  %v5252 = vcombine.low %v5238, %v5239
  %v5253 = vcombine.low %v5240, %v5241
  %5254 = vrot.lane.b32.xlu0 %v5250, 64
  %v5255 = vpop.permute.xlu0 %5254
  %5256 = vrot.lane.b32.xlu0 %v5251, 64
  %v5257 = vpop.permute.xlu0 %5256
  %5258 = vrot.lane.b32.xlu0 %v5252, 64
  %v5259 = vpop.permute.xlu0 %5258
  %5260 = vrot.lane.b32.xlu0 %v5253, 64
  %v5261 = vpop.permute.xlu0 %5260
  %5266 = vst.msk [vmem:[#allocation4 + $0x20] sm:$0xff] %vm1429, %v5255
  %5267 = vst.msk [vmem:[#allocation4 + $0x48] sm:$0xff] %vm1429, %v5257
  %5268 = vst.msk [vmem:[#allocation4 + $0x70] sm:$0xff] %vm1429, %v5259
  %5269 = vst.msk [vmem:[#allocation4 + $0x98] sm:$0xff] %vm1429, %v5261
  %v5270 = vld [vmem:[#allocation4] sm:$0xff]
  %v5271 = vld [vmem:[#allocation4 + $0x8] sm:$0xff]
  %v5272 = vld [vmem:[#allocation4 + $0x10] sm:$0xff]
  %v5273 = vld [vmem:[#allocation4 + $0x18] sm:$0xff]
  %v5274 = vld [vmem:[#allocation4 + $0x20] sm:$0xff]
  %v5275 = vld [vmem:[#allocation4 + $0x28] sm:$0xff]
  %v5276 = vld [vmem:[#allocation4 + $0x30] sm:$0xff]
  %v5277 = vld [vmem:[#allocation4 + $0x38] sm:$0xff]
  %v5278 = vld [vmem:[#allocation4 + $0x40] sm:$0xff]
  %v5279 = vld [vmem:[#allocation4 + $0x48] sm:$0xff]
  %v5280 = vld [vmem:[#allocation4 + $0x50] sm:$0xff]
  %v5281 = vld [vmem:[#allocation4 + $0x58] sm:$0xff]
  %v5282 = vld [vmem:[#allocation4 + $0x60] sm:$0xff]
  %v5283 = vld [vmem:[#allocation4 + $0x68] sm:$0xff]
  %v5284 = vld [vmem:[#allocation4 + $0x70] sm:$0xff]
  %v5285 = vld [vmem:[#allocation4 + $0x78] sm:$0xff]
  %v5286 = vld [vmem:[#allocation4 + $0x80] sm:$0xff]
  %v5287 = vld [vmem:[#allocation4 + $0x88] sm:$0xff]
  %v5288 = vld [vmem:[#allocation4 + $0x90] sm:$0xff]
  %v5289 = vld [vmem:[#allocation4 + $0x98] sm:$0xff]
  %v5291 = vsel %vm1429, %v5274, 0
  %v5294 = vsel %vm1429, %v5279, 0
  %v5297 = vsel %vm1429, %v5284, 0
  %v5300 = vsel %vm1429, %v5289, 0
  %5302 = vmatprep.subr.mxu0 0.0
  %5303 = vmatpush1.msra.mxu0 %v3875
  %5304 = vmatprep.subr.mxu0 0.0
  %5305 = vmatpush1.msra.mxu0 %v3876
  %5306 = vmatprep.subr.mxu0 0.0
  %5307 = vmatpush1.msra.mxu0 %v3877
  %5308 = vmatprep.subr.mxu0 0.0
  %5309 = vmatpush1.msra.mxu0 %v3878
  %5310 = vmatprep.subr.mxu0 0.0
  %5311 = vmatpush1.msra.mxu0 %v3879
  %5312 = vmatprep.subr.mxu0 0.0
  %5313 = vmatpush1.msra.mxu0 %v3880
  %5314 = vmatprep.subr.mxu0 0.0
  %5315 = vmatpush1.msra.mxu0 %v3881
  %5316 = vmatprep.subr.mxu0 0.0
  %5317 = vmatpush1.msra.mxu0 %v3882
  %5318 = vmatprep.subr.mxu0 0.0
  %5319 = vmatpush1.msra.mxu0 %v3883
  %5320 = vmatprep.subr.mxu0 0.0
  %5321 = vmatpush1.msra.mxu0 %v3884
  %5322 = vmatprep.subr.mxu0 0.0
  %5323 = vmatpush1.msra.mxu0 %v3885
  %5324 = vmatprep.subr.mxu0 0.0
  %5325 = vmatpush1.msra.mxu0 %v3886
  %5326 = vmatprep.subr.mxu0 0.0
  %5327 = vmatpush1.msra.mxu0 %v3887
  %5328 = vmatprep.subr.mxu0 0.0
  %5329 = vmatpush1.msra.mxu0 %v3888
  %5330 = vmatprep.subr.mxu0 0.0
  %5331 = vmatpush1.msra.mxu0 %v3889
  %5332 = vmatprep.subr.mxu0 0.0
  %5333 = vmatpush1.msra.mxu0 %v3890
  %5334 = vmatprep.subr.mxu0 0.0
  %5335 = vmatpush1.msra.mxu0 %v3891
  %5336 = vmatprep.subr.mxu0 0.0
  %5337 = vmatpush1.msra.mxu0 %v3892
  %5338 = vmatprep.subr.mxu0 0.0
  %5339 = vmatpush1.msra.mxu0 %v3893
  %5340 = vmatprep.subr.mxu0 0.0
  %5341 = vmatpush1.msra.mxu0 %v3894
  %5342 = vmatprep.subr.mxu0 0.0
  %5343 = vmatpush1.msra.mxu0 %v3895
  %5344 = vmatprep.subr.mxu0 0.0
  %5345 = vmatpush1.msra.mxu0 %v3896
  %5346 = vmatprep.subr.mxu0 0.0
  %5347 = vmatpush1.msra.mxu0 %v3897
  %5348 = vmatprep.subr.mxu0 0.0
  %5349 = vmatpush1.msra.mxu0 %v3898
  %5350 = vmatprep.subr.mxu0 0.0
  %5351 = vmatpush1.msra.mxu0 %v3899
  %5352 = vmatprep.subr.mxu0 0.0
  %5353 = vmatpush1.msra.mxu0 %v3900
  %5354 = vmatprep.subr.mxu0 0.0
  %5355 = vmatpush1.msra.mxu0 %v3901
  %5356 = vmatprep.subr.mxu0 0.0
  %5357 = vmatpush1.msra.mxu0 %v3902
  %5358 = vmatprep.subr.mxu0 0.0
  %5359 = vmatpush1.msra.mxu0 %v3903
  %5360 = vmatprep.subr.mxu0 0.0
  %5361 = vmatpush1.msra.mxu0 %v3904
  %5362 = vmatprep.subr.mxu0 0.0
  %5363 = vmatpush1.msra.mxu0 %v3905
  %5364 = vmatprep.subr.mxu0 0.0
  %5365 = vmatpush1.msra.mxu0 %v3906
  %5366 = vmatprep.mubr.f32.mxu0 %v5271
  %5367 = vmatmul.mubr.f32.gmra.mrb[0].mxu0 %v5270
  %v5368 = vpop.f32.mrb[0].mxu0
  %v5369 = vadd.f32 %v3947, %v5368
  %v5370 = vpop.f32.mrb[0].mxu0
  %5371 = vmatprep.mubr.f32.mxu0 %v5276
  %5372 = vmatmul.mubr.f32.gmra.mrb[0].mxu0 %v5275
  %v5373 = vpop.f32.mrb[0].mxu0
  %v5374 = vadd.f32 %v3947, %v5373
  %v5375 = vpop.f32.mrb[0].mxu0
  %5376 = vmatprep.mubr.f32.mxu0 %v5281
  %5377 = vmatmul.mubr.f32.gmra.mrb[0].mxu0 %v5280
  %v5378 = vpop.f32.mrb[0].mxu0
  %v5379 = vadd.f32 %v3947, %v5378
  %v5380 = vpop.f32.mrb[0].mxu0
  %5381 = vmatprep.mubr.f32.mxu0 %v5286
  %5382 = vmatmul.mubr.f32.gmra.mrb[0].mxu0 %v5285
  %v5383 = vpop.f32.mrb[0].mxu0
  %v5384 = vadd.f32 %v3947, %v5383
  %v5385 = vpop.f32.mrb[0].mxu0
  %5386 = vdwg.mxu0
  %5387 = vmatprep.subr.mxu0 0.0
  %5388 = vmatpush1.msra.mxu0 %v3907
  %5389 = vmatprep.subr.mxu0 0.0
  %5390 = vmatpush1.msra.mxu0 %v3908
  %5391 = vmatprep.subr.mxu0 0.0
  %5392 = vmatpush1.msra.mxu0 %v3909
  %5393 = vmatprep.subr.mxu0 0.0
  %5394 = vmatpush1.msra.mxu0 %v3910
  %5395 = vmatprep.subr.mxu0 0.0
  %5396 = vmatpush1.msra.mxu0 %v3911
  %5397 = vmatprep.subr.mxu0 0.0
  %5398 = vmatpush1.msra.mxu0 %v3912
  %5399 = vmatprep.subr.mxu0 0.0
  %5400 = vmatpush1.msra.mxu0 %v3913
  %5401 = vmatprep.subr.mxu0 0.0
  %5402 = vmatpush1.msra.mxu0 %v3914
  %5403 = vmatprep.subr.mxu0 0.0
  %5404 = vmatpush1.msra.mxu0 %v3915
  %5405 = vmatprep.subr.mxu0 0.0
  %5406 = vmatpush1.msra.mxu0 %v3916
  %5407 = vmatprep.subr.mxu0 0.0
  %5408 = vmatpush1.msra.mxu0 %v3917
  %5409 = vmatprep.subr.mxu0 0.0
  %5410 = vmatpush1.msra.mxu0 %v3918
  %5411 = vmatprep.subr.mxu0 0.0
  %5412 = vmatpush1.msra.mxu0 %v3919
  %5413 = vmatprep.subr.mxu0 0.0
  %5414 = vmatpush1.msra.mxu0 %v3920
  %5415 = vmatprep.subr.mxu0 0.0
  %5416 = vmatpush1.msra.mxu0 %v3921
  %5417 = vmatprep.subr.mxu0 0.0
  %5418 = vmatpush1.msra.mxu0 %v3922
  %5419 = vmatprep.subr.mxu0 0.0
  %5420 = vmatpush1.msra.mxu0 %v3923
  %5421 = vmatprep.subr.mxu0 0.0
  %5422 = vmatpush1.msra.mxu0 %v3924
  %5423 = vmatprep.subr.mxu0 0.0
  %5424 = vmatpush1.msra.mxu0 %v3925
  %5425 = vmatprep.subr.mxu0 0.0
  %5426 = vmatpush1.msra.mxu0 %v3926
  %5427 = vmatprep.subr.mxu0 0.0
  %5428 = vmatpush1.msra.mxu0 %v3927
  %5429 = vmatprep.subr.mxu0 0.0
  %5430 = vmatpush1.msra.mxu0 %v3928
  %5431 = vmatprep.subr.mxu0 0.0
  %5432 = vmatpush1.msra.mxu0 %v3929
  %5433 = vmatprep.subr.mxu0 0.0
  %5434 = vmatpush1.msra.mxu0 %v3930
  %5435 = vmatprep.subr.mxu0 0.0
  %5436 = vmatpush1.msra.mxu0 %v3931
  %5437 = vmatprep.subr.mxu0 0.0
  %5438 = vmatpush1.msra.mxu0 %v3932
  %5439 = vmatprep.subr.mxu0 0.0
  %5440 = vmatpush1.msra.mxu0 %v3933
  %5441 = vmatprep.subr.mxu0 0.0
  %5442 = vmatpush1.msra.mxu0 %v3934
  %5443 = vmatprep.subr.mxu0 0.0
  %5444 = vmatpush1.msra.mxu0 %v3935
  %5445 = vmatprep.subr.mxu0 0.0
  %5446 = vmatpush1.msra.mxu0 %v3936
  %5447 = vmatprep.subr.mxu0 0.0
  %5448 = vmatpush1.msra.mxu0 %v3937
  %5449 = vmatprep.subr.mxu0 0.0
  %5450 = vmatpush1.msra.mxu0 %v3938
  %5451 = vmatprep.mubr.f32.mxu0 %v5273
  %5452 = vmatmul.mubr.f32.gmra.mrb[0].mxu0 %v5272
  %v5453 = vpop.f32.mrb[0].mxu0
  %v5454 = vadd.f32 %v5369, %v5453
  %v5455 = vpop.f32.mrb[0].mxu0
  %5456 = vmatprep.mubr.f32.mxu0 %v5278
  %5457 = vmatmul.mubr.f32.gmra.mrb[0].mxu0 %v5277
  %v5458 = vpop.f32.mrb[0].mxu0
  %v5459 = vadd.f32 %v5374, %v5458
  %v5460 = vpop.f32.mrb[0].mxu0
  %5461 = vmatprep.mubr.f32.mxu0 %v5283
  %5462 = vmatmul.mubr.f32.gmra.mrb[0].mxu0 %v5282
  %v5463 = vpop.f32.mrb[0].mxu0
  %v5464 = vadd.f32 %v5379, %v5463
  %v5465 = vpop.f32.mrb[0].mxu0
  %5466 = vmatprep.mubr.f32.mxu0 %v5288
  %5467 = vmatmul.mubr.f32.gmra.mrb[0].mxu0 %v5287
  %v5468 = vpop.f32.mrb[0].mxu0
  %v5469 = vadd.f32 %v5384, %v5468
  %v5470 = vpop.f32.mrb[0].mxu0
  %5471 = vdwg.mxu0
  %5472 = vmatprep.subr.mxu0 0.0
  %5473 = vmatpush1.msra.mxu0 %v3939
  %5474 = vmatprep.subr.mxu0 0.0
  %5475 = vmatpush1.msra.mxu0 %v3940
  %5476 = vmatprep.subr.mxu0 0.0
  %5477 = vmatpush1.msra.mxu0 %v3941
  %5478 = vmatprep.subr.mxu0 0.0
  %5479 = vmatpush1.msra.mxu0 %v3942
  %5480 = vmatprep.subr.mxu0 0.0
  %5481 = vmatpush1.msra.mxu0 %v3943
  %5482 = vmatprep.subr.mxu0 0.0
  %5483 = vmatpush1.msra.mxu0 %v3944
  %5484 = vmatprep.subr.mxu0 0.0
  %5485 = vmatpush1.msra.mxu0 %v3945
  %5486 = vmatprep.subr.mxu0 0.0
  %5487 = vmatpush1.msra.mxu0 %v3946
  %5488 = vmatprep.subr.mxu0 0.0
  %5489 = vmatpush1.msra.mxu0 0.0
  %5490 = vmatprep.subr.mxu0 0.0
  %5491 = vmatpush1.msra.mxu0 0.0
  %5492 = vmatprep.subr.mxu0 0.0
  %5493 = vmatpush1.msra.mxu0 0.0
  %5494 = vmatprep.subr.mxu0 0.0
  %5495 = vmatpush1.msra.mxu0 0.0
  %5496 = vmatprep.subr.mxu0 0.0
  %5497 = vmatpush1.msra.mxu0 0.0
  %5498 = vmatprep.subr.mxu0 0.0
  %5499 = vmatpush1.msra.mxu0 0.0
  %5500 = vmatprep.subr.mxu0 0.0
  %5501 = vmatpush1.msra.mxu0 0.0
  %5502 = vmatprep.subr.mxu0 0.0
  %5503 = vmatpush1.msra.mxu0 0.0
  %5504 = vmatprep.subr.mxu0 0.0
  %5505 = vmatpush1.msra.mxu0 0.0
  %5506 = vmatprep.subr.mxu0 0.0
  %5507 = vmatpush1.msra.mxu0 0.0
  %5508 = vmatprep.subr.mxu0 0.0
  %5509 = vmatpush1.msra.mxu0 0.0
  %5510 = vmatprep.subr.mxu0 0.0
  %5511 = vmatpush1.msra.mxu0 0.0
  %5512 = vmatprep.subr.mxu0 0.0
  %5513 = vmatpush1.msra.mxu0 0.0
  %5514 = vmatprep.subr.mxu0 0.0
  %5515 = vmatpush1.msra.mxu0 0.0
  %5516 = vmatprep.subr.mxu0 0.0
  %5517 = vmatpush1.msra.mxu0 0.0
  %5518 = vmatprep.subr.mxu0 0.0
  %5519 = vmatpush1.msra.mxu0 0.0
  %5520 = vmatprep.subr.mxu0 0.0
  %5521 = vmatpush1.msra.mxu0 0.0
  %5522 = vmatprep.subr.mxu0 0.0
  %5523 = vmatpush1.msra.mxu0 0.0
  %5524 = vmatprep.subr.mxu0 0.0
  %5525 = vmatpush1.msra.mxu0 0.0
  %5526 = vmatprep.subr.mxu0 0.0
  %5527 = vmatpush1.msra.mxu0 0.0
  %5528 = vmatprep.subr.mxu0 0.0
  %5529 = vmatpush1.msra.mxu0 0.0
  %5530 = vmatprep.subr.mxu0 0.0
  %5531 = vmatpush1.msra.mxu0 0.0
  %5532 = vmatprep.subr.mxu0 0.0
  %5533 = vmatpush1.msra.mxu0 0.0
  %5534 = vmatprep.subr.mxu0 0.0
  %5535 = vmatpush1.msra.mxu0 0.0
  %5536 = vmatprep.mubr.f32.mxu0 0.0
  %5537 = vmatmul.mubr.f32.gmra.mrb[0].mxu0 %v5291
  %v5538 = vpop.f32.mrb[0].mxu0
  %v5539 = vadd.f32 %v5454, %v5538
  %v5540 = vpop.f32.mrb[0].mxu0
  %5541 = vmatprep.mubr.f32.mxu0 0.0
  %5542 = vmatmul.mubr.f32.gmra.mrb[0].mxu0 %v5294
  %v5543 = vpop.f32.mrb[0].mxu0
  %v5544 = vadd.f32 %v5459, %v5543
  %v5545 = vpop.f32.mrb[0].mxu0
  %5546 = vmatprep.mubr.f32.mxu0 0.0
  %5547 = vmatmul.mubr.f32.gmra.mrb[0].mxu0 %v5297
  %v5548 = vpop.f32.mrb[0].mxu0
  %v5549 = vadd.f32 %v5464, %v5548
  %v5550 = vpop.f32.mrb[0].mxu0
  %5551 = vmatprep.mubr.f32.mxu0 0.0
  %5552 = vmatmul.mubr.f32.gmra.mrb[0].mxu0 %v5300
  %v5553 = vpop.f32.mrb[0].mxu0
  %v5554 = vadd.f32 %v5469, %v5553
  %v5555 = vpop.f32.mrb[0].mxu0
  %5556 = vdwg.mxu0
  %vm5557 = vcmp.ge.f32.partialorder %v5539, 0.0
  %vm5558 = vcmp.ge.f32.partialorder %v5544, 0.0
  %vm5559 = vcmp.ge.f32.partialorder %v5549, 0.0
  %vm5560 = vcmp.ge.f32.partialorder %v5554, 0.0
  %v5561 = vmul.f32 %v5539, 0.01
  %v5562 = vmul.f32 %v5544, 0.01
  %v5563 = vmul.f32 %v5549, 0.01
  %v5564 = vmul.f32 %v5554, 0.01
  %v5565 = vsel %vm5557, %v5539, %v5561
  %v5566 = vsel %vm5558, %v5544, %v5562
  %v5567 = vsel %vm5559, %v5549, %v5563
  %v5568 = vsel %vm5560, %v5554, %v5564
  %s5569 = scalar_lea.vmem %s3, 1728
  %v5570 = vld [vmem:[%s5569] sm:$0xff]
  %v5571 = vld [vmem:[%s5569 + $0x8] sm:$0xff]
  %v5572 = vld [vmem:[%s5569 + $0x10] sm:$0xff]
  %v5573 = vld [vmem:[%s5569 + $0x18] sm:$0xff]
  %v5574 = vld [vmem:[%s5569 + $0x20] sm:$0xff]
  %v5575 = vld [vmem:[%s5569 + $0x28] sm:$0xff]
  %v5576 = vld [vmem:[%s5569 + $0x30] sm:$0xff]
  %v5577 = vld [vmem:[%s5569 + $0x38] sm:$0xff]
  %v5578 = vld [vmem:[%s5569 + $0x40] sm:$0xff]
  %v5579 = vld [vmem:[%s5569 + $0x48] sm:$0xff]
  %v5580 = vld [vmem:[%s5569 + $0x50] sm:$0xff]
  %v5581 = vld [vmem:[%s5569 + $0x58] sm:$0xff]
  %v5582 = vld [vmem:[%s5569 + $0x60] sm:$0xff]
  %v5583 = vld [vmem:[%s5569 + $0x68] sm:$0xff]
  %v5584 = vld [vmem:[%s5569 + $0x70] sm:$0xff]
  %v5585 = vld [vmem:[%s5569 + $0x78] sm:$0xff]
  %v5586 = vld [vmem:[%s5569 + $0x80] sm:$0xff]
  %v5587 = vld [vmem:[%s5569 + $0x88] sm:$0xff]
  %v5588 = vld [vmem:[%s5569 + $0x90] sm:$0xff]
  %v5589 = vld [vmem:[%s5569 + $0x98] sm:$0xff]
  %v5590 = vld [vmem:[%s5569 + $0xa0] sm:$0xff]
  %v5591 = vld [vmem:[%s5569 + $0xa8] sm:$0xff]
  %v5592 = vld [vmem:[%s5569 + $0xb0] sm:$0xff]
  %v5593 = vld [vmem:[%s5569 + $0xb8] sm:$0xff]
  %v5594 = vld [vmem:[%s5569 + $0xc0] sm:$0xff]
  %v5595 = vld [vmem:[%s5569 + $0xc8] sm:$0xff]
  %v5596 = vld [vmem:[%s5569 + $0xd0] sm:$0xff]
  %v5597 = vld [vmem:[%s5569 + $0xd8] sm:$0xff]
  %v5598 = vld [vmem:[%s5569 + $0xe0] sm:$0xff]
  %v5599 = vld [vmem:[%s5569 + $0xe8] sm:$0xff]
  %v5600 = vld [vmem:[%s5569 + $0xf0] sm:$0xff]
  %v5601 = vld [vmem:[%s5569 + $0xf8] sm:$0xff]
  %v5602 = vld [vmem:[%s5569 + $0x100] sm:$0xff]
  %v5603 = vld [vmem:[%s5569 + $0x108] sm:$0xff]
  %v5604 = vld [vmem:[%s5569 + $0x110] sm:$0xff]
  %v5605 = vld [vmem:[%s5569 + $0x118] sm:$0xff]
  %v5606 = vld [vmem:[%s5569 + $0x120] sm:$0xff]
  %v5607 = vld [vmem:[%s5569 + $0x128] sm:$0xff]
  %v5608 = vld [vmem:[%s5569 + $0x130] sm:$0xff]
  %v5609 = vld [vmem:[%s5569 + $0x138] sm:$0xff]
  %v5610 = vld [vmem:[%s5569 + $0x140] sm:$0xff]
  %v5611 = vld [vmem:[%s5569 + $0x148] sm:$0xff]
  %v5612 = vld [vmem:[%s5569 + $0x150] sm:$0xff]
  %v5613 = vld [vmem:[%s5569 + $0x158] sm:$0xff]
  %v5614 = vld [vmem:[%s5569 + $0x160] sm:$0xff]
  %v5615 = vld [vmem:[%s5569 + $0x168] sm:$0xff]
  %v5616 = vld [vmem:[%s5569 + $0x170] sm:$0xff]
  %v5617 = vld [vmem:[%s5569 + $0x178] sm:$0xff]
  %v5618 = vld [vmem:[%s5569 + $0x180] sm:$0xff]
  %v5619 = vld [vmem:[%s5569 + $0x188] sm:$0xff]
  %v5620 = vld [vmem:[%s5569 + $0x190] sm:$0xff]
  %v5621 = vld [vmem:[%s5569 + $0x198] sm:$0xff]
  %v5622 = vld [vmem:[%s5569 + $0x1a0] sm:$0xff]
  %v5623 = vld [vmem:[%s5569 + $0x1a8] sm:$0xff]
  %v5624 = vld [vmem:[%s5569 + $0x1b0] sm:$0xff]
  %v5625 = vld [vmem:[%s5569 + $0x1b8] sm:$0xff]
  %v5626 = vld [vmem:[%s5569 + $0x1c0] sm:$0xff]
  %v5627 = vld [vmem:[%s5569 + $0x1c8] sm:$0xff]
  %v5628 = vld [vmem:[%s5569 + $0x1d0] sm:$0xff]
  %v5629 = vld [vmem:[%s5569 + $0x1d8] sm:$0xff]
  %v5630 = vld [vmem:[%s5569 + $0x1e0] sm:$0xff]
  %v5631 = vld [vmem:[%s5569 + $0x1e8] sm:$0xff]
  %v5632 = vld [vmem:[%s5569 + $0x1f0] sm:$0xff]
  %v5633 = vld [vmem:[%s5569 + $0x1f8] sm:$0xff]
  %v5634 = vld [vmem:[%s5569 + $0x200] sm:$0xff]
  %v5635 = vld [vmem:[%s5569 + $0x208] sm:$0xff]
  %v5636 = vld [vmem:[%s5569 + $0x210] sm:$0xff]
  %v5637 = vld [vmem:[%s5569 + $0x218] sm:$0xff]
  %v5638 = vld [vmem:[%s5569 + $0x220] sm:$0xff]
  %v5639 = vld [vmem:[%s5569 + $0x228] sm:$0xff]
  %v5640 = vld [vmem:[%s5569 + $0x230] sm:$0xff]
  %v5641 = vld [vmem:[%s5569 + $0x238] sm:$0xff]
  %v5642 = vld [vmem:[%s1 + $0x4] ss:$0 sm:$0xff]
  %s5643 = scalar_lea.vmem %s3, 2304
  %v5644 = vld [vmem:[%s5643] sm:$0xff]
  %v5645 = vld [vmem:[%s5643 + $0x8] sm:$0xff]
  %v5646 = vld [vmem:[%s5643 + $0x10] sm:$0xff]
  %v5647 = vld [vmem:[%s5643 + $0x18] sm:$0xff]
  %v5648 = vld [vmem:[%s5643 + $0x20] sm:$0xff]
  %v5649 = vld [vmem:[%s5643 + $0x28] sm:$0xff]
  %v5650 = vld [vmem:[%s5643 + $0x30] sm:$0xff]
  %v5651 = vld [vmem:[%s5643 + $0x38] sm:$0xff]
  %v5652 = vld [vmem:[%s5643 + $0x40] sm:$0xff]
  %v5653 = vld [vmem:[%s5643 + $0x48] sm:$0xff]
  %v5654 = vld [vmem:[%s5643 + $0x50] sm:$0xff]
  %v5655 = vld [vmem:[%s5643 + $0x58] sm:$0xff]
  %v5656 = vld [vmem:[%s5643 + $0x60] sm:$0xff]
  %v5657 = vld [vmem:[%s5643 + $0x68] sm:$0xff]
  %v5658 = vld [vmem:[%s5643 + $0x70] sm:$0xff]
  %v5659 = vld [vmem:[%s5643 + $0x78] sm:$0xff]
  %v5660 = vld [vmem:[%s5643 + $0x80] sm:$0xff]
  %v5661 = vld [vmem:[%s5643 + $0x88] sm:$0xff]
  %v5662 = vld [vmem:[%s5643 + $0x90] sm:$0xff]
  %v5663 = vld [vmem:[%s5643 + $0x98] sm:$0xff]
  %v5664 = vld [vmem:[%s5643 + $0xa0] sm:$0xff]
  %v5665 = vld [vmem:[%s5643 + $0xa8] sm:$0xff]
  %v5666 = vld [vmem:[%s5643 + $0xb0] sm:$0xff]
  %v5667 = vld [vmem:[%s5643 + $0xb8] sm:$0xff]
  %v5668 = vld [vmem:[%s5643 + $0xc0] sm:$0xff]
  %v5669 = vld [vmem:[%s5643 + $0xc8] sm:$0xff]
  %v5670 = vld [vmem:[%s5643 + $0xd0] sm:$0xff]
  %v5671 = vld [vmem:[%s5643 + $0xd8] sm:$0xff]
  %v5672 = vld [vmem:[%s5643 + $0xe0] sm:$0xff]
  %v5673 = vld [vmem:[%s5643 + $0xe8] sm:$0xff]
  %v5674 = vld [vmem:[%s5643 + $0xf0] sm:$0xff]
  %v5675 = vld [vmem:[%s5643 + $0xf8] sm:$0xff]
  %v5676 = vld [vmem:[%s5643 + $0x100] sm:$0xff]
  %v5677 = vld [vmem:[%s5643 + $0x108] sm:$0xff]
  %v5678 = vld [vmem:[%s5643 + $0x110] sm:$0xff]
  %v5679 = vld [vmem:[%s5643 + $0x118] sm:$0xff]
  %v5680 = vld [vmem:[%s5643 + $0x120] sm:$0xff]
  %v5681 = vld [vmem:[%s5643 + $0x128] sm:$0xff]
  %v5682 = vld [vmem:[%s5643 + $0x130] sm:$0xff]
  %v5683 = vld [vmem:[%s5643 + $0x138] sm:$0xff]
  %v5684 = vld [vmem:[%s5643 + $0x140] sm:$0xff]
  %v5685 = vld [vmem:[%s5643 + $0x148] sm:$0xff]
  %v5686 = vld [vmem:[%s5643 + $0x150] sm:$0xff]
  %v5687 = vld [vmem:[%s5643 + $0x158] sm:$0xff]
  %v5688 = vld [vmem:[%s5643 + $0x160] sm:$0xff]
  %v5689 = vld [vmem:[%s5643 + $0x168] sm:$0xff]
  %v5690 = vld [vmem:[%s5643 + $0x170] sm:$0xff]
  %v5691 = vld [vmem:[%s5643 + $0x178] sm:$0xff]
  %v5692 = vld [vmem:[%s5643 + $0x180] sm:$0xff]
  %v5693 = vld [vmem:[%s5643 + $0x188] sm:$0xff]
  %v5694 = vld [vmem:[%s5643 + $0x190] sm:$0xff]
  %v5695 = vld [vmem:[%s5643 + $0x198] sm:$0xff]
  %v5696 = vld [vmem:[%s5643 + $0x1a0] sm:$0xff]
  %v5697 = vld [vmem:[%s5643 + $0x1a8] sm:$0xff]
  %v5698 = vld [vmem:[%s5643 + $0x1b0] sm:$0xff]
  %v5699 = vld [vmem:[%s5643 + $0x1b8] sm:$0xff]
  %v5700 = vld [vmem:[%s5643 + $0x1c0] sm:$0xff]
  %v5701 = vld [vmem:[%s5643 + $0x1c8] sm:$0xff]
  %v5702 = vld [vmem:[%s5643 + $0x1d0] sm:$0xff]
  %v5703 = vld [vmem:[%s5643 + $0x1d8] sm:$0xff]
  %v5704 = vld [vmem:[%s5643 + $0x1e0] sm:$0xff]
  %v5705 = vld [vmem:[%s5643 + $0x1e8] sm:$0xff]
  %v5706 = vld [vmem:[%s5643 + $0x1f0] sm:$0xff]
  %v5707 = vld [vmem:[%s5643 + $0x1f8] sm:$0xff]
  %v5708 = vld [vmem:[%s5643 + $0x200] sm:$0xff]
  %v5709 = vld [vmem:[%s5643 + $0x208] sm:$0xff]
  %v5710 = vld [vmem:[%s5643 + $0x210] sm:$0xff]
  %v5711 = vld [vmem:[%s5643 + $0x218] sm:$0xff]
  %v5712 = vld [vmem:[%s5643 + $0x220] sm:$0xff]
  %v5713 = vld [vmem:[%s5643 + $0x228] sm:$0xff]
  %v5714 = vld [vmem:[%s5643 + $0x230] sm:$0xff]
  %v5715 = vld [vmem:[%s5643 + $0x238] sm:$0xff]
  %v5716 = vld [vmem:[%s1 + $0x5] ss:$0 sm:$0xff]
  %vm5717 = vcmask 521216
  %5718 = vst.msk [vmem:[#allocation2] sm:$0x3f] %vm5717, 0.0
  %5719 = vst.msk [vmem:[#allocation2 + $0xa0] sm:$0x3f] %vm5717, 0.0
  %s5720 = scalar_lea.vmem [#allocation2], 80
  %5721 = vst.msk [vmem:[%s5720] sm:$0x3f] %vm5717, 0.0
  %5722 = vst.msk [vmem:[%s5720 + $0xa0] sm:$0x3f] %vm5717, 0.0
  %5723 = vst.msk [vmem:[%s1440] sm:$0x1] %vm1441, 0.0
  %5724 = vst.msk [vmem:[%s1440 + $0x10] sm:$0x1] %vm1441, 0.0
  %5725 = vst.msk [vmem:[%s1440 + $0x20] sm:$0x1] %vm1441, 0.0
  %5726 = vst.msk [vmem:[%s1440 + $0x30] sm:$0x1] %vm1441, 0.0
  %5727 = vst.msk [vmem:[%s1440 + $0xa0] sm:$0x1] %vm1441, 0.0
  %5728 = vst.msk [vmem:[%s1440 + $0xb0] sm:$0x1] %vm1441, 0.0
  %5729 = vst.msk [vmem:[%s1440 + $0xc0] sm:$0x1] %vm1441, 0.0
  %5730 = vst.msk [vmem:[%s1440 + $0xd0] sm:$0x1] %vm1441, 0.0
  %5731 = vst.msk [vmem:[%s1440 + $0x5] sm:$0x1] %vm1441, 0.0
  %5732 = vst.msk [vmem:[%s1440 + $0x15] sm:$0x1] %vm1441, 0.0
  %5733 = vst.msk [vmem:[%s1440 + $0x25] sm:$0x1] %vm1441, 0.0
  %5734 = vst.msk [vmem:[%s1440 + $0x35] sm:$0x1] %vm1441, 0.0
  %5735 = vst.msk [vmem:[%s1440 + $0xa5] sm:$0x1] %vm1441, 0.0
  %5736 = vst.msk [vmem:[%s1440 + $0xb5] sm:$0x1] %vm1441, 0.0
  %5737 = vst.msk [vmem:[%s1440 + $0xc5] sm:$0x1] %vm1441, 0.0
  %5738 = vst.msk [vmem:[%s1440 + $0xd5] sm:$0x1] %vm1441, 0.0
  %v5743 = vcombine.high %v5565, %v5565
  %v5744 = vcombine.high %v5566, %v5566
  %v5745 = vcombine.high %v5567, %v5567
  %v5746 = vcombine.high %v5568, %v5568
  %5751 = vst.msk [vmem:[%s1440 + $0x1] sm:$0xf] %vm4423, %v5565
  %5752 = vst.msk [vmem:[%s1440 + $0x11] sm:$0xf] %vm4423, %v5743
  %5753 = vst.msk [vmem:[%s1440 + $0x21] sm:$0xf] %vm4423, %v5566
  %5754 = vst.msk [vmem:[%s1440 + $0x31] sm:$0xf] %vm4423, %v5744
  %5755 = vst.msk [vmem:[%s1440 + $0xa1] sm:$0xf] %vm4423, %v5567
  %5756 = vst.msk [vmem:[%s1440 + $0xb1] sm:$0xf] %vm4423, %v5745
  %5757 = vst.msk [vmem:[%s1440 + $0xc1] sm:$0xf] %vm4423, %v5568
  %5758 = vst.msk [vmem:[%s1440 + $0xd1] sm:$0xf] %vm4423, %v5746
  %v5759 = vld [vmem:[#allocation2] sm:$0xf]
  %v5760 = vld [vmem:[#allocation2 + $0x10] sm:$0xf]
  %v5761 = vld [vmem:[#allocation2 + $0x20] sm:$0xf]
  %v5762 = vld [vmem:[#allocation2 + $0x30] sm:$0xf]
  %v5763 = vld [vmem:[#allocation2 + $0xa0] sm:$0xf]
  %v5764 = vld [vmem:[#allocation2 + $0xb0] sm:$0xf]
  %v5765 = vld [vmem:[#allocation2 + $0xc0] sm:$0xf]
  %v5766 = vld [vmem:[#allocation2 + $0xd0] sm:$0xf]
  %v5775 = vcombine.low %v5759, %v5760
  %v5776 = vcombine.low %v5761, %v5762
  %v5777 = vcombine.low %v5763, %v5764
  %v5778 = vcombine.low %v5765, %v5766
  %5783 = vst.msk [vmem:[#allocation4] sm:$0xff] %vm1429, %v5775
  %5784 = vst.msk [vmem:[#allocation4 + $0x28] sm:$0xff] %vm1429, %v5776
  %5785 = vst.msk [vmem:[#allocation4 + $0x50] sm:$0xff] %vm1429, %v5777
  %5786 = vst.msk [vmem:[#allocation4 + $0x78] sm:$0xff] %vm1429, %v5778
  %v5787 = vld [vmem:[#allocation2 + $0x1] sm:$0xf]
  %v5788 = vld [vmem:[#allocation2 + $0x11] sm:$0xf]
  %v5789 = vld [vmem:[#allocation2 + $0x21] sm:$0xf]
  %v5790 = vld [vmem:[#allocation2 + $0x31] sm:$0xf]
  %v5791 = vld [vmem:[#allocation2 + $0xa1] sm:$0xf]
  %v5792 = vld [vmem:[#allocation2 + $0xb1] sm:$0xf]
  %v5793 = vld [vmem:[#allocation2 + $0xc1] sm:$0xf]
  %v5794 = vld [vmem:[#allocation2 + $0xd1] sm:$0xf]
  %v5803 = vcombine.low %v5787, %v5788
  %v5804 = vcombine.low %v5789, %v5790
  %v5805 = vcombine.low %v5791, %v5792
  %v5806 = vcombine.low %v5793, %v5794
  %5807 = vrot.lane.b32.xlu0 %v5803, 64
  %v5808 = vpop.permute.xlu0 %5807
  %5809 = vrot.lane.b32.xlu0 %v5804, 64
  %v5810 = vpop.permute.xlu0 %5809
  %5811 = vrot.lane.b32.xlu0 %v5805, 64
  %v5812 = vpop.permute.xlu0 %5811
  %5813 = vrot.lane.b32.xlu0 %v5806, 64
  %v5814 = vpop.permute.xlu0 %5813
  %5819 = vst.msk [vmem:[#allocation4] sm:$0xff] %vm1602, %v5808
  %5820 = vst.msk [vmem:[#allocation4 + $0x28] sm:$0xff] %vm1602, %v5810
  %5821 = vst.msk [vmem:[#allocation4 + $0x50] sm:$0xff] %vm1602, %v5812
  %5822 = vst.msk [vmem:[#allocation4 + $0x78] sm:$0xff] %vm1602, %v5814
  %v5823 = vld [vmem:[#allocation2 + $0x2] sm:$0xf]
  %v5824 = vld [vmem:[#allocation2 + $0x12] sm:$0xf]
  %v5825 = vld [vmem:[#allocation2 + $0x22] sm:$0xf]
  %v5826 = vld [vmem:[#allocation2 + $0x32] sm:$0xf]
  %v5827 = vld [vmem:[#allocation2 + $0xa2] sm:$0xf]
  %v5828 = vld [vmem:[#allocation2 + $0xb2] sm:$0xf]
  %v5829 = vld [vmem:[#allocation2 + $0xc2] sm:$0xf]
  %v5830 = vld [vmem:[#allocation2 + $0xd2] sm:$0xf]
  %v5839 = vcombine.low %v5823, %v5824
  %v5840 = vcombine.low %v5825, %v5826
  %v5841 = vcombine.low %v5827, %v5828
  %v5842 = vcombine.low %v5829, %v5830
  %5847 = vst.msk [vmem:[#allocation4 + $0x8] sm:$0xff] %vm1429, %v5839
  %5848 = vst.msk [vmem:[#allocation4 + $0x30] sm:$0xff] %vm1429, %v5840
  %5849 = vst.msk [vmem:[#allocation4 + $0x58] sm:$0xff] %vm1429, %v5841
  %5850 = vst.msk [vmem:[#allocation4 + $0x80] sm:$0xff] %vm1429, %v5842
  %v5851 = vld [vmem:[%s1440] sm:$0xf]
  %v5852 = vld [vmem:[%s1440 + $0x10] sm:$0xf]
  %v5853 = vld [vmem:[%s1440 + $0x20] sm:$0xf]
  %v5854 = vld [vmem:[%s1440 + $0x30] sm:$0xf]
  %v5855 = vld [vmem:[%s1440 + $0xa0] sm:$0xf]
  %v5856 = vld [vmem:[%s1440 + $0xb0] sm:$0xf]
  %v5857 = vld [vmem:[%s1440 + $0xc0] sm:$0xf]
  %v5858 = vld [vmem:[%s1440 + $0xd0] sm:$0xf]
  %v5867 = vcombine.low %v5851, %v5852
  %v5868 = vcombine.low %v5853, %v5854
  %v5869 = vcombine.low %v5855, %v5856
  %v5870 = vcombine.low %v5857, %v5858
  %5871 = vrot.lane.b32.xlu0 %v5867, 64
  %v5872 = vpop.permute.xlu0 %5871
  %5873 = vrot.lane.b32.xlu0 %v5868, 64
  %v5874 = vpop.permute.xlu0 %5873
  %5875 = vrot.lane.b32.xlu0 %v5869, 64
  %v5876 = vpop.permute.xlu0 %5875
  %5877 = vrot.lane.b32.xlu0 %v5870, 64
  %v5878 = vpop.permute.xlu0 %5877
  %5883 = vst.msk [vmem:[#allocation4 + $0x8] sm:$0xff] %vm1602, %v5872
  %5884 = vst.msk [vmem:[#allocation4 + $0x30] sm:$0xff] %vm1602, %v5874
  %5885 = vst.msk [vmem:[#allocation4 + $0x58] sm:$0xff] %vm1602, %v5876
  %5886 = vst.msk [vmem:[#allocation4 + $0x80] sm:$0xff] %vm1602, %v5878
  %v5887 = vld [vmem:[%s1440 + $0x1] sm:$0xf]
  %v5888 = vld [vmem:[%s1440 + $0x11] sm:$0xf]
  %v5889 = vld [vmem:[%s1440 + $0x21] sm:$0xf]
  %v5890 = vld [vmem:[%s1440 + $0x31] sm:$0xf]
  %v5891 = vld [vmem:[%s1440 + $0xa1] sm:$0xf]
  %v5892 = vld [vmem:[%s1440 + $0xb1] sm:$0xf]
  %v5893 = vld [vmem:[%s1440 + $0xc1] sm:$0xf]
  %v5894 = vld [vmem:[%s1440 + $0xd1] sm:$0xf]
  %v5903 = vcombine.low %v5887, %v5888
  %v5904 = vcombine.low %v5889, %v5890
  %v5905 = vcombine.low %v5891, %v5892
  %v5906 = vcombine.low %v5893, %v5894
  %5911 = vst.msk [vmem:[#allocation4 + $0x10] sm:$0xff] %vm1429, %v5903
  %5912 = vst.msk [vmem:[#allocation4 + $0x38] sm:$0xff] %vm1429, %v5904
  %5913 = vst.msk [vmem:[#allocation4 + $0x60] sm:$0xff] %vm1429, %v5905
  %5914 = vst.msk [vmem:[#allocation4 + $0x88] sm:$0xff] %vm1429, %v5906
  %v5915 = vld [vmem:[%s1440 + $0x2] sm:$0xf]
  %v5916 = vld [vmem:[%s1440 + $0x12] sm:$0xf]
  %v5917 = vld [vmem:[%s1440 + $0x22] sm:$0xf]
  %v5918 = vld [vmem:[%s1440 + $0x32] sm:$0xf]
  %v5919 = vld [vmem:[%s1440 + $0xa2] sm:$0xf]
  %v5920 = vld [vmem:[%s1440 + $0xb2] sm:$0xf]
  %v5921 = vld [vmem:[%s1440 + $0xc2] sm:$0xf]
  %v5922 = vld [vmem:[%s1440 + $0xd2] sm:$0xf]
  %v5931 = vcombine.low %v5915, %v5916
  %v5932 = vcombine.low %v5917, %v5918
  %v5933 = vcombine.low %v5919, %v5920
  %v5934 = vcombine.low %v5921, %v5922
  %5935 = vrot.lane.b32.xlu0 %v5931, 64
  %v5936 = vpop.permute.xlu0 %5935
  %5937 = vrot.lane.b32.xlu0 %v5932, 64
  %v5938 = vpop.permute.xlu0 %5937
  %5939 = vrot.lane.b32.xlu0 %v5933, 64
  %v5940 = vpop.permute.xlu0 %5939
  %5941 = vrot.lane.b32.xlu0 %v5934, 64
  %v5942 = vpop.permute.xlu0 %5941
  %5947 = vst.msk [vmem:[#allocation4 + $0x10] sm:$0xff] %vm1602, %v5936
  %5948 = vst.msk [vmem:[#allocation4 + $0x38] sm:$0xff] %vm1602, %v5938
  %5949 = vst.msk [vmem:[#allocation4 + $0x60] sm:$0xff] %vm1602, %v5940
  %5950 = vst.msk [vmem:[#allocation4 + $0x88] sm:$0xff] %vm1602, %v5942
  %v5951 = vld [vmem:[%s1875] sm:$0xf]
  %v5952 = vld [vmem:[%s1875 + $0x10] sm:$0xf]
  %v5953 = vld [vmem:[%s1875 + $0x20] sm:$0xf]
  %v5954 = vld [vmem:[%s1875 + $0x30] sm:$0xf]
  %v5955 = vld [vmem:[%s1875 + $0xa0] sm:$0xf]
  %v5956 = vld [vmem:[%s1875 + $0xb0] sm:$0xf]
  %v5957 = vld [vmem:[%s1875 + $0xc0] sm:$0xf]
  %v5958 = vld [vmem:[%s1875 + $0xd0] sm:$0xf]
  %v5967 = vcombine.low %v5951, %v5952
  %v5968 = vcombine.low %v5953, %v5954
  %v5969 = vcombine.low %v5955, %v5956
  %v5970 = vcombine.low %v5957, %v5958
  %5975 = vst.msk [vmem:[#allocation4 + $0x18] sm:$0xff] %vm1429, %v5967
  %5976 = vst.msk [vmem:[#allocation4 + $0x40] sm:$0xff] %vm1429, %v5968
  %5977 = vst.msk [vmem:[#allocation4 + $0x68] sm:$0xff] %vm1429, %v5969
  %5978 = vst.msk [vmem:[#allocation4 + $0x90] sm:$0xff] %vm1429, %v5970
  %v5979 = vld [vmem:[%s1875 + $0x1] sm:$0xf]
  %v5980 = vld [vmem:[%s1875 + $0x11] sm:$0xf]
  %v5981 = vld [vmem:[%s1875 + $0x21] sm:$0xf]
  %v5982 = vld [vmem:[%s1875 + $0x31] sm:$0xf]
  %v5983 = vld [vmem:[%s1875 + $0xa1] sm:$0xf]
  %v5984 = vld [vmem:[%s1875 + $0xb1] sm:$0xf]
  %v5985 = vld [vmem:[%s1875 + $0xc1] sm:$0xf]
  %v5986 = vld [vmem:[%s1875 + $0xd1] sm:$0xf]
  %v5995 = vcombine.low %v5979, %v5980
  %v5996 = vcombine.low %v5981, %v5982
  %v5997 = vcombine.low %v5983, %v5984
  %v5998 = vcombine.low %v5985, %v5986
  %5999 = vrot.lane.b32.xlu0 %v5995, 64
  %v6000 = vpop.permute.xlu0 %5999
  %6001 = vrot.lane.b32.xlu0 %v5996, 64
  %v6002 = vpop.permute.xlu0 %6001
  %6003 = vrot.lane.b32.xlu0 %v5997, 64
  %v6004 = vpop.permute.xlu0 %6003
  %6005 = vrot.lane.b32.xlu0 %v5998, 64
  %v6006 = vpop.permute.xlu0 %6005
  %6011 = vst.msk [vmem:[#allocation4 + $0x18] sm:$0xff] %vm1602, %v6000
  %6012 = vst.msk [vmem:[#allocation4 + $0x40] sm:$0xff] %vm1602, %v6002
  %6013 = vst.msk [vmem:[#allocation4 + $0x68] sm:$0xff] %vm1602, %v6004
  %6014 = vst.msk [vmem:[#allocation4 + $0x90] sm:$0xff] %vm1602, %v6006
  %v6015 = vld [vmem:[%s1875 + $0x2] sm:$0xf]
  %v6016 = vld [vmem:[%s1875 + $0x12] sm:$0xf]
  %v6017 = vld [vmem:[%s1875 + $0x22] sm:$0xf]
  %v6018 = vld [vmem:[%s1875 + $0x32] sm:$0xf]
  %v6019 = vld [vmem:[%s1875 + $0xa2] sm:$0xf]
  %v6020 = vld [vmem:[%s1875 + $0xb2] sm:$0xf]
  %v6021 = vld [vmem:[%s1875 + $0xc2] sm:$0xf]
  %v6022 = vld [vmem:[%s1875 + $0xd2] sm:$0xf]
  %v6031 = vcombine.low %v6015, %v6016
  %v6032 = vcombine.low %v6017, %v6018
  %v6033 = vcombine.low %v6019, %v6020
  %v6034 = vcombine.low %v6021, %v6022
  %6039 = vst.msk [vmem:[#allocation4 + $0x20] sm:$0xff] %vm1429, %v6031
  %6040 = vst.msk [vmem:[#allocation4 + $0x48] sm:$0xff] %vm1429, %v6032
  %6041 = vst.msk [vmem:[#allocation4 + $0x70] sm:$0xff] %vm1429, %v6033
  %6042 = vst.msk [vmem:[#allocation4 + $0x98] sm:$0xff] %vm1429, %v6034
  %v6043 = vld [vmem:[#allocation4] sm:$0xff]
  %v6044 = vld [vmem:[#allocation4 + $0x8] sm:$0xff]
  %v6045 = vld [vmem:[#allocation4 + $0x10] sm:$0xff]
  %v6046 = vld [vmem:[#allocation4 + $0x18] sm:$0xff]
  %v6047 = vld [vmem:[#allocation4 + $0x20] sm:$0xff]
  %v6048 = vld [vmem:[#allocation4 + $0x28] sm:$0xff]
  %v6049 = vld [vmem:[#allocation4 + $0x30] sm:$0xff]
  %v6050 = vld [vmem:[#allocation4 + $0x38] sm:$0xff]
  %v6051 = vld [vmem:[#allocation4 + $0x40] sm:$0xff]
  %v6052 = vld [vmem:[#allocation4 + $0x48] sm:$0xff]
  %v6053 = vld [vmem:[#allocation4 + $0x50] sm:$0xff]
  %v6054 = vld [vmem:[#allocation4 + $0x58] sm:$0xff]
  %v6055 = vld [vmem:[#allocation4 + $0x60] sm:$0xff]
  %v6056 = vld [vmem:[#allocation4 + $0x68] sm:$0xff]
  %v6057 = vld [vmem:[#allocation4 + $0x70] sm:$0xff]
  %v6058 = vld [vmem:[#allocation4 + $0x78] sm:$0xff]
  %v6059 = vld [vmem:[#allocation4 + $0x80] sm:$0xff]
  %v6060 = vld [vmem:[#allocation4 + $0x88] sm:$0xff]
  %v6061 = vld [vmem:[#allocation4 + $0x90] sm:$0xff]
  %v6062 = vld [vmem:[#allocation4 + $0x98] sm:$0xff]
  %v6064 = vsel %vm1429, %v6047, 0
  %v6067 = vsel %vm1429, %v6052, 0
  %v6070 = vsel %vm1429, %v6057, 0
  %v6073 = vsel %vm1429, %v6062, 0
  %6075 = vmatprep.subr.mxu0 0.0
  %6076 = vmatpush1.msra.mxu0 %v5570
  %6077 = vmatprep.subr.mxu0 0.0
  %6078 = vmatpush1.msra.mxu0 %v5571
  %6079 = vmatprep.subr.mxu0 0.0
  %6080 = vmatpush1.msra.mxu0 %v5572
  %6081 = vmatprep.subr.mxu0 0.0
  %6082 = vmatpush1.msra.mxu0 %v5573
  %6083 = vmatprep.subr.mxu0 0.0
  %6084 = vmatpush1.msra.mxu0 %v5574
  %6085 = vmatprep.subr.mxu0 0.0
  %6086 = vmatpush1.msra.mxu0 %v5575
  %6087 = vmatprep.subr.mxu0 0.0
  %6088 = vmatpush1.msra.mxu0 %v5576
  %6089 = vmatprep.subr.mxu0 0.0
  %6090 = vmatpush1.msra.mxu0 %v5577
  %6091 = vmatprep.subr.mxu0 0.0
  %6092 = vmatpush1.msra.mxu0 %v5578
  %6093 = vmatprep.subr.mxu0 0.0
  %6094 = vmatpush1.msra.mxu0 %v5579
  %6095 = vmatprep.subr.mxu0 0.0
  %6096 = vmatpush1.msra.mxu0 %v5580
  %6097 = vmatprep.subr.mxu0 0.0
  %6098 = vmatpush1.msra.mxu0 %v5581
  %6099 = vmatprep.subr.mxu0 0.0
  %6100 = vmatpush1.msra.mxu0 %v5582
  %6101 = vmatprep.subr.mxu0 0.0
  %6102 = vmatpush1.msra.mxu0 %v5583
  %6103 = vmatprep.subr.mxu0 0.0
  %6104 = vmatpush1.msra.mxu0 %v5584
  %6105 = vmatprep.subr.mxu0 0.0
  %6106 = vmatpush1.msra.mxu0 %v5585
  %6107 = vmatprep.subr.mxu0 0.0
  %6108 = vmatpush1.msra.mxu0 %v5586
  %6109 = vmatprep.subr.mxu0 0.0
  %6110 = vmatpush1.msra.mxu0 %v5587
  %6111 = vmatprep.subr.mxu0 0.0
  %6112 = vmatpush1.msra.mxu0 %v5588
  %6113 = vmatprep.subr.mxu0 0.0
  %6114 = vmatpush1.msra.mxu0 %v5589
  %6115 = vmatprep.subr.mxu0 0.0
  %6116 = vmatpush1.msra.mxu0 %v5590
  %6117 = vmatprep.subr.mxu0 0.0
  %6118 = vmatpush1.msra.mxu0 %v5591
  %6119 = vmatprep.subr.mxu0 0.0
  %6120 = vmatpush1.msra.mxu0 %v5592
  %6121 = vmatprep.subr.mxu0 0.0
  %6122 = vmatpush1.msra.mxu0 %v5593
  %6123 = vmatprep.subr.mxu0 0.0
  %6124 = vmatpush1.msra.mxu0 %v5594
  %6125 = vmatprep.subr.mxu0 0.0
  %6126 = vmatpush1.msra.mxu0 %v5595
  %6127 = vmatprep.subr.mxu0 0.0
  %6128 = vmatpush1.msra.mxu0 %v5596
  %6129 = vmatprep.subr.mxu0 0.0
  %6130 = vmatpush1.msra.mxu0 %v5597
  %6131 = vmatprep.subr.mxu0 0.0
  %6132 = vmatpush1.msra.mxu0 %v5598
  %6133 = vmatprep.subr.mxu0 0.0
  %6134 = vmatpush1.msra.mxu0 %v5599
  %6135 = vmatprep.subr.mxu0 0.0
  %6136 = vmatpush1.msra.mxu0 %v5600
  %6137 = vmatprep.subr.mxu0 0.0
  %6138 = vmatpush1.msra.mxu0 %v5601
  %6139 = vmatprep.mubr.f32.mxu0 %v6044
  %6140 = vmatmul.mubr.f32.gmra.mrb[0].mxu0 %v6043
  %v6141 = vpop.f32.mrb[0].mxu0
  %v6142 = vadd.f32 %v5642, %v6141
  %v6143 = vpop.f32.mrb[0].mxu0
  %6144 = vmatprep.mubr.f32.mxu0 %v6049
  %6145 = vmatmul.mubr.f32.gmra.mrb[0].mxu0 %v6048
  %v6146 = vpop.f32.mrb[0].mxu0
  %v6147 = vadd.f32 %v5642, %v6146
  %v6148 = vpop.f32.mrb[0].mxu0
  %6149 = vmatprep.mubr.f32.mxu0 %v6054
  %6150 = vmatmul.mubr.f32.gmra.mrb[0].mxu0 %v6053
  %v6151 = vpop.f32.mrb[0].mxu0
  %v6152 = vadd.f32 %v5642, %v6151
  %v6153 = vpop.f32.mrb[0].mxu0
  %6154 = vmatprep.mubr.f32.mxu0 %v6059
  %6155 = vmatmul.mubr.f32.gmra.mrb[0].mxu0 %v6058
  %v6156 = vpop.f32.mrb[0].mxu0
  %v6157 = vadd.f32 %v5642, %v6156
  %v6158 = vpop.f32.mrb[0].mxu0
  %6159 = vdwg.mxu0
  %6160 = vmatprep.subr.mxu0 0.0
  %6161 = vmatpush1.msra.mxu0 %v5602
  %6162 = vmatprep.subr.mxu0 0.0
  %6163 = vmatpush1.msra.mxu0 %v5603
  %6164 = vmatprep.subr.mxu0 0.0
  %6165 = vmatpush1.msra.mxu0 %v5604
  %6166 = vmatprep.subr.mxu0 0.0
  %6167 = vmatpush1.msra.mxu0 %v5605
  %6168 = vmatprep.subr.mxu0 0.0
  %6169 = vmatpush1.msra.mxu0 %v5606
  %6170 = vmatprep.subr.mxu0 0.0
  %6171 = vmatpush1.msra.mxu0 %v5607
  %6172 = vmatprep.subr.mxu0 0.0
  %6173 = vmatpush1.msra.mxu0 %v5608
  %6174 = vmatprep.subr.mxu0 0.0
  %6175 = vmatpush1.msra.mxu0 %v5609
  %6176 = vmatprep.subr.mxu0 0.0
  %6177 = vmatpush1.msra.mxu0 %v5610
  %6178 = vmatprep.subr.mxu0 0.0
  %6179 = vmatpush1.msra.mxu0 %v5611
  %6180 = vmatprep.subr.mxu0 0.0
  %6181 = vmatpush1.msra.mxu0 %v5612
  %6182 = vmatprep.subr.mxu0 0.0
  %6183 = vmatpush1.msra.mxu0 %v5613
  %6184 = vmatprep.subr.mxu0 0.0
  %6185 = vmatpush1.msra.mxu0 %v5614
  %6186 = vmatprep.subr.mxu0 0.0
  %6187 = vmatpush1.msra.mxu0 %v5615
  %6188 = vmatprep.subr.mxu0 0.0
  %6189 = vmatpush1.msra.mxu0 %v5616
  %6190 = vmatprep.subr.mxu0 0.0
  %6191 = vmatpush1.msra.mxu0 %v5617
  %6192 = vmatprep.subr.mxu0 0.0
  %6193 = vmatpush1.msra.mxu0 %v5618
  %6194 = vmatprep.subr.mxu0 0.0
  %6195 = vmatpush1.msra.mxu0 %v5619
  %6196 = vmatprep.subr.mxu0 0.0
  %6197 = vmatpush1.msra.mxu0 %v5620
  %6198 = vmatprep.subr.mxu0 0.0
  %6199 = vmatpush1.msra.mxu0 %v5621
  %6200 = vmatprep.subr.mxu0 0.0
  %6201 = vmatpush1.msra.mxu0 %v5622
  %6202 = vmatprep.subr.mxu0 0.0
  %6203 = vmatpush1.msra.mxu0 %v5623
  %6204 = vmatprep.subr.mxu0 0.0
  %6205 = vmatpush1.msra.mxu0 %v5624
  %6206 = vmatprep.subr.mxu0 0.0
  %6207 = vmatpush1.msra.mxu0 %v5625
  %6208 = vmatprep.subr.mxu0 0.0
  %6209 = vmatpush1.msra.mxu0 %v5626
  %6210 = vmatprep.subr.mxu0 0.0
  %6211 = vmatpush1.msra.mxu0 %v5627
  %6212 = vmatprep.subr.mxu0 0.0
  %6213 = vmatpush1.msra.mxu0 %v5628
  %6214 = vmatprep.subr.mxu0 0.0
  %6215 = vmatpush1.msra.mxu0 %v5629
  %6216 = vmatprep.subr.mxu0 0.0
  %6217 = vmatpush1.msra.mxu0 %v5630
  %6218 = vmatprep.subr.mxu0 0.0
  %6219 = vmatpush1.msra.mxu0 %v5631
  %6220 = vmatprep.subr.mxu0 0.0
  %6221 = vmatpush1.msra.mxu0 %v5632
  %6222 = vmatprep.subr.mxu0 0.0
  %6223 = vmatpush1.msra.mxu0 %v5633
  %6224 = vmatprep.mubr.f32.mxu0 %v6046
  %6225 = vmatmul.mubr.f32.gmra.mrb[0].mxu0 %v6045
  %v6226 = vpop.f32.mrb[0].mxu0
  %v6227 = vadd.f32 %v6142, %v6226
  %v6228 = vpop.f32.mrb[0].mxu0
  %6229 = vmatprep.mubr.f32.mxu0 %v6051
  %6230 = vmatmul.mubr.f32.gmra.mrb[0].mxu0 %v6050
  %v6231 = vpop.f32.mrb[0].mxu0
  %v6232 = vadd.f32 %v6147, %v6231
  %v6233 = vpop.f32.mrb[0].mxu0
  %6234 = vmatprep.mubr.f32.mxu0 %v6056
  %6235 = vmatmul.mubr.f32.gmra.mrb[0].mxu0 %v6055
  %v6236 = vpop.f32.mrb[0].mxu0
  %v6237 = vadd.f32 %v6152, %v6236
  %v6238 = vpop.f32.mrb[0].mxu0
  %6239 = vmatprep.mubr.f32.mxu0 %v6061
  %6240 = vmatmul.mubr.f32.gmra.mrb[0].mxu0 %v6060
  %v6241 = vpop.f32.mrb[0].mxu0
  %v6242 = vadd.f32 %v6157, %v6241
  %v6243 = vpop.f32.mrb[0].mxu0
  %6244 = vdwg.mxu0
  %6245 = vmatprep.subr.mxu0 0.0
  %6246 = vmatpush1.msra.mxu0 %v5634
  %6247 = vmatprep.subr.mxu0 0.0
  %6248 = vmatpush1.msra.mxu0 %v5635
  %6249 = vmatprep.subr.mxu0 0.0
  %6250 = vmatpush1.msra.mxu0 %v5636
  %6251 = vmatprep.subr.mxu0 0.0
  %6252 = vmatpush1.msra.mxu0 %v5637
  %6253 = vmatprep.subr.mxu0 0.0
  %6254 = vmatpush1.msra.mxu0 %v5638
  %6255 = vmatprep.subr.mxu0 0.0
  %6256 = vmatpush1.msra.mxu0 %v5639
  %6257 = vmatprep.subr.mxu0 0.0
  %6258 = vmatpush1.msra.mxu0 %v5640
  %6259 = vmatprep.subr.mxu0 0.0
  %6260 = vmatpush1.msra.mxu0 %v5641
  %6261 = vmatprep.subr.mxu0 0.0
  %6262 = vmatpush1.msra.mxu0 0.0
  %6263 = vmatprep.subr.mxu0 0.0
  %6264 = vmatpush1.msra.mxu0 0.0
  %6265 = vmatprep.subr.mxu0 0.0
  %6266 = vmatpush1.msra.mxu0 0.0
  %6267 = vmatprep.subr.mxu0 0.0
  %6268 = vmatpush1.msra.mxu0 0.0
  %6269 = vmatprep.subr.mxu0 0.0
  %6270 = vmatpush1.msra.mxu0 0.0
  %6271 = vmatprep.subr.mxu0 0.0
  %6272 = vmatpush1.msra.mxu0 0.0
  %6273 = vmatprep.subr.mxu0 0.0
  %6274 = vmatpush1.msra.mxu0 0.0
  %6275 = vmatprep.subr.mxu0 0.0
  %6276 = vmatpush1.msra.mxu0 0.0
  %6277 = vmatprep.subr.mxu0 0.0
  %6278 = vmatpush1.msra.mxu0 0.0
  %6279 = vmatprep.subr.mxu0 0.0
  %6280 = vmatpush1.msra.mxu0 0.0
  %6281 = vmatprep.subr.mxu0 0.0
  %6282 = vmatpush1.msra.mxu0 0.0
  %6283 = vmatprep.subr.mxu0 0.0
  %6284 = vmatpush1.msra.mxu0 0.0
  %6285 = vmatprep.subr.mxu0 0.0
  %6286 = vmatpush1.msra.mxu0 0.0
  %6287 = vmatprep.subr.mxu0 0.0
  %6288 = vmatpush1.msra.mxu0 0.0
  %6289 = vmatprep.subr.mxu0 0.0
  %6290 = vmatpush1.msra.mxu0 0.0
  %6291 = vmatprep.subr.mxu0 0.0
  %6292 = vmatpush1.msra.mxu0 0.0
  %6293 = vmatprep.subr.mxu0 0.0
  %6294 = vmatpush1.msra.mxu0 0.0
  %6295 = vmatprep.subr.mxu0 0.0
  %6296 = vmatpush1.msra.mxu0 0.0
  %6297 = vmatprep.subr.mxu0 0.0
  %6298 = vmatpush1.msra.mxu0 0.0
  %6299 = vmatprep.subr.mxu0 0.0
  %6300 = vmatpush1.msra.mxu0 0.0
  %6301 = vmatprep.subr.mxu0 0.0
  %6302 = vmatpush1.msra.mxu0 0.0
  %6303 = vmatprep.subr.mxu0 0.0
  %6304 = vmatpush1.msra.mxu0 0.0
  %6305 = vmatprep.subr.mxu0 0.0
  %6306 = vmatpush1.msra.mxu0 0.0
  %6307 = vmatprep.subr.mxu0 0.0
  %6308 = vmatpush1.msra.mxu0 0.0
  %6309 = vmatprep.mubr.f32.mxu0 0.0
  %6310 = vmatmul.mubr.f32.gmra.mrb[0].mxu0 %v6064
  %v6311 = vpop.f32.mrb[0].mxu0
  %v6312 = vadd.f32 %v6227, %v6311
  %v6313 = vpop.f32.mrb[0].mxu0
  %6314 = vmatprep.mubr.f32.mxu0 0.0
  %6315 = vmatmul.mubr.f32.gmra.mrb[0].mxu0 %v6067
  %v6316 = vpop.f32.mrb[0].mxu0
  %v6317 = vadd.f32 %v6232, %v6316
  %v6318 = vpop.f32.mrb[0].mxu0
  %6319 = vmatprep.mubr.f32.mxu0 0.0
  %6320 = vmatmul.mubr.f32.gmra.mrb[0].mxu0 %v6070
  %v6321 = vpop.f32.mrb[0].mxu0
  %v6322 = vadd.f32 %v6237, %v6321
  %v6323 = vpop.f32.mrb[0].mxu0
  %6324 = vmatprep.mubr.f32.mxu0 0.0
  %6325 = vmatmul.mubr.f32.gmra.mrb[0].mxu0 %v6073
  %v6326 = vpop.f32.mrb[0].mxu0
  %v6327 = vadd.f32 %v6242, %v6326
  %v6328 = vpop.f32.mrb[0].mxu0
  %6329 = vdwg.mxu0
  %vm6330 = vcmp.ge.f32.partialorder %v6312, 0.0
  %vm6331 = vcmp.ge.f32.partialorder %v6317, 0.0
  %vm6332 = vcmp.ge.f32.partialorder %v6322, 0.0
  %vm6333 = vcmp.ge.f32.partialorder %v6327, 0.0
  %v6334 = vmul.f32 %v6312, 0.01
  %v6335 = vmul.f32 %v6317, 0.01
  %v6336 = vmul.f32 %v6322, 0.01
  %v6337 = vmul.f32 %v6327, 0.01
  %v6338 = vsel %vm6330, %v6312, %v6334
  %v6339 = vsel %vm6331, %v6317, %v6335
  %v6340 = vsel %vm6332, %v6322, %v6336
  %v6341 = vsel %vm6333, %v6327, %v6337
  %6342 = vst.msk [vmem:[#allocation2] sm:$0x3f] %vm5717, 0.0
  %6343 = vst.msk [vmem:[#allocation2 + $0xa0] sm:$0x3f] %vm5717, 0.0
  %6344 = vst.msk [vmem:[%s5720] sm:$0x3f] %vm5717, 0.0
  %6345 = vst.msk [vmem:[%s5720 + $0xa0] sm:$0x3f] %vm5717, 0.0
  %6346 = vst.msk [vmem:[%s1440] sm:$0x1] %vm1441, 0.0
  %6347 = vst.msk [vmem:[%s1440 + $0x10] sm:$0x1] %vm1441, 0.0
  %6348 = vst.msk [vmem:[%s1440 + $0x20] sm:$0x1] %vm1441, 0.0
  %6349 = vst.msk [vmem:[%s1440 + $0x30] sm:$0x1] %vm1441, 0.0
  %6350 = vst.msk [vmem:[%s1440 + $0xa0] sm:$0x1] %vm1441, 0.0
  %6351 = vst.msk [vmem:[%s1440 + $0xb0] sm:$0x1] %vm1441, 0.0
  %6352 = vst.msk [vmem:[%s1440 + $0xc0] sm:$0x1] %vm1441, 0.0
  %6353 = vst.msk [vmem:[%s1440 + $0xd0] sm:$0x1] %vm1441, 0.0
  %6354 = vst.msk [vmem:[%s1440 + $0x5] sm:$0x1] %vm1441, 0.0
  %6355 = vst.msk [vmem:[%s1440 + $0x15] sm:$0x1] %vm1441, 0.0
  %6356 = vst.msk [vmem:[%s1440 + $0x25] sm:$0x1] %vm1441, 0.0
  %6357 = vst.msk [vmem:[%s1440 + $0x35] sm:$0x1] %vm1441, 0.0
  %6358 = vst.msk [vmem:[%s1440 + $0xa5] sm:$0x1] %vm1441, 0.0
  %6359 = vst.msk [vmem:[%s1440 + $0xb5] sm:$0x1] %vm1441, 0.0
  %6360 = vst.msk [vmem:[%s1440 + $0xc5] sm:$0x1] %vm1441, 0.0
  %6361 = vst.msk [vmem:[%s1440 + $0xd5] sm:$0x1] %vm1441, 0.0
  %v6366 = vcombine.high %v6338, %v6338
  %v6367 = vcombine.high %v6339, %v6339
  %v6368 = vcombine.high %v6340, %v6340
  %v6369 = vcombine.high %v6341, %v6341
  %6374 = vst.msk [vmem:[%s1440 + $0x1] sm:$0xf] %vm4423, %v6338
  %6375 = vst.msk [vmem:[%s1440 + $0x11] sm:$0xf] %vm4423, %v6366
  %6376 = vst.msk [vmem:[%s1440 + $0x21] sm:$0xf] %vm4423, %v6339
  %6377 = vst.msk [vmem:[%s1440 + $0x31] sm:$0xf] %vm4423, %v6367
  %6378 = vst.msk [vmem:[%s1440 + $0xa1] sm:$0xf] %vm4423, %v6340
  %6379 = vst.msk [vmem:[%s1440 + $0xb1] sm:$0xf] %vm4423, %v6368
  %6380 = vst.msk [vmem:[%s1440 + $0xc1] sm:$0xf] %vm4423, %v6341
  %6381 = vst.msk [vmem:[%s1440 + $0xd1] sm:$0xf] %vm4423, %v6369
  %v6382 = vld [vmem:[#allocation2] sm:$0xf]
  %v6383 = vld [vmem:[#allocation2 + $0x10] sm:$0xf]
  %v6384 = vld [vmem:[#allocation2 + $0x20] sm:$0xf]
  %v6385 = vld [vmem:[#allocation2 + $0x30] sm:$0xf]
  %v6386 = vld [vmem:[#allocation2 + $0xa0] sm:$0xf]
  %v6387 = vld [vmem:[#allocation2 + $0xb0] sm:$0xf]
  %v6388 = vld [vmem:[#allocation2 + $0xc0] sm:$0xf]
  %v6389 = vld [vmem:[#allocation2 + $0xd0] sm:$0xf]
  %v6398 = vcombine.low %v6382, %v6383
  %v6399 = vcombine.low %v6384, %v6385
  %v6400 = vcombine.low %v6386, %v6387
  %v6401 = vcombine.low %v6388, %v6389
  %6406 = vst.msk [vmem:[#allocation4] sm:$0xff] %vm1429, %v6398
  %6407 = vst.msk [vmem:[#allocation4 + $0x28] sm:$0xff] %vm1429, %v6399
  %6408 = vst.msk [vmem:[#allocation4 + $0x50] sm:$0xff] %vm1429, %v6400
  %6409 = vst.msk [vmem:[#allocation4 + $0x78] sm:$0xff] %vm1429, %v6401
  %v6410 = vld [vmem:[#allocation2 + $0x1] sm:$0xf]
  %v6411 = vld [vmem:[#allocation2 + $0x11] sm:$0xf]
  %v6412 = vld [vmem:[#allocation2 + $0x21] sm:$0xf]
  %v6413 = vld [vmem:[#allocation2 + $0x31] sm:$0xf]
  %v6414 = vld [vmem:[#allocation2 + $0xa1] sm:$0xf]
  %v6415 = vld [vmem:[#allocation2 + $0xb1] sm:$0xf]
  %v6416 = vld [vmem:[#allocation2 + $0xc1] sm:$0xf]
  %v6417 = vld [vmem:[#allocation2 + $0xd1] sm:$0xf]
  %v6426 = vcombine.low %v6410, %v6411
  %v6427 = vcombine.low %v6412, %v6413
  %v6428 = vcombine.low %v6414, %v6415
  %v6429 = vcombine.low %v6416, %v6417
  %6430 = vrot.lane.b32.xlu0 %v6426, 64
  %v6431 = vpop.permute.xlu0 %6430
  %6432 = vrot.lane.b32.xlu0 %v6427, 64
  %v6433 = vpop.permute.xlu0 %6432
  %6434 = vrot.lane.b32.xlu0 %v6428, 64
  %v6435 = vpop.permute.xlu0 %6434
  %6436 = vrot.lane.b32.xlu0 %v6429, 64
  %v6437 = vpop.permute.xlu0 %6436
  %6442 = vst.msk [vmem:[#allocation4] sm:$0xff] %vm1602, %v6431
  %6443 = vst.msk [vmem:[#allocation4 + $0x28] sm:$0xff] %vm1602, %v6433
  %6444 = vst.msk [vmem:[#allocation4 + $0x50] sm:$0xff] %vm1602, %v6435
  %6445 = vst.msk [vmem:[#allocation4 + $0x78] sm:$0xff] %vm1602, %v6437
  %v6446 = vld [vmem:[#allocation2 + $0x2] sm:$0xf]
  %v6447 = vld [vmem:[#allocation2 + $0x12] sm:$0xf]
  %v6448 = vld [vmem:[#allocation2 + $0x22] sm:$0xf]
  %v6449 = vld [vmem:[#allocation2 + $0x32] sm:$0xf]
  %v6450 = vld [vmem:[#allocation2 + $0xa2] sm:$0xf]
  %v6451 = vld [vmem:[#allocation2 + $0xb2] sm:$0xf]
  %v6452 = vld [vmem:[#allocation2 + $0xc2] sm:$0xf]
  %v6453 = vld [vmem:[#allocation2 + $0xd2] sm:$0xf]
  %v6462 = vcombine.low %v6446, %v6447
  %v6463 = vcombine.low %v6448, %v6449
  %v6464 = vcombine.low %v6450, %v6451
  %v6465 = vcombine.low %v6452, %v6453
  %6470 = vst.msk [vmem:[#allocation4 + $0x8] sm:$0xff] %vm1429, %v6462
  %6471 = vst.msk [vmem:[#allocation4 + $0x30] sm:$0xff] %vm1429, %v6463
  %6472 = vst.msk [vmem:[#allocation4 + $0x58] sm:$0xff] %vm1429, %v6464
  %6473 = vst.msk [vmem:[#allocation4 + $0x80] sm:$0xff] %vm1429, %v6465
  %v6474 = vld [vmem:[%s1440] sm:$0xf]
  %v6475 = vld [vmem:[%s1440 + $0x10] sm:$0xf]
  %v6476 = vld [vmem:[%s1440 + $0x20] sm:$0xf]
  %v6477 = vld [vmem:[%s1440 + $0x30] sm:$0xf]
  %v6478 = vld [vmem:[%s1440 + $0xa0] sm:$0xf]
  %v6479 = vld [vmem:[%s1440 + $0xb0] sm:$0xf]
  %v6480 = vld [vmem:[%s1440 + $0xc0] sm:$0xf]
  %v6481 = vld [vmem:[%s1440 + $0xd0] sm:$0xf]
  %v6490 = vcombine.low %v6474, %v6475
  %v6491 = vcombine.low %v6476, %v6477
  %v6492 = vcombine.low %v6478, %v6479
  %v6493 = vcombine.low %v6480, %v6481
  %6494 = vrot.lane.b32.xlu0 %v6490, 64
  %v6495 = vpop.permute.xlu0 %6494
  %6496 = vrot.lane.b32.xlu0 %v6491, 64
  %v6497 = vpop.permute.xlu0 %6496
  %6498 = vrot.lane.b32.xlu0 %v6492, 64
  %v6499 = vpop.permute.xlu0 %6498
  %6500 = vrot.lane.b32.xlu0 %v6493, 64
  %v6501 = vpop.permute.xlu0 %6500
  %6506 = vst.msk [vmem:[#allocation4 + $0x8] sm:$0xff] %vm1602, %v6495
  %6507 = vst.msk [vmem:[#allocation4 + $0x30] sm:$0xff] %vm1602, %v6497
  %6508 = vst.msk [vmem:[#allocation4 + $0x58] sm:$0xff] %vm1602, %v6499
  %6509 = vst.msk [vmem:[#allocation4 + $0x80] sm:$0xff] %vm1602, %v6501
  %v6510 = vld [vmem:[%s1440 + $0x1] sm:$0xf]
  %v6511 = vld [vmem:[%s1440 + $0x11] sm:$0xf]
  %v6512 = vld [vmem:[%s1440 + $0x21] sm:$0xf]
  %v6513 = vld [vmem:[%s1440 + $0x31] sm:$0xf]
  %v6514 = vld [vmem:[%s1440 + $0xa1] sm:$0xf]
  %v6515 = vld [vmem:[%s1440 + $0xb1] sm:$0xf]
  %v6516 = vld [vmem:[%s1440 + $0xc1] sm:$0xf]
  %v6517 = vld [vmem:[%s1440 + $0xd1] sm:$0xf]
  %v6526 = vcombine.low %v6510, %v6511
  %v6527 = vcombine.low %v6512, %v6513
  %v6528 = vcombine.low %v6514, %v6515
  %v6529 = vcombine.low %v6516, %v6517
  %6534 = vst.msk [vmem:[#allocation4 + $0x10] sm:$0xff] %vm1429, %v6526
  %6535 = vst.msk [vmem:[#allocation4 + $0x38] sm:$0xff] %vm1429, %v6527
  %6536 = vst.msk [vmem:[#allocation4 + $0x60] sm:$0xff] %vm1429, %v6528
  %6537 = vst.msk [vmem:[#allocation4 + $0x88] sm:$0xff] %vm1429, %v6529
  %v6538 = vld [vmem:[%s1440 + $0x2] sm:$0xf]
  %v6539 = vld [vmem:[%s1440 + $0x12] sm:$0xf]
  %v6540 = vld [vmem:[%s1440 + $0x22] sm:$0xf]
  %v6541 = vld [vmem:[%s1440 + $0x32] sm:$0xf]
  %v6542 = vld [vmem:[%s1440 + $0xa2] sm:$0xf]
  %v6543 = vld [vmem:[%s1440 + $0xb2] sm:$0xf]
  %v6544 = vld [vmem:[%s1440 + $0xc2] sm:$0xf]
  %v6545 = vld [vmem:[%s1440 + $0xd2] sm:$0xf]
  %v6554 = vcombine.low %v6538, %v6539
  %v6555 = vcombine.low %v6540, %v6541
  %v6556 = vcombine.low %v6542, %v6543
  %v6557 = vcombine.low %v6544, %v6545
  %6558 = vrot.lane.b32.xlu0 %v6554, 64
  %v6559 = vpop.permute.xlu0 %6558
  %6560 = vrot.lane.b32.xlu0 %v6555, 64
  %v6561 = vpop.permute.xlu0 %6560
  %6562 = vrot.lane.b32.xlu0 %v6556, 64
  %v6563 = vpop.permute.xlu0 %6562
  %6564 = vrot.lane.b32.xlu0 %v6557, 64
  %v6565 = vpop.permute.xlu0 %6564
  %6570 = vst.msk [vmem:[#allocation4 + $0x10] sm:$0xff] %vm1602, %v6559
  %6571 = vst.msk [vmem:[#allocation4 + $0x38] sm:$0xff] %vm1602, %v6561
  %6572 = vst.msk [vmem:[#allocation4 + $0x60] sm:$0xff] %vm1602, %v6563
  %6573 = vst.msk [vmem:[#allocation4 + $0x88] sm:$0xff] %vm1602, %v6565
  %v6574 = vld [vmem:[%s1875] sm:$0xf]
  %v6575 = vld [vmem:[%s1875 + $0x10] sm:$0xf]
  %v6576 = vld [vmem:[%s1875 + $0x20] sm:$0xf]
  %v6577 = vld [vmem:[%s1875 + $0x30] sm:$0xf]
  %v6578 = vld [vmem:[%s1875 + $0xa0] sm:$0xf]
  %v6579 = vld [vmem:[%s1875 + $0xb0] sm:$0xf]
  %v6580 = vld [vmem:[%s1875 + $0xc0] sm:$0xf]
  %v6581 = vld [vmem:[%s1875 + $0xd0] sm:$0xf]
  %v6590 = vcombine.low %v6574, %v6575
  %v6591 = vcombine.low %v6576, %v6577
  %v6592 = vcombine.low %v6578, %v6579
  %v6593 = vcombine.low %v6580, %v6581
  %6598 = vst.msk [vmem:[#allocation4 + $0x18] sm:$0xff] %vm1429, %v6590
  %6599 = vst.msk [vmem:[#allocation4 + $0x40] sm:$0xff] %vm1429, %v6591
  %6600 = vst.msk [vmem:[#allocation4 + $0x68] sm:$0xff] %vm1429, %v6592
  %6601 = vst.msk [vmem:[#allocation4 + $0x90] sm:$0xff] %vm1429, %v6593
  %v6602 = vld [vmem:[%s1875 + $0x1] sm:$0xf]
  %v6603 = vld [vmem:[%s1875 + $0x11] sm:$0xf]
  %v6604 = vld [vmem:[%s1875 + $0x21] sm:$0xf]
  %v6605 = vld [vmem:[%s1875 + $0x31] sm:$0xf]
  %v6606 = vld [vmem:[%s1875 + $0xa1] sm:$0xf]
  %v6607 = vld [vmem:[%s1875 + $0xb1] sm:$0xf]
  %v6608 = vld [vmem:[%s1875 + $0xc1] sm:$0xf]
  %v6609 = vld [vmem:[%s1875 + $0xd1] sm:$0xf]
  %v6618 = vcombine.low %v6602, %v6603
  %v6619 = vcombine.low %v6604, %v6605
  %v6620 = vcombine.low %v6606, %v6607
  %v6621 = vcombine.low %v6608, %v6609
  %6622 = vrot.lane.b32.xlu0 %v6618, 64
  %v6623 = vpop.permute.xlu0 %6622
  %6624 = vrot.lane.b32.xlu0 %v6619, 64
  %v6625 = vpop.permute.xlu0 %6624
  %6626 = vrot.lane.b32.xlu0 %v6620, 64
  %v6627 = vpop.permute.xlu0 %6626
  %6628 = vrot.lane.b32.xlu0 %v6621, 64
  %v6629 = vpop.permute.xlu0 %6628
  %6634 = vst.msk [vmem:[#allocation4 + $0x18] sm:$0xff] %vm1602, %v6623
  %6635 = vst.msk [vmem:[#allocation4 + $0x40] sm:$0xff] %vm1602, %v6625
  %6636 = vst.msk [vmem:[#allocation4 + $0x68] sm:$0xff] %vm1602, %v6627
  %6637 = vst.msk [vmem:[#allocation4 + $0x90] sm:$0xff] %vm1602, %v6629
  %v6638 = vld [vmem:[%s1875 + $0x2] sm:$0xf]
  %v6639 = vld [vmem:[%s1875 + $0x12] sm:$0xf]
  %v6640 = vld [vmem:[%s1875 + $0x22] sm:$0xf]
  %v6641 = vld [vmem:[%s1875 + $0x32] sm:$0xf]
  %v6642 = vld [vmem:[%s1875 + $0xa2] sm:$0xf]
  %v6643 = vld [vmem:[%s1875 + $0xb2] sm:$0xf]
  %v6644 = vld [vmem:[%s1875 + $0xc2] sm:$0xf]
  %v6645 = vld [vmem:[%s1875 + $0xd2] sm:$0xf]
  %v6654 = vcombine.low %v6638, %v6639
  %v6655 = vcombine.low %v6640, %v6641
  %v6656 = vcombine.low %v6642, %v6643
  %v6657 = vcombine.low %v6644, %v6645
  %6662 = vst.msk [vmem:[#allocation4 + $0x20] sm:$0xff] %vm1429, %v6654
  %6663 = vst.msk [vmem:[#allocation4 + $0x48] sm:$0xff] %vm1429, %v6655
  %6664 = vst.msk [vmem:[#allocation4 + $0x70] sm:$0xff] %vm1429, %v6656
  %6665 = vst.msk [vmem:[#allocation4 + $0x98] sm:$0xff] %vm1429, %v6657
  %v6666 = vld [vmem:[#allocation4] sm:$0xff]
  %v6667 = vld [vmem:[#allocation4 + $0x8] sm:$0xff]
  %v6668 = vld [vmem:[#allocation4 + $0x10] sm:$0xff]
  %v6669 = vld [vmem:[#allocation4 + $0x18] sm:$0xff]
  %v6670 = vld [vmem:[#allocation4 + $0x20] sm:$0xff]
  %v6671 = vld [vmem:[#allocation4 + $0x28] sm:$0xff]
  %v6672 = vld [vmem:[#allocation4 + $0x30] sm:$0xff]
  %v6673 = vld [vmem:[#allocation4 + $0x38] sm:$0xff]
  %v6674 = vld [vmem:[#allocation4 + $0x40] sm:$0xff]
  %v6675 = vld [vmem:[#allocation4 + $0x48] sm:$0xff]
  %v6676 = vld [vmem:[#allocation4 + $0x50] sm:$0xff]
  %v6677 = vld [vmem:[#allocation4 + $0x58] sm:$0xff]
  %v6678 = vld [vmem:[#allocation4 + $0x60] sm:$0xff]
  %v6679 = vld [vmem:[#allocation4 + $0x68] sm:$0xff]
  %v6680 = vld [vmem:[#allocation4 + $0x70] sm:$0xff]
  %v6681 = vld [vmem:[#allocation4 + $0x78] sm:$0xff]
  %v6682 = vld [vmem:[#allocation4 + $0x80] sm:$0xff]
  %v6683 = vld [vmem:[#allocation4 + $0x88] sm:$0xff]
  %v6684 = vld [vmem:[#allocation4 + $0x90] sm:$0xff]
  %v6685 = vld [vmem:[#allocation4 + $0x98] sm:$0xff]
  %v6687 = vsel %vm1429, %v6670, 0
  %v6690 = vsel %vm1429, %v6675, 0
  %v6693 = vsel %vm1429, %v6680, 0
  %v6696 = vsel %vm1429, %v6685, 0
  %6698 = vmatprep.subr.mxu0 0.0
  %6699 = vmatpush1.msra.mxu0 %v5644
  %6700 = vmatprep.subr.mxu0 0.0
  %6701 = vmatpush1.msra.mxu0 %v5645
  %6702 = vmatprep.subr.mxu0 0.0
  %6703 = vmatpush1.msra.mxu0 %v5646
  %6704 = vmatprep.subr.mxu0 0.0
  %6705 = vmatpush1.msra.mxu0 %v5647
  %6706 = vmatprep.subr.mxu0 0.0
  %6707 = vmatpush1.msra.mxu0 %v5648
  %6708 = vmatprep.subr.mxu0 0.0
  %6709 = vmatpush1.msra.mxu0 %v5649
  %6710 = vmatprep.subr.mxu0 0.0
  %6711 = vmatpush1.msra.mxu0 %v5650
  %6712 = vmatprep.subr.mxu0 0.0
  %6713 = vmatpush1.msra.mxu0 %v5651
  %6714 = vmatprep.subr.mxu0 0.0
  %6715 = vmatpush1.msra.mxu0 %v5652
  %6716 = vmatprep.subr.mxu0 0.0
  %6717 = vmatpush1.msra.mxu0 %v5653
  %6718 = vmatprep.subr.mxu0 0.0
  %6719 = vmatpush1.msra.mxu0 %v5654
  %6720 = vmatprep.subr.mxu0 0.0
  %6721 = vmatpush1.msra.mxu0 %v5655
  %6722 = vmatprep.subr.mxu0 0.0
  %6723 = vmatpush1.msra.mxu0 %v5656
  %6724 = vmatprep.subr.mxu0 0.0
  %6725 = vmatpush1.msra.mxu0 %v5657
  %6726 = vmatprep.subr.mxu0 0.0
  %6727 = vmatpush1.msra.mxu0 %v5658
  %6728 = vmatprep.subr.mxu0 0.0
  %6729 = vmatpush1.msra.mxu0 %v5659
  %6730 = vmatprep.subr.mxu0 0.0
  %6731 = vmatpush1.msra.mxu0 %v5660
  %6732 = vmatprep.subr.mxu0 0.0
  %6733 = vmatpush1.msra.mxu0 %v5661
  %6734 = vmatprep.subr.mxu0 0.0
  %6735 = vmatpush1.msra.mxu0 %v5662
  %6736 = vmatprep.subr.mxu0 0.0
  %6737 = vmatpush1.msra.mxu0 %v5663
  %6738 = vmatprep.subr.mxu0 0.0
  %6739 = vmatpush1.msra.mxu0 %v5664
  %6740 = vmatprep.subr.mxu0 0.0
  %6741 = vmatpush1.msra.mxu0 %v5665
  %6742 = vmatprep.subr.mxu0 0.0
  %6743 = vmatpush1.msra.mxu0 %v5666
  %6744 = vmatprep.subr.mxu0 0.0
  %6745 = vmatpush1.msra.mxu0 %v5667
  %6746 = vmatprep.subr.mxu0 0.0
  %6747 = vmatpush1.msra.mxu0 %v5668
  %6748 = vmatprep.subr.mxu0 0.0
  %6749 = vmatpush1.msra.mxu0 %v5669
  %6750 = vmatprep.subr.mxu0 0.0
  %6751 = vmatpush1.msra.mxu0 %v5670
  %6752 = vmatprep.subr.mxu0 0.0
  %6753 = vmatpush1.msra.mxu0 %v5671
  %6754 = vmatprep.subr.mxu0 0.0
  %6755 = vmatpush1.msra.mxu0 %v5672
  %6756 = vmatprep.subr.mxu0 0.0
  %6757 = vmatpush1.msra.mxu0 %v5673
  %6758 = vmatprep.subr.mxu0 0.0
  %6759 = vmatpush1.msra.mxu0 %v5674
  %6760 = vmatprep.subr.mxu0 0.0
  %6761 = vmatpush1.msra.mxu0 %v5675
  %6762 = vmatprep.mubr.f32.mxu0 %v6667
  %6763 = vmatmul.mubr.f32.gmra.mrb[0].mxu0 %v6666
  %v6764 = vpop.f32.mrb[0].mxu0
  %v6765 = vadd.f32 %v5716, %v6764
  %v6766 = vpop.f32.mrb[0].mxu0
  %6767 = vmatprep.mubr.f32.mxu0 %v6672
  %6768 = vmatmul.mubr.f32.gmra.mrb[0].mxu0 %v6671
  %v6769 = vpop.f32.mrb[0].mxu0
  %v6770 = vadd.f32 %v5716, %v6769
  %v6771 = vpop.f32.mrb[0].mxu0
  %6772 = vmatprep.mubr.f32.mxu0 %v6677
  %6773 = vmatmul.mubr.f32.gmra.mrb[0].mxu0 %v6676
  %v6774 = vpop.f32.mrb[0].mxu0
  %v6775 = vadd.f32 %v5716, %v6774
  %v6776 = vpop.f32.mrb[0].mxu0
  %6777 = vmatprep.mubr.f32.mxu0 %v6682
  %6778 = vmatmul.mubr.f32.gmra.mrb[0].mxu0 %v6681
  %v6779 = vpop.f32.mrb[0].mxu0
  %v6780 = vadd.f32 %v5716, %v6779
  %v6781 = vpop.f32.mrb[0].mxu0
  %6782 = vdwg.mxu0
  %6783 = vmatprep.subr.mxu0 0.0
  %6784 = vmatpush1.msra.mxu0 %v5676
  %6785 = vmatprep.subr.mxu0 0.0
  %6786 = vmatpush1.msra.mxu0 %v5677
  %6787 = vmatprep.subr.mxu0 0.0
  %6788 = vmatpush1.msra.mxu0 %v5678
  %6789 = vmatprep.subr.mxu0 0.0
  %6790 = vmatpush1.msra.mxu0 %v5679
  %6791 = vmatprep.subr.mxu0 0.0
  %6792 = vmatpush1.msra.mxu0 %v5680
  %6793 = vmatprep.subr.mxu0 0.0
  %6794 = vmatpush1.msra.mxu0 %v5681
  %6795 = vmatprep.subr.mxu0 0.0
  %6796 = vmatpush1.msra.mxu0 %v5682
  %6797 = vmatprep.subr.mxu0 0.0
  %6798 = vmatpush1.msra.mxu0 %v5683
  %6799 = vmatprep.subr.mxu0 0.0
  %6800 = vmatpush1.msra.mxu0 %v5684
  %6801 = vmatprep.subr.mxu0 0.0
  %6802 = vmatpush1.msra.mxu0 %v5685
  %6803 = vmatprep.subr.mxu0 0.0
  %6804 = vmatpush1.msra.mxu0 %v5686
  %6805 = vmatprep.subr.mxu0 0.0
  %6806 = vmatpush1.msra.mxu0 %v5687
  %6807 = vmatprep.subr.mxu0 0.0
  %6808 = vmatpush1.msra.mxu0 %v5688
  %6809 = vmatprep.subr.mxu0 0.0
  %6810 = vmatpush1.msra.mxu0 %v5689
  %6811 = vmatprep.subr.mxu0 0.0
  %6812 = vmatpush1.msra.mxu0 %v5690
  %6813 = vmatprep.subr.mxu0 0.0
  %6814 = vmatpush1.msra.mxu0 %v5691
  %6815 = vmatprep.subr.mxu0 0.0
  %6816 = vmatpush1.msra.mxu0 %v5692
  %6817 = vmatprep.subr.mxu0 0.0
  %6818 = vmatpush1.msra.mxu0 %v5693
  %6819 = vmatprep.subr.mxu0 0.0
  %6820 = vmatpush1.msra.mxu0 %v5694
  %6821 = vmatprep.subr.mxu0 0.0
  %6822 = vmatpush1.msra.mxu0 %v5695
  %6823 = vmatprep.subr.mxu0 0.0
  %6824 = vmatpush1.msra.mxu0 %v5696
  %6825 = vmatprep.subr.mxu0 0.0
  %6826 = vmatpush1.msra.mxu0 %v5697
  %6827 = vmatprep.subr.mxu0 0.0
  %6828 = vmatpush1.msra.mxu0 %v5698
  %6829 = vmatprep.subr.mxu0 0.0
  %6830 = vmatpush1.msra.mxu0 %v5699
  %6831 = vmatprep.subr.mxu0 0.0
  %6832 = vmatpush1.msra.mxu0 %v5700
  %6833 = vmatprep.subr.mxu0 0.0
  %6834 = vmatpush1.msra.mxu0 %v5701
  %6835 = vmatprep.subr.mxu0 0.0
  %6836 = vmatpush1.msra.mxu0 %v5702
  %6837 = vmatprep.subr.mxu0 0.0
  %6838 = vmatpush1.msra.mxu0 %v5703
  %6839 = vmatprep.subr.mxu0 0.0
  %6840 = vmatpush1.msra.mxu0 %v5704
  %6841 = vmatprep.subr.mxu0 0.0
  %6842 = vmatpush1.msra.mxu0 %v5705
  %6843 = vmatprep.subr.mxu0 0.0
  %6844 = vmatpush1.msra.mxu0 %v5706
  %6845 = vmatprep.subr.mxu0 0.0
  %6846 = vmatpush1.msra.mxu0 %v5707
  %6847 = vmatprep.mubr.f32.mxu0 %v6669
  %6848 = vmatmul.mubr.f32.gmra.mrb[0].mxu0 %v6668
  %v6849 = vpop.f32.mrb[0].mxu0
  %v6850 = vadd.f32 %v6765, %v6849
  %v6851 = vpop.f32.mrb[0].mxu0
  %6852 = vmatprep.mubr.f32.mxu0 %v6674
  %6853 = vmatmul.mubr.f32.gmra.mrb[0].mxu0 %v6673
  %v6854 = vpop.f32.mrb[0].mxu0
  %v6855 = vadd.f32 %v6770, %v6854
  %v6856 = vpop.f32.mrb[0].mxu0
  %6857 = vmatprep.mubr.f32.mxu0 %v6679
  %6858 = vmatmul.mubr.f32.gmra.mrb[0].mxu0 %v6678
  %v6859 = vpop.f32.mrb[0].mxu0
  %v6860 = vadd.f32 %v6775, %v6859
  %v6861 = vpop.f32.mrb[0].mxu0
  %6862 = vmatprep.mubr.f32.mxu0 %v6684
  %6863 = vmatmul.mubr.f32.gmra.mrb[0].mxu0 %v6683
  %v6864 = vpop.f32.mrb[0].mxu0
  %v6865 = vadd.f32 %v6780, %v6864
  %v6866 = vpop.f32.mrb[0].mxu0
  %6867 = vdwg.mxu0
  %6868 = vmatprep.subr.mxu0 0.0
  %6869 = vmatpush1.msra.mxu0 %v5708
  %6870 = vmatprep.subr.mxu0 0.0
  %6871 = vmatpush1.msra.mxu0 %v5709
  %6872 = vmatprep.subr.mxu0 0.0
  %6873 = vmatpush1.msra.mxu0 %v5710
  %6874 = vmatprep.subr.mxu0 0.0
  %6875 = vmatpush1.msra.mxu0 %v5711
  %6876 = vmatprep.subr.mxu0 0.0
  %6877 = vmatpush1.msra.mxu0 %v5712
  %6878 = vmatprep.subr.mxu0 0.0
  %6879 = vmatpush1.msra.mxu0 %v5713
  %6880 = vmatprep.subr.mxu0 0.0
  %6881 = vmatpush1.msra.mxu0 %v5714
  %6882 = vmatprep.subr.mxu0 0.0
  %6883 = vmatpush1.msra.mxu0 %v5715
  %6884 = vmatprep.subr.mxu0 0.0
  %6885 = vmatpush1.msra.mxu0 0.0
  %6886 = vmatprep.subr.mxu0 0.0
  %6887 = vmatpush1.msra.mxu0 0.0
  %6888 = vmatprep.subr.mxu0 0.0
  %6889 = vmatpush1.msra.mxu0 0.0
  %6890 = vmatprep.subr.mxu0 0.0
  %6891 = vmatpush1.msra.mxu0 0.0
  %6892 = vmatprep.subr.mxu0 0.0
  %6893 = vmatpush1.msra.mxu0 0.0
  %6894 = vmatprep.subr.mxu0 0.0
  %6895 = vmatpush1.msra.mxu0 0.0
  %6896 = vmatprep.subr.mxu0 0.0
  %6897 = vmatpush1.msra.mxu0 0.0
  %6898 = vmatprep.subr.mxu0 0.0
  %6899 = vmatpush1.msra.mxu0 0.0
  %6900 = vmatprep.subr.mxu0 0.0
  %6901 = vmatpush1.msra.mxu0 0.0
  %6902 = vmatprep.subr.mxu0 0.0
  %6903 = vmatpush1.msra.mxu0 0.0
  %6904 = vmatprep.subr.mxu0 0.0
  %6905 = vmatpush1.msra.mxu0 0.0
  %6906 = vmatprep.subr.mxu0 0.0
  %6907 = vmatpush1.msra.mxu0 0.0
  %6908 = vmatprep.subr.mxu0 0.0
  %6909 = vmatpush1.msra.mxu0 0.0
  %6910 = vmatprep.subr.mxu0 0.0
  %6911 = vmatpush1.msra.mxu0 0.0
  %6912 = vmatprep.subr.mxu0 0.0
  %6913 = vmatpush1.msra.mxu0 0.0
  %6914 = vmatprep.subr.mxu0 0.0
  %6915 = vmatpush1.msra.mxu0 0.0
  %6916 = vmatprep.subr.mxu0 0.0
  %6917 = vmatpush1.msra.mxu0 0.0
  %6918 = vmatprep.subr.mxu0 0.0
  %6919 = vmatpush1.msra.mxu0 0.0
  %6920 = vmatprep.subr.mxu0 0.0
  %6921 = vmatpush1.msra.mxu0 0.0
  %6922 = vmatprep.subr.mxu0 0.0
  %6923 = vmatpush1.msra.mxu0 0.0
  %6924 = vmatprep.subr.mxu0 0.0
  %6925 = vmatpush1.msra.mxu0 0.0
  %6926 = vmatprep.subr.mxu0 0.0
  %6927 = vmatpush1.msra.mxu0 0.0
  %6928 = vmatprep.subr.mxu0 0.0
  %6929 = vmatpush1.msra.mxu0 0.0
  %6930 = vmatprep.subr.mxu0 0.0
  %6931 = vmatpush1.msra.mxu0 0.0
  %6932 = vmatprep.mubr.f32.mxu0 0.0
  %6933 = vmatmul.mubr.f32.gmra.mrb[0].mxu0 %v6687
  %v6934 = vpop.f32.mrb[0].mxu0
  %v6935 = vadd.f32 %v6850, %v6934
  %v6936 = vpop.f32.mrb[0].mxu0
  %6937 = vmatprep.mubr.f32.mxu0 0.0
  %6938 = vmatmul.mubr.f32.gmra.mrb[0].mxu0 %v6690
  %v6939 = vpop.f32.mrb[0].mxu0
  %v6940 = vadd.f32 %v6855, %v6939
  %v6941 = vpop.f32.mrb[0].mxu0
  %6942 = vmatprep.mubr.f32.mxu0 0.0
  %6943 = vmatmul.mubr.f32.gmra.mrb[0].mxu0 %v6693
  %v6944 = vpop.f32.mrb[0].mxu0
  %v6945 = vadd.f32 %v6860, %v6944
  %v6946 = vpop.f32.mrb[0].mxu0
  %6947 = vmatprep.mubr.f32.mxu0 0.0
  %6948 = vmatmul.mubr.f32.gmra.mrb[0].mxu0 %v6696
  %v6949 = vpop.f32.mrb[0].mxu0
  %v6950 = vadd.f32 %v6865, %v6949
  %v6951 = vpop.f32.mrb[0].mxu0
  %6952 = vdwg.mxu0
  %vm6953 = vcmp.ge.f32.partialorder %v6935, 0.0
  %vm6954 = vcmp.ge.f32.partialorder %v6940, 0.0
  %vm6955 = vcmp.ge.f32.partialorder %v6945, 0.0
  %vm6956 = vcmp.ge.f32.partialorder %v6950, 0.0
  %v6957 = vmul.f32 %v6935, 0.01
  %v6958 = vmul.f32 %v6940, 0.01
  %v6959 = vmul.f32 %v6945, 0.01
  %v6960 = vmul.f32 %v6950, 0.01
  %v6961 = vsel %vm6953, %v6935, %v6957
  %v6962 = vsel %vm6954, %v6940, %v6958
  %v6963 = vsel %vm6955, %v6945, %v6959
  %v6964 = vsel %vm6956, %v6950, %v6960
  %v6965 = vadd.f32 %v5565, %v6961
  %v6966 = vadd.f32 %v5566, %v6962
  %v6967 = vadd.f32 %v5567, %v6963
  %v6968 = vadd.f32 %v5568, %v6964
  %s6969 = scalar_lea.vmem %s3, 2880
  %v6970 = vld [vmem:[%s6969] sm:$0xff]
  %v6971 = vld [vmem:[%s6969 + $0x8] sm:$0xff]
  %v6972 = vld [vmem:[%s6969 + $0x10] sm:$0xff]
  %v6973 = vld [vmem:[%s6969 + $0x18] sm:$0xff]
  %v6974 = vld [vmem:[%s6969 + $0x20] sm:$0xff]
  %v6975 = vld [vmem:[%s6969 + $0x28] sm:$0xff]
  %v6976 = vld [vmem:[%s6969 + $0x30] sm:$0xff]
  %v6977 = vld [vmem:[%s6969 + $0x38] sm:$0xff]
  %v6978 = vld [vmem:[%s6969 + $0x40] sm:$0xff]
  %v6979 = vld [vmem:[%s6969 + $0x48] sm:$0xff]
  %v6980 = vld [vmem:[%s6969 + $0x50] sm:$0xff]
  %v6981 = vld [vmem:[%s6969 + $0x58] sm:$0xff]
  %v6982 = vld [vmem:[%s6969 + $0x60] sm:$0xff]
  %v6983 = vld [vmem:[%s6969 + $0x68] sm:$0xff]
  %v6984 = vld [vmem:[%s6969 + $0x70] sm:$0xff]
  %v6985 = vld [vmem:[%s6969 + $0x78] sm:$0xff]
  %v6986 = vld [vmem:[%s6969 + $0x80] sm:$0xff]
  %v6987 = vld [vmem:[%s6969 + $0x88] sm:$0xff]
  %v6988 = vld [vmem:[%s6969 + $0x90] sm:$0xff]
  %v6989 = vld [vmem:[%s6969 + $0x98] sm:$0xff]
  %v6990 = vld [vmem:[%s6969 + $0xa0] sm:$0xff]
  %v6991 = vld [vmem:[%s6969 + $0xa8] sm:$0xff]
  %v6992 = vld [vmem:[%s6969 + $0xb0] sm:$0xff]
  %v6993 = vld [vmem:[%s6969 + $0xb8] sm:$0xff]
  %v6994 = vld [vmem:[%s6969 + $0xc0] sm:$0xff]
  %v6995 = vld [vmem:[%s6969 + $0xc8] sm:$0xff]
  %v6996 = vld [vmem:[%s6969 + $0xd0] sm:$0xff]
  %v6997 = vld [vmem:[%s6969 + $0xd8] sm:$0xff]
  %v6998 = vld [vmem:[%s6969 + $0xe0] sm:$0xff]
  %v6999 = vld [vmem:[%s6969 + $0xe8] sm:$0xff]
  %v7000 = vld [vmem:[%s6969 + $0xf0] sm:$0xff]
  %v7001 = vld [vmem:[%s6969 + $0xf8] sm:$0xff]
  %v7002 = vld [vmem:[%s6969 + $0x100] sm:$0xff]
  %v7003 = vld [vmem:[%s6969 + $0x108] sm:$0xff]
  %v7004 = vld [vmem:[%s6969 + $0x110] sm:$0xff]
  %v7005 = vld [vmem:[%s6969 + $0x118] sm:$0xff]
  %v7006 = vld [vmem:[%s6969 + $0x120] sm:$0xff]
  %v7007 = vld [vmem:[%s6969 + $0x128] sm:$0xff]
  %v7008 = vld [vmem:[%s6969 + $0x130] sm:$0xff]
  %v7009 = vld [vmem:[%s6969 + $0x138] sm:$0xff]
  %v7010 = vld [vmem:[%s6969 + $0x140] sm:$0xff]
  %v7011 = vld [vmem:[%s6969 + $0x148] sm:$0xff]
  %v7012 = vld [vmem:[%s6969 + $0x150] sm:$0xff]
  %v7013 = vld [vmem:[%s6969 + $0x158] sm:$0xff]
  %v7014 = vld [vmem:[%s6969 + $0x160] sm:$0xff]
  %v7015 = vld [vmem:[%s6969 + $0x168] sm:$0xff]
  %v7016 = vld [vmem:[%s6969 + $0x170] sm:$0xff]
  %v7017 = vld [vmem:[%s6969 + $0x178] sm:$0xff]
  %v7018 = vld [vmem:[%s6969 + $0x180] sm:$0xff]
  %v7019 = vld [vmem:[%s6969 + $0x188] sm:$0xff]
  %v7020 = vld [vmem:[%s6969 + $0x190] sm:$0xff]
  %v7021 = vld [vmem:[%s6969 + $0x198] sm:$0xff]
  %v7022 = vld [vmem:[%s6969 + $0x1a0] sm:$0xff]
  %v7023 = vld [vmem:[%s6969 + $0x1a8] sm:$0xff]
  %v7024 = vld [vmem:[%s6969 + $0x1b0] sm:$0xff]
  %v7025 = vld [vmem:[%s6969 + $0x1b8] sm:$0xff]
  %v7026 = vld [vmem:[%s6969 + $0x1c0] sm:$0xff]
  %v7027 = vld [vmem:[%s6969 + $0x1c8] sm:$0xff]
  %v7028 = vld [vmem:[%s6969 + $0x1d0] sm:$0xff]
  %v7029 = vld [vmem:[%s6969 + $0x1d8] sm:$0xff]
  %v7030 = vld [vmem:[%s6969 + $0x1e0] sm:$0xff]
  %v7031 = vld [vmem:[%s6969 + $0x1e8] sm:$0xff]
  %v7032 = vld [vmem:[%s6969 + $0x1f0] sm:$0xff]
  %v7033 = vld [vmem:[%s6969 + $0x1f8] sm:$0xff]
  %v7034 = vld [vmem:[%s6969 + $0x200] sm:$0xff]
  %v7035 = vld [vmem:[%s6969 + $0x208] sm:$0xff]
  %v7036 = vld [vmem:[%s6969 + $0x210] sm:$0xff]
  %v7037 = vld [vmem:[%s6969 + $0x218] sm:$0xff]
  %v7038 = vld [vmem:[%s6969 + $0x220] sm:$0xff]
  %v7039 = vld [vmem:[%s6969 + $0x228] sm:$0xff]
  %v7040 = vld [vmem:[%s6969 + $0x230] sm:$0xff]
  %v7041 = vld [vmem:[%s6969 + $0x238] sm:$0xff]
  %v7042 = vld [vmem:[%s1 + $0x6] ss:$0 sm:$0xff]
  %7043 = vst [vmem:[#allocation3] sm:$0x7] 0.0
  %7044 = vst [vmem:[#allocation3 + $0x10] sm:$0x7] 0.0
  %7045 = vst [vmem:[#allocation3 + $0x120] sm:$0x7] 0.0
  %7046 = vst [vmem:[#allocation3 + $0x130] sm:$0x7] 0.0
  %7047 = vst [vmem:[#allocation3] sm:$0x1] 0.0
  %7048 = vst [vmem:[#allocation3 + $0x10] sm:$0x1] 0.0
  %7049 = vst [vmem:[#allocation3 + $0x20] sm:$0x1] 0.0
  %7050 = vst [vmem:[#allocation3 + $0x30] sm:$0x1] 0.0
  %7051 = vst [vmem:[#allocation3 + $0x40] sm:$0x1] 0.0
  %7052 = vst [vmem:[#allocation3 + $0x50] sm:$0x1] 0.0
  %7053 = vst [vmem:[#allocation3 + $0x120] sm:$0x1] 0.0
  %7054 = vst [vmem:[#allocation3 + $0x130] sm:$0x1] 0.0
  %7055 = vst [vmem:[#allocation3 + $0x140] sm:$0x1] 0.0
  %7056 = vst [vmem:[#allocation3 + $0x150] sm:$0x1] 0.0
  %7057 = vst [vmem:[#allocation3 + $0x160] sm:$0x1] 0.0
  %7058 = vst [vmem:[#allocation3 + $0x170] sm:$0x1] 0.0
  %v7063 = vcombine.high %v6965, %v6965
  %v7065 = vunpack.c.l.s4 1983009808
  %v7066 = vunpack.c.0.s8 %v7065
  %v7067 = vlaneseq
  %v7068 = vshrl.u32 %v7067, 7
  %v7069 = vsub.s32 %v7066, %v7068
  %v7070 = vrot.slane %v6965, %v7069
  %v7072 = vunpack.c.l.s4 1983009808
  %v7073 = vunpack.c.0.s8 %v7072
  %v7074 = vlaneseq
  %v7075 = vshrl.u32 %v7074, 7
  %v7076 = vsub.s32 %v7073, %v7075
  %v7077 = vrot.slane %v7063, %v7076
  %v7078 = vcombine.high %v7070, %v7070
  %v7079 = vcombine.high %v7077, %v7077
  %v7080 = vcombine.high %v6966, %v6966
  %v7082 = vunpack.c.l.s4 1983009808
  %v7083 = vunpack.c.0.s8 %v7082
  %v7084 = vlaneseq
  %v7085 = vshrl.u32 %v7084, 7
  %v7086 = vsub.s32 %v7083, %v7085
  %v7087 = vrot.slane %v6966, %v7086
  %v7089 = vunpack.c.l.s4 1983009808
  %v7090 = vunpack.c.0.s8 %v7089
  %v7091 = vlaneseq
  %v7092 = vshrl.u32 %v7091, 7
  %v7093 = vsub.s32 %v7090, %v7092
  %v7094 = vrot.slane %v7080, %v7093
  %v7095 = vcombine.high %v7087, %v7087
  %v7096 = vcombine.high %v7094, %v7094
  %v7097 = vcombine.high %v6967, %v6967
  %v7099 = vunpack.c.l.s4 1983009808
  %v7100 = vunpack.c.0.s8 %v7099
  %v7101 = vlaneseq
  %v7102 = vshrl.u32 %v7101, 7
  %v7103 = vsub.s32 %v7100, %v7102
  %v7104 = vrot.slane %v6967, %v7103
  %v7106 = vunpack.c.l.s4 1983009808
  %v7107 = vunpack.c.0.s8 %v7106
  %v7108 = vlaneseq
  %v7109 = vshrl.u32 %v7108, 7
  %v7110 = vsub.s32 %v7107, %v7109
  %v7111 = vrot.slane %v7097, %v7110
  %v7112 = vcombine.high %v7104, %v7104
  %v7113 = vcombine.high %v7111, %v7111
  %v7114 = vcombine.high %v6968, %v6968
  %v7116 = vunpack.c.l.s4 1983009808
  %v7117 = vunpack.c.0.s8 %v7116
  %v7118 = vlaneseq
  %v7119 = vshrl.u32 %v7118, 7
  %v7120 = vsub.s32 %v7117, %v7119
  %v7121 = vrot.slane %v6968, %v7120
  %v7123 = vunpack.c.l.s4 1983009808
  %v7124 = vunpack.c.0.s8 %v7123
  %v7125 = vlaneseq
  %v7126 = vshrl.u32 %v7125, 7
  %v7127 = vsub.s32 %v7124, %v7126
  %v7128 = vrot.slane %v7114, %v7127
  %v7129 = vcombine.high %v7121, %v7121
  %v7130 = vcombine.high %v7128, %v7128
  %v7131 = vlaneseq
  %v7132 = vshrl.u32 %v7131, 7
  %v7133 = vsub.s32 0, %v7132
  %v7134 = vrot.slane %v7070, %v7133
  %v7135 = vlaneseq
  %v7136 = vshrl.u32 %v7135, 7
  %v7137 = vsub.s32 0, %v7136
  %v7138 = vrot.slane %v7078, %v7137
  %v7139 = vlaneseq
  %v7140 = vshrl.u32 %v7139, 7
  %v7141 = vsub.s32 0, %v7140
  %v7142 = vrot.slane %v7087, %v7141
  %v7143 = vlaneseq
  %v7144 = vshrl.u32 %v7143, 7
  %v7145 = vsub.s32 0, %v7144
  %v7146 = vrot.slane %v7095, %v7145
  %v7147 = vlaneseq
  %v7148 = vshrl.u32 %v7147, 7
  %v7149 = vsub.s32 0, %v7148
  %v7150 = vrot.slane %v7104, %v7149
  %v7151 = vlaneseq
  %v7152 = vshrl.u32 %v7151, 7
  %v7153 = vsub.s32 0, %v7152
  %v7154 = vrot.slane %v7112, %v7153
  %v7155 = vlaneseq
  %v7156 = vshrl.u32 %v7155, 7
  %v7157 = vsub.s32 0, %v7156
  %v7158 = vrot.slane %v7121, %v7157
  %v7159 = vlaneseq
  %v7160 = vshrl.u32 %v7159, 7
  %v7161 = vsub.s32 0, %v7160
  %v7162 = vrot.slane %v7129, %v7161
  %v7163 = vsel %vm4388, %v7138, %v7134
  %v7164 = vsel %vm4388, %v7146, %v7142
  %v7165 = vsel %vm4388, %v7154, %v7150
  %v7166 = vsel %vm4388, %v7162, %v7158
  %7171 = vst.msk [vmem:[%s107 + $0x1] sm:$0x3] %vm1431, %v7163
  %7172 = vst.msk [vmem:[%s107 + $0x21] sm:$0x3] %vm1431, %v7164
  %7173 = vst.msk [vmem:[%s107 + $0x121] sm:$0x3] %vm1431, %v7165
  %7174 = vst.msk [vmem:[%s107 + $0x141] sm:$0x3] %vm1431, %v7166
  %v7175 = vlaneseq
  %v7176 = vshrl.u32 %v7175, 7
  %v7177 = vsub.s32 1, %v7176
  %v7178 = vrot.slane %v7070, %v7177
  %v7179 = vlaneseq
  %v7180 = vshrl.u32 %v7179, 7
  %v7181 = vsub.s32 1, %v7180
  %v7182 = vrot.slane %v7078, %v7181
  %v7183 = vlaneseq
  %v7184 = vshrl.u32 %v7183, 7
  %v7185 = vsub.s32 1, %v7184
  %v7186 = vrot.slane %v7087, %v7185
  %v7187 = vlaneseq
  %v7188 = vshrl.u32 %v7187, 7
  %v7189 = vsub.s32 1, %v7188
  %v7190 = vrot.slane %v7095, %v7189
  %v7191 = vlaneseq
  %v7192 = vshrl.u32 %v7191, 7
  %v7193 = vsub.s32 1, %v7192
  %v7194 = vrot.slane %v7104, %v7193
  %v7195 = vlaneseq
  %v7196 = vshrl.u32 %v7195, 7
  %v7197 = vsub.s32 1, %v7196
  %v7198 = vrot.slane %v7112, %v7197
  %v7199 = vlaneseq
  %v7200 = vshrl.u32 %v7199, 7
  %v7201 = vsub.s32 1, %v7200
  %v7202 = vrot.slane %v7121, %v7201
  %v7203 = vlaneseq
  %v7204 = vshrl.u32 %v7203, 7
  %v7205 = vsub.s32 1, %v7204
  %v7206 = vrot.slane %v7129, %v7205
  %v7207 = vsel %vm4390, %v7182, %v7178
  %v7208 = vsel %vm4390, %v7190, %v7186
  %v7209 = vsel %vm4390, %v7198, %v7194
  %v7210 = vsel %vm4390, %v7206, %v7202
  %7211 = vrot.lane.b32.xlu0 %v7207, 64
  %v7212 = vpop.permute.xlu0 %7211
  %7213 = vrot.lane.b32.xlu0 %v7208, 64
  %v7214 = vpop.permute.xlu0 %7213
  %7215 = vrot.lane.b32.xlu0 %v7209, 64
  %v7216 = vpop.permute.xlu0 %7215
  %7217 = vrot.lane.b32.xlu0 %v7210, 64
  %v7218 = vpop.permute.xlu0 %7217
  %vm7223 = vcmask 1042945
  %7224 = vst.msk [vmem:[%s107] sm:$0x6] %vm7223, %v7212
  %7225 = vst.msk [vmem:[%s107 + $0x20] sm:$0x6] %vm7223, %v7214
  %7226 = vst.msk [vmem:[%s107 + $0x120] sm:$0x6] %vm7223, %v7216
  %7227 = vst.msk [vmem:[%s107 + $0x140] sm:$0x6] %vm7223, %v7218
  %v7228 = vlaneseq
  %v7229 = vshrl.u32 %v7228, 7
  %v7230 = vsub.s32 0, %v7229
  %v7231 = vrot.slane %v7077, %v7230
  %v7232 = vlaneseq
  %v7233 = vshrl.u32 %v7232, 7
  %v7234 = vsub.s32 0, %v7233
  %v7235 = vrot.slane %v7079, %v7234
  %v7236 = vlaneseq
  %v7237 = vshrl.u32 %v7236, 7
  %v7238 = vsub.s32 0, %v7237
  %v7239 = vrot.slane %v7094, %v7238
  %v7240 = vlaneseq
  %v7241 = vshrl.u32 %v7240, 7
  %v7242 = vsub.s32 0, %v7241
  %v7243 = vrot.slane %v7096, %v7242
  %v7244 = vlaneseq
  %v7245 = vshrl.u32 %v7244, 7
  %v7246 = vsub.s32 0, %v7245
  %v7247 = vrot.slane %v7111, %v7246
  %v7248 = vlaneseq
  %v7249 = vshrl.u32 %v7248, 7
  %v7250 = vsub.s32 0, %v7249
  %v7251 = vrot.slane %v7113, %v7250
  %v7252 = vlaneseq
  %v7253 = vshrl.u32 %v7252, 7
  %v7254 = vsub.s32 0, %v7253
  %v7255 = vrot.slane %v7128, %v7254
  %v7256 = vlaneseq
  %v7257 = vshrl.u32 %v7256, 7
  %v7258 = vsub.s32 0, %v7257
  %v7259 = vrot.slane %v7130, %v7258
  %v7260 = vsel %vm4388, %v7235, %v7231
  %v7261 = vsel %vm4388, %v7243, %v7239
  %v7262 = vsel %vm4388, %v7251, %v7247
  %v7263 = vsel %vm4388, %v7259, %v7255
  %7268 = vst.msk [vmem:[%s728 + $0x1] sm:$0x3] %vm1431, %v7260
  %7269 = vst.msk [vmem:[%s728 + $0x21] sm:$0x3] %vm1431, %v7261
  %7270 = vst.msk [vmem:[%s728 + $0x121] sm:$0x3] %vm1431, %v7262
  %7271 = vst.msk [vmem:[%s728 + $0x141] sm:$0x3] %vm1431, %v7263
  %v7272 = vlaneseq
  %v7273 = vshrl.u32 %v7272, 7
  %v7274 = vsub.s32 1, %v7273
  %v7275 = vrot.slane %v7077, %v7274
  %v7276 = vlaneseq
  %v7277 = vshrl.u32 %v7276, 7
  %v7278 = vsub.s32 1, %v7277
  %v7279 = vrot.slane %v7079, %v7278
  %v7280 = vlaneseq
  %v7281 = vshrl.u32 %v7280, 7
  %v7282 = vsub.s32 1, %v7281
  %v7283 = vrot.slane %v7094, %v7282
  %v7284 = vlaneseq
  %v7285 = vshrl.u32 %v7284, 7
  %v7286 = vsub.s32 1, %v7285
  %v7287 = vrot.slane %v7096, %v7286
  %v7288 = vlaneseq
  %v7289 = vshrl.u32 %v7288, 7
  %v7290 = vsub.s32 1, %v7289
  %v7291 = vrot.slane %v7111, %v7290
  %v7292 = vlaneseq
  %v7293 = vshrl.u32 %v7292, 7
  %v7294 = vsub.s32 1, %v7293
  %v7295 = vrot.slane %v7113, %v7294
  %v7296 = vlaneseq
  %v7297 = vshrl.u32 %v7296, 7
  %v7298 = vsub.s32 1, %v7297
  %v7299 = vrot.slane %v7128, %v7298
  %v7300 = vlaneseq
  %v7301 = vshrl.u32 %v7300, 7
  %v7302 = vsub.s32 1, %v7301
  %v7303 = vrot.slane %v7130, %v7302
  %v7304 = vsel %vm4390, %v7279, %v7275
  %v7305 = vsel %vm4390, %v7287, %v7283
  %v7306 = vsel %vm4390, %v7295, %v7291
  %v7307 = vsel %vm4390, %v7303, %v7299
  %7308 = vrot.lane.b32.xlu0 %v7304, 64
  %v7309 = vpop.permute.xlu0 %7308
  %7310 = vrot.lane.b32.xlu0 %v7305, 64
  %v7311 = vpop.permute.xlu0 %7310
  %7312 = vrot.lane.b32.xlu0 %v7306, 64
  %v7313 = vpop.permute.xlu0 %7312
  %7314 = vrot.lane.b32.xlu0 %v7307, 64
  %v7315 = vpop.permute.xlu0 %7314
  %7320 = vst.msk [vmem:[%s728] sm:$0x6] %vm7223, %v7309
  %7321 = vst.msk [vmem:[%s728 + $0x20] sm:$0x6] %vm7223, %v7311
  %7322 = vst.msk [vmem:[%s728 + $0x120] sm:$0x6] %vm7223, %v7313
  %7323 = vst.msk [vmem:[%s728 + $0x140] sm:$0x6] %vm7223, %v7315
  %v7324 = vld [vmem:[%s145] sm:$0x3]
  %v7325 = vld [vmem:[%s145 + $0x20] sm:$0x3]
  %v7326 = vld [vmem:[%s145 + $0x120] sm:$0x3]
  %v7327 = vld [vmem:[%s145 + $0x140] sm:$0x3]
  %v7332 = vcombine.low %v7324, %v7325
  %v7333 = vcombine.low %v7326, %v7327
  %v7335 = vunpack.c.l.s4 1983009808
  %v7336 = vunpack.c.0.s8 %v7335
  %v7337 = vlaneseq
  %v7338 = vshrl.u32 %v7337, 7
  %v7339 = vsub.s32 %v7336, %v7338
  %v7340 = vrot.slane %v7332, %v7339
  %v7342 = vunpack.c.l.s4 1983009808
  %v7343 = vunpack.c.0.s8 %v7342
  %v7344 = vlaneseq
  %v7345 = vshrl.u32 %v7344, 7
  %v7346 = vsub.s32 %v7343, %v7345
  %v7347 = vrot.slane %v7333, %v7346
  %v7348 = vcombine.low %v7340, %v7347
  %7349 = vrot.lane.b32.xlu0 %v7348, 64
  %v7350 = vpop.permute.xlu0 %7349
  %7352 = vst.msk [vmem:[#allocation4] sm:$0xff] %vm1429, %v7350
  %v7353 = vld [vmem:[%s145 + $0x1] sm:$0x3]
  %v7354 = vld [vmem:[%s145 + $0x21] sm:$0x3]
  %v7355 = vld [vmem:[%s145 + $0x121] sm:$0x3]
  %v7356 = vld [vmem:[%s145 + $0x141] sm:$0x3]
  %v7361 = vcombine.low %v7353, %v7354
  %v7362 = vcombine.low %v7355, %v7356
  %v7364 = vunpack.c.l.s4 1983009808
  %v7365 = vunpack.c.0.s8 %v7364
  %v7366 = vlaneseq
  %v7367 = vshrl.u32 %v7366, 7
  %v7368 = vsub.s32 %v7365, %v7367
  %v7369 = vrot.slane %v7361, %v7368
  %v7371 = vunpack.c.l.s4 1983009808
  %v7372 = vunpack.c.0.s8 %v7371
  %v7373 = vlaneseq
  %v7374 = vshrl.u32 %v7373, 7
  %v7375 = vsub.s32 %v7372, %v7374
  %v7376 = vrot.slane %v7362, %v7375
  %v7377 = vcombine.low %v7369, %v7376
  %7378 = vrot.lane.b32.xlu0 %v7377, 64
  %v7379 = vpop.permute.xlu0 %7378
  %7381 = vst.msk [vmem:[#allocation4] sm:$0xff] %vm1602, %v7379
  %v7382 = vld [vmem:[%s145 + $0x1] sm:$0x3]
  %v7383 = vld [vmem:[%s145 + $0x21] sm:$0x3]
  %v7384 = vld [vmem:[%s145 + $0x121] sm:$0x3]
  %v7385 = vld [vmem:[%s145 + $0x141] sm:$0x3]
  %v7390 = vcombine.low %v7382, %v7383
  %v7391 = vcombine.low %v7384, %v7385
  %v7393 = vunpack.c.l.s4 1983009808
  %v7394 = vunpack.c.0.s8 %v7393
  %v7395 = vlaneseq
  %v7396 = vshrl.u32 %v7395, 7
  %v7397 = vsub.s32 %v7394, %v7396
  %v7398 = vrot.slane %v7390, %v7397
  %v7400 = vunpack.c.l.s4 1983009808
  %v7401 = vunpack.c.0.s8 %v7400
  %v7402 = vlaneseq
  %v7403 = vshrl.u32 %v7402, 7
  %v7404 = vsub.s32 %v7401, %v7403
  %v7405 = vrot.slane %v7391, %v7404
  %v7406 = vcombine.low %v7398, %v7405
  %7407 = vrot.lane.b32.xlu0 %v7406, 64
  %v7408 = vpop.permute.xlu0 %7407
  %7410 = vst.msk [vmem:[#allocation4 + $0x8] sm:$0xff] %vm1429, %v7408
  %v7411 = vld [vmem:[%s107] sm:$0x3]
  %v7412 = vld [vmem:[%s107 + $0x20] sm:$0x3]
  %v7413 = vld [vmem:[%s107 + $0x120] sm:$0x3]
  %v7414 = vld [vmem:[%s107 + $0x140] sm:$0x3]
  %v7419 = vcombine.low %v7411, %v7412
  %v7420 = vcombine.low %v7413, %v7414
  %v7422 = vunpack.c.l.s4 1983009808
  %v7423 = vunpack.c.0.s8 %v7422
  %v7424 = vlaneseq
  %v7425 = vshrl.u32 %v7424, 7
  %v7426 = vsub.s32 %v7423, %v7425
  %v7427 = vrot.slane %v7419, %v7426
  %v7429 = vunpack.c.l.s4 1983009808
  %v7430 = vunpack.c.0.s8 %v7429
  %v7431 = vlaneseq
  %v7432 = vshrl.u32 %v7431, 7
  %v7433 = vsub.s32 %v7430, %v7432
  %v7434 = vrot.slane %v7420, %v7433
  %v7435 = vcombine.low %v7427, %v7434
  %7437 = vst.msk [vmem:[#allocation4 + $0x8] sm:$0xff] %vm1602, %v7435
  %v7438 = vld [vmem:[%s107 + $0x1] sm:$0x3]
  %v7439 = vld [vmem:[%s107 + $0x21] sm:$0x3]
  %v7440 = vld [vmem:[%s107 + $0x121] sm:$0x3]
  %v7441 = vld [vmem:[%s107 + $0x141] sm:$0x3]
  %v7446 = vcombine.low %v7438, %v7439
  %v7447 = vcombine.low %v7440, %v7441
  %v7449 = vunpack.c.l.s4 1983009808
  %v7450 = vunpack.c.0.s8 %v7449
  %v7451 = vlaneseq
  %v7452 = vshrl.u32 %v7451, 7
  %v7453 = vsub.s32 %v7450, %v7452
  %v7454 = vrot.slane %v7446, %v7453
  %v7456 = vunpack.c.l.s4 1983009808
  %v7457 = vunpack.c.0.s8 %v7456
  %v7458 = vlaneseq
  %v7459 = vshrl.u32 %v7458, 7
  %v7460 = vsub.s32 %v7457, %v7459
  %v7461 = vrot.slane %v7447, %v7460
  %v7462 = vcombine.low %v7454, %v7461
  %7464 = vst.msk [vmem:[#allocation4 + $0x10] sm:$0xff] %vm1429, %v7462
  %v7465 = vld [vmem:[%s107 + $0x1] sm:$0x3]
  %v7466 = vld [vmem:[%s107 + $0x21] sm:$0x3]
  %v7467 = vld [vmem:[%s107 + $0x121] sm:$0x3]
  %v7468 = vld [vmem:[%s107 + $0x141] sm:$0x3]
  %v7473 = vcombine.low %v7465, %v7466
  %v7474 = vcombine.low %v7467, %v7468
  %v7476 = vunpack.c.l.s4 1983009808
  %v7477 = vunpack.c.0.s8 %v7476
  %v7478 = vlaneseq
  %v7479 = vshrl.u32 %v7478, 7
  %v7480 = vsub.s32 %v7477, %v7479
  %v7481 = vrot.slane %v7473, %v7480
  %v7483 = vunpack.c.l.s4 1983009808
  %v7484 = vunpack.c.0.s8 %v7483
  %v7485 = vlaneseq
  %v7486 = vshrl.u32 %v7485, 7
  %v7487 = vsub.s32 %v7484, %v7486
  %v7488 = vrot.slane %v7474, %v7487
  %v7489 = vcombine.low %v7481, %v7488
  %7491 = vst.msk [vmem:[#allocation4 + $0x10] sm:$0xff] %vm1602, %v7489
  %v7492 = vld [vmem:[%s728] sm:$0x3]
  %v7493 = vld [vmem:[%s728 + $0x20] sm:$0x3]
  %v7494 = vld [vmem:[%s728 + $0x120] sm:$0x3]
  %v7495 = vld [vmem:[%s728 + $0x140] sm:$0x3]
  %v7500 = vcombine.low %v7492, %v7493
  %v7501 = vcombine.low %v7494, %v7495
  %v7503 = vunpack.c.l.s4 1983009808
  %v7504 = vunpack.c.0.s8 %v7503
  %v7505 = vlaneseq
  %v7506 = vshrl.u32 %v7505, 7
  %v7507 = vsub.s32 %v7504, %v7506
  %v7508 = vrot.slane %v7500, %v7507
  %v7510 = vunpack.c.l.s4 1983009808
  %v7511 = vunpack.c.0.s8 %v7510
  %v7512 = vlaneseq
  %v7513 = vshrl.u32 %v7512, 7
  %v7514 = vsub.s32 %v7511, %v7513
  %v7515 = vrot.slane %v7501, %v7514
  %v7516 = vcombine.low %v7508, %v7515
  %7517 = vrot.lane.b32.xlu0 %v7516, 64
  %v7518 = vpop.permute.xlu0 %7517
  %7520 = vst.msk [vmem:[#allocation4 + $0x18] sm:$0xff] %vm1429, %v7518
  %v7521 = vld [vmem:[%s728 + $0x1] sm:$0x3]
  %v7522 = vld [vmem:[%s728 + $0x21] sm:$0x3]
  %v7523 = vld [vmem:[%s728 + $0x121] sm:$0x3]
  %v7524 = vld [vmem:[%s728 + $0x141] sm:$0x3]
  %v7529 = vcombine.low %v7521, %v7522
  %v7530 = vcombine.low %v7523, %v7524
  %v7532 = vunpack.c.l.s4 1983009808
  %v7533 = vunpack.c.0.s8 %v7532
  %v7534 = vlaneseq
  %v7535 = vshrl.u32 %v7534, 7
  %v7536 = vsub.s32 %v7533, %v7535
  %v7537 = vrot.slane %v7529, %v7536
  %v7539 = vunpack.c.l.s4 1983009808
  %v7540 = vunpack.c.0.s8 %v7539
  %v7541 = vlaneseq
  %v7542 = vshrl.u32 %v7541, 7
  %v7543 = vsub.s32 %v7540, %v7542
  %v7544 = vrot.slane %v7530, %v7543
  %v7545 = vcombine.low %v7537, %v7544
  %7546 = vrot.lane.b32.xlu0 %v7545, 64
  %v7547 = vpop.permute.xlu0 %7546
  %7549 = vst.msk [vmem:[#allocation4 + $0x18] sm:$0xff] %vm1602, %v7547
  %v7550 = vld [vmem:[%s728 + $0x1] sm:$0x3]
  %v7551 = vld [vmem:[%s728 + $0x21] sm:$0x3]
  %v7552 = vld [vmem:[%s728 + $0x121] sm:$0x3]
  %v7553 = vld [vmem:[%s728 + $0x141] sm:$0x3]
  %v7558 = vcombine.low %v7550, %v7551
  %v7559 = vcombine.low %v7552, %v7553
  %v7561 = vunpack.c.l.s4 1983009808
  %v7562 = vunpack.c.0.s8 %v7561
  %v7563 = vlaneseq
  %v7564 = vshrl.u32 %v7563, 7
  %v7565 = vsub.s32 %v7562, %v7564
  %v7566 = vrot.slane %v7558, %v7565
  %v7568 = vunpack.c.l.s4 1983009808
  %v7569 = vunpack.c.0.s8 %v7568
  %v7570 = vlaneseq
  %v7571 = vshrl.u32 %v7570, 7
  %v7572 = vsub.s32 %v7569, %v7571
  %v7573 = vrot.slane %v7559, %v7572
  %v7574 = vcombine.low %v7566, %v7573
  %7575 = vrot.lane.b32.xlu0 %v7574, 64
  %v7576 = vpop.permute.xlu0 %7575
  %7578 = vst.msk [vmem:[#allocation4 + $0x20] sm:$0xff] %vm1429, %v7576
  %v7579 = vld [vmem:[#allocation4] sm:$0xff]
  %v7580 = vld [vmem:[#allocation4 + $0x8] sm:$0xff]
  %v7581 = vld [vmem:[#allocation4 + $0x10] sm:$0xff]
  %v7582 = vld [vmem:[#allocation4 + $0x18] sm:$0xff]
  %v7583 = vld [vmem:[#allocation4 + $0x20] sm:$0xff]
  %v7585 = vsel %vm1429, %v7583, 0
  %7587 = vmatprep.subr.mxu0 0.0
  %7588 = vmatpush1.msra.mxu0 %v6970
  %7589 = vmatprep.subr.mxu0 0.0
  %7590 = vmatpush1.msra.mxu0 %v6971
  %7591 = vmatprep.subr.mxu0 0.0
  %7592 = vmatpush1.msra.mxu0 %v6972
  %7593 = vmatprep.subr.mxu0 0.0
  %7594 = vmatpush1.msra.mxu0 %v6973
  %7595 = vmatprep.subr.mxu0 0.0
  %7596 = vmatpush1.msra.mxu0 %v6974
  %7597 = vmatprep.subr.mxu0 0.0
  %7598 = vmatpush1.msra.mxu0 %v6975
  %7599 = vmatprep.subr.mxu0 0.0
  %7600 = vmatpush1.msra.mxu0 %v6976
  %7601 = vmatprep.subr.mxu0 0.0
  %7602 = vmatpush1.msra.mxu0 %v6977
  %7603 = vmatprep.subr.mxu0 0.0
  %7604 = vmatpush1.msra.mxu0 %v6978
  %7605 = vmatprep.subr.mxu0 0.0
  %7606 = vmatpush1.msra.mxu0 %v6979
  %7607 = vmatprep.subr.mxu0 0.0
  %7608 = vmatpush1.msra.mxu0 %v6980
  %7609 = vmatprep.subr.mxu0 0.0
  %7610 = vmatpush1.msra.mxu0 %v6981
  %7611 = vmatprep.subr.mxu0 0.0
  %7612 = vmatpush1.msra.mxu0 %v6982
  %7613 = vmatprep.subr.mxu0 0.0
  %7614 = vmatpush1.msra.mxu0 %v6983
  %7615 = vmatprep.subr.mxu0 0.0
  %7616 = vmatpush1.msra.mxu0 %v6984
  %7617 = vmatprep.subr.mxu0 0.0
  %7618 = vmatpush1.msra.mxu0 %v6985
  %7619 = vmatprep.subr.mxu0 0.0
  %7620 = vmatpush1.msra.mxu0 %v6986
  %7621 = vmatprep.subr.mxu0 0.0
  %7622 = vmatpush1.msra.mxu0 %v6987
  %7623 = vmatprep.subr.mxu0 0.0
  %7624 = vmatpush1.msra.mxu0 %v6988
  %7625 = vmatprep.subr.mxu0 0.0
  %7626 = vmatpush1.msra.mxu0 %v6989
  %7627 = vmatprep.subr.mxu0 0.0
  %7628 = vmatpush1.msra.mxu0 %v6990
  %7629 = vmatprep.subr.mxu0 0.0
  %7630 = vmatpush1.msra.mxu0 %v6991
  %7631 = vmatprep.subr.mxu0 0.0
  %7632 = vmatpush1.msra.mxu0 %v6992
  %7633 = vmatprep.subr.mxu0 0.0
  %7634 = vmatpush1.msra.mxu0 %v6993
  %7635 = vmatprep.subr.mxu0 0.0
  %7636 = vmatpush1.msra.mxu0 %v6994
  %7637 = vmatprep.subr.mxu0 0.0
  %7638 = vmatpush1.msra.mxu0 %v6995
  %7639 = vmatprep.subr.mxu0 0.0
  %7640 = vmatpush1.msra.mxu0 %v6996
  %7641 = vmatprep.subr.mxu0 0.0
  %7642 = vmatpush1.msra.mxu0 %v6997
  %7643 = vmatprep.subr.mxu0 0.0
  %7644 = vmatpush1.msra.mxu0 %v6998
  %7645 = vmatprep.subr.mxu0 0.0
  %7646 = vmatpush1.msra.mxu0 %v6999
  %7647 = vmatprep.subr.mxu0 0.0
  %7648 = vmatpush1.msra.mxu0 %v7000
  %7649 = vmatprep.subr.mxu0 0.0
  %7650 = vmatpush1.msra.mxu0 %v7001
  %7651 = vmatprep.mubr.f32.mxu0 %v7580
  %7652 = vmatmul.mubr.f32.gmra.mrb[0].mxu0 %v7579
  %v7653 = vpop.f32.mrb[0].mxu0
  %v7654 = vadd.f32 %v7042, %v7653
  %v7655 = vpop.f32.mrb[0].mxu0
  %7656 = vdwg.mxu0
  %7657 = vmatprep.subr.mxu0 0.0
  %7658 = vmatpush1.msra.mxu0 %v7002
  %7659 = vmatprep.subr.mxu0 0.0
  %7660 = vmatpush1.msra.mxu0 %v7003
  %7661 = vmatprep.subr.mxu0 0.0
  %7662 = vmatpush1.msra.mxu0 %v7004
  %7663 = vmatprep.subr.mxu0 0.0
  %7664 = vmatpush1.msra.mxu0 %v7005
  %7665 = vmatprep.subr.mxu0 0.0
  %7666 = vmatpush1.msra.mxu0 %v7006
  %7667 = vmatprep.subr.mxu0 0.0
  %7668 = vmatpush1.msra.mxu0 %v7007
  %7669 = vmatprep.subr.mxu0 0.0
  %7670 = vmatpush1.msra.mxu0 %v7008
  %7671 = vmatprep.subr.mxu0 0.0
  %7672 = vmatpush1.msra.mxu0 %v7009
  %7673 = vmatprep.subr.mxu0 0.0
  %7674 = vmatpush1.msra.mxu0 %v7010
  %7675 = vmatprep.subr.mxu0 0.0
  %7676 = vmatpush1.msra.mxu0 %v7011
  %7677 = vmatprep.subr.mxu0 0.0
  %7678 = vmatpush1.msra.mxu0 %v7012
  %7679 = vmatprep.subr.mxu0 0.0
  %7680 = vmatpush1.msra.mxu0 %v7013
  %7681 = vmatprep.subr.mxu0 0.0
  %7682 = vmatpush1.msra.mxu0 %v7014
  %7683 = vmatprep.subr.mxu0 0.0
  %7684 = vmatpush1.msra.mxu0 %v7015
  %7685 = vmatprep.subr.mxu0 0.0
  %7686 = vmatpush1.msra.mxu0 %v7016
  %7687 = vmatprep.subr.mxu0 0.0
  %7688 = vmatpush1.msra.mxu0 %v7017
  %7689 = vmatprep.subr.mxu0 0.0
  %7690 = vmatpush1.msra.mxu0 %v7018
  %7691 = vmatprep.subr.mxu0 0.0
  %7692 = vmatpush1.msra.mxu0 %v7019
  %7693 = vmatprep.subr.mxu0 0.0
  %7694 = vmatpush1.msra.mxu0 %v7020
  %7695 = vmatprep.subr.mxu0 0.0
  %7696 = vmatpush1.msra.mxu0 %v7021
  %7697 = vmatprep.subr.mxu0 0.0
  %7698 = vmatpush1.msra.mxu0 %v7022
  %7699 = vmatprep.subr.mxu0 0.0
  %7700 = vmatpush1.msra.mxu0 %v7023
  %7701 = vmatprep.subr.mxu0 0.0
  %7702 = vmatpush1.msra.mxu0 %v7024
  %7703 = vmatprep.subr.mxu0 0.0
  %7704 = vmatpush1.msra.mxu0 %v7025
  %7705 = vmatprep.subr.mxu0 0.0
  %7706 = vmatpush1.msra.mxu0 %v7026
  %7707 = vmatprep.subr.mxu0 0.0
  %7708 = vmatpush1.msra.mxu0 %v7027
  %7709 = vmatprep.subr.mxu0 0.0
  %7710 = vmatpush1.msra.mxu0 %v7028
  %7711 = vmatprep.subr.mxu0 0.0
  %7712 = vmatpush1.msra.mxu0 %v7029
  %7713 = vmatprep.subr.mxu0 0.0
  %7714 = vmatpush1.msra.mxu0 %v7030
  %7715 = vmatprep.subr.mxu0 0.0
  %7716 = vmatpush1.msra.mxu0 %v7031
  %7717 = vmatprep.subr.mxu0 0.0
  %7718 = vmatpush1.msra.mxu0 %v7032
  %7719 = vmatprep.subr.mxu0 0.0
  %7720 = vmatpush1.msra.mxu0 %v7033
  %7721 = vmatprep.mubr.f32.mxu0 %v7582
  %7722 = vmatmul.mubr.f32.gmra.mrb[0].mxu0 %v7581
  %v7723 = vpop.f32.mrb[0].mxu0
  %v7724 = vadd.f32 %v7654, %v7723
  %v7725 = vpop.f32.mrb[0].mxu0
  %7726 = vdwg.mxu0
  %7727 = vmatprep.subr.mxu0 0.0
  %7728 = vmatpush1.msra.mxu0 %v7034
  %7729 = vmatprep.subr.mxu0 0.0
  %7730 = vmatpush1.msra.mxu0 %v7035
  %7731 = vmatprep.subr.mxu0 0.0
  %7732 = vmatpush1.msra.mxu0 %v7036
  %7733 = vmatprep.subr.mxu0 0.0
  %7734 = vmatpush1.msra.mxu0 %v7037
  %7735 = vmatprep.subr.mxu0 0.0
  %7736 = vmatpush1.msra.mxu0 %v7038
  %7737 = vmatprep.subr.mxu0 0.0
  %7738 = vmatpush1.msra.mxu0 %v7039
  %7739 = vmatprep.subr.mxu0 0.0
  %7740 = vmatpush1.msra.mxu0 %v7040
  %7741 = vmatprep.subr.mxu0 0.0
  %7742 = vmatpush1.msra.mxu0 %v7041
  %7743 = vmatprep.subr.mxu0 0.0
  %7744 = vmatpush1.msra.mxu0 0.0
  %7745 = vmatprep.subr.mxu0 0.0
  %7746 = vmatpush1.msra.mxu0 0.0
  %7747 = vmatprep.subr.mxu0 0.0
  %7748 = vmatpush1.msra.mxu0 0.0
  %7749 = vmatprep.subr.mxu0 0.0
  %7750 = vmatpush1.msra.mxu0 0.0
  %7751 = vmatprep.subr.mxu0 0.0
  %7752 = vmatpush1.msra.mxu0 0.0
  %7753 = vmatprep.subr.mxu0 0.0
  %7754 = vmatpush1.msra.mxu0 0.0
  %7755 = vmatprep.subr.mxu0 0.0
  %7756 = vmatpush1.msra.mxu0 0.0
  %7757 = vmatprep.subr.mxu0 0.0
  %7758 = vmatpush1.msra.mxu0 0.0
  %7759 = vmatprep.subr.mxu0 0.0
  %7760 = vmatpush1.msra.mxu0 0.0
  %7761 = vmatprep.subr.mxu0 0.0
  %7762 = vmatpush1.msra.mxu0 0.0
  %7763 = vmatprep.subr.mxu0 0.0
  %7764 = vmatpush1.msra.mxu0 0.0
  %7765 = vmatprep.subr.mxu0 0.0
  %7766 = vmatpush1.msra.mxu0 0.0
  %7767 = vmatprep.subr.mxu0 0.0
  %7768 = vmatpush1.msra.mxu0 0.0
  %7769 = vmatprep.subr.mxu0 0.0
  %7770 = vmatpush1.msra.mxu0 0.0
  %7771 = vmatprep.subr.mxu0 0.0
  %7772 = vmatpush1.msra.mxu0 0.0
  %7773 = vmatprep.subr.mxu0 0.0
  %7774 = vmatpush1.msra.mxu0 0.0
  %7775 = vmatprep.subr.mxu0 0.0
  %7776 = vmatpush1.msra.mxu0 0.0
  %7777 = vmatprep.subr.mxu0 0.0
  %7778 = vmatpush1.msra.mxu0 0.0
  %7779 = vmatprep.subr.mxu0 0.0
  %7780 = vmatpush1.msra.mxu0 0.0
  %7781 = vmatprep.subr.mxu0 0.0
  %7782 = vmatpush1.msra.mxu0 0.0
  %7783 = vmatprep.subr.mxu0 0.0
  %7784 = vmatpush1.msra.mxu0 0.0
  %7785 = vmatprep.subr.mxu0 0.0
  %7786 = vmatpush1.msra.mxu0 0.0
  %7787 = vmatprep.subr.mxu0 0.0
  %7788 = vmatpush1.msra.mxu0 0.0
  %7789 = vmatprep.subr.mxu0 0.0
  %7790 = vmatpush1.msra.mxu0 0.0
  %7791 = vmatprep.mubr.f32.mxu0 0.0
  %7792 = vmatmul.mubr.f32.gmra.mrb[0].mxu0 %v7585
  %v7793 = vpop.f32.mrb[0].mxu0
  %v7794 = vadd.f32 %v7724, %v7793
  %v7795 = vpop.f32.mrb[0].mxu0
  %7796 = vdwg.mxu0
  %vm7797 = vcmp.ge.f32.partialorder %v7794, 0.0
  %v7798 = vmul.f32 %v7794, 0.01
  %v7799 = vsel %vm7797, %v7794, %v7798
  %s7800 = scalar_lea.vmem %s3, 3456
  %v7801 = vld [vmem:[%s7800] sm:$0xff]
  %v7802 = vld [vmem:[%s7800 + $0x8] sm:$0xff]
  %v7803 = vld [vmem:[%s7800 + $0x10] sm:$0xff]
  %v7804 = vld [vmem:[%s7800 + $0x18] sm:$0xff]
  %v7805 = vld [vmem:[%s7800 + $0x20] sm:$0xff]
  %v7806 = vld [vmem:[%s7800 + $0x28] sm:$0xff]
  %v7807 = vld [vmem:[%s7800 + $0x30] sm:$0xff]
  %v7808 = vld [vmem:[%s7800 + $0x38] sm:$0xff]
  %v7809 = vld [vmem:[%s7800 + $0x40] sm:$0xff]
  %v7810 = vld [vmem:[%s7800 + $0x48] sm:$0xff]
  %v7811 = vld [vmem:[%s7800 + $0x50] sm:$0xff]
  %v7812 = vld [vmem:[%s7800 + $0x58] sm:$0xff]
  %v7813 = vld [vmem:[%s7800 + $0x60] sm:$0xff]
  %v7814 = vld [vmem:[%s7800 + $0x68] sm:$0xff]
  %v7815 = vld [vmem:[%s7800 + $0x70] sm:$0xff]
  %v7816 = vld [vmem:[%s7800 + $0x78] sm:$0xff]
  %v7817 = vld [vmem:[%s7800 + $0x80] sm:$0xff]
  %v7818 = vld [vmem:[%s7800 + $0x88] sm:$0xff]
  %v7819 = vld [vmem:[%s7800 + $0x90] sm:$0xff]
  %v7820 = vld [vmem:[%s7800 + $0x98] sm:$0xff]
  %v7821 = vld [vmem:[%s7800 + $0xa0] sm:$0xff]
  %v7822 = vld [vmem:[%s7800 + $0xa8] sm:$0xff]
  %v7823 = vld [vmem:[%s7800 + $0xb0] sm:$0xff]
  %v7824 = vld [vmem:[%s7800 + $0xb8] sm:$0xff]
  %v7825 = vld [vmem:[%s7800 + $0xc0] sm:$0xff]
  %v7826 = vld [vmem:[%s7800 + $0xc8] sm:$0xff]
  %v7827 = vld [vmem:[%s7800 + $0xd0] sm:$0xff]
  %v7828 = vld [vmem:[%s7800 + $0xd8] sm:$0xff]
  %v7829 = vld [vmem:[%s7800 + $0xe0] sm:$0xff]
  %v7830 = vld [vmem:[%s7800 + $0xe8] sm:$0xff]
  %v7831 = vld [vmem:[%s7800 + $0xf0] sm:$0xff]
  %v7832 = vld [vmem:[%s7800 + $0xf8] sm:$0xff]
  %v7833 = vld [vmem:[%s7800 + $0x100] sm:$0xff]
  %v7834 = vld [vmem:[%s7800 + $0x108] sm:$0xff]
  %v7835 = vld [vmem:[%s7800 + $0x110] sm:$0xff]
  %v7836 = vld [vmem:[%s7800 + $0x118] sm:$0xff]
  %v7837 = vld [vmem:[%s7800 + $0x120] sm:$0xff]
  %v7838 = vld [vmem:[%s7800 + $0x128] sm:$0xff]
  %v7839 = vld [vmem:[%s7800 + $0x130] sm:$0xff]
  %v7840 = vld [vmem:[%s7800 + $0x138] sm:$0xff]
  %v7841 = vld [vmem:[%s7800 + $0x140] sm:$0xff]
  %v7842 = vld [vmem:[%s7800 + $0x148] sm:$0xff]
  %v7843 = vld [vmem:[%s7800 + $0x150] sm:$0xff]
  %v7844 = vld [vmem:[%s7800 + $0x158] sm:$0xff]
  %v7845 = vld [vmem:[%s7800 + $0x160] sm:$0xff]
  %v7846 = vld [vmem:[%s7800 + $0x168] sm:$0xff]
  %v7847 = vld [vmem:[%s7800 + $0x170] sm:$0xff]
  %v7848 = vld [vmem:[%s7800 + $0x178] sm:$0xff]
  %v7849 = vld [vmem:[%s7800 + $0x180] sm:$0xff]
  %v7850 = vld [vmem:[%s7800 + $0x188] sm:$0xff]
  %v7851 = vld [vmem:[%s7800 + $0x190] sm:$0xff]
  %v7852 = vld [vmem:[%s7800 + $0x198] sm:$0xff]
  %v7853 = vld [vmem:[%s7800 + $0x1a0] sm:$0xff]
  %v7854 = vld [vmem:[%s7800 + $0x1a8] sm:$0xff]
  %v7855 = vld [vmem:[%s7800 + $0x1b0] sm:$0xff]
  %v7856 = vld [vmem:[%s7800 + $0x1b8] sm:$0xff]
  %v7857 = vld [vmem:[%s7800 + $0x1c0] sm:$0xff]
  %v7858 = vld [vmem:[%s7800 + $0x1c8] sm:$0xff]
  %v7859 = vld [vmem:[%s7800 + $0x1d0] sm:$0xff]
  %v7860 = vld [vmem:[%s7800 + $0x1d8] sm:$0xff]
  %v7861 = vld [vmem:[%s7800 + $0x1e0] sm:$0xff]
  %v7862 = vld [vmem:[%s7800 + $0x1e8] sm:$0xff]
  %v7863 = vld [vmem:[%s7800 + $0x1f0] sm:$0xff]
  %v7864 = vld [vmem:[%s7800 + $0x1f8] sm:$0xff]
  %v7865 = vld [vmem:[%s7800 + $0x200] sm:$0xff]
  %v7866 = vld [vmem:[%s7800 + $0x208] sm:$0xff]
  %v7867 = vld [vmem:[%s7800 + $0x210] sm:$0xff]
  %v7868 = vld [vmem:[%s7800 + $0x218] sm:$0xff]
  %v7869 = vld [vmem:[%s7800 + $0x220] sm:$0xff]
  %v7870 = vld [vmem:[%s7800 + $0x228] sm:$0xff]
  %v7871 = vld [vmem:[%s7800 + $0x230] sm:$0xff]
  %v7872 = vld [vmem:[%s7800 + $0x238] sm:$0xff]
  %v7873 = vld [vmem:[%s1 + $0x7] ss:$0 sm:$0xff]
  %s7874 = scalar_lea.vmem %s3, 4032
  %v7875 = vld [vmem:[%s7874] sm:$0xff]
  %v7876 = vld [vmem:[%s7874 + $0x8] sm:$0xff]
  %v7877 = vld [vmem:[%s7874 + $0x10] sm:$0xff]
  %v7878 = vld [vmem:[%s7874 + $0x18] sm:$0xff]
  %v7879 = vld [vmem:[%s7874 + $0x20] sm:$0xff]
  %v7880 = vld [vmem:[%s7874 + $0x28] sm:$0xff]
  %v7881 = vld [vmem:[%s7874 + $0x30] sm:$0xff]
  %v7882 = vld [vmem:[%s7874 + $0x38] sm:$0xff]
  %v7883 = vld [vmem:[%s7874 + $0x40] sm:$0xff]
  %v7884 = vld [vmem:[%s7874 + $0x48] sm:$0xff]
  %v7885 = vld [vmem:[%s7874 + $0x50] sm:$0xff]
  %v7886 = vld [vmem:[%s7874 + $0x58] sm:$0xff]
  %v7887 = vld [vmem:[%s7874 + $0x60] sm:$0xff]
  %v7888 = vld [vmem:[%s7874 + $0x68] sm:$0xff]
  %v7889 = vld [vmem:[%s7874 + $0x70] sm:$0xff]
  %v7890 = vld [vmem:[%s7874 + $0x78] sm:$0xff]
  %v7891 = vld [vmem:[%s7874 + $0x80] sm:$0xff]
  %v7892 = vld [vmem:[%s7874 + $0x88] sm:$0xff]
  %v7893 = vld [vmem:[%s7874 + $0x90] sm:$0xff]
  %v7894 = vld [vmem:[%s7874 + $0x98] sm:$0xff]
  %v7895 = vld [vmem:[%s7874 + $0xa0] sm:$0xff]
  %v7896 = vld [vmem:[%s7874 + $0xa8] sm:$0xff]
  %v7897 = vld [vmem:[%s7874 + $0xb0] sm:$0xff]
  %v7898 = vld [vmem:[%s7874 + $0xb8] sm:$0xff]
  %v7899 = vld [vmem:[%s7874 + $0xc0] sm:$0xff]
  %v7900 = vld [vmem:[%s7874 + $0xc8] sm:$0xff]
  %v7901 = vld [vmem:[%s7874 + $0xd0] sm:$0xff]
  %v7902 = vld [vmem:[%s7874 + $0xd8] sm:$0xff]
  %v7903 = vld [vmem:[%s7874 + $0xe0] sm:$0xff]
  %v7904 = vld [vmem:[%s7874 + $0xe8] sm:$0xff]
  %v7905 = vld [vmem:[%s7874 + $0xf0] sm:$0xff]
  %v7906 = vld [vmem:[%s7874 + $0xf8] sm:$0xff]
  %v7907 = vld [vmem:[%s7874 + $0x100] sm:$0xff]
  %v7908 = vld [vmem:[%s7874 + $0x108] sm:$0xff]
  %v7909 = vld [vmem:[%s7874 + $0x110] sm:$0xff]
  %v7910 = vld [vmem:[%s7874 + $0x118] sm:$0xff]
  %v7911 = vld [vmem:[%s7874 + $0x120] sm:$0xff]
  %v7912 = vld [vmem:[%s7874 + $0x128] sm:$0xff]
  %v7913 = vld [vmem:[%s7874 + $0x130] sm:$0xff]
  %v7914 = vld [vmem:[%s7874 + $0x138] sm:$0xff]
  %v7915 = vld [vmem:[%s7874 + $0x140] sm:$0xff]
  %v7916 = vld [vmem:[%s7874 + $0x148] sm:$0xff]
  %v7917 = vld [vmem:[%s7874 + $0x150] sm:$0xff]
  %v7918 = vld [vmem:[%s7874 + $0x158] sm:$0xff]
  %v7919 = vld [vmem:[%s7874 + $0x160] sm:$0xff]
  %v7920 = vld [vmem:[%s7874 + $0x168] sm:$0xff]
  %v7921 = vld [vmem:[%s7874 + $0x170] sm:$0xff]
  %v7922 = vld [vmem:[%s7874 + $0x178] sm:$0xff]
  %v7923 = vld [vmem:[%s7874 + $0x180] sm:$0xff]
  %v7924 = vld [vmem:[%s7874 + $0x188] sm:$0xff]
  %v7925 = vld [vmem:[%s7874 + $0x190] sm:$0xff]
  %v7926 = vld [vmem:[%s7874 + $0x198] sm:$0xff]
  %v7927 = vld [vmem:[%s7874 + $0x1a0] sm:$0xff]
  %v7928 = vld [vmem:[%s7874 + $0x1a8] sm:$0xff]
  %v7929 = vld [vmem:[%s7874 + $0x1b0] sm:$0xff]
  %v7930 = vld [vmem:[%s7874 + $0x1b8] sm:$0xff]
  %v7931 = vld [vmem:[%s7874 + $0x1c0] sm:$0xff]
  %v7932 = vld [vmem:[%s7874 + $0x1c8] sm:$0xff]
  %v7933 = vld [vmem:[%s7874 + $0x1d0] sm:$0xff]
  %v7934 = vld [vmem:[%s7874 + $0x1d8] sm:$0xff]
  %v7935 = vld [vmem:[%s7874 + $0x1e0] sm:$0xff]
  %v7936 = vld [vmem:[%s7874 + $0x1e8] sm:$0xff]
  %v7937 = vld [vmem:[%s7874 + $0x1f0] sm:$0xff]
  %v7938 = vld [vmem:[%s7874 + $0x1f8] sm:$0xff]
  %v7939 = vld [vmem:[%s7874 + $0x200] sm:$0xff]
  %v7940 = vld [vmem:[%s7874 + $0x208] sm:$0xff]
  %v7941 = vld [vmem:[%s7874 + $0x210] sm:$0xff]
  %v7942 = vld [vmem:[%s7874 + $0x218] sm:$0xff]
  %v7943 = vld [vmem:[%s7874 + $0x220] sm:$0xff]
  %v7944 = vld [vmem:[%s7874 + $0x228] sm:$0xff]
  %v7945 = vld [vmem:[%s7874 + $0x230] sm:$0xff]
  %v7946 = vld [vmem:[%s7874 + $0x238] sm:$0xff]
  %v7947 = vld [vmem:[%s1 + $0x10] ss:$0 sm:$0xff]
  %7948 = vst.msk [vmem:[#allocation2] sm:$0xf] %vm4423, 0.0
  %7949 = vst.msk [vmem:[#allocation2 + $0xa0] sm:$0xf] %vm4423, 0.0
  %s7950 = scalar_lea.vmem [#allocation2], 48
  %7951 = vst.msk [vmem:[%s7950] sm:$0xf] %vm4423, 0.0
  %7952 = vst.msk [vmem:[%s7950 + $0xa0] sm:$0xf] %vm4423, 0.0
  %7953 = vst.msk [vmem:[%s1440] sm:$0x1] %vm1441, 0.0
  %7954 = vst.msk [vmem:[%s1440 + $0x10] sm:$0x1] %vm1441, 0.0
  %7955 = vst.msk [vmem:[%s1440 + $0xa0] sm:$0x1] %vm1441, 0.0
  %7956 = vst.msk [vmem:[%s1440 + $0xb0] sm:$0x1] %vm1441, 0.0
  %7957 = vst.msk [vmem:[%s1440 + $0x3] sm:$0x1] %vm1441, 0.0
  %7958 = vst.msk [vmem:[%s1440 + $0x13] sm:$0x1] %vm1441, 0.0
  %7959 = vst.msk [vmem:[%s1440 + $0xa3] sm:$0x1] %vm1441, 0.0
  %7960 = vst.msk [vmem:[%s1440 + $0xb3] sm:$0x1] %vm1441, 0.0
  %v7962 = vcombine.high %v7799, %v7799
  %v7964 = vunpack.c.l.s4 1983009808
  %v7965 = vunpack.c.0.s8 %v7964
  %v7966 = vlaneseq
  %v7967 = vshrl.u32 %v7966, 7
  %v7968 = vsub.s32 %v7965, %v7967
  %v7969 = vrot.slane %v7799, %v7968
  %v7971 = vunpack.c.l.s4 1983009808
  %v7972 = vunpack.c.0.s8 %v7971
  %v7973 = vlaneseq
  %v7974 = vshrl.u32 %v7973, 7
  %v7975 = vsub.s32 %v7972, %v7974
  %v7976 = vrot.slane %v7962, %v7975
  %v7977 = vcombine.high %v7969, %v7969
  %v7978 = vcombine.high %v7976, %v7976
  %7983 = vst.msk [vmem:[%s1440 + $0x1] sm:$0x3] %vm1431, %v7969
  %7984 = vst.msk [vmem:[%s1440 + $0x11] sm:$0x3] %vm1431, %v7977
  %7985 = vst.msk [vmem:[%s1440 + $0xa1] sm:$0x3] %vm1431, %v7976
  %7986 = vst.msk [vmem:[%s1440 + $0xb1] sm:$0x3] %vm1431, %v7978
  %v7987 = vld [vmem:[#allocation2] sm:$0x3]
  %v7988 = vld [vmem:[#allocation2 + $0x10] sm:$0x3]
  %v7989 = vld [vmem:[#allocation2 + $0xa0] sm:$0x3]
  %v7990 = vld [vmem:[#allocation2 + $0xb0] sm:$0x3]
  %v7995 = vcombine.low %v7987, %v7988
  %v7996 = vcombine.low %v7989, %v7990
  %v7998 = vunpack.c.l.s4 1983009808
  %v7999 = vunpack.c.0.s8 %v7998
  %v8000 = vlaneseq
  %v8001 = vshrl.u32 %v8000, 7
  %v8002 = vsub.s32 %v7999, %v8001
  %v8003 = vrot.slane %v7995, %v8002
  %v8005 = vunpack.c.l.s4 1983009808
  %v8006 = vunpack.c.0.s8 %v8005
  %v8007 = vlaneseq
  %v8008 = vshrl.u32 %v8007, 7
  %v8009 = vsub.s32 %v8006, %v8008
  %v8010 = vrot.slane %v7996, %v8009
  %v8011 = vcombine.low %v8003, %v8010
  %8013 = vst.msk [vmem:[#allocation4] sm:$0xff] %vm1429, %v8011
  %v8014 = vld [vmem:[#allocation2 + $0x1] sm:$0x3]
  %v8015 = vld [vmem:[#allocation2 + $0x11] sm:$0x3]
  %v8016 = vld [vmem:[#allocation2 + $0xa1] sm:$0x3]
  %v8017 = vld [vmem:[#allocation2 + $0xb1] sm:$0x3]
  %v8022 = vcombine.low %v8014, %v8015
  %v8023 = vcombine.low %v8016, %v8017
  %v8025 = vunpack.c.l.s4 1983009808
  %v8026 = vunpack.c.0.s8 %v8025
  %v8027 = vlaneseq
  %v8028 = vshrl.u32 %v8027, 7
  %v8029 = vsub.s32 %v8026, %v8028
  %v8030 = vrot.slane %v8022, %v8029
  %v8032 = vunpack.c.l.s4 1983009808
  %v8033 = vunpack.c.0.s8 %v8032
  %v8034 = vlaneseq
  %v8035 = vshrl.u32 %v8034, 7
  %v8036 = vsub.s32 %v8033, %v8035
  %v8037 = vrot.slane %v8023, %v8036
  %v8038 = vcombine.low %v8030, %v8037
  %8039 = vrot.lane.b32.xlu0 %v8038, 64
  %v8040 = vpop.permute.xlu0 %8039
  %8042 = vst.msk [vmem:[#allocation4] sm:$0xff] %vm1602, %v8040
  %v8043 = vld [vmem:[#allocation2 + $0x2] sm:$0x3]
  %v8044 = vld [vmem:[#allocation2 + $0x12] sm:$0x3]
  %v8045 = vld [vmem:[#allocation2 + $0xa2] sm:$0x3]
  %v8046 = vld [vmem:[#allocation2 + $0xb2] sm:$0x3]
  %v8051 = vcombine.low %v8043, %v8044
  %v8052 = vcombine.low %v8045, %v8046
  %v8054 = vunpack.c.l.s4 1983009808
  %v8055 = vunpack.c.0.s8 %v8054
  %v8056 = vlaneseq
  %v8057 = vshrl.u32 %v8056, 7
  %v8058 = vsub.s32 %v8055, %v8057
  %v8059 = vrot.slane %v8051, %v8058
  %v8061 = vunpack.c.l.s4 1983009808
  %v8062 = vunpack.c.0.s8 %v8061
  %v8063 = vlaneseq
  %v8064 = vshrl.u32 %v8063, 7
  %v8065 = vsub.s32 %v8062, %v8064
  %v8066 = vrot.slane %v8052, %v8065
  %v8067 = vcombine.low %v8059, %v8066
  %8069 = vst.msk [vmem:[#allocation4 + $0x8] sm:$0xff] %vm1429, %v8067
  %v8070 = vld [vmem:[%s1440] sm:$0x3]
  %v8071 = vld [vmem:[%s1440 + $0x10] sm:$0x3]
  %v8072 = vld [vmem:[%s1440 + $0xa0] sm:$0x3]
  %v8073 = vld [vmem:[%s1440 + $0xb0] sm:$0x3]
  %v8078 = vcombine.low %v8070, %v8071
  %v8079 = vcombine.low %v8072, %v8073
  %v8081 = vunpack.c.l.s4 1983009808
  %v8082 = vunpack.c.0.s8 %v8081
  %v8083 = vlaneseq
  %v8084 = vshrl.u32 %v8083, 7
  %v8085 = vsub.s32 %v8082, %v8084
  %v8086 = vrot.slane %v8078, %v8085
  %v8088 = vunpack.c.l.s4 1983009808
  %v8089 = vunpack.c.0.s8 %v8088
  %v8090 = vlaneseq
  %v8091 = vshrl.u32 %v8090, 7
  %v8092 = vsub.s32 %v8089, %v8091
  %v8093 = vrot.slane %v8079, %v8092
  %v8094 = vcombine.low %v8086, %v8093
  %8095 = vrot.lane.b32.xlu0 %v8094, 64
  %v8096 = vpop.permute.xlu0 %8095
  %8098 = vst.msk [vmem:[#allocation4 + $0x8] sm:$0xff] %vm1602, %v8096
  %v8099 = vld [vmem:[%s1440 + $0x1] sm:$0x3]
  %v8100 = vld [vmem:[%s1440 + $0x11] sm:$0x3]
  %v8101 = vld [vmem:[%s1440 + $0xa1] sm:$0x3]
  %v8102 = vld [vmem:[%s1440 + $0xb1] sm:$0x3]
  %v8107 = vcombine.low %v8099, %v8100
  %v8108 = vcombine.low %v8101, %v8102
  %v8110 = vunpack.c.l.s4 1983009808
  %v8111 = vunpack.c.0.s8 %v8110
  %v8112 = vlaneseq
  %v8113 = vshrl.u32 %v8112, 7
  %v8114 = vsub.s32 %v8111, %v8113
  %v8115 = vrot.slane %v8107, %v8114
  %v8117 = vunpack.c.l.s4 1983009808
  %v8118 = vunpack.c.0.s8 %v8117
  %v8119 = vlaneseq
  %v8120 = vshrl.u32 %v8119, 7
  %v8121 = vsub.s32 %v8118, %v8120
  %v8122 = vrot.slane %v8108, %v8121
  %v8123 = vcombine.low %v8115, %v8122
  %8125 = vst.msk [vmem:[#allocation4 + $0x10] sm:$0xff] %vm1429, %v8123
  %v8126 = vld [vmem:[%s1440 + $0x2] sm:$0x3]
  %v8127 = vld [vmem:[%s1440 + $0x12] sm:$0x3]
  %v8128 = vld [vmem:[%s1440 + $0xa2] sm:$0x3]
  %v8129 = vld [vmem:[%s1440 + $0xb2] sm:$0x3]
  %v8134 = vcombine.low %v8126, %v8127
  %v8135 = vcombine.low %v8128, %v8129
  %v8137 = vunpack.c.l.s4 1983009808
  %v8138 = vunpack.c.0.s8 %v8137
  %v8139 = vlaneseq
  %v8140 = vshrl.u32 %v8139, 7
  %v8141 = vsub.s32 %v8138, %v8140
  %v8142 = vrot.slane %v8134, %v8141
  %v8144 = vunpack.c.l.s4 1983009808
  %v8145 = vunpack.c.0.s8 %v8144
  %v8146 = vlaneseq
  %v8147 = vshrl.u32 %v8146, 7
  %v8148 = vsub.s32 %v8145, %v8147
  %v8149 = vrot.slane %v8135, %v8148
  %v8150 = vcombine.low %v8142, %v8149
  %8151 = vrot.lane.b32.xlu0 %v8150, 64
  %v8152 = vpop.permute.xlu0 %8151
  %8154 = vst.msk [vmem:[#allocation4 + $0x10] sm:$0xff] %vm1602, %v8152
  %v8155 = vld [vmem:[%s1875] sm:$0x3]
  %v8156 = vld [vmem:[%s1875 + $0x10] sm:$0x3]
  %v8157 = vld [vmem:[%s1875 + $0xa0] sm:$0x3]
  %v8158 = vld [vmem:[%s1875 + $0xb0] sm:$0x3]
  %v8163 = vcombine.low %v8155, %v8156
  %v8164 = vcombine.low %v8157, %v8158
  %v8166 = vunpack.c.l.s4 1983009808
  %v8167 = vunpack.c.0.s8 %v8166
  %v8168 = vlaneseq
  %v8169 = vshrl.u32 %v8168, 7
  %v8170 = vsub.s32 %v8167, %v8169
  %v8171 = vrot.slane %v8163, %v8170
  %v8173 = vunpack.c.l.s4 1983009808
  %v8174 = vunpack.c.0.s8 %v8173
  %v8175 = vlaneseq
  %v8176 = vshrl.u32 %v8175, 7
  %v8177 = vsub.s32 %v8174, %v8176
  %v8178 = vrot.slane %v8164, %v8177
  %v8179 = vcombine.low %v8171, %v8178
  %8181 = vst.msk [vmem:[#allocation4 + $0x18] sm:$0xff] %vm1429, %v8179
  %v8182 = vld [vmem:[%s1875 + $0x1] sm:$0x3]
  %v8183 = vld [vmem:[%s1875 + $0x11] sm:$0x3]
  %v8184 = vld [vmem:[%s1875 + $0xa1] sm:$0x3]
  %v8185 = vld [vmem:[%s1875 + $0xb1] sm:$0x3]
  %v8190 = vcombine.low %v8182, %v8183
  %v8191 = vcombine.low %v8184, %v8185
  %v8193 = vunpack.c.l.s4 1983009808
  %v8194 = vunpack.c.0.s8 %v8193
  %v8195 = vlaneseq
  %v8196 = vshrl.u32 %v8195, 7
  %v8197 = vsub.s32 %v8194, %v8196
  %v8198 = vrot.slane %v8190, %v8197
  %v8200 = vunpack.c.l.s4 1983009808
  %v8201 = vunpack.c.0.s8 %v8200
  %v8202 = vlaneseq
  %v8203 = vshrl.u32 %v8202, 7
  %v8204 = vsub.s32 %v8201, %v8203
  %v8205 = vrot.slane %v8191, %v8204
  %v8206 = vcombine.low %v8198, %v8205
  %8207 = vrot.lane.b32.xlu0 %v8206, 64
  %v8208 = vpop.permute.xlu0 %8207
  %8210 = vst.msk [vmem:[#allocation4 + $0x18] sm:$0xff] %vm1602, %v8208
  %v8211 = vld [vmem:[%s1875 + $0x2] sm:$0x3]
  %v8212 = vld [vmem:[%s1875 + $0x12] sm:$0x3]
  %v8213 = vld [vmem:[%s1875 + $0xa2] sm:$0x3]
  %v8214 = vld [vmem:[%s1875 + $0xb2] sm:$0x3]
  %v8219 = vcombine.low %v8211, %v8212
  %v8220 = vcombine.low %v8213, %v8214
  %v8222 = vunpack.c.l.s4 1983009808
  %v8223 = vunpack.c.0.s8 %v8222
  %v8224 = vlaneseq
  %v8225 = vshrl.u32 %v8224, 7
  %v8226 = vsub.s32 %v8223, %v8225
  %v8227 = vrot.slane %v8219, %v8226
  %v8229 = vunpack.c.l.s4 1983009808
  %v8230 = vunpack.c.0.s8 %v8229
  %v8231 = vlaneseq
  %v8232 = vshrl.u32 %v8231, 7
  %v8233 = vsub.s32 %v8230, %v8232
  %v8234 = vrot.slane %v8220, %v8233
  %v8235 = vcombine.low %v8227, %v8234
  %8237 = vst.msk [vmem:[#allocation4 + $0x20] sm:$0xff] %vm1429, %v8235
  %v8238 = vld [vmem:[#allocation4] sm:$0xff]
  %v8239 = vld [vmem:[#allocation4 + $0x8] sm:$0xff]
  %v8240 = vld [vmem:[#allocation4 + $0x10] sm:$0xff]
  %v8241 = vld [vmem:[#allocation4 + $0x18] sm:$0xff]
  %v8242 = vld [vmem:[#allocation4 + $0x20] sm:$0xff]
  %v8244 = vsel %vm1429, %v8242, 0
  %8246 = vmatprep.subr.mxu0 0.0
  %8247 = vmatpush1.msra.mxu0 %v7801
  %8248 = vmatprep.subr.mxu0 0.0
  %8249 = vmatpush1.msra.mxu0 %v7802
  %8250 = vmatprep.subr.mxu0 0.0
  %8251 = vmatpush1.msra.mxu0 %v7803
  %8252 = vmatprep.subr.mxu0 0.0
  %8253 = vmatpush1.msra.mxu0 %v7804
  %8254 = vmatprep.subr.mxu0 0.0
  %8255 = vmatpush1.msra.mxu0 %v7805
  %8256 = vmatprep.subr.mxu0 0.0
  %8257 = vmatpush1.msra.mxu0 %v7806
  %8258 = vmatprep.subr.mxu0 0.0
  %8259 = vmatpush1.msra.mxu0 %v7807
  %8260 = vmatprep.subr.mxu0 0.0
  %8261 = vmatpush1.msra.mxu0 %v7808
  %8262 = vmatprep.subr.mxu0 0.0
  %8263 = vmatpush1.msra.mxu0 %v7809
  %8264 = vmatprep.subr.mxu0 0.0
  %8265 = vmatpush1.msra.mxu0 %v7810
  %8266 = vmatprep.subr.mxu0 0.0
  %8267 = vmatpush1.msra.mxu0 %v7811
  %8268 = vmatprep.subr.mxu0 0.0
  %8269 = vmatpush1.msra.mxu0 %v7812
  %8270 = vmatprep.subr.mxu0 0.0
  %8271 = vmatpush1.msra.mxu0 %v7813
  %8272 = vmatprep.subr.mxu0 0.0
  %8273 = vmatpush1.msra.mxu0 %v7814
  %8274 = vmatprep.subr.mxu0 0.0
  %8275 = vmatpush1.msra.mxu0 %v7815
  %8276 = vmatprep.subr.mxu0 0.0
  %8277 = vmatpush1.msra.mxu0 %v7816
  %8278 = vmatprep.subr.mxu0 0.0
  %8279 = vmatpush1.msra.mxu0 %v7817
  %8280 = vmatprep.subr.mxu0 0.0
  %8281 = vmatpush1.msra.mxu0 %v7818
  %8282 = vmatprep.subr.mxu0 0.0
  %8283 = vmatpush1.msra.mxu0 %v7819
  %8284 = vmatprep.subr.mxu0 0.0
  %8285 = vmatpush1.msra.mxu0 %v7820
  %8286 = vmatprep.subr.mxu0 0.0
  %8287 = vmatpush1.msra.mxu0 %v7821
  %8288 = vmatprep.subr.mxu0 0.0
  %8289 = vmatpush1.msra.mxu0 %v7822
  %8290 = vmatprep.subr.mxu0 0.0
  %8291 = vmatpush1.msra.mxu0 %v7823
  %8292 = vmatprep.subr.mxu0 0.0
  %8293 = vmatpush1.msra.mxu0 %v7824
  %8294 = vmatprep.subr.mxu0 0.0
  %8295 = vmatpush1.msra.mxu0 %v7825
  %8296 = vmatprep.subr.mxu0 0.0
  %8297 = vmatpush1.msra.mxu0 %v7826
  %8298 = vmatprep.subr.mxu0 0.0
  %8299 = vmatpush1.msra.mxu0 %v7827
  %8300 = vmatprep.subr.mxu0 0.0
  %8301 = vmatpush1.msra.mxu0 %v7828
  %8302 = vmatprep.subr.mxu0 0.0
  %8303 = vmatpush1.msra.mxu0 %v7829
  %8304 = vmatprep.subr.mxu0 0.0
  %8305 = vmatpush1.msra.mxu0 %v7830
  %8306 = vmatprep.subr.mxu0 0.0
  %8307 = vmatpush1.msra.mxu0 %v7831
  %8308 = vmatprep.subr.mxu0 0.0
  %8309 = vmatpush1.msra.mxu0 %v7832
  %8310 = vmatprep.mubr.f32.mxu0 %v8239
  %8311 = vmatmul.mubr.f32.gmra.mrb[0].mxu0 %v8238
  %v8312 = vpop.f32.mrb[0].mxu0
  %v8313 = vadd.f32 %v7873, %v8312
  %v8314 = vpop.f32.mrb[0].mxu0
  %8315 = vdwg.mxu0
  %8316 = vmatprep.subr.mxu0 0.0
  %8317 = vmatpush1.msra.mxu0 %v7833
  %8318 = vmatprep.subr.mxu0 0.0
  %8319 = vmatpush1.msra.mxu0 %v7834
  %8320 = vmatprep.subr.mxu0 0.0
  %8321 = vmatpush1.msra.mxu0 %v7835
  %8322 = vmatprep.subr.mxu0 0.0
  %8323 = vmatpush1.msra.mxu0 %v7836
  %8324 = vmatprep.subr.mxu0 0.0
  %8325 = vmatpush1.msra.mxu0 %v7837
  %8326 = vmatprep.subr.mxu0 0.0
  %8327 = vmatpush1.msra.mxu0 %v7838
  %8328 = vmatprep.subr.mxu0 0.0
  %8329 = vmatpush1.msra.mxu0 %v7839
  %8330 = vmatprep.subr.mxu0 0.0
  %8331 = vmatpush1.msra.mxu0 %v7840
  %8332 = vmatprep.subr.mxu0 0.0
  %8333 = vmatpush1.msra.mxu0 %v7841
  %8334 = vmatprep.subr.mxu0 0.0
  %8335 = vmatpush1.msra.mxu0 %v7842
  %8336 = vmatprep.subr.mxu0 0.0
  %8337 = vmatpush1.msra.mxu0 %v7843
  %8338 = vmatprep.subr.mxu0 0.0
  %8339 = vmatpush1.msra.mxu0 %v7844
  %8340 = vmatprep.subr.mxu0 0.0
  %8341 = vmatpush1.msra.mxu0 %v7845
  %8342 = vmatprep.subr.mxu0 0.0
  %8343 = vmatpush1.msra.mxu0 %v7846
  %8344 = vmatprep.subr.mxu0 0.0
  %8345 = vmatpush1.msra.mxu0 %v7847
  %8346 = vmatprep.subr.mxu0 0.0
  %8347 = vmatpush1.msra.mxu0 %v7848
  %8348 = vmatprep.subr.mxu0 0.0
  %8349 = vmatpush1.msra.mxu0 %v7849
  %8350 = vmatprep.subr.mxu0 0.0
  %8351 = vmatpush1.msra.mxu0 %v7850
  %8352 = vmatprep.subr.mxu0 0.0
  %8353 = vmatpush1.msra.mxu0 %v7851
  %8354 = vmatprep.subr.mxu0 0.0
  %8355 = vmatpush1.msra.mxu0 %v7852
  %8356 = vmatprep.subr.mxu0 0.0
  %8357 = vmatpush1.msra.mxu0 %v7853
  %8358 = vmatprep.subr.mxu0 0.0
  %8359 = vmatpush1.msra.mxu0 %v7854
  %8360 = vmatprep.subr.mxu0 0.0
  %8361 = vmatpush1.msra.mxu0 %v7855
  %8362 = vmatprep.subr.mxu0 0.0
  %8363 = vmatpush1.msra.mxu0 %v7856
  %8364 = vmatprep.subr.mxu0 0.0
  %8365 = vmatpush1.msra.mxu0 %v7857
  %8366 = vmatprep.subr.mxu0 0.0
  %8367 = vmatpush1.msra.mxu0 %v7858
  %8368 = vmatprep.subr.mxu0 0.0
  %8369 = vmatpush1.msra.mxu0 %v7859
  %8370 = vmatprep.subr.mxu0 0.0
  %8371 = vmatpush1.msra.mxu0 %v7860
  %8372 = vmatprep.subr.mxu0 0.0
  %8373 = vmatpush1.msra.mxu0 %v7861
  %8374 = vmatprep.subr.mxu0 0.0
  %8375 = vmatpush1.msra.mxu0 %v7862
  %8376 = vmatprep.subr.mxu0 0.0
  %8377 = vmatpush1.msra.mxu0 %v7863
  %8378 = vmatprep.subr.mxu0 0.0
  %8379 = vmatpush1.msra.mxu0 %v7864
  %8380 = vmatprep.mubr.f32.mxu0 %v8241
  %8381 = vmatmul.mubr.f32.gmra.mrb[0].mxu0 %v8240
  %v8382 = vpop.f32.mrb[0].mxu0
  %v8383 = vadd.f32 %v8313, %v8382
  %v8384 = vpop.f32.mrb[0].mxu0
  %8385 = vdwg.mxu0
  %8386 = vmatprep.subr.mxu0 0.0
  %8387 = vmatpush1.msra.mxu0 %v7865
  %8388 = vmatprep.subr.mxu0 0.0
  %8389 = vmatpush1.msra.mxu0 %v7866
  %8390 = vmatprep.subr.mxu0 0.0
  %8391 = vmatpush1.msra.mxu0 %v7867
  %8392 = vmatprep.subr.mxu0 0.0
  %8393 = vmatpush1.msra.mxu0 %v7868
  %8394 = vmatprep.subr.mxu0 0.0
  %8395 = vmatpush1.msra.mxu0 %v7869
  %8396 = vmatprep.subr.mxu0 0.0
  %8397 = vmatpush1.msra.mxu0 %v7870
  %8398 = vmatprep.subr.mxu0 0.0
  %8399 = vmatpush1.msra.mxu0 %v7871
  %8400 = vmatprep.subr.mxu0 0.0
  %8401 = vmatpush1.msra.mxu0 %v7872
  %8402 = vmatprep.subr.mxu0 0.0
  %8403 = vmatpush1.msra.mxu0 0.0
  %8404 = vmatprep.subr.mxu0 0.0
  %8405 = vmatpush1.msra.mxu0 0.0
  %8406 = vmatprep.subr.mxu0 0.0
  %8407 = vmatpush1.msra.mxu0 0.0
  %8408 = vmatprep.subr.mxu0 0.0
  %8409 = vmatpush1.msra.mxu0 0.0
  %8410 = vmatprep.subr.mxu0 0.0
  %8411 = vmatpush1.msra.mxu0 0.0
  %8412 = vmatprep.subr.mxu0 0.0
  %8413 = vmatpush1.msra.mxu0 0.0
  %8414 = vmatprep.subr.mxu0 0.0
  %8415 = vmatpush1.msra.mxu0 0.0
  %8416 = vmatprep.subr.mxu0 0.0
  %8417 = vmatpush1.msra.mxu0 0.0
  %8418 = vmatprep.subr.mxu0 0.0
  %8419 = vmatpush1.msra.mxu0 0.0
  %8420 = vmatprep.subr.mxu0 0.0
  %8421 = vmatpush1.msra.mxu0 0.0
  %8422 = vmatprep.subr.mxu0 0.0
  %8423 = vmatpush1.msra.mxu0 0.0
  %8424 = vmatprep.subr.mxu0 0.0
  %8425 = vmatpush1.msra.mxu0 0.0
  %8426 = vmatprep.subr.mxu0 0.0
  %8427 = vmatpush1.msra.mxu0 0.0
  %8428 = vmatprep.subr.mxu0 0.0
  %8429 = vmatpush1.msra.mxu0 0.0
  %8430 = vmatprep.subr.mxu0 0.0
  %8431 = vmatpush1.msra.mxu0 0.0
  %8432 = vmatprep.subr.mxu0 0.0
  %8433 = vmatpush1.msra.mxu0 0.0
  %8434 = vmatprep.subr.mxu0 0.0
  %8435 = vmatpush1.msra.mxu0 0.0
  %8436 = vmatprep.subr.mxu0 0.0
  %8437 = vmatpush1.msra.mxu0 0.0
  %8438 = vmatprep.subr.mxu0 0.0
  %8439 = vmatpush1.msra.mxu0 0.0
  %8440 = vmatprep.subr.mxu0 0.0
  %8441 = vmatpush1.msra.mxu0 0.0
  %8442 = vmatprep.subr.mxu0 0.0
  %8443 = vmatpush1.msra.mxu0 0.0
  %8444 = vmatprep.subr.mxu0 0.0
  %8445 = vmatpush1.msra.mxu0 0.0
  %8446 = vmatprep.subr.mxu0 0.0
  %8447 = vmatpush1.msra.mxu0 0.0
  %8448 = vmatprep.subr.mxu0 0.0
  %8449 = vmatpush1.msra.mxu0 0.0
  %8450 = vmatprep.mubr.f32.mxu0 0.0
  %8451 = vmatmul.mubr.f32.gmra.mrb[0].mxu0 %v8244
  %v8452 = vpop.f32.mrb[0].mxu0
  %v8453 = vadd.f32 %v8383, %v8452
  %v8454 = vpop.f32.mrb[0].mxu0
  %8455 = vdwg.mxu0
  %vm8456 = vcmp.ge.f32.partialorder %v8453, 0.0
  %v8457 = vmul.f32 %v8453, 0.01
  %v8458 = vsel %vm8456, %v8453, %v8457
  %8459 = vst.msk [vmem:[#allocation2] sm:$0xf] %vm4423, 0.0
  %8460 = vst.msk [vmem:[#allocation2 + $0xa0] sm:$0xf] %vm4423, 0.0
  %8461 = vst.msk [vmem:[%s7950] sm:$0xf] %vm4423, 0.0
  %8462 = vst.msk [vmem:[%s7950 + $0xa0] sm:$0xf] %vm4423, 0.0
  %8463 = vst.msk [vmem:[%s1440] sm:$0x1] %vm1441, 0.0
  %8464 = vst.msk [vmem:[%s1440 + $0x10] sm:$0x1] %vm1441, 0.0
  %8465 = vst.msk [vmem:[%s1440 + $0xa0] sm:$0x1] %vm1441, 0.0
  %8466 = vst.msk [vmem:[%s1440 + $0xb0] sm:$0x1] %vm1441, 0.0
  %8467 = vst.msk [vmem:[%s1440 + $0x3] sm:$0x1] %vm1441, 0.0
  %8468 = vst.msk [vmem:[%s1440 + $0x13] sm:$0x1] %vm1441, 0.0
  %8469 = vst.msk [vmem:[%s1440 + $0xa3] sm:$0x1] %vm1441, 0.0
  %8470 = vst.msk [vmem:[%s1440 + $0xb3] sm:$0x1] %vm1441, 0.0
  %v8472 = vcombine.high %v8458, %v8458
  %v8474 = vunpack.c.l.s4 1983009808
  %v8475 = vunpack.c.0.s8 %v8474
  %v8476 = vlaneseq
  %v8477 = vshrl.u32 %v8476, 7
  %v8478 = vsub.s32 %v8475, %v8477
  %v8479 = vrot.slane %v8458, %v8478
  %v8481 = vunpack.c.l.s4 1983009808
  %v8482 = vunpack.c.0.s8 %v8481
  %v8483 = vlaneseq
  %v8484 = vshrl.u32 %v8483, 7
  %v8485 = vsub.s32 %v8482, %v8484
  %v8486 = vrot.slane %v8472, %v8485
  %v8487 = vcombine.high %v8479, %v8479
  %v8488 = vcombine.high %v8486, %v8486
  %8493 = vst.msk [vmem:[%s1440 + $0x1] sm:$0x3] %vm1431, %v8479
  %8494 = vst.msk [vmem:[%s1440 + $0x11] sm:$0x3] %vm1431, %v8487
  %8495 = vst.msk [vmem:[%s1440 + $0xa1] sm:$0x3] %vm1431, %v8486
  %8496 = vst.msk [vmem:[%s1440 + $0xb1] sm:$0x3] %vm1431, %v8488
  %v8497 = vld [vmem:[#allocation2] sm:$0x3]
  %v8498 = vld [vmem:[#allocation2 + $0x10] sm:$0x3]
  %v8499 = vld [vmem:[#allocation2 + $0xa0] sm:$0x3]
  %v8500 = vld [vmem:[#allocation2 + $0xb0] sm:$0x3]
  %v8505 = vcombine.low %v8497, %v8498
  %v8506 = vcombine.low %v8499, %v8500
  %v8508 = vunpack.c.l.s4 1983009808
  %v8509 = vunpack.c.0.s8 %v8508
  %v8510 = vlaneseq
  %v8511 = vshrl.u32 %v8510, 7
  %v8512 = vsub.s32 %v8509, %v8511
  %v8513 = vrot.slane %v8505, %v8512
  %v8515 = vunpack.c.l.s4 1983009808
  %v8516 = vunpack.c.0.s8 %v8515
  %v8517 = vlaneseq
  %v8518 = vshrl.u32 %v8517, 7
  %v8519 = vsub.s32 %v8516, %v8518
  %v8520 = vrot.slane %v8506, %v8519
  %v8521 = vcombine.low %v8513, %v8520
  %8523 = vst.msk [vmem:[#allocation4] sm:$0xff] %vm1429, %v8521
  %v8524 = vld [vmem:[#allocation2 + $0x1] sm:$0x3]
  %v8525 = vld [vmem:[#allocation2 + $0x11] sm:$0x3]
  %v8526 = vld [vmem:[#allocation2 + $0xa1] sm:$0x3]
  %v8527 = vld [vmem:[#allocation2 + $0xb1] sm:$0x3]
  %v8532 = vcombine.low %v8524, %v8525
  %v8533 = vcombine.low %v8526, %v8527
  %v8535 = vunpack.c.l.s4 1983009808
  %v8536 = vunpack.c.0.s8 %v8535
  %v8537 = vlaneseq
  %v8538 = vshrl.u32 %v8537, 7
  %v8539 = vsub.s32 %v8536, %v8538
  %v8540 = vrot.slane %v8532, %v8539
  %v8542 = vunpack.c.l.s4 1983009808
  %v8543 = vunpack.c.0.s8 %v8542
  %v8544 = vlaneseq
  %v8545 = vshrl.u32 %v8544, 7
  %v8546 = vsub.s32 %v8543, %v8545
  %v8547 = vrot.slane %v8533, %v8546
  %v8548 = vcombine.low %v8540, %v8547
  %8549 = vrot.lane.b32.xlu0 %v8548, 64
  %v8550 = vpop.permute.xlu0 %8549
  %8552 = vst.msk [vmem:[#allocation4] sm:$0xff] %vm1602, %v8550
  %v8553 = vld [vmem:[#allocation2 + $0x2] sm:$0x3]
  %v8554 = vld [vmem:[#allocation2 + $0x12] sm:$0x3]
  %v8555 = vld [vmem:[#allocation2 + $0xa2] sm:$0x3]
  %v8556 = vld [vmem:[#allocation2 + $0xb2] sm:$0x3]
  %v8561 = vcombine.low %v8553, %v8554
  %v8562 = vcombine.low %v8555, %v8556
  %v8564 = vunpack.c.l.s4 1983009808
  %v8565 = vunpack.c.0.s8 %v8564
  %v8566 = vlaneseq
  %v8567 = vshrl.u32 %v8566, 7
  %v8568 = vsub.s32 %v8565, %v8567
  %v8569 = vrot.slane %v8561, %v8568
  %v8571 = vunpack.c.l.s4 1983009808
  %v8572 = vunpack.c.0.s8 %v8571
  %v8573 = vlaneseq
  %v8574 = vshrl.u32 %v8573, 7
  %v8575 = vsub.s32 %v8572, %v8574
  %v8576 = vrot.slane %v8562, %v8575
  %v8577 = vcombine.low %v8569, %v8576
  %8579 = vst.msk [vmem:[#allocation4 + $0x8] sm:$0xff] %vm1429, %v8577
  %v8580 = vld [vmem:[%s1440] sm:$0x3]
  %v8581 = vld [vmem:[%s1440 + $0x10] sm:$0x3]
  %v8582 = vld [vmem:[%s1440 + $0xa0] sm:$0x3]
  %v8583 = vld [vmem:[%s1440 + $0xb0] sm:$0x3]
  %v8588 = vcombine.low %v8580, %v8581
  %v8589 = vcombine.low %v8582, %v8583
  %v8591 = vunpack.c.l.s4 1983009808
  %v8592 = vunpack.c.0.s8 %v8591
  %v8593 = vlaneseq
  %v8594 = vshrl.u32 %v8593, 7
  %v8595 = vsub.s32 %v8592, %v8594
  %v8596 = vrot.slane %v8588, %v8595
  %v8598 = vunpack.c.l.s4 1983009808
  %v8599 = vunpack.c.0.s8 %v8598
  %v8600 = vlaneseq
  %v8601 = vshrl.u32 %v8600, 7
  %v8602 = vsub.s32 %v8599, %v8601
  %v8603 = vrot.slane %v8589, %v8602
  %v8604 = vcombine.low %v8596, %v8603
  %8605 = vrot.lane.b32.xlu0 %v8604, 64
  %v8606 = vpop.permute.xlu0 %8605
  %8608 = vst.msk [vmem:[#allocation4 + $0x8] sm:$0xff] %vm1602, %v8606
  %v8609 = vld [vmem:[%s1440 + $0x1] sm:$0x3]
  %v8610 = vld [vmem:[%s1440 + $0x11] sm:$0x3]
  %v8611 = vld [vmem:[%s1440 + $0xa1] sm:$0x3]
  %v8612 = vld [vmem:[%s1440 + $0xb1] sm:$0x3]
  %v8617 = vcombine.low %v8609, %v8610
  %v8618 = vcombine.low %v8611, %v8612
  %v8620 = vunpack.c.l.s4 1983009808
  %v8621 = vunpack.c.0.s8 %v8620
  %v8622 = vlaneseq
  %v8623 = vshrl.u32 %v8622, 7
  %v8624 = vsub.s32 %v8621, %v8623
  %v8625 = vrot.slane %v8617, %v8624
  %v8627 = vunpack.c.l.s4 1983009808
  %v8628 = vunpack.c.0.s8 %v8627
  %v8629 = vlaneseq
  %v8630 = vshrl.u32 %v8629, 7
  %v8631 = vsub.s32 %v8628, %v8630
  %v8632 = vrot.slane %v8618, %v8631
  %v8633 = vcombine.low %v8625, %v8632
  %8635 = vst.msk [vmem:[#allocation4 + $0x10] sm:$0xff] %vm1429, %v8633
  %v8636 = vld [vmem:[%s1440 + $0x2] sm:$0x3]
  %v8637 = vld [vmem:[%s1440 + $0x12] sm:$0x3]
  %v8638 = vld [vmem:[%s1440 + $0xa2] sm:$0x3]
  %v8639 = vld [vmem:[%s1440 + $0xb2] sm:$0x3]
  %v8644 = vcombine.low %v8636, %v8637
  %v8645 = vcombine.low %v8638, %v8639
  %v8647 = vunpack.c.l.s4 1983009808
  %v8648 = vunpack.c.0.s8 %v8647
  %v8649 = vlaneseq
  %v8650 = vshrl.u32 %v8649, 7
  %v8651 = vsub.s32 %v8648, %v8650
  %v8652 = vrot.slane %v8644, %v8651
  %v8654 = vunpack.c.l.s4 1983009808
  %v8655 = vunpack.c.0.s8 %v8654
  %v8656 = vlaneseq
  %v8657 = vshrl.u32 %v8656, 7
  %v8658 = vsub.s32 %v8655, %v8657
  %v8659 = vrot.slane %v8645, %v8658
  %v8660 = vcombine.low %v8652, %v8659
  %8661 = vrot.lane.b32.xlu0 %v8660, 64
  %v8662 = vpop.permute.xlu0 %8661
  %8664 = vst.msk [vmem:[#allocation4 + $0x10] sm:$0xff] %vm1602, %v8662
  %v8665 = vld [vmem:[%s1875] sm:$0x3]
  %v8666 = vld [vmem:[%s1875 + $0x10] sm:$0x3]
  %v8667 = vld [vmem:[%s1875 + $0xa0] sm:$0x3]
  %v8668 = vld [vmem:[%s1875 + $0xb0] sm:$0x3]
  %v8673 = vcombine.low %v8665, %v8666
  %v8674 = vcombine.low %v8667, %v8668
  %v8676 = vunpack.c.l.s4 1983009808
  %v8677 = vunpack.c.0.s8 %v8676
  %v8678 = vlaneseq
  %v8679 = vshrl.u32 %v8678, 7
  %v8680 = vsub.s32 %v8677, %v8679
  %v8681 = vrot.slane %v8673, %v8680
  %v8683 = vunpack.c.l.s4 1983009808
  %v8684 = vunpack.c.0.s8 %v8683
  %v8685 = vlaneseq
  %v8686 = vshrl.u32 %v8685, 7
  %v8687 = vsub.s32 %v8684, %v8686
  %v8688 = vrot.slane %v8674, %v8687
  %v8689 = vcombine.low %v8681, %v8688
  %8691 = vst.msk [vmem:[#allocation4 + $0x18] sm:$0xff] %vm1429, %v8689
  %v8692 = vld [vmem:[%s1875 + $0x1] sm:$0x3]
  %v8693 = vld [vmem:[%s1875 + $0x11] sm:$0x3]
  %v8694 = vld [vmem:[%s1875 + $0xa1] sm:$0x3]
  %v8695 = vld [vmem:[%s1875 + $0xb1] sm:$0x3]
  %v8700 = vcombine.low %v8692, %v8693
  %v8701 = vcombine.low %v8694, %v8695
  %v8703 = vunpack.c.l.s4 1983009808
  %v8704 = vunpack.c.0.s8 %v8703
  %v8705 = vlaneseq
  %v8706 = vshrl.u32 %v8705, 7
  %v8707 = vsub.s32 %v8704, %v8706
  %v8708 = vrot.slane %v8700, %v8707
  %v8710 = vunpack.c.l.s4 1983009808
  %v8711 = vunpack.c.0.s8 %v8710
  %v8712 = vlaneseq
  %v8713 = vshrl.u32 %v8712, 7
  %v8714 = vsub.s32 %v8711, %v8713
  %v8715 = vrot.slane %v8701, %v8714
  %v8716 = vcombine.low %v8708, %v8715
  %8717 = vrot.lane.b32.xlu0 %v8716, 64
  %v8718 = vpop.permute.xlu0 %8717
  %8720 = vst.msk [vmem:[#allocation4 + $0x18] sm:$0xff] %vm1602, %v8718
  %v8721 = vld [vmem:[%s1875 + $0x2] sm:$0x3]
  %v8722 = vld [vmem:[%s1875 + $0x12] sm:$0x3]
  %v8723 = vld [vmem:[%s1875 + $0xa2] sm:$0x3]
  %v8724 = vld [vmem:[%s1875 + $0xb2] sm:$0x3]
  %v8729 = vcombine.low %v8721, %v8722
  %v8730 = vcombine.low %v8723, %v8724
  %v8732 = vunpack.c.l.s4 1983009808
  %v8733 = vunpack.c.0.s8 %v8732
  %v8734 = vlaneseq
  %v8735 = vshrl.u32 %v8734, 7
  %v8736 = vsub.s32 %v8733, %v8735
  %v8737 = vrot.slane %v8729, %v8736
  %v8739 = vunpack.c.l.s4 1983009808
  %v8740 = vunpack.c.0.s8 %v8739
  %v8741 = vlaneseq
  %v8742 = vshrl.u32 %v8741, 7
  %v8743 = vsub.s32 %v8740, %v8742
  %v8744 = vrot.slane %v8730, %v8743
  %v8745 = vcombine.low %v8737, %v8744
  %8747 = vst.msk [vmem:[#allocation4 + $0x20] sm:$0xff] %vm1429, %v8745
  %v8748 = vld [vmem:[#allocation4] sm:$0xff]
  %v8749 = vld [vmem:[#allocation4 + $0x8] sm:$0xff]
  %v8750 = vld [vmem:[#allocation4 + $0x10] sm:$0xff]
  %v8751 = vld [vmem:[#allocation4 + $0x18] sm:$0xff]
  %v8752 = vld [vmem:[#allocation4 + $0x20] sm:$0xff]
  %v8754 = vsel %vm1429, %v8752, 0
  %8756 = vmatprep.subr.mxu0 0.0
  %8757 = vmatpush1.msra.mxu0 %v7875
  %8758 = vmatprep.subr.mxu0 0.0
  %8759 = vmatpush1.msra.mxu0 %v7876
  %8760 = vmatprep.subr.mxu0 0.0
  %8761 = vmatpush1.msra.mxu0 %v7877
  %8762 = vmatprep.subr.mxu0 0.0
  %8763 = vmatpush1.msra.mxu0 %v7878
  %8764 = vmatprep.subr.mxu0 0.0
  %8765 = vmatpush1.msra.mxu0 %v7879
  %8766 = vmatprep.subr.mxu0 0.0
  %8767 = vmatpush1.msra.mxu0 %v7880
  %8768 = vmatprep.subr.mxu0 0.0
  %8769 = vmatpush1.msra.mxu0 %v7881
  %8770 = vmatprep.subr.mxu0 0.0
  %8771 = vmatpush1.msra.mxu0 %v7882
  %8772 = vmatprep.subr.mxu0 0.0
  %8773 = vmatpush1.msra.mxu0 %v7883
  %8774 = vmatprep.subr.mxu0 0.0
  %8775 = vmatpush1.msra.mxu0 %v7884
  %8776 = vmatprep.subr.mxu0 0.0
  %8777 = vmatpush1.msra.mxu0 %v7885
  %8778 = vmatprep.subr.mxu0 0.0
  %8779 = vmatpush1.msra.mxu0 %v7886
  %8780 = vmatprep.subr.mxu0 0.0
  %8781 = vmatpush1.msra.mxu0 %v7887
  %8782 = vmatprep.subr.mxu0 0.0
  %8783 = vmatpush1.msra.mxu0 %v7888
  %8784 = vmatprep.subr.mxu0 0.0
  %8785 = vmatpush1.msra.mxu0 %v7889
  %8786 = vmatprep.subr.mxu0 0.0
  %8787 = vmatpush1.msra.mxu0 %v7890
  %8788 = vmatprep.subr.mxu0 0.0
  %8789 = vmatpush1.msra.mxu0 %v7891
  %8790 = vmatprep.subr.mxu0 0.0
  %8791 = vmatpush1.msra.mxu0 %v7892
  %8792 = vmatprep.subr.mxu0 0.0
  %8793 = vmatpush1.msra.mxu0 %v7893
  %8794 = vmatprep.subr.mxu0 0.0
  %8795 = vmatpush1.msra.mxu0 %v7894
  %8796 = vmatprep.subr.mxu0 0.0
  %8797 = vmatpush1.msra.mxu0 %v7895
  %8798 = vmatprep.subr.mxu0 0.0
  %8799 = vmatpush1.msra.mxu0 %v7896
  %8800 = vmatprep.subr.mxu0 0.0
  %8801 = vmatpush1.msra.mxu0 %v7897
  %8802 = vmatprep.subr.mxu0 0.0
  %8803 = vmatpush1.msra.mxu0 %v7898
  %8804 = vmatprep.subr.mxu0 0.0
  %8805 = vmatpush1.msra.mxu0 %v7899
  %8806 = vmatprep.subr.mxu0 0.0
  %8807 = vmatpush1.msra.mxu0 %v7900
  %8808 = vmatprep.subr.mxu0 0.0
  %8809 = vmatpush1.msra.mxu0 %v7901
  %8810 = vmatprep.subr.mxu0 0.0
  %8811 = vmatpush1.msra.mxu0 %v7902
  %8812 = vmatprep.subr.mxu0 0.0
  %8813 = vmatpush1.msra.mxu0 %v7903
  %8814 = vmatprep.subr.mxu0 0.0
  %8815 = vmatpush1.msra.mxu0 %v7904
  %8816 = vmatprep.subr.mxu0 0.0
  %8817 = vmatpush1.msra.mxu0 %v7905
  %8818 = vmatprep.subr.mxu0 0.0
  %8819 = vmatpush1.msra.mxu0 %v7906
  %8820 = vmatprep.mubr.f32.mxu0 %v8749
  %8821 = vmatmul.mubr.f32.gmra.mrb[0].mxu0 %v8748
  %v8822 = vpop.f32.mrb[0].mxu0
  %v8823 = vadd.f32 %v7947, %v8822
  %v8824 = vpop.f32.mrb[0].mxu0
  %8825 = vdwg.mxu0
  %8826 = vmatprep.subr.mxu0 0.0
  %8827 = vmatpush1.msra.mxu0 %v7907
  %8828 = vmatprep.subr.mxu0 0.0
  %8829 = vmatpush1.msra.mxu0 %v7908
  %8830 = vmatprep.subr.mxu0 0.0
  %8831 = vmatpush1.msra.mxu0 %v7909
  %8832 = vmatprep.subr.mxu0 0.0
  %8833 = vmatpush1.msra.mxu0 %v7910
  %8834 = vmatprep.subr.mxu0 0.0
  %8835 = vmatpush1.msra.mxu0 %v7911
  %8836 = vmatprep.subr.mxu0 0.0
  %8837 = vmatpush1.msra.mxu0 %v7912
  %8838 = vmatprep.subr.mxu0 0.0
  %8839 = vmatpush1.msra.mxu0 %v7913
  %8840 = vmatprep.subr.mxu0 0.0
  %8841 = vmatpush1.msra.mxu0 %v7914
  %8842 = vmatprep.subr.mxu0 0.0
  %8843 = vmatpush1.msra.mxu0 %v7915
  %8844 = vmatprep.subr.mxu0 0.0
  %8845 = vmatpush1.msra.mxu0 %v7916
  %8846 = vmatprep.subr.mxu0 0.0
  %8847 = vmatpush1.msra.mxu0 %v7917
  %8848 = vmatprep.subr.mxu0 0.0
  %8849 = vmatpush1.msra.mxu0 %v7918
  %8850 = vmatprep.subr.mxu0 0.0
  %8851 = vmatpush1.msra.mxu0 %v7919
  %8852 = vmatprep.subr.mxu0 0.0
  %8853 = vmatpush1.msra.mxu0 %v7920
  %8854 = vmatprep.subr.mxu0 0.0
  %8855 = vmatpush1.msra.mxu0 %v7921
  %8856 = vmatprep.subr.mxu0 0.0
  %8857 = vmatpush1.msra.mxu0 %v7922
  %8858 = vmatprep.subr.mxu0 0.0
  %8859 = vmatpush1.msra.mxu0 %v7923
  %8860 = vmatprep.subr.mxu0 0.0
  %8861 = vmatpush1.msra.mxu0 %v7924
  %8862 = vmatprep.subr.mxu0 0.0
  %8863 = vmatpush1.msra.mxu0 %v7925
  %8864 = vmatprep.subr.mxu0 0.0
  %8865 = vmatpush1.msra.mxu0 %v7926
  %8866 = vmatprep.subr.mxu0 0.0
  %8867 = vmatpush1.msra.mxu0 %v7927
  %8868 = vmatprep.subr.mxu0 0.0
  %8869 = vmatpush1.msra.mxu0 %v7928
  %8870 = vmatprep.subr.mxu0 0.0
  %8871 = vmatpush1.msra.mxu0 %v7929
  %8872 = vmatprep.subr.mxu0 0.0
  %8873 = vmatpush1.msra.mxu0 %v7930
  %8874 = vmatprep.subr.mxu0 0.0
  %8875 = vmatpush1.msra.mxu0 %v7931
  %8876 = vmatprep.subr.mxu0 0.0
  %8877 = vmatpush1.msra.mxu0 %v7932
  %8878 = vmatprep.subr.mxu0 0.0
  %8879 = vmatpush1.msra.mxu0 %v7933
  %8880 = vmatprep.subr.mxu0 0.0
  %8881 = vmatpush1.msra.mxu0 %v7934
  %8882 = vmatprep.subr.mxu0 0.0
  %8883 = vmatpush1.msra.mxu0 %v7935
  %8884 = vmatprep.subr.mxu0 0.0
  %8885 = vmatpush1.msra.mxu0 %v7936
  %8886 = vmatprep.subr.mxu0 0.0
  %8887 = vmatpush1.msra.mxu0 %v7937
  %8888 = vmatprep.subr.mxu0 0.0
  %8889 = vmatpush1.msra.mxu0 %v7938
  %8890 = vmatprep.mubr.f32.mxu0 %v8751
  %8891 = vmatmul.mubr.f32.gmra.mrb[0].mxu0 %v8750
  %v8892 = vpop.f32.mrb[0].mxu0
  %v8893 = vadd.f32 %v8823, %v8892
  %v8894 = vpop.f32.mrb[0].mxu0
  %8895 = vdwg.mxu0
  %8896 = vmatprep.subr.mxu0 0.0
  %8897 = vmatpush1.msra.mxu0 %v7939
  %8898 = vmatprep.subr.mxu0 0.0
  %8899 = vmatpush1.msra.mxu0 %v7940
  %8900 = vmatprep.subr.mxu0 0.0
  %8901 = vmatpush1.msra.mxu0 %v7941
  %8902 = vmatprep.subr.mxu0 0.0
  %8903 = vmatpush1.msra.mxu0 %v7942
  %8904 = vmatprep.subr.mxu0 0.0
  %8905 = vmatpush1.msra.mxu0 %v7943
  %8906 = vmatprep.subr.mxu0 0.0
  %8907 = vmatpush1.msra.mxu0 %v7944
  %8908 = vmatprep.subr.mxu0 0.0
  %8909 = vmatpush1.msra.mxu0 %v7945
  %8910 = vmatprep.subr.mxu0 0.0
  %8911 = vmatpush1.msra.mxu0 %v7946
  %8912 = vmatprep.subr.mxu0 0.0
  %8913 = vmatpush1.msra.mxu0 0.0
  %8914 = vmatprep.subr.mxu0 0.0
  %8915 = vmatpush1.msra.mxu0 0.0
  %8916 = vmatprep.subr.mxu0 0.0
  %8917 = vmatpush1.msra.mxu0 0.0
  %8918 = vmatprep.subr.mxu0 0.0
  %8919 = vmatpush1.msra.mxu0 0.0
  %8920 = vmatprep.subr.mxu0 0.0
  %8921 = vmatpush1.msra.mxu0 0.0
  %8922 = vmatprep.subr.mxu0 0.0
  %8923 = vmatpush1.msra.mxu0 0.0
  %8924 = vmatprep.subr.mxu0 0.0
  %8925 = vmatpush1.msra.mxu0 0.0
  %8926 = vmatprep.subr.mxu0 0.0
  %8927 = vmatpush1.msra.mxu0 0.0
  %8928 = vmatprep.subr.mxu0 0.0
  %8929 = vmatpush1.msra.mxu0 0.0
  %8930 = vmatprep.subr.mxu0 0.0
  %8931 = vmatpush1.msra.mxu0 0.0
  %8932 = vmatprep.subr.mxu0 0.0
  %8933 = vmatpush1.msra.mxu0 0.0
  %8934 = vmatprep.subr.mxu0 0.0
  %8935 = vmatpush1.msra.mxu0 0.0
  %8936 = vmatprep.subr.mxu0 0.0
  %8937 = vmatpush1.msra.mxu0 0.0
  %8938 = vmatprep.subr.mxu0 0.0
  %8939 = vmatpush1.msra.mxu0 0.0
  %8940 = vmatprep.subr.mxu0 0.0
  %8941 = vmatpush1.msra.mxu0 0.0
  %8942 = vmatprep.subr.mxu0 0.0
  %8943 = vmatpush1.msra.mxu0 0.0
  %8944 = vmatprep.subr.mxu0 0.0
  %8945 = vmatpush1.msra.mxu0 0.0
  %8946 = vmatprep.subr.mxu0 0.0
  %8947 = vmatpush1.msra.mxu0 0.0
  %8948 = vmatprep.subr.mxu0 0.0
  %8949 = vmatpush1.msra.mxu0 0.0
  %8950 = vmatprep.subr.mxu0 0.0
  %8951 = vmatpush1.msra.mxu0 0.0
  %8952 = vmatprep.subr.mxu0 0.0
  %8953 = vmatpush1.msra.mxu0 0.0
  %8954 = vmatprep.subr.mxu0 0.0
  %8955 = vmatpush1.msra.mxu0 0.0
  %8956 = vmatprep.subr.mxu0 0.0
  %8957 = vmatpush1.msra.mxu0 0.0
  %8958 = vmatprep.subr.mxu0 0.0
  %8959 = vmatpush1.msra.mxu0 0.0
  %8960 = vmatprep.mubr.f32.mxu0 0.0
  %8961 = vmatmul.mubr.f32.gmra.mrb[0].mxu0 %v8754
  %v8962 = vpop.f32.mrb[0].mxu0
  %v8963 = vadd.f32 %v8893, %v8962
  %v8964 = vpop.f32.mrb[0].mxu0
  %8965 = vdwg.mxu0
  %vm8966 = vcmp.ge.f32.partialorder %v8963, 0.0
  %v8967 = vmul.f32 %v8963, 0.01
  %v8968 = vsel %vm8966, %v8963, %v8967
  %v8969 = vadd.f32 %v7799, %v8968
  %v8971 = vcombine.high %v8969, %v8969
  %v8972 = vlaneseq
  %v8973 = vshrl.u32 %v8972, 7
  %v8974 = vsub.s32 0, %v8973
  %v8975 = vrot.slane %v8969, %v8974
  %v8976 = vlaneseq
  %v8977 = vshrl.u32 %v8976, 7
  %v8978 = vsub.s32 0, %v8977
  %v8979 = vrot.slane %v8971, %v8978
  %v8980 = vsel %vm4388, %v8979, %v8975
  %8982 = vst.msk [vmem:[#allocation4] sm:$0x3] %vm1431, %v8980
  %v8983 = vlaneseq
  %v8984 = vshrl.u32 %v8983, 7
  %v8985 = vsub.s32 1, %v8984
  %v8986 = vrot.slane %v8969, %v8985
  %v8987 = vlaneseq
  %v8988 = vshrl.u32 %v8987, 7
  %v8989 = vsub.s32 1, %v8988
  %v8990 = vrot.slane %v8971, %v8989
  %v8991 = vsel %vm4388, %v8990, %v8986
  %8992 = vrot.lane.b32.xlu0 %v8991, 64
  %v8993 = vpop.permute.xlu0 %8992
  %vm8995 = vcmask 1041920
  %8996 = vst.msk [vmem:[#allocation4] sm:$0x3] %vm8995, %v8993
  %v8997 = vlaneseq
  %v8998 = vshrl.u32 %v8997, 7
  %v8999 = vsub.s32 2, %v8998
  %v9000 = vrot.slane %v8969, %v8999
  %v9001 = vlaneseq
  %v9002 = vshrl.u32 %v9001, 7
  %v9003 = vsub.s32 2, %v9002
  %v9004 = vrot.slane %v8971, %v9003
  %v9005 = vsel %vm4388, %v9004, %v9000
  %9007 = vst.msk [vmem:[#allocation4 + $0x8] sm:$0x3] %vm1431, %v9005
  %v9008 = vlaneseq
  %v9009 = vshrl.u32 %v9008, 7
  %v9010 = vsub.s32 3, %v9009
  %v9011 = vrot.slane %v8969, %v9010
  %v9012 = vlaneseq
  %v9013 = vshrl.u32 %v9012, 7
  %v9014 = vsub.s32 3, %v9013
  %v9015 = vrot.slane %v8971, %v9014
  %v9016 = vsel %vm4388, %v9015, %v9011
  %9017 = vrot.lane.b32.xlu0 %v9016, 64
  %v9018 = vpop.permute.xlu0 %9017
  %9020 = vst.msk [vmem:[#allocation4 + $0x8] sm:$0x3] %vm8995, %v9018
  %v9021 = vld [vmem:[#allocation4] sm:$0x3]
  %v9022 = vld [vmem:[#allocation4 + $0x8] sm:$0x3]
  %v9023 = vld [vmem:[%s4] sm:$0xff]
  %v9024 = vld [vmem:[%s4 + $0x8] sm:$0xff]
  %v9025 = vld [vmem:[%s4 + $0x10] sm:$0xff]
  %v9026 = vld [vmem:[%s4 + $0x18] sm:$0xff]
  %v9027 = vld [vmem:[%s4 + $0x20] sm:$0xff]
  %v9028 = vld [vmem:[%s4 + $0x28] sm:$0xff]
  %v9029 = vld [vmem:[%s4 + $0x30] sm:$0xff]
  %v9030 = vld [vmem:[%s4 + $0x38] sm:$0xff]
  %v9031 = vld [vmem:[%s4 + $0x40] sm:$0xff]
  %v9032 = vld [vmem:[%s4 + $0x48] sm:$0xff]
  %v9033 = vld [vmem:[%s4 + $0x50] sm:$0xff]
  %v9034 = vld [vmem:[%s4 + $0x58] sm:$0xff]
  %v9035 = vld [vmem:[%s4 + $0x60] sm:$0xff]
  %v9036 = vld [vmem:[%s4 + $0x68] sm:$0xff]
  %v9037 = vld [vmem:[%s4 + $0x70] sm:$0xff]
  %v9038 = vld [vmem:[%s4 + $0x78] sm:$0xff]
  %v9039 = vld [vmem:[%s4 + $0x80] sm:$0xff]
  %v9040 = vld [vmem:[%s4 + $0x88] sm:$0xff]
  %v9041 = vld [vmem:[%s4 + $0x90] sm:$0xff]
  %v9042 = vld [vmem:[%s4 + $0x98] sm:$0xff]
  %v9043 = vld [vmem:[%s4 + $0xa0] sm:$0xff]
  %v9044 = vld [vmem:[%s4 + $0xa8] sm:$0xff]
  %v9045 = vld [vmem:[%s4 + $0xb0] sm:$0xff]
  %v9046 = vld [vmem:[%s4 + $0xb8] sm:$0xff]
  %v9047 = vld [vmem:[%s4 + $0xc0] sm:$0xff]
  %v9048 = vld [vmem:[%s4 + $0xc8] sm:$0xff]
  %v9049 = vld [vmem:[%s4 + $0xd0] sm:$0xff]
  %v9050 = vld [vmem:[%s4 + $0xd8] sm:$0xff]
  %v9051 = vld [vmem:[%s4 + $0xe0] sm:$0xff]
  %v9052 = vld [vmem:[%s4 + $0xe8] sm:$0xff]
  %v9053 = vld [vmem:[%s4 + $0xf0] sm:$0xff]
  %v9054 = vld [vmem:[%s4 + $0xf8] sm:$0xff]
  %v9055 = vld [vmem:[%s1 + $0x11] ss:$0 sm:$0xff]
  %9056 = vmatprep.subr.mxu0 0.0
  %9057 = vmatpush1.msra.mxu0 %v9023
  %9058 = vmatprep.subr.mxu0 0.0
  %9059 = vmatpush1.msra.mxu0 %v9024
  %9060 = vmatprep.subr.mxu0 0.0
  %9061 = vmatpush1.msra.mxu0 %v9025
  %9062 = vmatprep.subr.mxu0 0.0
  %9063 = vmatpush1.msra.mxu0 %v9026
  %9064 = vmatprep.subr.mxu0 0.0
  %9065 = vmatpush1.msra.mxu0 %v9027
  %9066 = vmatprep.subr.mxu0 0.0
  %9067 = vmatpush1.msra.mxu0 %v9028
  %9068 = vmatprep.subr.mxu0 0.0
  %9069 = vmatpush1.msra.mxu0 %v9029
  %9070 = vmatprep.subr.mxu0 0.0
  %9071 = vmatpush1.msra.mxu0 %v9030
  %9072 = vmatprep.subr.mxu0 0.0
  %9073 = vmatpush1.msra.mxu0 %v9031
  %9074 = vmatprep.subr.mxu0 0.0
  %9075 = vmatpush1.msra.mxu0 %v9032
  %9076 = vmatprep.subr.mxu0 0.0
  %9077 = vmatpush1.msra.mxu0 %v9033
  %9078 = vmatprep.subr.mxu0 0.0
  %9079 = vmatpush1.msra.mxu0 %v9034
  %9080 = vmatprep.subr.mxu0 0.0
  %9081 = vmatpush1.msra.mxu0 %v9035
  %9082 = vmatprep.subr.mxu0 0.0
  %9083 = vmatpush1.msra.mxu0 %v9036
  %9084 = vmatprep.subr.mxu0 0.0
  %9085 = vmatpush1.msra.mxu0 %v9037
  %9086 = vmatprep.subr.mxu0 0.0
  %9087 = vmatpush1.msra.mxu0 %v9038
  %9088 = vmatprep.subr.mxu0 0.0
  %9089 = vmatpush1.msra.mxu0 %v9039
  %9090 = vmatprep.subr.mxu0 0.0
  %9091 = vmatpush1.msra.mxu0 %v9040
  %9092 = vmatprep.subr.mxu0 0.0
  %9093 = vmatpush1.msra.mxu0 %v9041
  %9094 = vmatprep.subr.mxu0 0.0
  %9095 = vmatpush1.msra.mxu0 %v9042
  %9096 = vmatprep.subr.mxu0 0.0
  %9097 = vmatpush1.msra.mxu0 %v9043
  %9098 = vmatprep.subr.mxu0 0.0
  %9099 = vmatpush1.msra.mxu0 %v9044
  %9100 = vmatprep.subr.mxu0 0.0
  %9101 = vmatpush1.msra.mxu0 %v9045
  %9102 = vmatprep.subr.mxu0 0.0
  %9103 = vmatpush1.msra.mxu0 %v9046
  %9104 = vmatprep.subr.mxu0 0.0
  %9105 = vmatpush1.msra.mxu0 %v9047
  %9106 = vmatprep.subr.mxu0 0.0
  %9107 = vmatpush1.msra.mxu0 %v9048
  %9108 = vmatprep.subr.mxu0 0.0
  %9109 = vmatpush1.msra.mxu0 %v9049
  %9110 = vmatprep.subr.mxu0 0.0
  %9111 = vmatpush1.msra.mxu0 %v9050
  %9112 = vmatprep.subr.mxu0 0.0
  %9113 = vmatpush1.msra.mxu0 %v9051
  %9114 = vmatprep.subr.mxu0 0.0
  %9115 = vmatpush1.msra.mxu0 %v9052
  %9116 = vmatprep.subr.mxu0 0.0
  %9117 = vmatpush1.msra.mxu0 %v9053
  %9118 = vmatprep.subr.mxu0 0.0
  %9119 = vmatpush1.msra.mxu0 %v9054
  %9120 = vmatprep.mubr.f32.mxu0 %v9022
  %9121 = vmatmul.mubr.f32.gmra.mrb[0].mxu0 %v9021
  %v9122 = vpop.f32.mrb[0].mxu0
  %v9123 = vadd.f32 %v9055, %v9122
  %v9124 = vpop.f32.mrb[0].mxu0
  %9125 = vdwg.mxu0
  %vm9126 = vcmp.ge.f32.partialorder %v9123, 0.0
  %v9127 = vmul.f32 %v9123, 0.01
  %v9128 = vsel %vm9126, %v9123, %v9127
  %v9129 = vld [vmem:[%s5] sm:$0xff]
  %v9130 = vld [vmem:[%s5 + $0x8] sm:$0xff]
  %v9131 = vld [vmem:[%s5 + $0x10] sm:$0xff]
  %v9132 = vld [vmem:[%s5 + $0x18] sm:$0xff]
  %v9133 = vld [vmem:[%s5 + $0x20] sm:$0xff]
  %v9134 = vld [vmem:[%s5 + $0x28] sm:$0xff]
  %v9135 = vld [vmem:[%s5 + $0x30] sm:$0xff]
  %v9136 = vld [vmem:[%s5 + $0x38] sm:$0xff]
  %v9137 = vld [vmem:[%s5 + $0x40] sm:$0xff]
  %v9138 = vld [vmem:[%s5 + $0x48] sm:$0xff]
  %v9139 = vld [vmem:[%s5 + $0x50] sm:$0xff]
  %v9140 = vld [vmem:[%s5 + $0x58] sm:$0xff]
  %v9141 = vld [vmem:[%s5 + $0x60] sm:$0xff]
  %v9142 = vld [vmem:[%s5 + $0x68] sm:$0xff]
  %v9143 = vld [vmem:[%s5 + $0x70] sm:$0xff]
  %v9144 = vld [vmem:[%s5 + $0x78] sm:$0xff]
  %v9145 = vld [vmem:[%s1 + $0x12] ss:$0 sm:$0xff]
  %9146 = vmatprep.subr.mxu0 0.0
  %9147 = vmatpush1.msra.mxu0 %v9129
  %9148 = vmatprep.subr.mxu0 0.0
  %9149 = vmatpush1.msra.mxu0 %v9130
  %9150 = vmatprep.subr.mxu0 0.0
  %9151 = vmatpush1.msra.mxu0 %v9131
  %9152 = vmatprep.subr.mxu0 0.0
  %9153 = vmatpush1.msra.mxu0 %v9132
  %9154 = vmatprep.subr.mxu0 0.0
  %9155 = vmatpush1.msra.mxu0 %v9133
  %9156 = vmatprep.subr.mxu0 0.0
  %9157 = vmatpush1.msra.mxu0 %v9134
  %9158 = vmatprep.subr.mxu0 0.0
  %9159 = vmatpush1.msra.mxu0 %v9135
  %9160 = vmatprep.subr.mxu0 0.0
  %9161 = vmatpush1.msra.mxu0 %v9136
  %9162 = vmatprep.subr.mxu0 0.0
  %9163 = vmatpush1.msra.mxu0 %v9137
  %9164 = vmatprep.subr.mxu0 0.0
  %9165 = vmatpush1.msra.mxu0 %v9138
  %9166 = vmatprep.subr.mxu0 0.0
  %9167 = vmatpush1.msra.mxu0 %v9139
  %9168 = vmatprep.subr.mxu0 0.0
  %9169 = vmatpush1.msra.mxu0 %v9140
  %9170 = vmatprep.subr.mxu0 0.0
  %9171 = vmatpush1.msra.mxu0 %v9141
  %9172 = vmatprep.subr.mxu0 0.0
  %9173 = vmatpush1.msra.mxu0 %v9142
  %9174 = vmatprep.subr.mxu0 0.0
  %9175 = vmatpush1.msra.mxu0 %v9143
  %9176 = vmatprep.subr.mxu0 0.0
  %9177 = vmatpush1.msra.mxu0 %v9144
  %9178 = vmatprep.subr.mxu0 0.0
  %9179 = vmatpush1.msra.mxu0 0.0
  %9180 = vmatprep.subr.mxu0 0.0
  %9181 = vmatpush1.msra.mxu0 0.0
  %9182 = vmatprep.subr.mxu0 0.0
  %9183 = vmatpush1.msra.mxu0 0.0
  %9184 = vmatprep.subr.mxu0 0.0
  %9185 = vmatpush1.msra.mxu0 0.0
  %9186 = vmatprep.subr.mxu0 0.0
  %9187 = vmatpush1.msra.mxu0 0.0
  %9188 = vmatprep.subr.mxu0 0.0
  %9189 = vmatpush1.msra.mxu0 0.0
  %9190 = vmatprep.subr.mxu0 0.0
  %9191 = vmatpush1.msra.mxu0 0.0
  %9192 = vmatprep.subr.mxu0 0.0
  %9193 = vmatpush1.msra.mxu0 0.0
  %9194 = vmatprep.subr.mxu0 0.0
  %9195 = vmatpush1.msra.mxu0 0.0
  %9196 = vmatprep.subr.mxu0 0.0
  %9197 = vmatpush1.msra.mxu0 0.0
  %9198 = vmatprep.subr.mxu0 0.0
  %9199 = vmatpush1.msra.mxu0 0.0
  %9200 = vmatprep.subr.mxu0 0.0
  %9201 = vmatpush1.msra.mxu0 0.0
  %9202 = vmatprep.subr.mxu0 0.0
  %9203 = vmatpush1.msra.mxu0 0.0
  %9204 = vmatprep.subr.mxu0 0.0
  %9205 = vmatpush1.msra.mxu0 0.0
  %9206 = vmatprep.subr.mxu0 0.0
  %9207 = vmatpush1.msra.mxu0 0.0
  %9208 = vmatprep.subr.mxu0 0.0
  %9209 = vmatpush1.msra.mxu0 0.0
  %9210 = vmatprep.mubr.f32.mxu0 0.0
  %9211 = vmatmul.mubr.f32.gmra.mrb[0].mxu0 %v9128
  %v9212 = vpop.f32.mrb[0].mxu0
  %v9213 = vadd.f32 %v9145, %v9212
  %v9214 = vpop.f32.mrb[0].mxu0
  %9215 = vdwg.mxu0
  %vm9216 = vcmp.ge.f32.partialorder %v9213, 0.0
  %v9217 = vmul.f32 %v9213, 0.01
  %v9218 = vsel %vm9216, %v9213, %v9217
  %s9219 = scalar_lea.vmem %s5, 128
  %v9220 = vld [vmem:[%s9219] sm:$0xff]
  %v9221 = vld [vmem:[%s9219 + $0x8] sm:$0xff]
  %v9222 = vld [vmem:[%s9219 + $0x10] sm:$0xff]
  %v9223 = vld [vmem:[%s9219 + $0x18] sm:$0xff]
  %v9224 = vld [vmem:[%s9219 + $0x20] sm:$0xff]
  %v9225 = vld [vmem:[%s9219 + $0x28] sm:$0xff]
  %v9226 = vld [vmem:[%s9219 + $0x30] sm:$0xff]
  %v9227 = vld [vmem:[%s9219 + $0x38] sm:$0xff]
  %v9228 = vld [vmem:[%s9219 + $0x40] sm:$0xff]
  %v9229 = vld [vmem:[%s9219 + $0x48] sm:$0xff]
  %v9230 = vld [vmem:[%s9219 + $0x50] sm:$0xff]
  %v9231 = vld [vmem:[%s9219 + $0x58] sm:$0xff]
  %v9232 = vld [vmem:[%s9219 + $0x60] sm:$0xff]
  %v9233 = vld [vmem:[%s9219 + $0x68] sm:$0xff]
  %v9234 = vld [vmem:[%s9219 + $0x70] sm:$0xff]
  %v9235 = vld [vmem:[%s9219 + $0x78] sm:$0xff]
  %v9236 = vld [vmem:[%s1 + $0x13] ss:$0 sm:$0xff]
  %9237 = vmatprep.subr.mxu0 0.0
  %9238 = vmatpush1.msra.mxu0 %v9220
  %9239 = vmatprep.subr.mxu0 0.0
  %9240 = vmatpush1.msra.mxu0 %v9221
  %9241 = vmatprep.subr.mxu0 0.0
  %9242 = vmatpush1.msra.mxu0 %v9222
  %9243 = vmatprep.subr.mxu0 0.0
  %9244 = vmatpush1.msra.mxu0 %v9223
  %9245 = vmatprep.subr.mxu0 0.0
  %9246 = vmatpush1.msra.mxu0 %v9224
  %9247 = vmatprep.subr.mxu0 0.0
  %9248 = vmatpush1.msra.mxu0 %v9225
  %9249 = vmatprep.subr.mxu0 0.0
  %9250 = vmatpush1.msra.mxu0 %v9226
  %9251 = vmatprep.subr.mxu0 0.0
  %9252 = vmatpush1.msra.mxu0 %v9227
  %9253 = vmatprep.subr.mxu0 0.0
  %9254 = vmatpush1.msra.mxu0 %v9228
  %9255 = vmatprep.subr.mxu0 0.0
  %9256 = vmatpush1.msra.mxu0 %v9229
  %9257 = vmatprep.subr.mxu0 0.0
  %9258 = vmatpush1.msra.mxu0 %v9230
  %9259 = vmatprep.subr.mxu0 0.0
  %9260 = vmatpush1.msra.mxu0 %v9231
  %9261 = vmatprep.subr.mxu0 0.0
  %9262 = vmatpush1.msra.mxu0 %v9232
  %9263 = vmatprep.subr.mxu0 0.0
  %9264 = vmatpush1.msra.mxu0 %v9233
  %9265 = vmatprep.subr.mxu0 0.0
  %9266 = vmatpush1.msra.mxu0 %v9234
  %9267 = vmatprep.subr.mxu0 0.0
  %9268 = vmatpush1.msra.mxu0 %v9235
  %9269 = vmatprep.subr.mxu0 0.0
  %9270 = vmatpush1.msra.mxu0 0.0
  %9271 = vmatprep.subr.mxu0 0.0
  %9272 = vmatpush1.msra.mxu0 0.0
  %9273 = vmatprep.subr.mxu0 0.0
  %9274 = vmatpush1.msra.mxu0 0.0
  %9275 = vmatprep.subr.mxu0 0.0
  %9276 = vmatpush1.msra.mxu0 0.0
  %9277 = vmatprep.subr.mxu0 0.0
  %9278 = vmatpush1.msra.mxu0 0.0
  %9279 = vmatprep.subr.mxu0 0.0
  %9280 = vmatpush1.msra.mxu0 0.0
  %9281 = vmatprep.subr.mxu0 0.0
  %9282 = vmatpush1.msra.mxu0 0.0
  %9283 = vmatprep.subr.mxu0 0.0
  %9284 = vmatpush1.msra.mxu0 0.0
  %9285 = vmatprep.subr.mxu0 0.0
  %9286 = vmatpush1.msra.mxu0 0.0
  %9287 = vmatprep.subr.mxu0 0.0
  %9288 = vmatpush1.msra.mxu0 0.0
  %9289 = vmatprep.subr.mxu0 0.0
  %9290 = vmatpush1.msra.mxu0 0.0
  %9291 = vmatprep.subr.mxu0 0.0
  %9292 = vmatpush1.msra.mxu0 0.0
  %9293 = vmatprep.subr.mxu0 0.0
  %9294 = vmatpush1.msra.mxu0 0.0
  %9295 = vmatprep.subr.mxu0 0.0
  %9296 = vmatpush1.msra.mxu0 0.0
  %9297 = vmatprep.subr.mxu0 0.0
  %9298 = vmatpush1.msra.mxu0 0.0
  %9299 = vmatprep.subr.mxu0 0.0
  %9300 = vmatpush1.msra.mxu0 0.0
  %9301 = vmatprep.mubr.f32.mxu0 0.0
  %9302 = vmatmul.mubr.f32.gmra.mrb[0].mxu0 %v9218
  %v9303 = vpop.f32.mrb[0].mxu0
  %v9304 = vadd.f32 %v9236, %v9303
  %v9305 = vpop.f32.mrb[0].mxu0
  %9306 = vdwg.mxu0
  %vm9307 = vcmp.ge.f32.partialorder %v9304, 0.0
  %v9308 = vmul.f32 %v9304, 0.01
  %v9309 = vsel %vm9307, %v9304, %v9308
  %v9310 = vadd.f32 %v9128, %v9309
  %s9311 = scalar_lea.vmem %s5, 256
  %v9312 = vld [vmem:[%s9311] sm:$0xff]
  %v9313 = vld [vmem:[%s9311 + $0x8] sm:$0xff]
  %v9314 = vld [vmem:[%s9311 + $0x10] sm:$0xff]
  %v9315 = vld [vmem:[%s9311 + $0x18] sm:$0xff]
  %v9316 = vld [vmem:[%s9311 + $0x20] sm:$0xff]
  %v9317 = vld [vmem:[%s9311 + $0x28] sm:$0xff]
  %v9318 = vld [vmem:[%s9311 + $0x30] sm:$0xff]
  %v9319 = vld [vmem:[%s9311 + $0x38] sm:$0xff]
  %v9320 = vld [vmem:[%s9311 + $0x40] sm:$0xff]
  %v9321 = vld [vmem:[%s9311 + $0x48] sm:$0xff]
  %v9322 = vld [vmem:[%s9311 + $0x50] sm:$0xff]
  %v9323 = vld [vmem:[%s9311 + $0x58] sm:$0xff]
  %v9324 = vld [vmem:[%s9311 + $0x60] sm:$0xff]
  %v9325 = vld [vmem:[%s9311 + $0x68] sm:$0xff]
  %v9326 = vld [vmem:[%s9311 + $0x70] sm:$0xff]
  %v9327 = vld [vmem:[%s9311 + $0x78] sm:$0xff]
  %v9328 = vld [vmem:[%s1 + $0x14] ss:$0 sm:$0xff]
  %9329 = vmatprep.subr.mxu0 0.0
  %9330 = vmatpush1.msra.mxu0 %v9312
  %9331 = vmatprep.subr.mxu0 0.0
  %9332 = vmatpush1.msra.mxu0 %v9313
  %9333 = vmatprep.subr.mxu0 0.0
  %9334 = vmatpush1.msra.mxu0 %v9314
  %9335 = vmatprep.subr.mxu0 0.0
  %9336 = vmatpush1.msra.mxu0 %v9315
  %9337 = vmatprep.subr.mxu0 0.0
  %9338 = vmatpush1.msra.mxu0 %v9316
  %9339 = vmatprep.subr.mxu0 0.0
  %9340 = vmatpush1.msra.mxu0 %v9317
  %9341 = vmatprep.subr.mxu0 0.0
  %9342 = vmatpush1.msra.mxu0 %v9318
  %9343 = vmatprep.subr.mxu0 0.0
  %9344 = vmatpush1.msra.mxu0 %v9319
  %9345 = vmatprep.subr.mxu0 0.0
  %9346 = vmatpush1.msra.mxu0 %v9320
  %9347 = vmatprep.subr.mxu0 0.0
  %9348 = vmatpush1.msra.mxu0 %v9321
  %9349 = vmatprep.subr.mxu0 0.0
  %9350 = vmatpush1.msra.mxu0 %v9322
  %9351 = vmatprep.subr.mxu0 0.0
  %9352 = vmatpush1.msra.mxu0 %v9323
  %9353 = vmatprep.subr.mxu0 0.0
  %9354 = vmatpush1.msra.mxu0 %v9324
  %9355 = vmatprep.subr.mxu0 0.0
  %9356 = vmatpush1.msra.mxu0 %v9325
  %9357 = vmatprep.subr.mxu0 0.0
  %9358 = vmatpush1.msra.mxu0 %v9326
  %9359 = vmatprep.subr.mxu0 0.0
  %9360 = vmatpush1.msra.mxu0 %v9327
  %9361 = vmatprep.subr.mxu0 0.0
  %9362 = vmatpush1.msra.mxu0 0.0
  %9363 = vmatprep.subr.mxu0 0.0
  %9364 = vmatpush1.msra.mxu0 0.0
  %9365 = vmatprep.subr.mxu0 0.0
  %9366 = vmatpush1.msra.mxu0 0.0
  %9367 = vmatprep.subr.mxu0 0.0
  %9368 = vmatpush1.msra.mxu0 0.0
  %9369 = vmatprep.subr.mxu0 0.0
  %9370 = vmatpush1.msra.mxu0 0.0
  %9371 = vmatprep.subr.mxu0 0.0
  %9372 = vmatpush1.msra.mxu0 0.0
  %9373 = vmatprep.subr.mxu0 0.0
  %9374 = vmatpush1.msra.mxu0 0.0
  %9375 = vmatprep.subr.mxu0 0.0
  %9376 = vmatpush1.msra.mxu0 0.0
  %9377 = vmatprep.subr.mxu0 0.0
  %9378 = vmatpush1.msra.mxu0 0.0
  %9379 = vmatprep.subr.mxu0 0.0
  %9380 = vmatpush1.msra.mxu0 0.0
  %9381 = vmatprep.subr.mxu0 0.0
  %9382 = vmatpush1.msra.mxu0 0.0
  %9383 = vmatprep.subr.mxu0 0.0
  %9384 = vmatpush1.msra.mxu0 0.0
  %9385 = vmatprep.subr.mxu0 0.0
  %9386 = vmatpush1.msra.mxu0 0.0
  %9387 = vmatprep.subr.mxu0 0.0
  %9388 = vmatpush1.msra.mxu0 0.0
  %9389 = vmatprep.subr.mxu0 0.0
  %9390 = vmatpush1.msra.mxu0 0.0
  %9391 = vmatprep.subr.mxu0 0.0
  %9392 = vmatpush1.msra.mxu0 0.0
  %9393 = vmatprep.mubr.f32.mxu0 0.0
  %9394 = vmatmul.mubr.f32.gmra.mrb[0].mxu0 %v9310
  %v9395 = vpop.f32.mrb[0].mxu0
  %v9396 = vadd.f32 %v9328, %v9395
  %v9397 = vpop.f32.mrb[0].mxu0
  %9398 = vdwg.mxu0
  %vm9399 = vcmp.ge.f32.partialorder %v9396, 0.0
  %v9400 = vmul.f32 %v9396, 0.01
  %v9401 = vsel %vm9399, %v9396, %v9400
  %s9402 = scalar_lea.vmem %s5, 384
  %v9403 = vld [vmem:[%s9402] sm:$0xff]
  %v9404 = vld [vmem:[%s9402 + $0x8] sm:$0xff]
  %v9405 = vld [vmem:[%s9402 + $0x10] sm:$0xff]
  %v9406 = vld [vmem:[%s9402 + $0x18] sm:$0xff]
  %v9407 = vld [vmem:[%s9402 + $0x20] sm:$0xff]
  %v9408 = vld [vmem:[%s9402 + $0x28] sm:$0xff]
  %v9409 = vld [vmem:[%s9402 + $0x30] sm:$0xff]
  %v9410 = vld [vmem:[%s9402 + $0x38] sm:$0xff]
  %v9411 = vld [vmem:[%s9402 + $0x40] sm:$0xff]
  %v9412 = vld [vmem:[%s9402 + $0x48] sm:$0xff]
  %v9413 = vld [vmem:[%s9402 + $0x50] sm:$0xff]
  %v9414 = vld [vmem:[%s9402 + $0x58] sm:$0xff]
  %v9415 = vld [vmem:[%s9402 + $0x60] sm:$0xff]
  %v9416 = vld [vmem:[%s9402 + $0x68] sm:$0xff]
  %v9417 = vld [vmem:[%s9402 + $0x70] sm:$0xff]
  %v9418 = vld [vmem:[%s9402 + $0x78] sm:$0xff]
  %v9419 = vld [vmem:[%s1 + $0x15] ss:$0 sm:$0xff]
  %9420 = vmatprep.subr.mxu0 0.0
  %9421 = vmatpush1.msra.mxu0 %v9403
  %9422 = vmatprep.subr.mxu0 0.0
  %9423 = vmatpush1.msra.mxu0 %v9404
  %9424 = vmatprep.subr.mxu0 0.0
  %9425 = vmatpush1.msra.mxu0 %v9405
  %9426 = vmatprep.subr.mxu0 0.0
  %9427 = vmatpush1.msra.mxu0 %v9406
  %9428 = vmatprep.subr.mxu0 0.0
  %9429 = vmatpush1.msra.mxu0 %v9407
  %9430 = vmatprep.subr.mxu0 0.0
  %9431 = vmatpush1.msra.mxu0 %v9408
  %9432 = vmatprep.subr.mxu0 0.0
  %9433 = vmatpush1.msra.mxu0 %v9409
  %9434 = vmatprep.subr.mxu0 0.0
  %9435 = vmatpush1.msra.mxu0 %v9410
  %9436 = vmatprep.subr.mxu0 0.0
  %9437 = vmatpush1.msra.mxu0 %v9411
  %9438 = vmatprep.subr.mxu0 0.0
  %9439 = vmatpush1.msra.mxu0 %v9412
  %9440 = vmatprep.subr.mxu0 0.0
  %9441 = vmatpush1.msra.mxu0 %v9413
  %9442 = vmatprep.subr.mxu0 0.0
  %9443 = vmatpush1.msra.mxu0 %v9414
  %9444 = vmatprep.subr.mxu0 0.0
  %9445 = vmatpush1.msra.mxu0 %v9415
  %9446 = vmatprep.subr.mxu0 0.0
  %9447 = vmatpush1.msra.mxu0 %v9416
  %9448 = vmatprep.subr.mxu0 0.0
  %9449 = vmatpush1.msra.mxu0 %v9417
  %9450 = vmatprep.subr.mxu0 0.0
  %9451 = vmatpush1.msra.mxu0 %v9418
  %9452 = vmatprep.subr.mxu0 0.0
  %9453 = vmatpush1.msra.mxu0 0.0
  %9454 = vmatprep.subr.mxu0 0.0
  %9455 = vmatpush1.msra.mxu0 0.0
  %9456 = vmatprep.subr.mxu0 0.0
  %9457 = vmatpush1.msra.mxu0 0.0
  %9458 = vmatprep.subr.mxu0 0.0
  %9459 = vmatpush1.msra.mxu0 0.0
  %9460 = vmatprep.subr.mxu0 0.0
  %9461 = vmatpush1.msra.mxu0 0.0
  %9462 = vmatprep.subr.mxu0 0.0
  %9463 = vmatpush1.msra.mxu0 0.0
  %9464 = vmatprep.subr.mxu0 0.0
  %9465 = vmatpush1.msra.mxu0 0.0
  %9466 = vmatprep.subr.mxu0 0.0
  %9467 = vmatpush1.msra.mxu0 0.0
  %9468 = vmatprep.subr.mxu0 0.0
  %9469 = vmatpush1.msra.mxu0 0.0
  %9470 = vmatprep.subr.mxu0 0.0
  %9471 = vmatpush1.msra.mxu0 0.0
  %9472 = vmatprep.subr.mxu0 0.0
  %9473 = vmatpush1.msra.mxu0 0.0
  %9474 = vmatprep.subr.mxu0 0.0
  %9475 = vmatpush1.msra.mxu0 0.0
  %9476 = vmatprep.subr.mxu0 0.0
  %9477 = vmatpush1.msra.mxu0 0.0
  %9478 = vmatprep.subr.mxu0 0.0
  %9479 = vmatpush1.msra.mxu0 0.0
  %9480 = vmatprep.subr.mxu0 0.0
  %9481 = vmatpush1.msra.mxu0 0.0
  %9482 = vmatprep.subr.mxu0 0.0
  %9483 = vmatpush1.msra.mxu0 0.0
  %9484 = vmatprep.mubr.f32.mxu0 0.0
  %9485 = vmatmul.mubr.f32.gmra.mrb[0].mxu0 %v9401
  %v9486 = vpop.f32.mrb[0].mxu0
  %v9487 = vadd.f32 %v9419, %v9486
  %v9488 = vpop.f32.mrb[0].mxu0
  %9489 = vdwg.mxu0
  %vm9490 = vcmp.ge.f32.partialorder %v9487, 0.0
  %v9491 = vmul.f32 %v9487, 0.01
  %v9492 = vsel %vm9490, %v9487, %v9491
  %s9493 = scalar_lea.vmem %s5, 512
  %v9494 = vld [vmem:[%s9493] sm:$0xff]
  %v9495 = vld [vmem:[%s9493 + $0x8] sm:$0xff]
  %v9496 = vld [vmem:[%s9493 + $0x10] sm:$0xff]
  %v9497 = vld [vmem:[%s9493 + $0x18] sm:$0xff]
  %v9498 = vld [vmem:[%s9493 + $0x20] sm:$0xff]
  %v9499 = vld [vmem:[%s9493 + $0x28] sm:$0xff]
  %v9500 = vld [vmem:[%s9493 + $0x30] sm:$0xff]
  %v9501 = vld [vmem:[%s9493 + $0x38] sm:$0xff]
  %v9502 = vld [vmem:[%s9493 + $0x40] sm:$0xff]
  %v9503 = vld [vmem:[%s9493 + $0x48] sm:$0xff]
  %v9504 = vld [vmem:[%s9493 + $0x50] sm:$0xff]
  %v9505 = vld [vmem:[%s9493 + $0x58] sm:$0xff]
  %v9506 = vld [vmem:[%s9493 + $0x60] sm:$0xff]
  %v9507 = vld [vmem:[%s9493 + $0x68] sm:$0xff]
  %v9508 = vld [vmem:[%s9493 + $0x70] sm:$0xff]
  %v9509 = vld [vmem:[%s9493 + $0x78] sm:$0xff]
  %v9510 = vld [vmem:[%s1 + $0x16] ss:$0 sm:$0xff]
  %9511 = vmatprep.subr.mxu0 0.0
  %9512 = vmatpush1.msra.mxu0 %v9494
  %9513 = vmatprep.subr.mxu0 0.0
  %9514 = vmatpush1.msra.mxu0 %v9495
  %9515 = vmatprep.subr.mxu0 0.0
  %9516 = vmatpush1.msra.mxu0 %v9496
  %9517 = vmatprep.subr.mxu0 0.0
  %9518 = vmatpush1.msra.mxu0 %v9497
  %9519 = vmatprep.subr.mxu0 0.0
  %9520 = vmatpush1.msra.mxu0 %v9498
  %9521 = vmatprep.subr.mxu0 0.0
  %9522 = vmatpush1.msra.mxu0 %v9499
  %9523 = vmatprep.subr.mxu0 0.0
  %9524 = vmatpush1.msra.mxu0 %v9500
  %9525 = vmatprep.subr.mxu0 0.0
  %9526 = vmatpush1.msra.mxu0 %v9501
  %9527 = vmatprep.subr.mxu0 0.0
  %9528 = vmatpush1.msra.mxu0 %v9502
  %9529 = vmatprep.subr.mxu0 0.0
  %9530 = vmatpush1.msra.mxu0 %v9503
  %9531 = vmatprep.subr.mxu0 0.0
  %9532 = vmatpush1.msra.mxu0 %v9504
  %9533 = vmatprep.subr.mxu0 0.0
  %9534 = vmatpush1.msra.mxu0 %v9505
  %9535 = vmatprep.subr.mxu0 0.0
  %9536 = vmatpush1.msra.mxu0 %v9506
  %9537 = vmatprep.subr.mxu0 0.0
  %9538 = vmatpush1.msra.mxu0 %v9507
  %9539 = vmatprep.subr.mxu0 0.0
  %9540 = vmatpush1.msra.mxu0 %v9508
  %9541 = vmatprep.subr.mxu0 0.0
  %9542 = vmatpush1.msra.mxu0 %v9509
  %9543 = vmatprep.subr.mxu0 0.0
  %9544 = vmatpush1.msra.mxu0 0.0
  %9545 = vmatprep.subr.mxu0 0.0
  %9546 = vmatpush1.msra.mxu0 0.0
  %9547 = vmatprep.subr.mxu0 0.0
  %9548 = vmatpush1.msra.mxu0 0.0
  %9549 = vmatprep.subr.mxu0 0.0
  %9550 = vmatpush1.msra.mxu0 0.0
  %9551 = vmatprep.subr.mxu0 0.0
  %9552 = vmatpush1.msra.mxu0 0.0
  %9553 = vmatprep.subr.mxu0 0.0
  %9554 = vmatpush1.msra.mxu0 0.0
  %9555 = vmatprep.subr.mxu0 0.0
  %9556 = vmatpush1.msra.mxu0 0.0
  %9557 = vmatprep.subr.mxu0 0.0
  %9558 = vmatpush1.msra.mxu0 0.0
  %9559 = vmatprep.subr.mxu0 0.0
  %9560 = vmatpush1.msra.mxu0 0.0
  %9561 = vmatprep.subr.mxu0 0.0
  %9562 = vmatpush1.msra.mxu0 0.0
  %9563 = vmatprep.subr.mxu0 0.0
  %9564 = vmatpush1.msra.mxu0 0.0
  %9565 = vmatprep.subr.mxu0 0.0
  %9566 = vmatpush1.msra.mxu0 0.0
  %9567 = vmatprep.subr.mxu0 0.0
  %9568 = vmatpush1.msra.mxu0 0.0
  %9569 = vmatprep.subr.mxu0 0.0
  %9570 = vmatpush1.msra.mxu0 0.0
  %9571 = vmatprep.subr.mxu0 0.0
  %9572 = vmatpush1.msra.mxu0 0.0
  %9573 = vmatprep.subr.mxu0 0.0
  %9574 = vmatpush1.msra.mxu0 0.0
  %9575 = vmatprep.mubr.f32.mxu0 0.0
  %9576 = vmatmul.mubr.f32.gmra.mrb[0].mxu0 %v9492
  %v9577 = vpop.f32.mrb[0].mxu0
  %v9578 = vadd.f32 %v9510, %v9577
  %v9579 = vpop.f32.mrb[0].mxu0
  %9580 = vdwg.mxu0
  %vm9581 = vcmp.ge.f32.partialorder %v9578, 0.0
  %v9582 = vmul.f32 %v9578, 0.01
  %v9583 = vsel %vm9581, %v9578, %v9582
  %v9584 = vadd.f32 %v9401, %v9583
  %v9585 = vld [vmem:[%s6] sm:$0xff]
  %v9586 = vld [vmem:[%s6 + $0x8] sm:$0xff]
  %v9587 = vld [vmem:[%s6 + $0x10] sm:$0xff]
  %v9588 = vld [vmem:[%s6 + $0x18] sm:$0xff]
  %v9589 = vld [vmem:[%s6 + $0x20] sm:$0xff]
  %v9590 = vld [vmem:[%s6 + $0x28] sm:$0xff]
  %v9591 = vld [vmem:[%s6 + $0x30] sm:$0xff]
  %v9592 = vld [vmem:[%s6 + $0x38] sm:$0xff]
  %v9593 = vld [vmem:[%s6 + $0x40] sm:$0xff]
  %v9594 = vld [vmem:[%s6 + $0x48] sm:$0xff]
  %v9595 = vld [vmem:[%s6 + $0x50] sm:$0xff]
  %v9596 = vld [vmem:[%s6 + $0x58] sm:$0xff]
  %v9597 = vld [vmem:[%s6 + $0x60] sm:$0xff]
  %v9598 = vld [vmem:[%s6 + $0x68] sm:$0xff]
  %v9599 = vld [vmem:[%s6 + $0x70] sm:$0xff]
  %v9600 = vld [vmem:[%s6 + $0x78] sm:$0xff]
  %v9601 = vld [vmem:[%s6 + $0x80] sm:$0xff]
  %v9602 = vld [vmem:[%s6 + $0x88] sm:$0xff]
  %v9603 = vld [vmem:[%s6 + $0x90] sm:$0xff]
  %v9604 = vld [vmem:[%s6 + $0x98] sm:$0xff]
  %v9605 = vld [vmem:[%s6 + $0xa0] sm:$0xff]
  %v9606 = vld [vmem:[%s6 + $0xa8] sm:$0xff]
  %v9607 = vld [vmem:[%s6 + $0xb0] sm:$0xff]
  %v9608 = vld [vmem:[%s6 + $0xb8] sm:$0xff]
  %v9609 = vld [vmem:[%s6 + $0xc0] sm:$0xff]
  %v9610 = vld [vmem:[%s6 + $0xc8] sm:$0xff]
  %v9611 = vld [vmem:[%s6 + $0xd0] sm:$0xff]
  %v9612 = vld [vmem:[%s6 + $0xd8] sm:$0xff]
  %v9613 = vld [vmem:[%s6 + $0xe0] sm:$0xff]
  %v9614 = vld [vmem:[%s6 + $0xe8] sm:$0xff]
  %v9615 = vld [vmem:[%s6 + $0xf0] sm:$0xff]
  %v9616 = vld [vmem:[%s6 + $0xf8] sm:$0xff]
  %s9617 = scalar_lea.vmem %s1, 23
  %v9618 = vld [vmem:[%s9617] ss:$8 sm:$0x3]
  %v9620 = vlaneseq
  %v9621 = vshrl.u32 %v9620, 7
  %v9622 = vsub.s32 0, %v9621
  %v9623 = vrot.slane %v9618, %v9622
  %v9624 = vlaneseq
  %v9625 = vshrl.u32 %v9624, 7
  %v9626 = vsub.s32 1, %v9625
  %v9627 = vrot.slane %v9618, %v9626
  %9630 = vmatprep.subr.mxu0 %v9586
  %9631 = vmatpush1.msra.mxu0 %v9585
  %9632 = vmatprep.subr.mxu0 %v9588
  %9633 = vmatpush1.msra.mxu0 %v9587
  %9634 = vmatprep.subr.mxu0 %v9590
  %9635 = vmatpush1.msra.mxu0 %v9589
  %9636 = vmatprep.subr.mxu0 %v9592
  %9637 = vmatpush1.msra.mxu0 %v9591
  %9638 = vmatprep.subr.mxu0 %v9594
  %9639 = vmatpush1.msra.mxu0 %v9593
  %9640 = vmatprep.subr.mxu0 %v9596
  %9641 = vmatpush1.msra.mxu0 %v9595
  %9642 = vmatprep.subr.mxu0 %v9598
  %9643 = vmatpush1.msra.mxu0 %v9597
  %9644 = vmatprep.subr.mxu0 %v9600
  %9645 = vmatpush1.msra.mxu0 %v9599
  %9646 = vmatprep.subr.mxu0 %v9602
  %9647 = vmatpush1.msra.mxu0 %v9601
  %9648 = vmatprep.subr.mxu0 %v9604
  %9649 = vmatpush1.msra.mxu0 %v9603
  %9650 = vmatprep.subr.mxu0 %v9606
  %9651 = vmatpush1.msra.mxu0 %v9605
  %9652 = vmatprep.subr.mxu0 %v9608
  %9653 = vmatpush1.msra.mxu0 %v9607
  %9654 = vmatprep.subr.mxu0 %v9610
  %9655 = vmatpush1.msra.mxu0 %v9609
  %9656 = vmatprep.subr.mxu0 %v9612
  %9657 = vmatpush1.msra.mxu0 %v9611
  %9658 = vmatprep.subr.mxu0 %v9614
  %9659 = vmatpush1.msra.mxu0 %v9613
  %9660 = vmatprep.subr.mxu0 %v9616
  %9661 = vmatpush1.msra.mxu0 %v9615
  %9662 = vmatprep.subr.mxu0 0.0
  %9663 = vmatpush1.msra.mxu0 0.0
  %9664 = vmatprep.subr.mxu0 0.0
  %9665 = vmatpush1.msra.mxu0 0.0
  %9666 = vmatprep.subr.mxu0 0.0
  %9667 = vmatpush1.msra.mxu0 0.0
  %9668 = vmatprep.subr.mxu0 0.0
  %9669 = vmatpush1.msra.mxu0 0.0
  %9670 = vmatprep.subr.mxu0 0.0
  %9671 = vmatpush1.msra.mxu0 0.0
  %9672 = vmatprep.subr.mxu0 0.0
  %9673 = vmatpush1.msra.mxu0 0.0
  %9674 = vmatprep.subr.mxu0 0.0
  %9675 = vmatpush1.msra.mxu0 0.0
  %9676 = vmatprep.subr.mxu0 0.0
  %9677 = vmatpush1.msra.mxu0 0.0
  %9678 = vmatprep.subr.mxu0 0.0
  %9679 = vmatpush1.msra.mxu0 0.0
  %9680 = vmatprep.subr.mxu0 0.0
  %9681 = vmatpush1.msra.mxu0 0.0
  %9682 = vmatprep.subr.mxu0 0.0
  %9683 = vmatpush1.msra.mxu0 0.0
  %9684 = vmatprep.subr.mxu0 0.0
  %9685 = vmatpush1.msra.mxu0 0.0
  %9686 = vmatprep.subr.mxu0 0.0
  %9687 = vmatpush1.msra.mxu0 0.0
  %9688 = vmatprep.subr.mxu0 0.0
  %9689 = vmatpush1.msra.mxu0 0.0
  %9690 = vmatprep.subr.mxu0 0.0
  %9691 = vmatpush1.msra.mxu0 0.0
  %9692 = vmatprep.subr.mxu0 0.0
  %9693 = vmatpush1.msra.mxu0 0.0
  %9694 = vmatprep.mubr.f32.mxu0 0.0
  %9695 = vmatmul.mubr.f32.gmra.mrb[0].mxu0 %v9584
  %v9696 = vpop.f32.mrb[0].mxu0
  %v9697 = vadd.f32 %v9623, %v9696
  %v9698 = vpop.f32.mrb[0].mxu0
  %v9699 = vadd.f32 %v9627, %v9698
  %9700 = vdwg.mxu0
  %vm9701 = vcmp.ge.f32.partialorder %v9697, 0.0
  %vm9702 = vcmp.ge.f32.partialorder %v9699, 0.0
  %v9703 = vmul.f32 %v9697, 0.01
  %v9704 = vmul.f32 %v9699, 0.01
  %v9705 = vsel %vm9701, %v9697, %v9703
  %v9706 = vsel %vm9702, %v9699, %v9704
  %v9707 = vld [vmem:[%s7] sm:$0xff]
  %v9708 = vld [vmem:[%s7 + $0x8] sm:$0xff]
  %v9709 = vld [vmem:[%s7 + $0x10] sm:$0xff]
  %v9710 = vld [vmem:[%s7 + $0x18] sm:$0xff]
  %v9711 = vld [vmem:[%s7 + $0x20] sm:$0xff]
  %v9712 = vld [vmem:[%s7 + $0x28] sm:$0xff]
  %v9713 = vld [vmem:[%s7 + $0x30] sm:$0xff]
  %v9714 = vld [vmem:[%s7 + $0x38] sm:$0xff]
  %v9715 = vld [vmem:[%s7 + $0x40] sm:$0xff]
  %v9716 = vld [vmem:[%s7 + $0x48] sm:$0xff]
  %v9717 = vld [vmem:[%s7 + $0x50] sm:$0xff]
  %v9718 = vld [vmem:[%s7 + $0x58] sm:$0xff]
  %v9719 = vld [vmem:[%s7 + $0x60] sm:$0xff]
  %v9720 = vld [vmem:[%s7 + $0x68] sm:$0xff]
  %v9721 = vld [vmem:[%s7 + $0x70] sm:$0xff]
  %v9722 = vld [vmem:[%s7 + $0x78] sm:$0xff]
  %v9723 = vld [vmem:[%s7 + $0x80] sm:$0xff]
  %v9724 = vld [vmem:[%s7 + $0x88] sm:$0xff]
  %v9725 = vld [vmem:[%s7 + $0x90] sm:$0xff]
  %v9726 = vld [vmem:[%s7 + $0x98] sm:$0xff]
  %v9727 = vld [vmem:[%s7 + $0xa0] sm:$0xff]
  %v9728 = vld [vmem:[%s7 + $0xa8] sm:$0xff]
  %v9729 = vld [vmem:[%s7 + $0xb0] sm:$0xff]
  %v9730 = vld [vmem:[%s7 + $0xb8] sm:$0xff]
  %v9731 = vld [vmem:[%s7 + $0xc0] sm:$0xff]
  %v9732 = vld [vmem:[%s7 + $0xc8] sm:$0xff]
  %v9733 = vld [vmem:[%s7 + $0xd0] sm:$0xff]
  %v9734 = vld [vmem:[%s7 + $0xd8] sm:$0xff]
  %v9735 = vld [vmem:[%s7 + $0xe0] sm:$0xff]
  %v9736 = vld [vmem:[%s7 + $0xe8] sm:$0xff]
  %v9737 = vld [vmem:[%s7 + $0xf0] sm:$0xff]
  %v9738 = vld [vmem:[%s7 + $0xf8] sm:$0xff]
  %v9739 = vld [vmem:[%s7 + $0x100] sm:$0xff]
  %v9740 = vld [vmem:[%s7 + $0x108] sm:$0xff]
  %v9741 = vld [vmem:[%s7 + $0x110] sm:$0xff]
  %v9742 = vld [vmem:[%s7 + $0x118] sm:$0xff]
  %v9743 = vld [vmem:[%s7 + $0x120] sm:$0xff]
  %v9744 = vld [vmem:[%s7 + $0x128] sm:$0xff]
  %v9745 = vld [vmem:[%s7 + $0x130] sm:$0xff]
  %v9746 = vld [vmem:[%s7 + $0x138] sm:$0xff]
  %v9747 = vld [vmem:[%s7 + $0x140] sm:$0xff]
  %v9748 = vld [vmem:[%s7 + $0x148] sm:$0xff]
  %v9749 = vld [vmem:[%s7 + $0x150] sm:$0xff]
  %v9750 = vld [vmem:[%s7 + $0x158] sm:$0xff]
  %v9751 = vld [vmem:[%s7 + $0x160] sm:$0xff]
  %v9752 = vld [vmem:[%s7 + $0x168] sm:$0xff]
  %v9753 = vld [vmem:[%s7 + $0x170] sm:$0xff]
  %v9754 = vld [vmem:[%s7 + $0x178] sm:$0xff]
  %v9755 = vld [vmem:[%s7 + $0x180] sm:$0xff]
  %v9756 = vld [vmem:[%s7 + $0x188] sm:$0xff]
  %v9757 = vld [vmem:[%s7 + $0x190] sm:$0xff]
  %v9758 = vld [vmem:[%s7 + $0x198] sm:$0xff]
  %v9759 = vld [vmem:[%s7 + $0x1a0] sm:$0xff]
  %v9760 = vld [vmem:[%s7 + $0x1a8] sm:$0xff]
  %v9761 = vld [vmem:[%s7 + $0x1b0] sm:$0xff]
  %v9762 = vld [vmem:[%s7 + $0x1b8] sm:$0xff]
  %v9763 = vld [vmem:[%s7 + $0x1c0] sm:$0xff]
  %v9764 = vld [vmem:[%s7 + $0x1c8] sm:$0xff]
  %v9765 = vld [vmem:[%s7 + $0x1d0] sm:$0xff]
  %v9766 = vld [vmem:[%s7 + $0x1d8] sm:$0xff]
  %v9767 = vld [vmem:[%s7 + $0x1e0] sm:$0xff]
  %v9768 = vld [vmem:[%s7 + $0x1e8] sm:$0xff]
  %v9769 = vld [vmem:[%s7 + $0x1f0] sm:$0xff]
  %v9770 = vld [vmem:[%s7 + $0x1f8] sm:$0xff]
  %s9771 = scalar_lea.vmem %s1, 32
  %v9772 = vld [vmem:[%s9771] ss:$8 sm:$0x3]
  %v9774 = vlaneseq
  %v9775 = vshrl.u32 %v9774, 7
  %v9776 = vsub.s32 0, %v9775
  %v9777 = vrot.slane %v9772, %v9776
  %v9778 = vlaneseq
  %v9779 = vshrl.u32 %v9778, 7
  %v9780 = vsub.s32 1, %v9779
  %v9781 = vrot.slane %v9772, %v9780
  %9784 = vmatprep.subr.mxu0 %v9708
  %9785 = vmatpush1.msra.mxu0 %v9707
  %9786 = vmatprep.subr.mxu0 %v9710
  %9787 = vmatpush1.msra.mxu0 %v9709
  %9788 = vmatprep.subr.mxu0 %v9712
  %9789 = vmatpush1.msra.mxu0 %v9711
  %9790 = vmatprep.subr.mxu0 %v9714
  %9791 = vmatpush1.msra.mxu0 %v9713
  %9792 = vmatprep.subr.mxu0 %v9716
  %9793 = vmatpush1.msra.mxu0 %v9715
  %9794 = vmatprep.subr.mxu0 %v9718
  %9795 = vmatpush1.msra.mxu0 %v9717
  %9796 = vmatprep.subr.mxu0 %v9720
  %9797 = vmatpush1.msra.mxu0 %v9719
  %9798 = vmatprep.subr.mxu0 %v9722
  %9799 = vmatpush1.msra.mxu0 %v9721
  %9800 = vmatprep.subr.mxu0 %v9724
  %9801 = vmatpush1.msra.mxu0 %v9723
  %9802 = vmatprep.subr.mxu0 %v9726
  %9803 = vmatpush1.msra.mxu0 %v9725
  %9804 = vmatprep.subr.mxu0 %v9728
  %9805 = vmatpush1.msra.mxu0 %v9727
  %9806 = vmatprep.subr.mxu0 %v9730
  %9807 = vmatpush1.msra.mxu0 %v9729
  %9808 = vmatprep.subr.mxu0 %v9732
  %9809 = vmatpush1.msra.mxu0 %v9731
  %9810 = vmatprep.subr.mxu0 %v9734
  %9811 = vmatpush1.msra.mxu0 %v9733
  %9812 = vmatprep.subr.mxu0 %v9736
  %9813 = vmatpush1.msra.mxu0 %v9735
  %9814 = vmatprep.subr.mxu0 %v9738
  %9815 = vmatpush1.msra.mxu0 %v9737
  %9816 = vmatprep.subr.mxu0 %v9740
  %9817 = vmatpush1.msra.mxu0 %v9739
  %9818 = vmatprep.subr.mxu0 %v9742
  %9819 = vmatpush1.msra.mxu0 %v9741
  %9820 = vmatprep.subr.mxu0 %v9744
  %9821 = vmatpush1.msra.mxu0 %v9743
  %9822 = vmatprep.subr.mxu0 %v9746
  %9823 = vmatpush1.msra.mxu0 %v9745
  %9824 = vmatprep.subr.mxu0 %v9748
  %9825 = vmatpush1.msra.mxu0 %v9747
  %9826 = vmatprep.subr.mxu0 %v9750
  %9827 = vmatpush1.msra.mxu0 %v9749
  %9828 = vmatprep.subr.mxu0 %v9752
  %9829 = vmatpush1.msra.mxu0 %v9751
  %9830 = vmatprep.subr.mxu0 %v9754
  %9831 = vmatpush1.msra.mxu0 %v9753
  %9832 = vmatprep.subr.mxu0 %v9756
  %9833 = vmatpush1.msra.mxu0 %v9755
  %9834 = vmatprep.subr.mxu0 %v9758
  %9835 = vmatpush1.msra.mxu0 %v9757
  %9836 = vmatprep.subr.mxu0 %v9760
  %9837 = vmatpush1.msra.mxu0 %v9759
  %9838 = vmatprep.subr.mxu0 %v9762
  %9839 = vmatpush1.msra.mxu0 %v9761
  %9840 = vmatprep.subr.mxu0 %v9764
  %9841 = vmatpush1.msra.mxu0 %v9763
  %9842 = vmatprep.subr.mxu0 %v9766
  %9843 = vmatpush1.msra.mxu0 %v9765
  %9844 = vmatprep.subr.mxu0 %v9768
  %9845 = vmatpush1.msra.mxu0 %v9767
  %9846 = vmatprep.subr.mxu0 %v9770
  %9847 = vmatpush1.msra.mxu0 %v9769
  %9848 = vmatprep.mubr.f32.mxu0 %v9706
  %9849 = vmatmul.mubr.f32.gmra.mrb[0].mxu0 %v9705
  %v9850 = vpop.f32.mrb[0].mxu0
  %v9851 = vadd.f32 %v9777, %v9850
  %v9852 = vpop.f32.mrb[0].mxu0
  %v9853 = vadd.f32 %v9781, %v9852
  %9854 = vdwg.mxu0
  %vm9855 = vcmp.ge.f32.partialorder %v9851, 0.0
  %vm9856 = vcmp.ge.f32.partialorder %v9853, 0.0
  %v9857 = vmul.f32 %v9851, 0.01
  %v9858 = vmul.f32 %v9853, 0.01
  %v9859 = vsel %vm9855, %v9851, %v9857
  %v9860 = vsel %vm9856, %v9853, %v9858
  %s9861 = scalar_lea.vmem %s7, 512
  %v9862 = vld [vmem:[%s9861] sm:$0xff]
  %v9863 = vld [vmem:[%s9861 + $0x8] sm:$0xff]
  %v9864 = vld [vmem:[%s9861 + $0x10] sm:$0xff]
  %v9865 = vld [vmem:[%s9861 + $0x18] sm:$0xff]
  %v9866 = vld [vmem:[%s9861 + $0x20] sm:$0xff]
  %v9867 = vld [vmem:[%s9861 + $0x28] sm:$0xff]
  %v9868 = vld [vmem:[%s9861 + $0x30] sm:$0xff]
  %v9869 = vld [vmem:[%s9861 + $0x38] sm:$0xff]
  %v9870 = vld [vmem:[%s9861 + $0x40] sm:$0xff]
  %v9871 = vld [vmem:[%s9861 + $0x48] sm:$0xff]
  %v9872 = vld [vmem:[%s9861 + $0x50] sm:$0xff]
  %v9873 = vld [vmem:[%s9861 + $0x58] sm:$0xff]
  %v9874 = vld [vmem:[%s9861 + $0x60] sm:$0xff]
  %v9875 = vld [vmem:[%s9861 + $0x68] sm:$0xff]
  %v9876 = vld [vmem:[%s9861 + $0x70] sm:$0xff]
  %v9877 = vld [vmem:[%s9861 + $0x78] sm:$0xff]
  %v9878 = vld [vmem:[%s9861 + $0x80] sm:$0xff]
  %v9879 = vld [vmem:[%s9861 + $0x88] sm:$0xff]
  %v9880 = vld [vmem:[%s9861 + $0x90] sm:$0xff]
  %v9881 = vld [vmem:[%s9861 + $0x98] sm:$0xff]
  %v9882 = vld [vmem:[%s9861 + $0xa0] sm:$0xff]
  %v9883 = vld [vmem:[%s9861 + $0xa8] sm:$0xff]
  %v9884 = vld [vmem:[%s9861 + $0xb0] sm:$0xff]
  %v9885 = vld [vmem:[%s9861 + $0xb8] sm:$0xff]
  %v9886 = vld [vmem:[%s9861 + $0xc0] sm:$0xff]
  %v9887 = vld [vmem:[%s9861 + $0xc8] sm:$0xff]
  %v9888 = vld [vmem:[%s9861 + $0xd0] sm:$0xff]
  %v9889 = vld [vmem:[%s9861 + $0xd8] sm:$0xff]
  %v9890 = vld [vmem:[%s9861 + $0xe0] sm:$0xff]
  %v9891 = vld [vmem:[%s9861 + $0xe8] sm:$0xff]
  %v9892 = vld [vmem:[%s9861 + $0xf0] sm:$0xff]
  %v9893 = vld [vmem:[%s9861 + $0xf8] sm:$0xff]
  %v9894 = vld [vmem:[%s9861 + $0x100] sm:$0xff]
  %v9895 = vld [vmem:[%s9861 + $0x108] sm:$0xff]
  %v9896 = vld [vmem:[%s9861 + $0x110] sm:$0xff]
  %v9897 = vld [vmem:[%s9861 + $0x118] sm:$0xff]
  %v9898 = vld [vmem:[%s9861 + $0x120] sm:$0xff]
  %v9899 = vld [vmem:[%s9861 + $0x128] sm:$0xff]
  %v9900 = vld [vmem:[%s9861 + $0x130] sm:$0xff]
  %v9901 = vld [vmem:[%s9861 + $0x138] sm:$0xff]
  %v9902 = vld [vmem:[%s9861 + $0x140] sm:$0xff]
  %v9903 = vld [vmem:[%s9861 + $0x148] sm:$0xff]
  %v9904 = vld [vmem:[%s9861 + $0x150] sm:$0xff]
  %v9905 = vld [vmem:[%s9861 + $0x158] sm:$0xff]
  %v9906 = vld [vmem:[%s9861 + $0x160] sm:$0xff]
  %v9907 = vld [vmem:[%s9861 + $0x168] sm:$0xff]
  %v9908 = vld [vmem:[%s9861 + $0x170] sm:$0xff]
  %v9909 = vld [vmem:[%s9861 + $0x178] sm:$0xff]
  %v9910 = vld [vmem:[%s9861 + $0x180] sm:$0xff]
  %v9911 = vld [vmem:[%s9861 + $0x188] sm:$0xff]
  %v9912 = vld [vmem:[%s9861 + $0x190] sm:$0xff]
  %v9913 = vld [vmem:[%s9861 + $0x198] sm:$0xff]
  %v9914 = vld [vmem:[%s9861 + $0x1a0] sm:$0xff]
  %v9915 = vld [vmem:[%s9861 + $0x1a8] sm:$0xff]
  %v9916 = vld [vmem:[%s9861 + $0x1b0] sm:$0xff]
  %v9917 = vld [vmem:[%s9861 + $0x1b8] sm:$0xff]
  %v9918 = vld [vmem:[%s9861 + $0x1c0] sm:$0xff]
  %v9919 = vld [vmem:[%s9861 + $0x1c8] sm:$0xff]
  %v9920 = vld [vmem:[%s9861 + $0x1d0] sm:$0xff]
  %v9921 = vld [vmem:[%s9861 + $0x1d8] sm:$0xff]
  %v9922 = vld [vmem:[%s9861 + $0x1e0] sm:$0xff]
  %v9923 = vld [vmem:[%s9861 + $0x1e8] sm:$0xff]
  %v9924 = vld [vmem:[%s9861 + $0x1f0] sm:$0xff]
  %v9925 = vld [vmem:[%s9861 + $0x1f8] sm:$0xff]
  %s9926 = scalar_lea.vmem %s1, 33
  %v9927 = vld [vmem:[%s9926] ss:$8 sm:$0x3]
  %v9929 = vlaneseq
  %v9930 = vshrl.u32 %v9929, 7
  %v9931 = vsub.s32 0, %v9930
  %v9932 = vrot.slane %v9927, %v9931
  %v9933 = vlaneseq
  %v9934 = vshrl.u32 %v9933, 7
  %v9935 = vsub.s32 1, %v9934
  %v9936 = vrot.slane %v9927, %v9935
  %9939 = vmatprep.subr.mxu0 %v9863
  %9940 = vmatpush1.msra.mxu0 %v9862
  %9941 = vmatprep.subr.mxu0 %v9865
  %9942 = vmatpush1.msra.mxu0 %v9864
  %9943 = vmatprep.subr.mxu0 %v9867
  %9944 = vmatpush1.msra.mxu0 %v9866
  %9945 = vmatprep.subr.mxu0 %v9869
  %9946 = vmatpush1.msra.mxu0 %v9868
  %9947 = vmatprep.subr.mxu0 %v9871
  %9948 = vmatpush1.msra.mxu0 %v9870
  %9949 = vmatprep.subr.mxu0 %v9873
  %9950 = vmatpush1.msra.mxu0 %v9872
  %9951 = vmatprep.subr.mxu0 %v9875
  %9952 = vmatpush1.msra.mxu0 %v9874
  %9953 = vmatprep.subr.mxu0 %v9877
  %9954 = vmatpush1.msra.mxu0 %v9876
  %9955 = vmatprep.subr.mxu0 %v9879
  %9956 = vmatpush1.msra.mxu0 %v9878
  %9957 = vmatprep.subr.mxu0 %v9881
  %9958 = vmatpush1.msra.mxu0 %v9880
  %9959 = vmatprep.subr.mxu0 %v9883
  %9960 = vmatpush1.msra.mxu0 %v9882
  %9961 = vmatprep.subr.mxu0 %v9885
  %9962 = vmatpush1.msra.mxu0 %v9884
  %9963 = vmatprep.subr.mxu0 %v9887
  %9964 = vmatpush1.msra.mxu0 %v9886
  %9965 = vmatprep.subr.mxu0 %v9889
  %9966 = vmatpush1.msra.mxu0 %v9888
  %9967 = vmatprep.subr.mxu0 %v9891
  %9968 = vmatpush1.msra.mxu0 %v9890
  %9969 = vmatprep.subr.mxu0 %v9893
  %9970 = vmatpush1.msra.mxu0 %v9892
  %9971 = vmatprep.subr.mxu0 %v9895
  %9972 = vmatpush1.msra.mxu0 %v9894
  %9973 = vmatprep.subr.mxu0 %v9897
  %9974 = vmatpush1.msra.mxu0 %v9896
  %9975 = vmatprep.subr.mxu0 %v9899
  %9976 = vmatpush1.msra.mxu0 %v9898
  %9977 = vmatprep.subr.mxu0 %v9901
  %9978 = vmatpush1.msra.mxu0 %v9900
  %9979 = vmatprep.subr.mxu0 %v9903
  %9980 = vmatpush1.msra.mxu0 %v9902
  %9981 = vmatprep.subr.mxu0 %v9905
  %9982 = vmatpush1.msra.mxu0 %v9904
  %9983 = vmatprep.subr.mxu0 %v9907
  %9984 = vmatpush1.msra.mxu0 %v9906
  %9985 = vmatprep.subr.mxu0 %v9909
  %9986 = vmatpush1.msra.mxu0 %v9908
  %9987 = vmatprep.subr.mxu0 %v9911
  %9988 = vmatpush1.msra.mxu0 %v9910
  %9989 = vmatprep.subr.mxu0 %v9913
  %9990 = vmatpush1.msra.mxu0 %v9912
  %9991 = vmatprep.subr.mxu0 %v9915
  %9992 = vmatpush1.msra.mxu0 %v9914
  %9993 = vmatprep.subr.mxu0 %v9917
  %9994 = vmatpush1.msra.mxu0 %v9916
  %9995 = vmatprep.subr.mxu0 %v9919
  %9996 = vmatpush1.msra.mxu0 %v9918
  %9997 = vmatprep.subr.mxu0 %v9921
  %9998 = vmatpush1.msra.mxu0 %v9920
  %9999 = vmatprep.subr.mxu0 %v9923
  %10000 = vmatpush1.msra.mxu0 %v9922
  %10001 = vmatprep.subr.mxu0 %v9925
  %10002 = vmatpush1.msra.mxu0 %v9924
  %10003 = vmatprep.mubr.f32.mxu0 %v9860
  %10004 = vmatmul.mubr.f32.gmra.mrb[0].mxu0 %v9859
  %v10005 = vpop.f32.mrb[0].mxu0
  %v10006 = vadd.f32 %v9932, %v10005
  %v10007 = vpop.f32.mrb[0].mxu0
  %v10008 = vadd.f32 %v9936, %v10007
  %10009 = vdwg.mxu0
  %vm10010 = vcmp.ge.f32.partialorder %v10006, 0.0
  %vm10011 = vcmp.ge.f32.partialorder %v10008, 0.0
  %v10012 = vmul.f32 %v10006, 0.01
  %v10013 = vmul.f32 %v10008, 0.01
  %v10014 = vsel %vm10010, %v10006, %v10012
  %v10015 = vsel %vm10011, %v10008, %v10013
  %v10016 = vadd.f32 %v9705, %v10014
  %v10017 = vadd.f32 %v9706, %v10015
  %v10020 = vcombine.low %v10016, %v10017
  %v10022 = vunpack.c.l.s4 1983009808
  %v10023 = vunpack.c.0.s8 %v10022
  %v10024 = vlaneseq
  %v10025 = vshrl.u32 %v10024, 7
  %v10026 = vsub.s32 %v10023, %v10025
  %v10027 = vrot.slane %v10020, %v10026
  %10029 = vst [vmem:[%s8] sm:$0xf] %v10027
  // Predicated region
  $region34: #{resnet_forward.1} parent=0 // pred_check
    _
  $region35: #{resnet_forward.1} parent=0 // pred_check_branch
    %10031 = sbr.rel (0) target = $region37
  $region36: #{resnet_forward.1} parent=0 // pred_region
    _
  $region37: #{resnet_forward.1} parent=0 // pred_fallthru
    _
  // Predicated region
  $region38: #{resnet_forward.1} parent=0 // pred_check
    _
  $region39: #{resnet_forward.1} parent=0 // pred_check_branch
    %10033 = sbr.rel (0) target = $region41
  $region40: #{resnet_forward.1} parent=0 // pred_region
    _
  $region41: #{resnet_forward.1} parent=0 // pred_fallthru
    _

</llo_original>
